<compile_context>
chip_gen: v6e
topology: v6e:2x2x1
jax: 0.10.0
libtpu: 0.0.40
codegen_flags: <defaults>
</compile_context>

<pallas_src>
import jax
import jax.numpy as jnp
from jax.experimental import pallas as pl
from jax.experimental.pallas import tpu as pltpu


MLP_K = 32 * 7 * 7          # 1568 flattened conv features
MLP_K_PAD = 1664            # 13 * 128 (lane-dense contraction)
MLP_N = 784                 # final decoder width
MLP_N_PAD = 896             # 7 * 128  (lane-dense output)


def _round_up(x, m):
    return (x + m - 1) // m * m


# ----------------------------------------------------------------------------
# Pallas kernel: conv-as-matmul with lane-dense output.
#   out = relu(W @ patches + b)
#   W (bf16, resident), patches (bf16, streamed), acc f32, bias-add/ReLU f32.
# ----------------------------------------------------------------------------
def _conv_matmul_relu_kernel(w_ref, b_ref, p_ref, o_ref):
    acc = jnp.dot(w_ref[...], p_ref[...], preferred_element_type=jnp.float32)
    o_ref[...] = jnp.maximum(acc + b_ref[...], 0.0).astype(o_ref.dtype)


def _choose_col_tile(p, max_tile=2048):
    """Pick a lane-dense column tile (multiple of 128) and padded extent."""
    p128 = _round_up(p, 128)
    if p128 <= max_tile:
        return p128, p128
    return max_tile, _round_up(p, max_tile)


def im2col_cnhw(x_cnhw, k=3, stride=2, pad=1):
    """Patches from a CNHW tensor, emitted directly in (C*k*k, B*Ho*Wo) layout.

    Row order per output pixel is (c_in, kh, kw), matching PyTorch's
    weight.reshape(C_out, -1); no transpose is materialized.
    """
    C, B, H, W = x_cnhw.shape
    Ho = (H + 2 * pad - k) // stride + 1
    Wo = (W + 2 * pad - k) // stride + 1
    xp = jnp.pad(x_cnhw, ((0, 0), (0, 0), (pad, pad), (pad, pad)))
    cols = []
    for i in range(k):
        for j in range(k):
            cols.append(
                xp[:, :, i:i + stride * Ho:stride, j:j + stride * Wo:stride])
    patches = jnp.stack(cols, axis=1)                  # (C, k*k, B, Ho, Wo)
    patches = patches.reshape(C * k * k, B * Ho * Wo)  # row order (c, kh, kw)
    return patches, Ho, Wo


def conv2d_relu_cnhw(x_cnhw, w_mat, b_col, stride=2, pad=1, k=3):
    """PyTorch-semantics Conv2d(k=3, stride=2, pad=1) + ReLU.

    x_cnhw: (C_in, B, H, W) bf16.  w_mat: (C_out, C_in*k*k) bf16.
    b_col: (C_out, 1) f32.  Returns (C_out, B, Ho, Wo) bf16 (stays CNHW).
    """
    B = x_cnhw.shape[1]
    C_out, ck2 = w_mat.shape
    patches, Ho, Wo = im2col_cnhw(x_cnhw, k=k, stride=stride, pad=pad)
    K, P = patches.shape
    assert K == ck2
    tile_p, p_pad = _choose_col_tile(P)
    if p_pad != P:
        patches = jnp.pad(patches, ((0, 0), (0, p_pad - P)))
    grid_p = p_pad // tile_p

    out = pl.pallas_call(
        _conv_matmul_relu_kernel,
        out_shape=jax.ShapeDtypeStruct((C_out, p_pad), jnp.bfloat16),
        grid=(grid_p,),
        in_specs=[
            pl.BlockSpec((C_out, K), lambda p: (0, 0),
                         pipeline_mode=pl.Buffered(1)),    # weights resident
            pl.BlockSpec((C_out, 1), lambda p: (0, 0),
                         pipeline_mode=pl.Buffered(1)),    # bias resident
            pl.BlockSpec((K, tile_p), lambda p: (0, p)),   # patch cols streamed
        ],
        out_specs=pl.BlockSpec((C_out, tile_p), lambda p: (0, p)),
        compiler_params=pltpu.CompilerParams(
            dimension_semantics=("parallel",)),
    )(w_mat, b_col, patches)

    return out[:, :P].reshape(C_out, B, Ho, Wo)            # stays CNHW, bf16


# ----------------------------------------------------------------------------
# Pallas kernel: five fused Linear+ReLU layers, bf16 weights resident in VMEM,
# f32 accumulation / bias-add / ReLU, bf16 re-cast between layers.
#   refs = (w1, b1, w2, b2, ..., w5, b5, out)
# ----------------------------------------------------------------------------
def _fused_mlp_kernel(x_ref, *refs):
    o_ref = refs[-1]
    n_layers = (len(refs) - 1) // 2
    h = x_ref[...]                                           # bf16 tile
    for idx in range(n_layers):
        w_ref, b_ref = refs[2 * idx], refs[2 * idx + 1]
        acc = jnp.dot(h, w_ref[...], preferred_element_type=jnp.float32)
        acc = jnp.maximum(acc + b_ref[...], 0.0)             # f32 bias + ReLU
        h = acc.astype(jnp.bfloat16) if idx + 1 < n_layers else acc
    o_ref[...] = h.astype(o_ref.dtype)


def fused_mlp_relu(x, layers, max_tile_m=512, min_m_tiles=2,
                   vmem_limit_bytes=48 * 1024 * 1024):
    """Chain relu(x @ w + b) over `layers` in a single pallas_call.

    x: (B, K_in) bf16 (cast if not).  layers: list of (w bf16 (K,N), b f32 (1,N)).
    Returns (B, N_last) f32.
    """
    B, K_in = x.shape
    N_out = layers[-1][0].shape[1]
    if x.dtype != jnp.bfloat16:
        x = x.astype(jnp.bfloat16)

    # Aim for >= 2 M tiles (v7x: 2 TensorCores, M axis is "parallel") while
    # keeping zero-row padding small for awkward batch sizes.  Tiles are
    # multiples of 16 (bf16 sublane packing), capped at max_tile_m.
    n_tiles = max(min_m_tiles, pl.cdiv(B, max_tile_m))
    tile_m = min(_round_up(pl.cdiv(B, n_tiles), 16), max_tile_m)
    b_pad = _round_up(B, tile_m)
    if b_pad != B:
        x = jnp.pad(x, ((0, b_pad - B), (0, 0)))
    grid_m = b_pad // tile_m

    args = [x]
    in_specs = [pl.BlockSpec((tile_m, K_in), lambda i: (i, 0))]
    for w, b in layers:
        k, n = w.shape
        args += [w, b]
        in_specs += [
            # Grid-invariant -> single-buffered, resident across all M tiles.
            pl.BlockSpec((k, n), lambda i: (0, 0), pipeline_mode=pl.Buffered(1)),
            pl.BlockSpec((1, n), lambda i: (0, 0), pipeline_mode=pl.Buffered(1)),
        ]

    flops = 2 * b_pad * sum(w.shape[0] * w.shape[1] for w, _ in layers)
    bytes_accessed = (2 * b_pad * K_in + 4 * b_pad * N_out
                      + sum(2 * w.size + 4 * b.size for w, b in layers))

    out = pl.pallas_call(
        _fused_mlp_kernel,
        out_shape=jax.ShapeDtypeStruct((b_pad, N_out), jnp.float32),
        grid=(grid_m,),
        in_specs=in_specs,
        out_specs=pl.BlockSpec((tile_m, N_out), lambda i: (i, 0)),
        compiler_params=pltpu.CompilerParams(
            dimension_semantics=("parallel",),
            vmem_limit_bytes=vmem_limit_bytes),
        cost_estimate=pl.CostEstimate(
            flops=flops, transcendentals=0, bytes_accessed=bytes_accessed),
    )(*args)
    return out[:B]


# ----------------------------------------------------------------------------
# Parameter construction (deterministic, shapes from the PyTorch __init__)
# ----------------------------------------------------------------------------
def init_params(key):
    def dense_init(key, fan_in, fan_out):
        k1, k2 = jax.random.split(key)
        lim = 1.0 / jnp.sqrt(fan_in)
        w = jax.random.uniform(k1, (fan_in, fan_out), jnp.float32, -lim, lim)
        b = jax.random.uniform(k2, (fan_out,), jnp.float32, -lim, lim)
        return w, b

    def conv_init(key, c_out, c_in, k):
        k1, k2 = jax.random.split(key)
        fan_in = c_in * k * k
        lim = 1.0 / jnp.sqrt(fan_in)
        w = jax.random.uniform(k1, (c_out, c_in, k, k), jnp.float32, -lim, lim)
        b = jax.random.uniform(k2, (c_out,), jnp.float32, -lim, lim)
        return w, b

    keys = jax.random.split(key, 7)
    return {
        "conv1": conv_init(keys[0], 16, 1, 3),
        "conv2": conv_init(keys[1], 32, 16, 3),
        "enc_fc1": dense_init(keys[2], MLP_K, 64),
        "enc_fc2": dense_init(keys[3], 64, 16),
        "dec_fc1": dense_init(keys[4], 16, 64),
        "dec_fc2": dense_init(keys[5], 64, MLP_K),
        "dec_fc3": dense_init(keys[6], MLP_K, MLP_N),
    }


def prepare_params(params):
    """One-time (outside jit) cast to bf16 and lane-dense zero-padding.

    Zero-padded weight rows/cols and zero-padded biases are exactly neutral:
    padded activation columns contribute nothing and padded output columns are
    relu(0) = 0, which the wrapper slices off.
    """
    def conv_prep(w, b):
        c_out = w.shape[0]
        return (w.reshape(c_out, -1).astype(jnp.bfloat16),
                b.reshape(c_out, 1).astype(jnp.float32))

    def dense_prep(w, b, k_pad=None, n_pad=None):
        k, n = w.shape
        k_pad = k if k_pad is None else k_pad
        n_pad = n if n_pad is None else n_pad
        w = jnp.pad(w, ((0, k_pad - k), (0, n_pad - n)))
        b = jnp.pad(b, ((0, n_pad - n),))
        return w.astype(jnp.bfloat16), b.reshape(1, n_pad).astype(jnp.float32)

    return {
        "conv1": conv_prep(*params["conv1"]),
        "conv2": conv_prep(*params["conv2"]),
        "mlp": [
            dense_prep(*params["enc_fc1"], k_pad=MLP_K_PAD),               # (1664, 64)
            dense_prep(*params["enc_fc2"]),                                # (64, 16)
            dense_prep(*params["dec_fc1"]),                                # (16, 64)
            dense_prep(*params["dec_fc2"], n_pad=MLP_K_PAD),               # (64, 1664)
            dense_prep(*params["dec_fc3"], k_pad=MLP_K_PAD, n_pad=MLP_N_PAD),  # (1664, 896)
        ],
    }


# ----------------------------------------------------------------------------
# Forward pass (matches the nn.Sequential structure exactly: every Conv/Linear
# in this model, including the latent layer and the final decoder layer, is
# followed by ReLU in the PyTorch module).
# ----------------------------------------------------------------------------
def autoencoder_forward(prepped, x):
    B = x.shape[0]
    # ----- encoder conv path in CNHW, bf16 activations end-to-end -----
    h = jnp.transpose(x, (1, 0, 2, 3)).astype(jnp.bfloat16)   # (1, B, 28, 28)
    h = conv2d_relu_cnhw(h, *prepped["conv1"])                # (16, B, 14, 14)
    h = conv2d_relu_cnhw(h, *prepped["conv2"])                # (32, B, 7, 7)
    # Flatten with PyTorch's per-row (C, H, W) order, then pad lane-dense.
    # TODO(synk): fuse this transpose/flatten into the conv2 kernel (XLU).
    h = jnp.transpose(h, (1, 0, 2, 3)).reshape(B, MLP_K)      # (B, 1568) bf16
    h = jnp.pad(h, ((0, 0), (0, MLP_K_PAD - MLP_K)))          # (B, 1664)
    # ----- 5 fused Linear+ReLU layers (encoder tail + full decoder) -----
    h = fused_mlp_relu(h, prepped["mlp"])                     # (B, 896) f32
    return h[:, :MLP_N].reshape(B, 1, 28, 28)                 # Unflatten


# ----------------------------------------------------------------------------
# Pure-JAX f32 reference for a correctness sanity check
# ----------------------------------------------------------------------------
def reference_forward(params, x):
    def conv_ref(x, w, b):
        y = jax.lax.conv_general_dilated(
            x, w, window_strides=(2, 2), padding=((1, 1), (1, 1)),
            dimension_numbers=("NCHW", "OIHW", "NCHW"))
        return jax.nn.relu(y + b[None, :, None, None])

    def dense_ref(x, w, b):
        return jax.nn.relu(x @ w + b)

    B = x.shape[0]
    h = conv_ref(x, *params["conv1"])
    h = conv_ref(h, *params["conv2"])
    h = h.reshape(B, MLP_K)
    h = dense_ref(h, *params["enc_fc1"])
    h = dense_ref(h, *params["enc_fc2"])
    h = dense_ref(h, *params["dec_fc1"])
    h = dense_ref(h, *params["dec_fc2"])
    h = dense_ref(h, *params["dec_fc3"])
    return h.reshape(B, 1, 28, 28)


if __name__ == "__main__":
    key = jax.random.PRNGKey(0)
    k_param, k_input = jax.random.split(key)

    params = init_params(k_param)
    prepped = prepare_params(params)     # bf16 + lane padding, once, outside jit
    # Input must be (B, 1, 28, 28): Linear(32*7*7, 64) pins the spatial size.
    x = jax.random.uniform(k_input, (2, 1, 28, 28), jnp.float32)

    out = jax.jit(autoencoder_forward)(prepped, x)
    out = jax.block_until_ready(out)
    assert out.shape == (2, 1, 28, 28) and out.dtype == jnp.float32

    ref = reference_forward(params, x)
    # bf16 MXU inputs (f32 accumulate) vs. the pure-f32 reference: expect
    # O(0.1-1%) relative error; tolerance relaxed accordingly.
    assert jnp.allclose(out, ref, atol=2e-2, rtol=2e-2), "mismatch vs reference"

    print("KERNEL_OK")
</pallas_src>

<mosaic_0001>
module attributes {stable_mosaic.version = 11 : i64} {
  func.func @_conv_matmul_relu_kernel(%arg0: i32, %arg1: memref<16x9xbf16, #tpu.memory_space<vmem>>, %arg2: memref<16x1xf32, #tpu.memory_space<vmem>>, %arg3: memref<9x512xbf16, #tpu.memory_space<vmem>>, %arg4: memref<16x512xbf16, #tpu.memory_space<vmem>>) attributes {dimension_semantics = [#tpu.dimension_semantics<parallel>], iteration_bounds = array<i64: 1>, scalar_prefetch = 0 : i64, scratch_operands = 0 : i64, tpu.core_type = #tpu.core_type<tc>, window_params = [{pipeline_mode = #tpu.pipeline_mode<synchronous>, transform_indices = @transform_0, window_bounds = array<i64: 16, 9>}, {pipeline_mode = #tpu.pipeline_mode<synchronous>, transform_indices = @transform_1, window_bounds = array<i64: 16, 1>}, {transform_indices = @transform_2, window_bounds = array<i64: 9, 512>}, {transform_indices = @transform_3, window_bounds = array<i64: 16, 512>}]} {
    %c0 = arith.constant 0 : index
    %c0_0 = arith.constant 0 : index
    %0 = vector.load %arg1[%c0, %c0_0] : memref<16x9xbf16, #tpu.memory_space<vmem>>, vector<16x9xbf16>
    %c0_1 = arith.constant 0 : index
    %c0_2 = arith.constant 0 : index
    %1 = vector.load %arg3[%c0_1, %c0_2] : memref<9x512xbf16, #tpu.memory_space<vmem>>, vector<9x512xbf16>
    %cst = arith.constant dense<0.000000e+00> : vector<16x512xf32>
    %2 = tpu.matmul %0, %1, %cst {dimension_numbers = #tpu.dot_dimension_numbers<[1], [0], [0], [1], [0, 0, 1, 1], [], []>} : vector<16x9xbf16>, vector<9x512xbf16>, vector<16x512xf32> -> vector<16x512xf32>
    %c0_3 = arith.constant 0 : index
    %c0_4 = arith.constant 0 : index
    %3 = vector.load %arg2[%c0_3, %c0_4] : memref<16x1xf32, #tpu.memory_space<vmem>>, vector<16x1xf32>
    %4 = vector.broadcast %3 : vector<16x1xf32> to vector<16x512xf32>
    %5 = arith.addf %2, %4 : vector<16x512xf32>
    %cst_5 = arith.constant 0.000000e+00 : f32
    %6 = vector.broadcast %cst_5 : f32 to vector<16x512xf32>
    %7 = arith.maximumf %5, %6 : vector<16x512xf32>
    %8 = arith.truncf %7 : vector<16x512xf32> to vector<16x512xbf16>
    %c0_6 = arith.constant 0 : index
    %c0_7 = arith.constant 0 : index
    %9 = vector.load %arg4[%c0_6, %c0_7] : memref<16x512xbf16, #tpu.memory_space<vmem>>, vector<16x512xbf16>
    tpu.vector_store %arg4[%c0_6, %c0_7], %8 {strides = array<i32>} : memref<16x512xbf16, #tpu.memory_space<vmem>>, vector<16x512xbf16>,
    return
  }
  func.func @transform_0(%arg0: i32) -> (i32, i32) {
    %c0_i32 = arith.constant 0 : i32
    %c0_i32_0 = arith.constant 0 : i32
    %c0_i32_1 = arith.constant 0 : i32
    return %c0_i32, %c0_i32_0 : i32, i32
  }
  func.func @transform_1(%arg0: i32) -> (i32, i32) {
    %c0_i32 = arith.constant 0 : i32
    %c0_i32_0 = arith.constant 0 : i32
    %c0_i32_1 = arith.constant 0 : i32
    return %c0_i32, %c0_i32_0 : i32, i32
  }
  func.func @transform_2(%arg0: i32) -> (i32, i32) {
    %c0_i32 = arith.constant 0 : i32
    %c0_i32_0 = arith.constant 0 : i32
    return %c0_i32, %arg0 : i32, i32
  }
  func.func @transform_3(%arg0: i32) -> (i32, i32) {
    %c0_i32 = arith.constant 0 : i32
    %c0_i32_0 = arith.constant 0 : i32
    return %c0_i32, %arg0 : i32, i32
  }
}

module attributes {stable_mosaic.version = 11 : i64} {
  func.func @_conv_matmul_relu_kernel(%arg0: i32, %arg1: memref<32x144xbf16, #tpu.memory_space<vmem>>, %arg2: memref<32x1xf32, #tpu.memory_space<vmem>>, %arg3: memref<144x128xbf16, #tpu.memory_space<vmem>>, %arg4: memref<32x128xbf16, #tpu.memory_space<vmem>>) attributes {dimension_semantics = [#tpu.dimension_semantics<parallel>], iteration_bounds = array<i64: 1>, scalar_prefetch = 0 : i64, scratch_operands = 0 : i64, tpu.core_type = #tpu.core_type<tc>, window_params = [{pipeline_mode = #tpu.pipeline_mode<synchronous>, transform_indices = @transform_0, window_bounds = array<i64: 32, 144>}, {pipeline_mode = #tpu.pipeline_mode<synchronous>, transform_indices = @transform_1, window_bounds = array<i64: 32, 1>}, {transform_indices = @transform_2, window_bounds = array<i64: 144, 128>}, {transform_indices = @transform_3, window_bounds = array<i64: 32, 128>}]} {
    %c0 = arith.constant 0 : index
    %c0_0 = arith.constant 0 : index
    %0 = vector.load %arg1[%c0, %c0_0] : memref<32x144xbf16, #tpu.memory_space<vmem>>, vector<32x144xbf16>
    %c0_1 = arith.constant 0 : index
    %c0_2 = arith.constant 0 : index
    %1 = vector.load %arg3[%c0_1, %c0_2] : memref<144x128xbf16, #tpu.memory_space<vmem>>, vector<144x128xbf16>
    %cst = arith.constant dense<0.000000e+00> : vector<32x128xf32>
    %2 = tpu.matmul %0, %1, %cst {dimension_numbers = #tpu.dot_dimension_numbers<[1], [0], [0], [1], [0, 0, 1, 1], [], []>} : vector<32x144xbf16>, vector<144x128xbf16>, vector<32x128xf32> -> vector<32x128xf32>
    %c0_3 = arith.constant 0 : index
    %c0_4 = arith.constant 0 : index
    %3 = vector.load %arg2[%c0_3, %c0_4] : memref<32x1xf32, #tpu.memory_space<vmem>>, vector<32x1xf32>
    %4 = vector.broadcast %3 : vector<32x1xf32> to vector<32x128xf32>
    %5 = arith.addf %2, %4 : vector<32x128xf32>
    %cst_5 = arith.constant 0.000000e+00 : f32
    %6 = vector.broadcast %cst_5 : f32 to vector<32x128xf32>
    %7 = arith.maximumf %5, %6 : vector<32x128xf32>
    %8 = arith.truncf %7 : vector<32x128xf32> to vector<32x128xbf16>
    %c0_6 = arith.constant 0 : index
    %c0_7 = arith.constant 0 : index
    %9 = vector.load %arg4[%c0_6, %c0_7] : memref<32x128xbf16, #tpu.memory_space<vmem>>, vector<32x128xbf16>
    tpu.vector_store %arg4[%c0_6, %c0_7], %8 {strides = array<i32>} : memref<32x128xbf16, #tpu.memory_space<vmem>>, vector<32x128xbf16>,
    return
  }
  func.func @transform_0(%arg0: i32) -> (i32, i32) {
    %c0_i32 = arith.constant 0 : i32
    %c0_i32_0 = arith.constant 0 : i32
    %c0_i32_1 = arith.constant 0 : i32
    return %c0_i32, %c0_i32_0 : i32, i32
  }
  func.func @transform_1(%arg0: i32) -> (i32, i32) {
    %c0_i32 = arith.constant 0 : i32
    %c0_i32_0 = arith.constant 0 : i32
    %c0_i32_1 = arith.constant 0 : i32
    return %c0_i32, %c0_i32_0 : i32, i32
  }
  func.func @transform_2(%arg0: i32) -> (i32, i32) {
    %c0_i32 = arith.constant 0 : i32
    %c0_i32_0 = arith.constant 0 : i32
    return %c0_i32, %arg0 : i32, i32
  }
  func.func @transform_3(%arg0: i32) -> (i32, i32) {
    %c0_i32 = arith.constant 0 : i32
    %c0_i32_0 = arith.constant 0 : i32
    return %c0_i32, %arg0 : i32, i32
  }
}

module attributes {stable_mosaic.version = 11 : i64} {
  func.func @_fused_mlp_kernel(%arg0: i32, %arg1: memref<16x1664xbf16, #tpu.memory_space<vmem>>, %arg2: memref<1664x64xbf16, #tpu.memory_space<vmem>>, %arg3: memref<1x64xf32, #tpu.memory_space<vmem>>, %arg4: memref<64x16xbf16, #tpu.memory_space<vmem>>, %arg5: memref<1x16xf32, #tpu.memory_space<vmem>>, %arg6: memref<16x64xbf16, #tpu.memory_space<vmem>>, %arg7: memref<1x64xf32, #tpu.memory_space<vmem>>, %arg8: memref<64x1664xbf16, #tpu.memory_space<vmem>>, %arg9: memref<1x1664xf32, #tpu.memory_space<vmem>>, %arg10: memref<1664x896xbf16, #tpu.memory_space<vmem>>, %arg11: memref<1x896xf32, #tpu.memory_space<vmem>>, %arg12: memref<16x896xf32, #tpu.memory_space<vmem>>) attributes {dimension_semantics = [#tpu.dimension_semantics<parallel>], iteration_bounds = array<i64: 1>, scalar_prefetch = 0 : i64, scratch_operands = 0 : i64, tpu.core_type = #tpu.core_type<tc>, window_params = [{transform_indices = @transform_0, window_bounds = array<i64: 16, 1664>}, {pipeline_mode = #tpu.pipeline_mode<synchronous>, transform_indices = @transform_1, window_bounds = array<i64: 1664, 64>}, {pipeline_mode = #tpu.pipeline_mode<synchronous>, transform_indices = @transform_2, window_bounds = array<i64: 1, 64>}, {pipeline_mode = #tpu.pipeline_mode<synchronous>, transform_indices = @transform_3, window_bounds = array<i64: 64, 16>}, {pipeline_mode = #tpu.pipeline_mode<synchronous>, transform_indices = @transform_4, window_bounds = array<i64: 1, 16>}, {pipeline_mode = #tpu.pipeline_mode<synchronous>, transform_indices = @transform_5, window_bounds = array<i64: 16, 64>}, {pipeline_mode = #tpu.pipeline_mode<synchronous>, transform_indices = @transform_6, window_bounds = array<i64: 1, 64>}, {pipeline_mode = #tpu.pipeline_mode<synchronous>, transform_indices = @transform_7, window_bounds = array<i64: 64, 1664>}, {pipeline_mode = #tpu.pipeline_mode<synchronous>, transform_indices = @transform_8, window_bounds = array<i64: 1, 1664>}, {pipeline_mode = #tpu.pipeline_mode<synchronous>, transform_indices = @transform_9, window_bounds = array<i64: 1664, 896>}, {pipeline_mode = #tpu.pipeline_mode<synchronous>, transform_indices = @transform_10, window_bounds = array<i64: 1, 896>}, {transform_indices = @transform_11, window_bounds = array<i64: 16, 896>}]} {
    %c0 = arith.constant 0 : index
    %c0_0 = arith.constant 0 : index
    %0 = vector.load %arg1[%c0, %c0_0] : memref<16x1664xbf16, #tpu.memory_space<vmem>>, vector<16x1664xbf16>
    %c0_1 = arith.constant 0 : index
    %c0_2 = arith.constant 0 : index
    %1 = vector.load %arg2[%c0_1, %c0_2] : memref<1664x64xbf16, #tpu.memory_space<vmem>>, vector<1664x64xbf16>
    %cst = arith.constant dense<0.000000e+00> : vector<16x64xf32>
    %2 = tpu.matmul %0, %1, %cst {dimension_numbers = #tpu.dot_dimension_numbers<[1], [0], [0], [1], [0, 0, 1, 1], [], []>} : vector<16x1664xbf16>, vector<1664x64xbf16>, vector<16x64xf32> -> vector<16x64xf32>
    %c0_3 = arith.constant 0 : index
    %c0_4 = arith.constant 0 : index
    %3 = vector.load %arg3[%c0_3, %c0_4] : memref<1x64xf32, #tpu.memory_space<vmem>>, vector<1x64xf32>
    %4 = vector.broadcast %3 : vector<1x64xf32> to vector<16x64xf32>
    %5 = arith.addf %2, %4 : vector<16x64xf32>
    %cst_5 = arith.constant 0.000000e+00 : f32
    %6 = vector.broadcast %cst_5 : f32 to vector<16x64xf32>
    %7 = arith.maximumf %5, %6 : vector<16x64xf32>
    %8 = arith.truncf %7 : vector<16x64xf32> to vector<16x64xbf16>
    %c0_6 = arith.constant 0 : index
    %c0_7 = arith.constant 0 : index
    %9 = vector.load %arg4[%c0_6, %c0_7] : memref<64x16xbf16, #tpu.memory_space<vmem>>, vector<64x16xbf16>
    %cst_8 = arith.constant dense<0.000000e+00> : vector<16x16xf32>
    %10 = tpu.matmul %8, %9, %cst_8 {dimension_numbers = #tpu.dot_dimension_numbers<[1], [0], [0], [1], [0, 0, 1, 1], [], []>} : vector<16x64xbf16>, vector<64x16xbf16>, vector<16x16xf32> -> vector<16x16xf32>
    %c0_9 = arith.constant 0 : index
    %c0_10 = arith.constant 0 : index
    %11 = vector.load %arg5[%c0_9, %c0_10] : memref<1x16xf32, #tpu.memory_space<vmem>>, vector<1x16xf32>
    %12 = vector.broadcast %11 : vector<1x16xf32> to vector<16x16xf32>
    %13 = arith.addf %10, %12 : vector<16x16xf32>
    %cst_11 = arith.constant 0.000000e+00 : f32
    %14 = vector.broadcast %cst_11 : f32 to vector<16x16xf32>
    %15 = arith.maximumf %13, %14 : vector<16x16xf32>
    %16 = arith.truncf %15 : vector<16x16xf32> to vector<16x16xbf16>
    %c0_12 = arith.constant 0 : index
    %c0_13 = arith.constant 0 : index
    %17 = vector.load %arg6[%c0_12, %c0_13] : memref<16x64xbf16, #tpu.memory_space<vmem>>, vector<16x64xbf16>
    %cst_14 = arith.constant dense<0.000000e+00> : vector<16x64xf32>
    %18 = tpu.matmul %16, %17, %cst_14 {dimension_numbers = #tpu.dot_dimension_numbers<[1], [0], [0], [1], [0, 0, 1, 1], [], []>} : vector<16x16xbf16>, vector<16x64xbf16>, vector<16x64xf32> -> vector<16x64xf32>
    %c0_15 = arith.constant 0 : index
    %c0_16 = arith.constant 0 : index
    %19 = vector.load %arg7[%c0_15, %c0_16] : memref<1x64xf32, #tpu.memory_space<vmem>>, vector<1x64xf32>
    %20 = vector.broadcast %19 : vector<1x64xf32> to vector<16x64xf32>
    %21 = arith.addf %18, %20 : vector<16x64xf32>
    %cst_17 = arith.constant 0.000000e+00 : f32
    %22 = vector.broadcast %cst_17 : f32 to vector<16x64xf32>
    %23 = arith.maximumf %21, %22 : vector<16x64xf32>
    %24 = arith.truncf %23 : vector<16x64xf32> to vector<16x64xbf16>
    %c0_18 = arith.constant 0 : index
    %c0_19 = arith.constant 0 : index
    %25 = vector.load %arg8[%c0_18, %c0_19] : memref<64x1664xbf16, #tpu.memory_space<vmem>>, vector<64x1664xbf16>
    %cst_20 = arith.constant dense<0.000000e+00> : vector<16x1664xf32>
    %26 = tpu.matmul %24, %25, %cst_20 {dimension_numbers = #tpu.dot_dimension_numbers<[1], [0], [0], [1], [0, 0, 1, 1], [], []>} : vector<16x64xbf16>, vector<64x1664xbf16>, vector<16x1664xf32> -> vector<16x1664xf32>
    %c0_21 = arith.constant 0 : index
    %c0_22 = arith.constant 0 : index
    %27 = vector.load %arg9[%c0_21, %c0_22] : memref<1x1664xf32, #tpu.memory_space<vmem>>, vector<1x1664xf32>
    %28 = vector.broadcast %27 : vector<1x1664xf32> to vector<16x1664xf32>
    %29 = arith.addf %26, %28 : vector<16x1664xf32>
    %cst_23 = arith.constant 0.000000e+00 : f32
    %30 = vector.broadcast %cst_23 : f32 to vector<16x1664xf32>
    %31 = arith.maximumf %29, %30 : vector<16x1664xf32>
    %32 = arith.truncf %31 : vector<16x1664xf32> to vector<16x1664xbf16>
    %c0_24 = arith.constant 0 : index
    %c0_25 = arith.constant 0 : index
    %33 = vector.load %arg10[%c0_24, %c0_25] : memref<1664x896xbf16, #tpu.memory_space<vmem>>, vector<1664x896xbf16>
    %cst_26 = arith.constant dense<0.000000e+00> : vector<16x896xf32>
    %34 = tpu.matmul %32, %33, %cst_26 {dimension_numbers = #tpu.dot_dimension_numbers<[1], [0], [0], [1], [0, 0, 1, 1], [], []>} : vector<16x1664xbf16>, vector<1664x896xbf16>, vector<16x896xf32> -> vector<16x896xf32>
    %c0_27 = arith.constant 0 : index
    %c0_28 = arith.constant 0 : index
    %35 = vector.load %arg11[%c0_27, %c0_28] : memref<1x896xf32, #tpu.memory_space<vmem>>, vector<1x896xf32>
    %36 = vector.broadcast %35 : vector<1x896xf32> to vector<16x896xf32>
    %37 = arith.addf %34, %36 : vector<16x896xf32>
    %cst_29 = arith.constant 0.000000e+00 : f32
    %38 = vector.broadcast %cst_29 : f32 to vector<16x896xf32>
    %39 = arith.maximumf %37, %38 : vector<16x896xf32>
    %c0_30 = arith.constant 0 : index
    %c0_31 = arith.constant 0 : index
    %40 = vector.load %arg12[%c0_30, %c0_31] : memref<16x896xf32, #tpu.memory_space<vmem>>, vector<16x896xf32>
    tpu.vector_store %arg12[%c0_30, %c0_31], %39 {strides = array<i32>} : memref<16x896xf32, #tpu.memory_space<vmem>>, vector<16x896xf32>,
    return
  }
  func.func @transform_0(%arg0: i32) -> (i32, i32) {
    %c0_i32 = arith.constant 0 : i32
    %c0_i32_0 = arith.constant 0 : i32
    return %arg0, %c0_i32 : i32, i32
  }
  func.func @transform_1(%arg0: i32) -> (i32, i32) {
    %c0_i32 = arith.constant 0 : i32
    %c0_i32_0 = arith.constant 0 : i32
    %c0_i32_1 = arith.constant 0 : i32
    return %c0_i32, %c0_i32_0 : i32, i32
  }
  func.func @transform_2(%arg0: i32) -> (i32, i32) {
    %c0_i32 = arith.constant 0 : i32
    %c0_i32_0 = arith.constant 0 : i32
    %c0_i32_1 = arith.constant 0 : i32
    return %c0_i32, %c0_i32_0 : i32, i32
  }
  func.func @transform_3(%arg0: i32) -> (i32, i32) {
    %c0_i32 = arith.constant 0 : i32
    %c0_i32_0 = arith.constant 0 : i32
    %c0_i32_1 = arith.constant 0 : i32
    return %c0_i32, %c0_i32_0 : i32, i32
  }
  func.func @transform_4(%arg0: i32) -> (i32, i32) {
    %c0_i32 = arith.constant 0 : i32
    %c0_i32_0 = arith.constant 0 : i32
    %c0_i32_1 = arith.constant 0 : i32
    return %c0_i32, %c0_i32_0 : i32, i32
  }
  func.func @transform_5(%arg0: i32) -> (i32, i32) {
    %c0_i32 = arith.constant 0 : i32
    %c0_i32_0 = arith.constant 0 : i32
    %c0_i32_1 = arith.constant 0 : i32
    return %c0_i32, %c0_i32_0 : i32, i32
  }
  func.func @transform_6(%arg0: i32) -> (i32, i32) {
    %c0_i32 = arith.constant 0 : i32
    %c0_i32_0 = arith.constant 0 : i32
    %c0_i32_1 = arith.constant 0 : i32
    return %c0_i32, %c0_i32_0 : i32, i32
  }
  func.func @transform_7(%arg0: i32) -> (i32, i32) {
    %c0_i32 = arith.constant 0 : i32
    %c0_i32_0 = arith.constant 0 : i32
    %c0_i32_1 = arith.constant 0 : i32
    return %c0_i32, %c0_i32_0 : i32, i32
  }
  func.func @transform_8(%arg0: i32) -> (i32, i32) {
    %c0_i32 = arith.constant 0 : i32
    %c0_i32_0 = arith.constant 0 : i32
    %c0_i32_1 = arith.constant 0 : i32
    return %c0_i32, %c0_i32_0 : i32, i32
  }
  func.func @transform_9(%arg0: i32) -> (i32, i32) {
    %c0_i32 = arith.constant 0 : i32
    %c0_i32_0 = arith.constant 0 : i32
    %c0_i32_1 = arith.constant 0 : i32
    return %c0_i32, %c0_i32_0 : i32, i32
  }
  func.func @transform_10(%arg0: i32) -> (i32, i32) {
    %c0_i32 = arith.constant 0 : i32
    %c0_i32_0 = arith.constant 0 : i32
    %c0_i32_1 = arith.constant 0 : i32
    return %c0_i32, %c0_i32_0 : i32, i32
  }
  func.func @transform_11(%arg0: i32) -> (i32, i32) {
    %c0_i32 = arith.constant 0 : i32
    %c0_i32_0 = arith.constant 0 : i32
    return %arg0, %c0_i32 : i32, i32
  }
}

</mosaic_0001>

<llo_original>
// kernel: autoencoder_forward.3
$region0: #{autoencoder_forward.3}
  #allocation0 [shape = 'u32[]', space=smem, size = 0x4, offset = 0x4, fixed_abs, tag = 'smem constant byte address 0x4 - core index']
  #allocation1 [shape = 'u32[144,128]{1,0:T(1,128)}', space=vmem, size = 0x12000, scoped, tag = 'internal scratch']
  %s0 = inlined_call_operand.hbm [shape: bf16[16,9], index: 0, kind: input, shape index: {}]
  %s1 = inlined_call_operand.vmem [shape: f32[16,1], index: 1, kind: input, shape index: {}]
  %s2 = inlined_call_operand.vmem [shape: bf16[9,512], index: 2, kind: input, shape index: {}]
  %s3 = inlined_call_operand.vmem [shape: bf16[16,512], index: 3, kind: output, shape index: {}]
  %s4 = sld [smem:[#allocation0]]
  $region26: #{autoencoder_forward.3} parent=0
    _
  %s6 = ssub.s32 1, %s4
  %s7 = scalar_select 0, %s6, %s4
  $region1: #{autoencoder_forward.3} parent=0
    #allocation2 [shape = 'u8[4096]{0}', space=vmem, size = 0x1000, scoped, tag = 'input window, operand 0, single buffered']
    #allocation3 [shape = 's32[1]{0}', space=sflag, size = 0x4, scoped, tag = 'scoped memory for autoencoder_forward.3']
    %8 = vsyncpa [#allocation3], 0
    // Predicated region
    $region2: #{autoencoder_forward.3} parent=1 // pred_check
      _
    $region3: #{autoencoder_forward.3} parent=1 // pred_check_branch
      %10 = sbr.rel (0) target = $region5
    $region4: #{autoencoder_forward.3} parent=1 // pred_region
      %s12 = ssub.s32 128, 128
      %13 = vsyncadd [#allocation3], %s12
      %s14 = sshll.u32 [#allocation2], 4
      %s15 = int_to_ptr.vmem [resolvable:$true] %s14
      %20 = dma.hbm_to_vmem [thread:$0]  %s0, 128, %s15, [#allocation3], 64, 64, 4
    $region5: #{autoencoder_forward.3} parent=1 // pred_fallthru
      _
    // Predicated region
    $region6: #{autoencoder_forward.3} parent=1 // pred_check
      _
    $region7: #{autoencoder_forward.3} parent=1 // pred_check_branch
      %22 = sbr.rel (0) target = $region9
    $region8: #{autoencoder_forward.3} parent=1 // pred_region
      _
    $region9: #{autoencoder_forward.3} parent=1 // pred_fallthru
      _
    // Predicated region
    $region10: #{autoencoder_forward.3} parent=1 // pred_check
      _
    $region11: #{autoencoder_forward.3} parent=1 // pred_check_branch
      %24 = sbr.rel (0) target = $region13
    $region12: #{autoencoder_forward.3} parent=1 // pred_region
      _
    $region13: #{autoencoder_forward.3} parent=1 // pred_fallthru
      _
    // Predicated region
    $region14: #{autoencoder_forward.3} parent=1 // pred_check
      _
    $region15: #{autoencoder_forward.3} parent=1 // pred_check_branch
      %26 = sbr.rel (0) target = $region17
    $region16: #{autoencoder_forward.3} parent=1 // pred_region
      %27 = dma.done [#allocation3], 128
    $region17: #{autoencoder_forward.3} parent=1 // pred_fallthru
      _
    %v29 = vld [vmem:[#allocation2] sm:$0xf]
    %v30 = vld [vmem:[#allocation2 + $0x4] sm:$0xf]
    %v31 = vld [vmem:[%s2] sm:$0xff]
    %v32 = vld [vmem:[%s2 + $0x8] sm:$0xff]
    %v33 = vld [vmem:[%s2 + $0x10] sm:$0x11]
    %v34 = vld [vmem:[%s2 + $0x18] sm:$0x11]
    %v35 = vld [vmem:[%s1] sm:$0xff]
    %v36 = vld [vmem:[%s1 + $0x8] sm:$0xff]
    %38 = vset.pattern.permute.xlu0 0
    %39 = vperm.xlu0 %38, %v35
    %v40 = vpop.permute.xlu0 %39
    %43 = vset.pattern.permute.xlu0 0
    %44 = vperm.xlu0 %43, %v36
    %v45 = vpop.permute.xlu0 %44
    %v49 = vunpack.c.l.b16 %v29
    %v50 = vunpack.c.l.b16 %v30
    %v51 = vpack.c.b16 %v50, %v49
    %v56 = vunpack.c.l.b16 %v31
    %v57 = vunpack.c.h.b16 %v31
    %v58 = vunpack.c.l.b16 %v32
    %v59 = vunpack.c.h.b16 %v32
    %v60 = vunpack.c.l.b16 %v33
    %v61 = vunpack.c.h.b16 %v33
    %v62 = vunpack.c.l.b16 %v34
    %v63 = vunpack.c.h.b16 %v34
    %v64 = vpack.c.b16 %v60, %v56
    %v65 = vpack.c.b16 %v61, %v57
    %v66 = vpack.c.b16 %v62, %v58
    %v67 = vpack.c.b16 %v63, %v59
    %vm68 = vcmask 72704
    %v70 = vsel %vm68, %v51, 0
    %vm72 = vcmask 1043456
    %vm73 = vcmask 1044480
    %v74 = vsel %vm72, 4294967295, 65535
    %v75 = vsel %vm73, %v74, 0
    %v77 = vand.u32 %v64, %v75
    %v80 = vand.u32 %v65, %v75
    %v83 = vand.u32 %v66, %v75
    %v86 = vand.u32 %v67, %v75
    %88 = vmatprep.subr.bf16.mxu0 0
    %89 = vmatpush1.bf16.msra.mxu0 0
    %90 = vmatprep.subr.bf16.mxu0 0
    %91 = vmatpush1.bf16.msra.mxu0 0
    %92 = vmatprep.subr.bf16.mxu0 0
    %93 = vmatpush1.bf16.msra.mxu0 0
    %94 = vmatprep.subr.bf16.mxu0 0
    %95 = vmatpush1.bf16.msra.mxu0 0
    %96 = vmatprep.subr.bf16.mxu0 0
    %97 = vmatpush1.bf16.msra.mxu0 0
    %98 = vmatprep.subr.bf16.mxu0 0
    %99 = vmatpush1.bf16.msra.mxu0 0
    %100 = vmatprep.subr.bf16.mxu0 0
    %101 = vmatpush1.bf16.msra.mxu0 0
    %102 = vmatprep.subr.bf16.mxu0 %v80
    %103 = vmatpush1.bf16.msra.mxu0 %v77
    %104 = vmatprep.subr.bf16.mxu0 0
    %105 = vmatpush2.bf16.msra.mxu0 0
    %106 = vmatprep.subr.bf16.mxu0 0
    %107 = vmatpush2.bf16.msra.mxu0 0
    %108 = vmatprep.subr.bf16.mxu0 0
    %109 = vmatpush2.bf16.msra.mxu0 0
    %110 = vmatprep.subr.bf16.mxu0 0
    %111 = vmatpush2.bf16.msra.mxu0 0
    %112 = vmatprep.subr.bf16.mxu0 0
    %113 = vmatpush2.bf16.msra.mxu0 0
    %114 = vmatprep.subr.bf16.mxu0 0
    %115 = vmatpush2.bf16.msra.mxu0 0
    %116 = vmatprep.subr.bf16.mxu0 0
    %117 = vmatpush2.bf16.msra.mxu0 0
    %118 = vmatprep.subr.bf16.mxu0 0
    %119 = vmatpush2.bf16.msra.mxu0 0
    %120 = vmatprep.mubr.bf16.mxu0 0
    %121 = vmatmul.mubr.bf16.gmra.mxu0 %v70
    %v122 = vpop.f32.mrf.mxu0
    %v123 = vadd.f32 %v40, %v122
    %v124 = vpop.f32.mrf.mxu0
    %v125 = vadd.f32 %v40, %v124
    %v126 = vpop.f32.mrf.mxu0
    %v127 = vadd.f32 %v45, %v126
    %v128 = vpop.f32.mrf.mxu0
    %v129 = vadd.f32 %v45, %v128
    %130 = vdwg.mxu0
    %131 = vmatprep.subr.bf16.mxu0 0
    %132 = vmatpush1.bf16.msra.mxu0 0
    %133 = vmatprep.subr.bf16.mxu0 0
    %134 = vmatpush1.bf16.msra.mxu0 0
    %135 = vmatprep.subr.bf16.mxu0 0
    %136 = vmatpush1.bf16.msra.mxu0 0
    %137 = vmatprep.subr.bf16.mxu0 0
    %138 = vmatpush1.bf16.msra.mxu0 0
    %139 = vmatprep.subr.bf16.mxu0 0
    %140 = vmatpush1.bf16.msra.mxu0 0
    %141 = vmatprep.subr.bf16.mxu0 0
    %142 = vmatpush1.bf16.msra.mxu0 0
    %143 = vmatprep.subr.bf16.mxu0 0
    %144 = vmatpush1.bf16.msra.mxu0 0
    %145 = vmatprep.subr.bf16.mxu0 %v86
    %146 = vmatpush1.bf16.msra.mxu0 %v83
    %147 = vmatprep.subr.bf16.mxu0 0
    %148 = vmatpush2.bf16.msra.mxu0 0
    %149 = vmatprep.subr.bf16.mxu0 0
    %150 = vmatpush2.bf16.msra.mxu0 0
    %151 = vmatprep.subr.bf16.mxu0 0
    %152 = vmatpush2.bf16.msra.mxu0 0
    %153 = vmatprep.subr.bf16.mxu0 0
    %154 = vmatpush2.bf16.msra.mxu0 0
    %155 = vmatprep.subr.bf16.mxu0 0
    %156 = vmatpush2.bf16.msra.mxu0 0
    %157 = vmatprep.subr.bf16.mxu0 0
    %158 = vmatpush2.bf16.msra.mxu0 0
    %159 = vmatprep.subr.bf16.mxu0 0
    %160 = vmatpush2.bf16.msra.mxu0 0
    %161 = vmatprep.subr.bf16.mxu0 0
    %162 = vmatpush2.bf16.msra.mxu0 0
    %163 = vmatprep.mubr.bf16.mxu0 0
    %164 = vmatmul.mubr.bf16.gmra.mxu0 %v70
    %v165 = vpop.f32.mrf.mxu0
    %v166 = vadd.f32 %v40, %v165
    %v167 = vpop.f32.mrf.mxu0
    %v168 = vadd.f32 %v40, %v167
    %v169 = vpop.f32.mrf.mxu0
    %v170 = vadd.f32 %v45, %v169
    %v171 = vpop.f32.mrf.mxu0
    %v172 = vadd.f32 %v45, %v171
    %173 = vdwg.mxu0
    %v174 = vmax.f32 %v123, 0.0
    %v175 = vmax.f32 %v125, 0.0
    %v176 = vmax.f32 %v166, 0.0
    %v177 = vmax.f32 %v168, 0.0
    %v178 = vmax.f32 %v127, 0.0
    %v179 = vmax.f32 %v129, 0.0
    %v180 = vmax.f32 %v170, 0.0
    %v181 = vmax.f32 %v172, 0.0
    %v182 = vpack.c.bf16 %v178, %v174
    %v183 = vpack.c.bf16 %v179, %v175
    %v184 = vpack.c.bf16 %v180, %v176
    %v185 = vpack.c.bf16 %v181, %v177
    %v190 = vunpack.c.l.b16 %v182
    %v191 = vunpack.c.l.b16 %v183
    %v192 = vunpack.c.l.b16 %v184
    %v193 = vunpack.c.l.b16 %v185
    %v194 = vunpack.c.h.b16 %v182
    %v195 = vunpack.c.h.b16 %v183
    %v196 = vunpack.c.h.b16 %v184
    %v197 = vunpack.c.h.b16 %v185
    %v198 = vpack.c.b16 %v191, %v190
    %v199 = vpack.c.b16 %v193, %v192
    %v200 = vpack.c.b16 %v195, %v194
    %v201 = vpack.c.b16 %v197, %v196
    %206 = vst [vmem:[%s3] sm:$0xff] %v198
    %207 = vst [vmem:[%s3 + $0x8] sm:$0xff] %v199
    %208 = vst [vmem:[%s3 + $0x10] sm:$0xff] %v200
    %209 = vst [vmem:[%s3 + $0x18] sm:$0xff] %v201
    // Predicated region
    $region18: #{autoencoder_forward.3} parent=1 // pred_check
      _
    $region19: #{autoencoder_forward.3} parent=1 // pred_check_branch
      %211 = sbr.rel (0) target = $region21
    $region20: #{autoencoder_forward.3} parent=1 // pred_region
      _
    $region21: #{autoencoder_forward.3} parent=1 // pred_fallthru
      _
    // Predicated region
    $region22: #{autoencoder_forward.3} parent=1 // pred_check
      _
    $region23: #{autoencoder_forward.3} parent=1 // pred_check_branch
      %213 = sbr.rel (0) target = $region25
    $region24: #{autoencoder_forward.3} parent=1 // pred_region
      _
    $region25: #{autoencoder_forward.3} parent=1 // pred_fallthru
      _
    %214 = vsyncpa [#allocation3], 1

// kernel: autoencoder_forward.4
$region0: #{autoencoder_forward.4}
  #allocation0 [shape = 'u32[]', space=smem, size = 0x4, offset = 0x4, fixed_abs, tag = 'smem constant byte address 0x4 - core index']
  #allocation1 [shape = 'u32[144,128]{1,0:T(1,128)}', space=vmem, size = 0x12000, scoped, tag = 'internal scratch']
  %s0 = inlined_call_operand.vmem [shape: bf16[32,144], index: 0, kind: input, shape index: {}]
  %s1 = inlined_call_operand.vmem [shape: f32[32,1], index: 1, kind: input, shape index: {}]
  %s2 = inlined_call_operand.vmem [shape: bf16[144,128], index: 2, kind: input, shape index: {}]
  %s3 = inlined_call_operand.vmem [shape: bf16[32,128], index: 3, kind: output, shape index: {}]
  %s4 = sld [smem:[#allocation0]]
  $region22: #{autoencoder_forward.4} parent=0
    _
  %s6 = ssub.s32 1, %s4
  %s7 = scalar_select 0, %s6, %s4
  // Predicated region
  $region2: #{autoencoder_forward.4} parent=0 // pred_check
    _
  $region3: #{autoencoder_forward.4} parent=0 // pred_check_branch
    %9 = sbr.rel (0) target = $region5
  $region4: #{autoencoder_forward.4} parent=0 // pred_region
    _
  $region5: #{autoencoder_forward.4} parent=0 // pred_fallthru
    _
  // Predicated region
  $region6: #{autoencoder_forward.4} parent=0 // pred_check
    _
  $region7: #{autoencoder_forward.4} parent=0 // pred_check_branch
    %11 = sbr.rel (0) target = $region9
  $region8: #{autoencoder_forward.4} parent=0 // pred_region
    _
  $region9: #{autoencoder_forward.4} parent=0 // pred_fallthru
    _
  // Predicated region
  $region10: #{autoencoder_forward.4} parent=0 // pred_check
    _
  $region11: #{autoencoder_forward.4} parent=0 // pred_check_branch
    %13 = sbr.rel (0) target = $region13
  $region12: #{autoencoder_forward.4} parent=0 // pred_region
    _
  $region13: #{autoencoder_forward.4} parent=0 // pred_fallthru
    _
  %v15 = vld [vmem:[%s0] sm:$0xff]
  %v16 = vld [vmem:[%s0 + $0x8] sm:$0xff]
  %v17 = vld [vmem:[%s0 + $0x10] sm:$0xff]
  %v18 = vld [vmem:[%s0 + $0x18] sm:$0xff]
  %v19 = vld [vmem:[%s2] sm:$0xf]
  %v20 = vld [vmem:[%s2 + $0x4] sm:$0xf]
  %v21 = vld [vmem:[%s2 + $0x8] sm:$0xf]
  %v22 = vld [vmem:[%s2 + $0xc] sm:$0xf]
  %v23 = vld [vmem:[%s2 + $0x10] sm:$0xf]
  %v24 = vld [vmem:[%s2 + $0x14] sm:$0xf]
  %v25 = vld [vmem:[%s2 + $0x18] sm:$0xf]
  %v26 = vld [vmem:[%s2 + $0x1c] sm:$0xf]
  %v27 = vld [vmem:[%s2 + $0x20] sm:$0xf]
  %v28 = vld [vmem:[%s2 + $0x24] sm:$0xf]
  %v29 = vld [vmem:[%s2 + $0x28] sm:$0xf]
  %v30 = vld [vmem:[%s2 + $0x2c] sm:$0xf]
  %v31 = vld [vmem:[%s2 + $0x30] sm:$0xf]
  %v32 = vld [vmem:[%s2 + $0x34] sm:$0xf]
  %v33 = vld [vmem:[%s2 + $0x38] sm:$0xf]
  %v34 = vld [vmem:[%s2 + $0x3c] sm:$0xf]
  %v35 = vld [vmem:[%s2 + $0x40] sm:$0xf]
  %v36 = vld [vmem:[%s2 + $0x44] sm:$0xf]
  %v37 = vld [vmem:[%s1] sm:$0xff]
  %v38 = vld [vmem:[%s1 + $0x8] sm:$0xff]
  %v39 = vld [vmem:[%s1 + $0x10] sm:$0xff]
  %v40 = vld [vmem:[%s1 + $0x18] sm:$0xff]
  %42 = vset.pattern.permute.xlu0 0
  %43 = vperm.xlu0 %42, %v37
  %v44 = vpop.permute.xlu0 %43
  %47 = vset.pattern.permute.xlu0 0
  %48 = vperm.xlu0 %47, %v38
  %v49 = vpop.permute.xlu0 %48
  %52 = vset.pattern.permute.xlu0 0
  %53 = vperm.xlu0 %52, %v39
  %v54 = vpop.permute.xlu0 %53
  %57 = vset.pattern.permute.xlu0 0
  %58 = vperm.xlu0 %57, %v40
  %v59 = vpop.permute.xlu0 %58
  %v65 = vunpack.c.l.b16 %v15
  %v66 = vunpack.c.h.b16 %v15
  %v67 = vunpack.c.l.b16 %v16
  %v68 = vunpack.c.h.b16 %v16
  %v69 = vunpack.c.l.b16 %v17
  %v70 = vunpack.c.h.b16 %v17
  %v71 = vunpack.c.l.b16 %v18
  %v72 = vunpack.c.h.b16 %v18
  %v73 = vpack.c.b16 %v67, %v65
  %v74 = vpack.c.b16 %v68, %v66
  %v75 = vpack.c.b16 %v71, %v69
  %v76 = vpack.c.b16 %v72, %v70
  %v97 = vunpack.c.l.b16 %v19
  %v98 = vunpack.c.l.b16 %v20
  %v99 = vunpack.c.l.b16 %v21
  %v100 = vunpack.c.l.b16 %v22
  %v101 = vunpack.c.l.b16 %v23
  %v102 = vunpack.c.l.b16 %v24
  %v103 = vunpack.c.l.b16 %v25
  %v104 = vunpack.c.l.b16 %v26
  %v105 = vunpack.c.l.b16 %v27
  %v106 = vunpack.c.l.b16 %v28
  %v107 = vunpack.c.l.b16 %v29
  %v108 = vunpack.c.l.b16 %v30
  %v109 = vunpack.c.l.b16 %v31
  %v110 = vunpack.c.l.b16 %v32
  %v111 = vunpack.c.l.b16 %v33
  %v112 = vunpack.c.l.b16 %v34
  %v113 = vunpack.c.l.b16 %v35
  %v114 = vunpack.c.l.b16 %v36
  %v115 = vpack.c.b16 %v98, %v97
  %v116 = vpack.c.b16 %v100, %v99
  %v117 = vpack.c.b16 %v102, %v101
  %v118 = vpack.c.b16 %v104, %v103
  %v119 = vpack.c.b16 %v106, %v105
  %v120 = vpack.c.b16 %v108, %v107
  %v121 = vpack.c.b16 %v110, %v109
  %v122 = vpack.c.b16 %v112, %v111
  %v123 = vpack.c.b16 %v114, %v113
  %vm133 = vcmask 130048
  %v135 = vsel %vm133, %v74, 0
  %v138 = vsel %vm133, %v76, 0
  %140 = vmatprep.subr.bf16.mxu0 0
  %141 = vmatpush1.bf16.msra.mxu0 %v122
  %142 = vmatprep.subr.bf16.mxu0 0
  %143 = vmatpush1.bf16.msra.mxu0 %v121
  %144 = vmatprep.subr.bf16.mxu0 0
  %145 = vmatpush1.bf16.msra.mxu0 %v120
  %146 = vmatprep.subr.bf16.mxu0 0
  %147 = vmatpush1.bf16.msra.mxu0 %v119
  %148 = vmatprep.subr.bf16.mxu0 0
  %149 = vmatpush1.bf16.msra.mxu0 %v118
  %150 = vmatprep.subr.bf16.mxu0 0
  %151 = vmatpush1.bf16.msra.mxu0 %v117
  %152 = vmatprep.subr.bf16.mxu0 0
  %153 = vmatpush1.bf16.msra.mxu0 %v116
  %154 = vmatprep.subr.bf16.mxu0 0
  %155 = vmatpush1.bf16.msra.mxu0 %v115
  %156 = vmatprep.subr.bf16.mxu0 0
  %157 = vmatpush2.bf16.msra.mxu0 0
  %158 = vmatprep.subr.bf16.mxu0 0
  %159 = vmatpush2.bf16.msra.mxu0 0
  %160 = vmatprep.subr.bf16.mxu0 0
  %161 = vmatpush2.bf16.msra.mxu0 0
  %162 = vmatprep.subr.bf16.mxu0 0
  %163 = vmatpush2.bf16.msra.mxu0 0
  %164 = vmatprep.subr.bf16.mxu0 0
  %165 = vmatpush2.bf16.msra.mxu0 0
  %166 = vmatprep.subr.bf16.mxu0 0
  %167 = vmatpush2.bf16.msra.mxu0 0
  %168 = vmatprep.subr.bf16.mxu0 0
  %169 = vmatpush2.bf16.msra.mxu0 0
  %170 = vmatprep.subr.bf16.mxu0 0
  %171 = vmatpush2.bf16.msra.mxu0 %v123
  %172 = vmatprep.mubr.bf16.mxu0 %v135
  %173 = vmatmul.mubr.bf16.gmra.mxu0 %v73
  %v174 = vpop.f32.mrf.mxu0
  %v175 = vadd.f32 %v44, %v174
  %v176 = vpop.f32.mrf.mxu0
  %v177 = vpop.f32.mrf.mxu0
  %v178 = vadd.f32 %v49, %v177
  %v179 = vpop.f32.mrf.mxu0
  %180 = vmatprep.mubr.bf16.mxu0 %v138
  %181 = vmatmul.mubr.bf16.gmra.mxu0 %v75
  %v182 = vpop.f32.mrf.mxu0
  %v183 = vadd.f32 %v54, %v182
  %v184 = vpop.f32.mrf.mxu0
  %v185 = vpop.f32.mrf.mxu0
  %v186 = vadd.f32 %v59, %v185
  %v187 = vpop.f32.mrf.mxu0
  %188 = vdwg.mxu0
  %v189 = vmax.f32 %v175, 0.0
  %v190 = vmax.f32 %v178, 0.0
  %v191 = vmax.f32 %v183, 0.0
  %v192 = vmax.f32 %v186, 0.0
  %v193 = vpack.c.bf16 %v190, %v189
  %v194 = vpack.c.bf16 %v192, %v191
  %v197 = vunpack.c.l.b16 %v193
  %v198 = vunpack.c.h.b16 %v193
  %v199 = vunpack.c.l.b16 %v194
  %v200 = vunpack.c.h.b16 %v194
  %v201 = vpack.c.b16 %v197, %v197
  %v202 = vpack.c.b16 %v198, %v198
  %v203 = vpack.c.b16 %v199, %v199
  %v204 = vpack.c.b16 %v200, %v200
  %209 = vst [vmem:[%s3] sm:$0xf] %v201
  %210 = vst [vmem:[%s3 + $0x4] sm:$0xf] %v202
  %211 = vst [vmem:[%s3 + $0x8] sm:$0xf] %v203
  %212 = vst [vmem:[%s3 + $0xc] sm:$0xf] %v204
  // Predicated region
  $region14: #{autoencoder_forward.4} parent=0 // pred_check
    _
  $region15: #{autoencoder_forward.4} parent=0 // pred_check_branch
    %214 = sbr.rel (0) target = $region17
  $region16: #{autoencoder_forward.4} parent=0 // pred_region
    _
  $region17: #{autoencoder_forward.4} parent=0 // pred_fallthru
    _
  // Predicated region
  $region18: #{autoencoder_forward.4} parent=0 // pred_check
    _
  $region19: #{autoencoder_forward.4} parent=0 // pred_check_branch
    %216 = sbr.rel (0) target = $region21
  $region20: #{autoencoder_forward.4} parent=0 // pred_region
    _
  $region21: #{autoencoder_forward.4} parent=0 // pred_fallthru
    _

// kernel: autoencoder_forward.5
$region0: #{autoencoder_forward.5}
  #allocation0 [shape = 'u32[]', space=smem, size = 0x4, offset = 0x4, fixed_abs, tag = 'smem constant byte address 0x4 - core index']
  #allocation1 [shape = 'u32[144,128]{1,0:T(1,128)}', space=vmem, size = 0x12000, scoped, tag = 'internal scratch']
  %s0 = inlined_call_operand.vmem [shape: bf16[16,1664], index: 0, kind: input, shape index: {}]
  %s1 = inlined_call_operand.vmem [shape: bf16[1664,64], index: 1, kind: input, shape index: {}]
  %s2 = inlined_call_operand.vmem [shape: f32[1,64], index: 2, kind: input, shape index: {}]
  %s3 = inlined_call_operand.vmem [shape: bf16[64,16], index: 3, kind: input, shape index: {}]
  %s4 = inlined_call_operand.vmem [shape: f32[1,16], index: 4, kind: input, shape index: {}]
  %s5 = inlined_call_operand.vmem [shape: bf16[16,64], index: 5, kind: input, shape index: {}]
  %s6 = inlined_call_operand.vmem [shape: f32[1,64], index: 6, kind: input, shape index: {}]
  %s7 = inlined_call_operand.vmem [shape: bf16[64,1664], index: 7, kind: input, shape index: {}]
  %s8 = inlined_call_operand.vmem [shape: f32[1,1664], index: 8, kind: input, shape index: {}]
  %s9 = inlined_call_operand.vmem [shape: bf16[1664,896], index: 9, kind: input, shape index: {}]
  %s10 = inlined_call_operand.vmem [shape: f32[1,896], index: 10, kind: input, shape index: {}]
  %s11 = inlined_call_operand.vmem [shape: f32[16,896], index: 11, kind: output, shape index: {}]
  %s12 = sld [smem:[#allocation0]]
  $region54: #{autoencoder_forward.5} parent=0
    _
  %s14 = ssub.s32 1, %s12
  %s15 = scalar_select 0, %s14, %s12
  // Predicated region
  $region2: #{autoencoder_forward.5} parent=0 // pred_check
    _
  $region3: #{autoencoder_forward.5} parent=0 // pred_check_branch
    %17 = sbr.rel (0) target = $region5
  $region4: #{autoencoder_forward.5} parent=0 // pred_region
    _
  $region5: #{autoencoder_forward.5} parent=0 // pred_fallthru
    _
  // Predicated region
  $region6: #{autoencoder_forward.5} parent=0 // pred_check
    _
  $region7: #{autoencoder_forward.5} parent=0 // pred_check_branch
    %19 = sbr.rel (0) target = $region9
  $region8: #{autoencoder_forward.5} parent=0 // pred_region
    _
  $region9: #{autoencoder_forward.5} parent=0 // pred_fallthru
    _
  // Predicated region
  $region10: #{autoencoder_forward.5} parent=0 // pred_check
    _
  $region11: #{autoencoder_forward.5} parent=0 // pred_check_branch
    %21 = sbr.rel (0) target = $region13
  $region12: #{autoencoder_forward.5} parent=0 // pred_region
    _
  $region13: #{autoencoder_forward.5} parent=0 // pred_fallthru
    _
  // Predicated region
  $region14: #{autoencoder_forward.5} parent=0 // pred_check
    _
  $region15: #{autoencoder_forward.5} parent=0 // pred_check_branch
    %23 = sbr.rel (0) target = $region17
  $region16: #{autoencoder_forward.5} parent=0 // pred_region
    _
  $region17: #{autoencoder_forward.5} parent=0 // pred_fallthru
    _
  // Predicated region
  $region18: #{autoencoder_forward.5} parent=0 // pred_check
    _
  $region19: #{autoencoder_forward.5} parent=0 // pred_check_branch
    %25 = sbr.rel (0) target = $region21
  $region20: #{autoencoder_forward.5} parent=0 // pred_region
    _
  $region21: #{autoencoder_forward.5} parent=0 // pred_fallthru
    _
  // Predicated region
  $region22: #{autoencoder_forward.5} parent=0 // pred_check
    _
  $region23: #{autoencoder_forward.5} parent=0 // pred_check_branch
    %27 = sbr.rel (0) target = $region25
  $region24: #{autoencoder_forward.5} parent=0 // pred_region
    _
  $region25: #{autoencoder_forward.5} parent=0 // pred_fallthru
    _
  // Predicated region
  $region26: #{autoencoder_forward.5} parent=0 // pred_check
    _
  $region27: #{autoencoder_forward.5} parent=0 // pred_check_branch
    %29 = sbr.rel (0) target = $region29
  $region28: #{autoencoder_forward.5} parent=0 // pred_region
    _
  $region29: #{autoencoder_forward.5} parent=0 // pred_fallthru
    _
  // Predicated region
  $region30: #{autoencoder_forward.5} parent=0 // pred_check
    _
  $region31: #{autoencoder_forward.5} parent=0 // pred_check_branch
    %31 = sbr.rel (0) target = $region33
  $region32: #{autoencoder_forward.5} parent=0 // pred_region
    _
  $region33: #{autoencoder_forward.5} parent=0 // pred_fallthru
    _
  // Predicated region
  $region34: #{autoencoder_forward.5} parent=0 // pred_check
    _
  $region35: #{autoencoder_forward.5} parent=0 // pred_check_branch
    %33 = sbr.rel (0) target = $region37
  $region36: #{autoencoder_forward.5} parent=0 // pred_region
    _
  $region37: #{autoencoder_forward.5} parent=0 // pred_fallthru
    _
  // Predicated region
  $region38: #{autoencoder_forward.5} parent=0 // pred_check
    _
  $region39: #{autoencoder_forward.5} parent=0 // pred_check_branch
    %35 = sbr.rel (0) target = $region41
  $region40: #{autoencoder_forward.5} parent=0 // pred_region
    _
  $region41: #{autoencoder_forward.5} parent=0 // pred_fallthru
    _
  // Predicated region
  $region42: #{autoencoder_forward.5} parent=0 // pred_check
    _
  $region43: #{autoencoder_forward.5} parent=0 // pred_check_branch
    %37 = sbr.rel (0) target = $region45
  $region44: #{autoencoder_forward.5} parent=0 // pred_region
    _
  $region45: #{autoencoder_forward.5} parent=0 // pred_fallthru
    _
  %v39 = vld [vmem:[%s0] sm:$0xff]
  %v40 = vld [vmem:[%s0 + $0x8] sm:$0xff]
  %v41 = vld [vmem:[%s0 + $0x10] sm:$0xff]
  %v42 = vld [vmem:[%s0 + $0x18] sm:$0xff]
  %v43 = vld [vmem:[%s0 + $0x20] sm:$0xff]
  %v44 = vld [vmem:[%s0 + $0x28] sm:$0xff]
  %v45 = vld [vmem:[%s0 + $0x30] sm:$0xf]
  %v46 = vld [vmem:[%s0 + $0x34] sm:$0xff]
  %v47 = vld [vmem:[%s0 + $0x3c] sm:$0xff]
  %v48 = vld [vmem:[%s0 + $0x44] sm:$0xff]
  %v49 = vld [vmem:[%s0 + $0x4c] sm:$0xff]
  %v50 = vld [vmem:[%s0 + $0x54] sm:$0xff]
  %v51 = vld [vmem:[%s0 + $0x5c] sm:$0xff]
  %v52 = vld [vmem:[%s0 + $0x64] sm:$0xf]
  %v53 = vld [vmem:[%s1] sm:$0xf]
  %v54 = vld [vmem:[%s1 + $0x4] sm:$0xf]
  %v55 = vld [vmem:[%s1 + $0x8] sm:$0xf]
  %v56 = vld [vmem:[%s1 + $0xc] sm:$0xf]
  %v57 = vld [vmem:[%s1 + $0x10] sm:$0xf]
  %v58 = vld [vmem:[%s1 + $0x14] sm:$0xf]
  %v59 = vld [vmem:[%s1 + $0x18] sm:$0xf]
  %v60 = vld [vmem:[%s1 + $0x1c] sm:$0xf]
  %v61 = vld [vmem:[%s1 + $0x20] sm:$0xf]
  %v62 = vld [vmem:[%s1 + $0x24] sm:$0xf]
  %v63 = vld [vmem:[%s1 + $0x28] sm:$0xf]
  %v64 = vld [vmem:[%s1 + $0x2c] sm:$0xf]
  %v65 = vld [vmem:[%s1 + $0x30] sm:$0xf]
  %v66 = vld [vmem:[%s1 + $0x34] sm:$0xf]
  %v67 = vld [vmem:[%s1 + $0x38] sm:$0xf]
  %v68 = vld [vmem:[%s1 + $0x3c] sm:$0xf]
  %v69 = vld [vmem:[%s1 + $0x40] sm:$0xf]
  %v70 = vld [vmem:[%s1 + $0x44] sm:$0xf]
  %v71 = vld [vmem:[%s1 + $0x48] sm:$0xf]
  %v72 = vld [vmem:[%s1 + $0x4c] sm:$0xf]
  %v73 = vld [vmem:[%s1 + $0x50] sm:$0xf]
  %v74 = vld [vmem:[%s1 + $0x54] sm:$0xf]
  %v75 = vld [vmem:[%s1 + $0x58] sm:$0xf]
  %v76 = vld [vmem:[%s1 + $0x5c] sm:$0xf]
  %v77 = vld [vmem:[%s1 + $0x60] sm:$0xf]
  %v78 = vld [vmem:[%s1 + $0x64] sm:$0xf]
  %v79 = vld [vmem:[%s1 + $0x68] sm:$0xf]
  %v80 = vld [vmem:[%s1 + $0x6c] sm:$0xf]
  %v81 = vld [vmem:[%s1 + $0x70] sm:$0xf]
  %v82 = vld [vmem:[%s1 + $0x74] sm:$0xf]
  %v83 = vld [vmem:[%s1 + $0x78] sm:$0xf]
  %v84 = vld [vmem:[%s1 + $0x7c] sm:$0xf]
  %v85 = vld [vmem:[%s1 + $0x80] sm:$0xf]
  %v86 = vld [vmem:[%s1 + $0x84] sm:$0xf]
  %v87 = vld [vmem:[%s1 + $0x88] sm:$0xf]
  %v88 = vld [vmem:[%s1 + $0x8c] sm:$0xf]
  %v89 = vld [vmem:[%s1 + $0x90] sm:$0xf]
  %v90 = vld [vmem:[%s1 + $0x94] sm:$0xf]
  %v91 = vld [vmem:[%s1 + $0x98] sm:$0xf]
  %v92 = vld [vmem:[%s1 + $0x9c] sm:$0xf]
  %v93 = vld [vmem:[%s1 + $0xa0] sm:$0xf]
  %v94 = vld [vmem:[%s1 + $0xa4] sm:$0xf]
  %v95 = vld [vmem:[%s1 + $0xa8] sm:$0xf]
  %v96 = vld [vmem:[%s1 + $0xac] sm:$0xf]
  %v97 = vld [vmem:[%s1 + $0xb0] sm:$0xf]
  %v98 = vld [vmem:[%s1 + $0xb4] sm:$0xf]
  %v99 = vld [vmem:[%s1 + $0xb8] sm:$0xf]
  %v100 = vld [vmem:[%s1 + $0xbc] sm:$0xf]
  %v101 = vld [vmem:[%s1 + $0xc0] sm:$0xf]
  %v102 = vld [vmem:[%s1 + $0xc4] sm:$0xf]
  %v103 = vld [vmem:[%s1 + $0xc8] sm:$0xf]
  %v104 = vld [vmem:[%s1 + $0xcc] sm:$0xf]
  %v105 = vld [vmem:[%s1 + $0xd0] sm:$0xf]
  %v106 = vld [vmem:[%s1 + $0xd4] sm:$0xf]
  %v107 = vld [vmem:[%s1 + $0xd8] sm:$0xf]
  %v108 = vld [vmem:[%s1 + $0xdc] sm:$0xf]
  %v109 = vld [vmem:[%s1 + $0xe0] sm:$0xf]
  %v110 = vld [vmem:[%s1 + $0xe4] sm:$0xf]
  %v111 = vld [vmem:[%s1 + $0xe8] sm:$0xf]
  %v112 = vld [vmem:[%s1 + $0xec] sm:$0xf]
  %v113 = vld [vmem:[%s1 + $0xf0] sm:$0xf]
  %v114 = vld [vmem:[%s1 + $0xf4] sm:$0xf]
  %v115 = vld [vmem:[%s1 + $0xf8] sm:$0xf]
  %v116 = vld [vmem:[%s1 + $0xfc] sm:$0xf]
  %v117 = vld [vmem:[%s1 + $0x100] sm:$0xf]
  %v118 = vld [vmem:[%s1 + $0x104] sm:$0xf]
  %v119 = vld [vmem:[%s1 + $0x108] sm:$0xf]
  %v120 = vld [vmem:[%s1 + $0x10c] sm:$0xf]
  %v121 = vld [vmem:[%s1 + $0x110] sm:$0xf]
  %v122 = vld [vmem:[%s1 + $0x114] sm:$0xf]
  %v123 = vld [vmem:[%s1 + $0x118] sm:$0xf]
  %v124 = vld [vmem:[%s1 + $0x11c] sm:$0xf]
  %v125 = vld [vmem:[%s1 + $0x120] sm:$0xf]
  %v126 = vld [vmem:[%s1 + $0x124] sm:$0xf]
  %v127 = vld [vmem:[%s1 + $0x128] sm:$0xf]
  %v128 = vld [vmem:[%s1 + $0x12c] sm:$0xf]
  %v129 = vld [vmem:[%s1 + $0x130] sm:$0xf]
  %v130 = vld [vmem:[%s1 + $0x134] sm:$0xf]
  %v131 = vld [vmem:[%s1 + $0x138] sm:$0xf]
  %v132 = vld [vmem:[%s1 + $0x13c] sm:$0xf]
  %v133 = vld [vmem:[%s1 + $0x140] sm:$0xf]
  %v134 = vld [vmem:[%s1 + $0x144] sm:$0xf]
  %v135 = vld [vmem:[%s1 + $0x148] sm:$0xf]
  %v136 = vld [vmem:[%s1 + $0x14c] sm:$0xf]
  %v137 = vld [vmem:[%s1 + $0x150] sm:$0xf]
  %v138 = vld [vmem:[%s1 + $0x154] sm:$0xf]
  %v139 = vld [vmem:[%s1 + $0x158] sm:$0xf]
  %v140 = vld [vmem:[%s1 + $0x15c] sm:$0xf]
  %v141 = vld [vmem:[%s1 + $0x160] sm:$0xf]
  %v142 = vld [vmem:[%s1 + $0x164] sm:$0xf]
  %v143 = vld [vmem:[%s1 + $0x168] sm:$0xf]
  %v144 = vld [vmem:[%s1 + $0x16c] sm:$0xf]
  %v145 = vld [vmem:[%s1 + $0x170] sm:$0xf]
  %v146 = vld [vmem:[%s1 + $0x174] sm:$0xf]
  %v147 = vld [vmem:[%s1 + $0x178] sm:$0xf]
  %v148 = vld [vmem:[%s1 + $0x17c] sm:$0xf]
  %v149 = vld [vmem:[%s1 + $0x180] sm:$0xf]
  %v150 = vld [vmem:[%s1 + $0x184] sm:$0xf]
  %v151 = vld [vmem:[%s1 + $0x188] sm:$0xf]
  %v152 = vld [vmem:[%s1 + $0x18c] sm:$0xf]
  %v153 = vld [vmem:[%s1 + $0x190] sm:$0xf]
  %v154 = vld [vmem:[%s1 + $0x194] sm:$0xf]
  %v155 = vld [vmem:[%s1 + $0x198] sm:$0xf]
  %v156 = vld [vmem:[%s1 + $0x19c] sm:$0xf]
  %v157 = vld [vmem:[%s1 + $0x1a0] sm:$0xf]
  %v158 = vld [vmem:[%s1 + $0x1a4] sm:$0xf]
  %v159 = vld [vmem:[%s1 + $0x1a8] sm:$0xf]
  %v160 = vld [vmem:[%s1 + $0x1ac] sm:$0xf]
  %v161 = vld [vmem:[%s1 + $0x1b0] sm:$0xf]
  %v162 = vld [vmem:[%s1 + $0x1b4] sm:$0xf]
  %v163 = vld [vmem:[%s1 + $0x1b8] sm:$0xf]
  %v164 = vld [vmem:[%s1 + $0x1bc] sm:$0xf]
  %v165 = vld [vmem:[%s1 + $0x1c0] sm:$0xf]
  %v166 = vld [vmem:[%s1 + $0x1c4] sm:$0xf]
  %v167 = vld [vmem:[%s1 + $0x1c8] sm:$0xf]
  %v168 = vld [vmem:[%s1 + $0x1cc] sm:$0xf]
  %v169 = vld [vmem:[%s1 + $0x1d0] sm:$0xf]
  %v170 = vld [vmem:[%s1 + $0x1d4] sm:$0xf]
  %v171 = vld [vmem:[%s1 + $0x1d8] sm:$0xf]
  %v172 = vld [vmem:[%s1 + $0x1dc] sm:$0xf]
  %v173 = vld [vmem:[%s1 + $0x1e0] sm:$0xf]
  %v174 = vld [vmem:[%s1 + $0x1e4] sm:$0xf]
  %v175 = vld [vmem:[%s1 + $0x1e8] sm:$0xf]
  %v176 = vld [vmem:[%s1 + $0x1ec] sm:$0xf]
  %v177 = vld [vmem:[%s1 + $0x1f0] sm:$0xf]
  %v178 = vld [vmem:[%s1 + $0x1f4] sm:$0xf]
  %v179 = vld [vmem:[%s1 + $0x1f8] sm:$0xf]
  %v180 = vld [vmem:[%s1 + $0x1fc] sm:$0xf]
  %v181 = vld [vmem:[%s1 + $0x200] sm:$0xf]
  %v182 = vld [vmem:[%s1 + $0x204] sm:$0xf]
  %v183 = vld [vmem:[%s1 + $0x208] sm:$0xf]
  %v184 = vld [vmem:[%s1 + $0x20c] sm:$0xf]
  %v185 = vld [vmem:[%s1 + $0x210] sm:$0xf]
  %v186 = vld [vmem:[%s1 + $0x214] sm:$0xf]
  %v187 = vld [vmem:[%s1 + $0x218] sm:$0xf]
  %v188 = vld [vmem:[%s1 + $0x21c] sm:$0xf]
  %v189 = vld [vmem:[%s1 + $0x220] sm:$0xf]
  %v190 = vld [vmem:[%s1 + $0x224] sm:$0xf]
  %v191 = vld [vmem:[%s1 + $0x228] sm:$0xf]
  %v192 = vld [vmem:[%s1 + $0x22c] sm:$0xf]
  %v193 = vld [vmem:[%s1 + $0x230] sm:$0xf]
  %v194 = vld [vmem:[%s1 + $0x234] sm:$0xf]
  %v195 = vld [vmem:[%s1 + $0x238] sm:$0xf]
  %v196 = vld [vmem:[%s1 + $0x23c] sm:$0xf]
  %v197 = vld [vmem:[%s1 + $0x240] sm:$0xf]
  %v198 = vld [vmem:[%s1 + $0x244] sm:$0xf]
  %v199 = vld [vmem:[%s1 + $0x248] sm:$0xf]
  %v200 = vld [vmem:[%s1 + $0x24c] sm:$0xf]
  %v201 = vld [vmem:[%s1 + $0x250] sm:$0xf]
  %v202 = vld [vmem:[%s1 + $0x254] sm:$0xf]
  %v203 = vld [vmem:[%s1 + $0x258] sm:$0xf]
  %v204 = vld [vmem:[%s1 + $0x25c] sm:$0xf]
  %v205 = vld [vmem:[%s1 + $0x260] sm:$0xf]
  %v206 = vld [vmem:[%s1 + $0x264] sm:$0xf]
  %v207 = vld [vmem:[%s1 + $0x268] sm:$0xf]
  %v208 = vld [vmem:[%s1 + $0x26c] sm:$0xf]
  %v209 = vld [vmem:[%s1 + $0x270] sm:$0xf]
  %v210 = vld [vmem:[%s1 + $0x274] sm:$0xf]
  %v211 = vld [vmem:[%s1 + $0x278] sm:$0xf]
  %v212 = vld [vmem:[%s1 + $0x27c] sm:$0xf]
  %v213 = vld [vmem:[%s1 + $0x280] sm:$0xf]
  %v214 = vld [vmem:[%s1 + $0x284] sm:$0xf]
  %v215 = vld [vmem:[%s1 + $0x288] sm:$0xf]
  %v216 = vld [vmem:[%s1 + $0x28c] sm:$0xf]
  %v217 = vld [vmem:[%s1 + $0x290] sm:$0xf]
  %v218 = vld [vmem:[%s1 + $0x294] sm:$0xf]
  %v219 = vld [vmem:[%s1 + $0x298] sm:$0xf]
  %v220 = vld [vmem:[%s1 + $0x29c] sm:$0xf]
  %v221 = vld [vmem:[%s1 + $0x2a0] sm:$0xf]
  %v222 = vld [vmem:[%s1 + $0x2a4] sm:$0xf]
  %v223 = vld [vmem:[%s1 + $0x2a8] sm:$0xf]
  %v224 = vld [vmem:[%s1 + $0x2ac] sm:$0xf]
  %v225 = vld [vmem:[%s1 + $0x2b0] sm:$0xf]
  %v226 = vld [vmem:[%s1 + $0x2b4] sm:$0xf]
  %v227 = vld [vmem:[%s1 + $0x2b8] sm:$0xf]
  %v228 = vld [vmem:[%s1 + $0x2bc] sm:$0xf]
  %v229 = vld [vmem:[%s1 + $0x2c0] sm:$0xf]
  %v230 = vld [vmem:[%s1 + $0x2c4] sm:$0xf]
  %v231 = vld [vmem:[%s1 + $0x2c8] sm:$0xf]
  %v232 = vld [vmem:[%s1 + $0x2cc] sm:$0xf]
  %v233 = vld [vmem:[%s1 + $0x2d0] sm:$0xf]
  %v234 = vld [vmem:[%s1 + $0x2d4] sm:$0xf]
  %v235 = vld [vmem:[%s1 + $0x2d8] sm:$0xf]
  %v236 = vld [vmem:[%s1 + $0x2dc] sm:$0xf]
  %v237 = vld [vmem:[%s1 + $0x2e0] sm:$0xf]
  %v238 = vld [vmem:[%s1 + $0x2e4] sm:$0xf]
  %v239 = vld [vmem:[%s1 + $0x2e8] sm:$0xf]
  %v240 = vld [vmem:[%s1 + $0x2ec] sm:$0xf]
  %v241 = vld [vmem:[%s1 + $0x2f0] sm:$0xf]
  %v242 = vld [vmem:[%s1 + $0x2f4] sm:$0xf]
  %v243 = vld [vmem:[%s1 + $0x2f8] sm:$0xf]
  %v244 = vld [vmem:[%s1 + $0x2fc] sm:$0xf]
  %v245 = vld [vmem:[%s1 + $0x300] sm:$0xf]
  %v246 = vld [vmem:[%s1 + $0x304] sm:$0xf]
  %v247 = vld [vmem:[%s1 + $0x308] sm:$0xf]
  %v248 = vld [vmem:[%s1 + $0x30c] sm:$0xf]
  %v249 = vld [vmem:[%s1 + $0x310] sm:$0xf]
  %v250 = vld [vmem:[%s1 + $0x314] sm:$0xf]
  %v251 = vld [vmem:[%s1 + $0x318] sm:$0xf]
  %v252 = vld [vmem:[%s1 + $0x31c] sm:$0xf]
  %v253 = vld [vmem:[%s1 + $0x320] sm:$0xf]
  %v254 = vld [vmem:[%s1 + $0x324] sm:$0xf]
  %v255 = vld [vmem:[%s1 + $0x328] sm:$0xf]
  %v256 = vld [vmem:[%s1 + $0x32c] sm:$0xf]
  %v257 = vld [vmem:[%s1 + $0x330] sm:$0xf]
  %v258 = vld [vmem:[%s1 + $0x334] sm:$0xf]
  %v259 = vld [vmem:[%s1 + $0x338] sm:$0xf]
  %v260 = vld [vmem:[%s1 + $0x33c] sm:$0xf]
  %v261 = vld [vmem:[%s2] sm:$0x1]
  %v263 = vlaneseq
  %v264 = vshrl.u32 %v263, 7
  %v265 = vsub.s32 0, %v264
  %v266 = vrot.slane %v261, %v265
  %v282 = vunpack.c.l.b16 %v39
  %v283 = vunpack.c.h.b16 %v39
  %v284 = vunpack.c.l.b16 %v40
  %v285 = vunpack.c.h.b16 %v40
  %v286 = vunpack.c.l.b16 %v41
  %v287 = vunpack.c.h.b16 %v41
  %v288 = vunpack.c.l.b16 %v42
  %v289 = vunpack.c.h.b16 %v42
  %v290 = vunpack.c.l.b16 %v43
  %v291 = vunpack.c.h.b16 %v43
  %v292 = vunpack.c.l.b16 %v44
  %v293 = vunpack.c.h.b16 %v44
  %v294 = vunpack.c.l.b16 %v45
  %v295 = vunpack.c.l.b16 %v46
  %v296 = vunpack.c.h.b16 %v46
  %v297 = vunpack.c.l.b16 %v47
  %v298 = vunpack.c.h.b16 %v47
  %v299 = vunpack.c.l.b16 %v48
  %v300 = vunpack.c.h.b16 %v48
  %v301 = vunpack.c.l.b16 %v49
  %v302 = vunpack.c.h.b16 %v49
  %v303 = vunpack.c.l.b16 %v50
  %v304 = vunpack.c.h.b16 %v50
  %v305 = vunpack.c.l.b16 %v51
  %v306 = vunpack.c.h.b16 %v51
  %v307 = vunpack.c.l.b16 %v52
  %v308 = vpack.c.b16 %v295, %v282
  %v309 = vpack.c.b16 %v296, %v283
  %v310 = vpack.c.b16 %v297, %v284
  %v311 = vpack.c.b16 %v298, %v285
  %v312 = vpack.c.b16 %v299, %v286
  %v313 = vpack.c.b16 %v300, %v287
  %v314 = vpack.c.b16 %v301, %v288
  %v315 = vpack.c.b16 %v302, %v289
  %v316 = vpack.c.b16 %v303, %v290
  %v317 = vpack.c.b16 %v304, %v291
  %v318 = vpack.c.b16 %v305, %v292
  %v319 = vpack.c.b16 %v306, %v293
  %v320 = vpack.c.b16 %v307, %v294
  %v542 = vunpack.c.l.b16 %v53
  %v543 = vunpack.c.l.b16 %v54
  %v544 = vunpack.c.l.b16 %v55
  %v545 = vunpack.c.l.b16 %v56
  %v546 = vunpack.c.l.b16 %v57
  %v547 = vunpack.c.l.b16 %v58
  %v548 = vunpack.c.l.b16 %v59
  %v549 = vunpack.c.l.b16 %v60
  %v550 = vunpack.c.l.b16 %v61
  %v551 = vunpack.c.l.b16 %v62
  %v552 = vunpack.c.l.b16 %v63
  %v553 = vunpack.c.l.b16 %v64
  %v554 = vunpack.c.l.b16 %v65
  %v555 = vunpack.c.l.b16 %v66
  %v556 = vunpack.c.l.b16 %v67
  %v557 = vunpack.c.l.b16 %v68
  %v558 = vunpack.c.l.b16 %v69
  %v559 = vunpack.c.l.b16 %v70
  %v560 = vunpack.c.l.b16 %v71
  %v561 = vunpack.c.l.b16 %v72
  %v562 = vunpack.c.l.b16 %v73
  %v563 = vunpack.c.l.b16 %v74
  %v564 = vunpack.c.l.b16 %v75
  %v565 = vunpack.c.l.b16 %v76
  %v566 = vunpack.c.l.b16 %v77
  %v567 = vunpack.c.l.b16 %v78
  %v568 = vunpack.c.l.b16 %v79
  %v569 = vunpack.c.l.b16 %v80
  %v570 = vunpack.c.l.b16 %v81
  %v571 = vunpack.c.l.b16 %v82
  %v572 = vunpack.c.l.b16 %v83
  %v573 = vunpack.c.l.b16 %v84
  %v574 = vunpack.c.l.b16 %v85
  %v575 = vunpack.c.l.b16 %v86
  %v576 = vunpack.c.l.b16 %v87
  %v577 = vunpack.c.l.b16 %v88
  %v578 = vunpack.c.l.b16 %v89
  %v579 = vunpack.c.l.b16 %v90
  %v580 = vunpack.c.l.b16 %v91
  %v581 = vunpack.c.l.b16 %v92
  %v582 = vunpack.c.l.b16 %v93
  %v583 = vunpack.c.l.b16 %v94
  %v584 = vunpack.c.l.b16 %v95
  %v585 = vunpack.c.l.b16 %v96
  %v586 = vunpack.c.l.b16 %v97
  %v587 = vunpack.c.l.b16 %v98
  %v588 = vunpack.c.l.b16 %v99
  %v589 = vunpack.c.l.b16 %v100
  %v590 = vunpack.c.l.b16 %v101
  %v591 = vunpack.c.l.b16 %v102
  %v592 = vunpack.c.l.b16 %v103
  %v593 = vunpack.c.l.b16 %v104
  %v594 = vunpack.c.l.b16 %v105
  %v595 = vunpack.c.l.b16 %v106
  %v596 = vunpack.c.l.b16 %v107
  %v597 = vunpack.c.l.b16 %v108
  %v598 = vunpack.c.l.b16 %v109
  %v599 = vunpack.c.l.b16 %v110
  %v600 = vunpack.c.l.b16 %v111
  %v601 = vunpack.c.l.b16 %v112
  %v602 = vunpack.c.l.b16 %v113
  %v603 = vunpack.c.l.b16 %v114
  %v604 = vunpack.c.l.b16 %v115
  %v605 = vunpack.c.l.b16 %v116
  %v606 = vunpack.c.l.b16 %v117
  %v607 = vunpack.c.l.b16 %v118
  %v608 = vunpack.c.l.b16 %v119
  %v609 = vunpack.c.l.b16 %v120
  %v610 = vunpack.c.l.b16 %v121
  %v611 = vunpack.c.l.b16 %v122
  %v612 = vunpack.c.l.b16 %v123
  %v613 = vunpack.c.l.b16 %v124
  %v614 = vunpack.c.l.b16 %v125
  %v615 = vunpack.c.l.b16 %v126
  %v616 = vunpack.c.l.b16 %v127
  %v617 = vunpack.c.l.b16 %v128
  %v618 = vunpack.c.l.b16 %v129
  %v619 = vunpack.c.l.b16 %v130
  %v620 = vunpack.c.l.b16 %v131
  %v621 = vunpack.c.l.b16 %v132
  %v622 = vunpack.c.l.b16 %v133
  %v623 = vunpack.c.l.b16 %v134
  %v624 = vunpack.c.l.b16 %v135
  %v625 = vunpack.c.l.b16 %v136
  %v626 = vunpack.c.l.b16 %v137
  %v627 = vunpack.c.l.b16 %v138
  %v628 = vunpack.c.l.b16 %v139
  %v629 = vunpack.c.l.b16 %v140
  %v630 = vunpack.c.l.b16 %v141
  %v631 = vunpack.c.l.b16 %v142
  %v632 = vunpack.c.l.b16 %v143
  %v633 = vunpack.c.l.b16 %v144
  %v634 = vunpack.c.l.b16 %v145
  %v635 = vunpack.c.l.b16 %v146
  %v636 = vunpack.c.l.b16 %v147
  %v637 = vunpack.c.l.b16 %v148
  %v638 = vunpack.c.l.b16 %v149
  %v639 = vunpack.c.l.b16 %v150
  %v640 = vunpack.c.l.b16 %v151
  %v641 = vunpack.c.l.b16 %v152
  %v642 = vunpack.c.l.b16 %v153
  %v643 = vunpack.c.l.b16 %v154
  %v644 = vunpack.c.l.b16 %v155
  %v645 = vunpack.c.l.b16 %v156
  %v646 = vunpack.c.l.b16 %v157
  %v647 = vunpack.c.l.b16 %v158
  %v648 = vunpack.c.l.b16 %v159
  %v649 = vunpack.c.l.b16 %v160
  %v650 = vunpack.c.l.b16 %v161
  %v651 = vunpack.c.l.b16 %v162
  %v652 = vunpack.c.l.b16 %v163
  %v653 = vunpack.c.l.b16 %v164
  %v654 = vunpack.c.l.b16 %v165
  %v655 = vunpack.c.l.b16 %v166
  %v656 = vunpack.c.l.b16 %v167
  %v657 = vunpack.c.l.b16 %v168
  %v658 = vunpack.c.l.b16 %v169
  %v659 = vunpack.c.l.b16 %v170
  %v660 = vunpack.c.l.b16 %v171
  %v661 = vunpack.c.l.b16 %v172
  %v662 = vunpack.c.l.b16 %v173
  %v663 = vunpack.c.l.b16 %v174
  %v664 = vunpack.c.l.b16 %v175
  %v665 = vunpack.c.l.b16 %v176
  %v666 = vunpack.c.l.b16 %v177
  %v667 = vunpack.c.l.b16 %v178
  %v668 = vunpack.c.l.b16 %v179
  %v669 = vunpack.c.l.b16 %v180
  %v670 = vunpack.c.l.b16 %v181
  %v671 = vunpack.c.l.b16 %v182
  %v672 = vunpack.c.l.b16 %v183
  %v673 = vunpack.c.l.b16 %v184
  %v674 = vunpack.c.l.b16 %v185
  %v675 = vunpack.c.l.b16 %v186
  %v676 = vunpack.c.l.b16 %v187
  %v677 = vunpack.c.l.b16 %v188
  %v678 = vunpack.c.l.b16 %v189
  %v679 = vunpack.c.l.b16 %v190
  %v680 = vunpack.c.l.b16 %v191
  %v681 = vunpack.c.l.b16 %v192
  %v682 = vunpack.c.l.b16 %v193
  %v683 = vunpack.c.l.b16 %v194
  %v684 = vunpack.c.l.b16 %v195
  %v685 = vunpack.c.l.b16 %v196
  %v686 = vunpack.c.l.b16 %v197
  %v687 = vunpack.c.l.b16 %v198
  %v688 = vunpack.c.l.b16 %v199
  %v689 = vunpack.c.l.b16 %v200
  %v690 = vunpack.c.l.b16 %v201
  %v691 = vunpack.c.l.b16 %v202
  %v692 = vunpack.c.l.b16 %v203
  %v693 = vunpack.c.l.b16 %v204
  %v694 = vunpack.c.l.b16 %v205
  %v695 = vunpack.c.l.b16 %v206
  %v696 = vunpack.c.l.b16 %v207
  %v697 = vunpack.c.l.b16 %v208
  %v698 = vunpack.c.l.b16 %v209
  %v699 = vunpack.c.l.b16 %v210
  %v700 = vunpack.c.l.b16 %v211
  %v701 = vunpack.c.l.b16 %v212
  %v702 = vunpack.c.l.b16 %v213
  %v703 = vunpack.c.l.b16 %v214
  %v704 = vunpack.c.l.b16 %v215
  %v705 = vunpack.c.l.b16 %v216
  %v706 = vunpack.c.l.b16 %v217
  %v707 = vunpack.c.l.b16 %v218
  %v708 = vunpack.c.l.b16 %v219
  %v709 = vunpack.c.l.b16 %v220
  %v710 = vunpack.c.l.b16 %v221
  %v711 = vunpack.c.l.b16 %v222
  %v712 = vunpack.c.l.b16 %v223
  %v713 = vunpack.c.l.b16 %v224
  %v714 = vunpack.c.l.b16 %v225
  %v715 = vunpack.c.l.b16 %v226
  %v716 = vunpack.c.l.b16 %v227
  %v717 = vunpack.c.l.b16 %v228
  %v718 = vunpack.c.l.b16 %v229
  %v719 = vunpack.c.l.b16 %v230
  %v720 = vunpack.c.l.b16 %v231
  %v721 = vunpack.c.l.b16 %v232
  %v722 = vunpack.c.l.b16 %v233
  %v723 = vunpack.c.l.b16 %v234
  %v724 = vunpack.c.l.b16 %v235
  %v725 = vunpack.c.l.b16 %v236
  %v726 = vunpack.c.l.b16 %v237
  %v727 = vunpack.c.l.b16 %v238
  %v728 = vunpack.c.l.b16 %v239
  %v729 = vunpack.c.l.b16 %v240
  %v730 = vunpack.c.l.b16 %v241
  %v731 = vunpack.c.l.b16 %v242
  %v732 = vunpack.c.l.b16 %v243
  %v733 = vunpack.c.l.b16 %v244
  %v734 = vunpack.c.l.b16 %v245
  %v735 = vunpack.c.l.b16 %v246
  %v736 = vunpack.c.l.b16 %v247
  %v737 = vunpack.c.l.b16 %v248
  %v738 = vunpack.c.l.b16 %v249
  %v739 = vunpack.c.l.b16 %v250
  %v740 = vunpack.c.l.b16 %v251
  %v741 = vunpack.c.l.b16 %v252
  %v742 = vunpack.c.l.b16 %v253
  %v743 = vunpack.c.l.b16 %v254
  %v744 = vunpack.c.l.b16 %v255
  %v745 = vunpack.c.l.b16 %v256
  %v746 = vunpack.c.l.b16 %v257
  %v747 = vunpack.c.l.b16 %v258
  %v748 = vunpack.c.l.b16 %v259
  %v749 = vunpack.c.l.b16 %v260
  %v750 = vpack.c.b16 %v543, %v542
  %v751 = vpack.c.b16 %v545, %v544
  %v752 = vpack.c.b16 %v547, %v546
  %v753 = vpack.c.b16 %v549, %v548
  %v754 = vpack.c.b16 %v551, %v550
  %v755 = vpack.c.b16 %v553, %v552
  %v756 = vpack.c.b16 %v555, %v554
  %v757 = vpack.c.b16 %v557, %v556
  %v758 = vpack.c.b16 %v559, %v558
  %v759 = vpack.c.b16 %v561, %v560
  %v760 = vpack.c.b16 %v563, %v562
  %v761 = vpack.c.b16 %v565, %v564
  %v762 = vpack.c.b16 %v567, %v566
  %v763 = vpack.c.b16 %v569, %v568
  %v764 = vpack.c.b16 %v571, %v570
  %v765 = vpack.c.b16 %v573, %v572
  %v766 = vpack.c.b16 %v575, %v574
  %v767 = vpack.c.b16 %v577, %v576
  %v768 = vpack.c.b16 %v579, %v578
  %v769 = vpack.c.b16 %v581, %v580
  %v770 = vpack.c.b16 %v583, %v582
  %v771 = vpack.c.b16 %v585, %v584
  %v772 = vpack.c.b16 %v587, %v586
  %v773 = vpack.c.b16 %v589, %v588
  %v774 = vpack.c.b16 %v591, %v590
  %v775 = vpack.c.b16 %v593, %v592
  %v776 = vpack.c.b16 %v595, %v594
  %v777 = vpack.c.b16 %v597, %v596
  %v778 = vpack.c.b16 %v599, %v598
  %v779 = vpack.c.b16 %v601, %v600
  %v780 = vpack.c.b16 %v603, %v602
  %v781 = vpack.c.b16 %v605, %v604
  %v782 = vpack.c.b16 %v607, %v606
  %v783 = vpack.c.b16 %v609, %v608
  %v784 = vpack.c.b16 %v611, %v610
  %v785 = vpack.c.b16 %v613, %v612
  %v786 = vpack.c.b16 %v615, %v614
  %v787 = vpack.c.b16 %v617, %v616
  %v788 = vpack.c.b16 %v619, %v618
  %v789 = vpack.c.b16 %v621, %v620
  %v790 = vpack.c.b16 %v623, %v622
  %v791 = vpack.c.b16 %v625, %v624
  %v792 = vpack.c.b16 %v627, %v626
  %v793 = vpack.c.b16 %v629, %v628
  %v794 = vpack.c.b16 %v631, %v630
  %v795 = vpack.c.b16 %v633, %v632
  %v796 = vpack.c.b16 %v635, %v634
  %v797 = vpack.c.b16 %v637, %v636
  %v798 = vpack.c.b16 %v639, %v638
  %v799 = vpack.c.b16 %v641, %v640
  %v800 = vpack.c.b16 %v643, %v642
  %v801 = vpack.c.b16 %v645, %v644
  %v802 = vpack.c.b16 %v647, %v646
  %v803 = vpack.c.b16 %v649, %v648
  %v804 = vpack.c.b16 %v651, %v650
  %v805 = vpack.c.b16 %v653, %v652
  %v806 = vpack.c.b16 %v655, %v654
  %v807 = vpack.c.b16 %v657, %v656
  %v808 = vpack.c.b16 %v659, %v658
  %v809 = vpack.c.b16 %v661, %v660
  %v810 = vpack.c.b16 %v663, %v662
  %v811 = vpack.c.b16 %v665, %v664
  %v812 = vpack.c.b16 %v667, %v666
  %v813 = vpack.c.b16 %v669, %v668
  %v814 = vpack.c.b16 %v671, %v670
  %v815 = vpack.c.b16 %v673, %v672
  %v816 = vpack.c.b16 %v675, %v674
  %v817 = vpack.c.b16 %v677, %v676
  %v818 = vpack.c.b16 %v679, %v678
  %v819 = vpack.c.b16 %v681, %v680
  %v820 = vpack.c.b16 %v683, %v682
  %v821 = vpack.c.b16 %v685, %v684
  %v822 = vpack.c.b16 %v687, %v686
  %v823 = vpack.c.b16 %v689, %v688
  %v824 = vpack.c.b16 %v691, %v690
  %v825 = vpack.c.b16 %v693, %v692
  %v826 = vpack.c.b16 %v695, %v694
  %v827 = vpack.c.b16 %v697, %v696
  %v828 = vpack.c.b16 %v699, %v698
  %v829 = vpack.c.b16 %v701, %v700
  %v830 = vpack.c.b16 %v703, %v702
  %v831 = vpack.c.b16 %v705, %v704
  %v832 = vpack.c.b16 %v707, %v706
  %v833 = vpack.c.b16 %v709, %v708
  %v834 = vpack.c.b16 %v711, %v710
  %v835 = vpack.c.b16 %v713, %v712
  %v836 = vpack.c.b16 %v715, %v714
  %v837 = vpack.c.b16 %v717, %v716
  %v838 = vpack.c.b16 %v719, %v718
  %v839 = vpack.c.b16 %v721, %v720
  %v840 = vpack.c.b16 %v723, %v722
  %v841 = vpack.c.b16 %v725, %v724
  %v842 = vpack.c.b16 %v727, %v726
  %v843 = vpack.c.b16 %v729, %v728
  %v844 = vpack.c.b16 %v731, %v730
  %v845 = vpack.c.b16 %v733, %v732
  %v846 = vpack.c.b16 %v735, %v734
  %v847 = vpack.c.b16 %v737, %v736
  %v848 = vpack.c.b16 %v739, %v738
  %v849 = vpack.c.b16 %v741, %v740
  %v850 = vpack.c.b16 %v743, %v742
  %v851 = vpack.c.b16 %v745, %v744
  %v852 = vpack.c.b16 %v747, %v746
  %v853 = vpack.c.b16 %v749, %v748
  %958 = vmatprep.subr.bf16.mxu0 0
  %959 = vmatpush1.bf16.msra.mxu0 %v757
  %960 = vmatprep.subr.bf16.mxu0 0
  %961 = vmatpush1.bf16.msra.mxu0 %v756
  %962 = vmatprep.subr.bf16.mxu0 0
  %963 = vmatpush1.bf16.msra.mxu0 %v755
  %964 = vmatprep.subr.bf16.mxu0 0
  %965 = vmatpush1.bf16.msra.mxu0 %v754
  %966 = vmatprep.subr.bf16.mxu0 0
  %967 = vmatpush1.bf16.msra.mxu0 %v753
  %968 = vmatprep.subr.bf16.mxu0 0
  %969 = vmatpush1.bf16.msra.mxu0 %v752
  %970 = vmatprep.subr.bf16.mxu0 0
  %971 = vmatpush1.bf16.msra.mxu0 %v751
  %972 = vmatprep.subr.bf16.mxu0 0
  %973 = vmatpush1.bf16.msra.mxu0 %v750
  %974 = vmatprep.subr.bf16.mxu0 0
  %975 = vmatpush2.bf16.msra.mxu0 %v765
  %976 = vmatprep.subr.bf16.mxu0 0
  %977 = vmatpush2.bf16.msra.mxu0 %v764
  %978 = vmatprep.subr.bf16.mxu0 0
  %979 = vmatpush2.bf16.msra.mxu0 %v763
  %980 = vmatprep.subr.bf16.mxu0 0
  %981 = vmatpush2.bf16.msra.mxu0 %v762
  %982 = vmatprep.subr.bf16.mxu0 0
  %983 = vmatpush2.bf16.msra.mxu0 %v761
  %984 = vmatprep.subr.bf16.mxu0 0
  %985 = vmatpush2.bf16.msra.mxu0 %v760
  %986 = vmatprep.subr.bf16.mxu0 0
  %987 = vmatpush2.bf16.msra.mxu0 %v759
  %988 = vmatprep.subr.bf16.mxu0 0
  %989 = vmatpush2.bf16.msra.mxu0 %v758
  %990 = vmatprep.mubr.bf16.mxu0 %v309
  %991 = vmatmul.mubr.bf16.gmra.mxu0 %v308
  %v992 = vpop.f32.mrf.mxu0
  %v993 = vadd.f32 %v266, %v992
  %v994 = vpop.f32.mrf.mxu0
  %v995 = vpop.f32.mrf.mxu0
  %v996 = vadd.f32 %v266, %v995
  %v997 = vpop.f32.mrf.mxu0
  %998 = vdwg.mxu0
  %999 = vmatprep.subr.bf16.mxu0 0
  %1000 = vmatpush1.bf16.msra.mxu0 %v773
  %1001 = vmatprep.subr.bf16.mxu0 0
  %1002 = vmatpush1.bf16.msra.mxu0 %v772
  %1003 = vmatprep.subr.bf16.mxu0 0
  %1004 = vmatpush1.bf16.msra.mxu0 %v771
  %1005 = vmatprep.subr.bf16.mxu0 0
  %1006 = vmatpush1.bf16.msra.mxu0 %v770
  %1007 = vmatprep.subr.bf16.mxu0 0
  %1008 = vmatpush1.bf16.msra.mxu0 %v769
  %1009 = vmatprep.subr.bf16.mxu0 0
  %1010 = vmatpush1.bf16.msra.mxu0 %v768
  %1011 = vmatprep.subr.bf16.mxu0 0
  %1012 = vmatpush1.bf16.msra.mxu0 %v767
  %1013 = vmatprep.subr.bf16.mxu0 0
  %1014 = vmatpush1.bf16.msra.mxu0 %v766
  %1015 = vmatprep.subr.bf16.mxu0 0
  %1016 = vmatpush2.bf16.msra.mxu0 %v781
  %1017 = vmatprep.subr.bf16.mxu0 0
  %1018 = vmatpush2.bf16.msra.mxu0 %v780
  %1019 = vmatprep.subr.bf16.mxu0 0
  %1020 = vmatpush2.bf16.msra.mxu0 %v779
  %1021 = vmatprep.subr.bf16.mxu0 0
  %1022 = vmatpush2.bf16.msra.mxu0 %v778
  %1023 = vmatprep.subr.bf16.mxu0 0
  %1024 = vmatpush2.bf16.msra.mxu0 %v777
  %1025 = vmatprep.subr.bf16.mxu0 0
  %1026 = vmatpush2.bf16.msra.mxu0 %v776
  %1027 = vmatprep.subr.bf16.mxu0 0
  %1028 = vmatpush2.bf16.msra.mxu0 %v775
  %1029 = vmatprep.subr.bf16.mxu0 0
  %1030 = vmatpush2.bf16.msra.mxu0 %v774
  %1031 = vmatprep.mubr.bf16.mxu0 %v311
  %1032 = vmatmul.mubr.bf16.gmra.mxu0 %v310
  %v1033 = vpop.f32.mrf.mxu0
  %v1034 = vadd.f32 %v993, %v1033
  %v1035 = vpop.f32.mrf.mxu0
  %v1036 = vpop.f32.mrf.mxu0
  %v1037 = vadd.f32 %v996, %v1036
  %v1038 = vpop.f32.mrf.mxu0
  %1039 = vdwg.mxu0
  %1040 = vmatprep.subr.bf16.mxu0 0
  %1041 = vmatpush1.bf16.msra.mxu0 %v789
  %1042 = vmatprep.subr.bf16.mxu0 0
  %1043 = vmatpush1.bf16.msra.mxu0 %v788
  %1044 = vmatprep.subr.bf16.mxu0 0
  %1045 = vmatpush1.bf16.msra.mxu0 %v787
  %1046 = vmatprep.subr.bf16.mxu0 0
  %1047 = vmatpush1.bf16.msra.mxu0 %v786
  %1048 = vmatprep.subr.bf16.mxu0 0
  %1049 = vmatpush1.bf16.msra.mxu0 %v785
  %1050 = vmatprep.subr.bf16.mxu0 0
  %1051 = vmatpush1.bf16.msra.mxu0 %v784
  %1052 = vmatprep.subr.bf16.mxu0 0
  %1053 = vmatpush1.bf16.msra.mxu0 %v783
  %1054 = vmatprep.subr.bf16.mxu0 0
  %1055 = vmatpush1.bf16.msra.mxu0 %v782
  %1056 = vmatprep.subr.bf16.mxu0 0
  %1057 = vmatpush2.bf16.msra.mxu0 %v797
  %1058 = vmatprep.subr.bf16.mxu0 0
  %1059 = vmatpush2.bf16.msra.mxu0 %v796
  %1060 = vmatprep.subr.bf16.mxu0 0
  %1061 = vmatpush2.bf16.msra.mxu0 %v795
  %1062 = vmatprep.subr.bf16.mxu0 0
  %1063 = vmatpush2.bf16.msra.mxu0 %v794
  %1064 = vmatprep.subr.bf16.mxu0 0
  %1065 = vmatpush2.bf16.msra.mxu0 %v793
  %1066 = vmatprep.subr.bf16.mxu0 0
  %1067 = vmatpush2.bf16.msra.mxu0 %v792
  %1068 = vmatprep.subr.bf16.mxu0 0
  %1069 = vmatpush2.bf16.msra.mxu0 %v791
  %1070 = vmatprep.subr.bf16.mxu0 0
  %1071 = vmatpush2.bf16.msra.mxu0 %v790
  %1072 = vmatprep.mubr.bf16.mxu0 %v313
  %1073 = vmatmul.mubr.bf16.gmra.mxu0 %v312
  %v1074 = vpop.f32.mrf.mxu0
  %v1075 = vadd.f32 %v1034, %v1074
  %v1076 = vpop.f32.mrf.mxu0
  %v1077 = vpop.f32.mrf.mxu0
  %v1078 = vadd.f32 %v1037, %v1077
  %v1079 = vpop.f32.mrf.mxu0
  %1080 = vdwg.mxu0
  %1081 = vmatprep.subr.bf16.mxu0 0
  %1082 = vmatpush1.bf16.msra.mxu0 %v805
  %1083 = vmatprep.subr.bf16.mxu0 0
  %1084 = vmatpush1.bf16.msra.mxu0 %v804
  %1085 = vmatprep.subr.bf16.mxu0 0
  %1086 = vmatpush1.bf16.msra.mxu0 %v803
  %1087 = vmatprep.subr.bf16.mxu0 0
  %1088 = vmatpush1.bf16.msra.mxu0 %v802
  %1089 = vmatprep.subr.bf16.mxu0 0
  %1090 = vmatpush1.bf16.msra.mxu0 %v801
  %1091 = vmatprep.subr.bf16.mxu0 0
  %1092 = vmatpush1.bf16.msra.mxu0 %v800
  %1093 = vmatprep.subr.bf16.mxu0 0
  %1094 = vmatpush1.bf16.msra.mxu0 %v799
  %1095 = vmatprep.subr.bf16.mxu0 0
  %1096 = vmatpush1.bf16.msra.mxu0 %v798
  %1097 = vmatprep.subr.bf16.mxu0 0
  %1098 = vmatpush2.bf16.msra.mxu0 %v813
  %1099 = vmatprep.subr.bf16.mxu0 0
  %1100 = vmatpush2.bf16.msra.mxu0 %v812
  %1101 = vmatprep.subr.bf16.mxu0 0
  %1102 = vmatpush2.bf16.msra.mxu0 %v811
  %1103 = vmatprep.subr.bf16.mxu0 0
  %1104 = vmatpush2.bf16.msra.mxu0 %v810
  %1105 = vmatprep.subr.bf16.mxu0 0
  %1106 = vmatpush2.bf16.msra.mxu0 %v809
  %1107 = vmatprep.subr.bf16.mxu0 0
  %1108 = vmatpush2.bf16.msra.mxu0 %v808
  %1109 = vmatprep.subr.bf16.mxu0 0
  %1110 = vmatpush2.bf16.msra.mxu0 %v807
  %1111 = vmatprep.subr.bf16.mxu0 0
  %1112 = vmatpush2.bf16.msra.mxu0 %v806
  %1113 = vmatprep.mubr.bf16.mxu0 %v315
  %1114 = vmatmul.mubr.bf16.gmra.mxu0 %v314
  %v1115 = vpop.f32.mrf.mxu0
  %v1116 = vadd.f32 %v1075, %v1115
  %v1117 = vpop.f32.mrf.mxu0
  %v1118 = vpop.f32.mrf.mxu0
  %v1119 = vadd.f32 %v1078, %v1118
  %v1120 = vpop.f32.mrf.mxu0
  %1121 = vdwg.mxu0
  %1122 = vmatprep.subr.bf16.mxu0 0
  %1123 = vmatpush1.bf16.msra.mxu0 %v821
  %1124 = vmatprep.subr.bf16.mxu0 0
  %1125 = vmatpush1.bf16.msra.mxu0 %v820
  %1126 = vmatprep.subr.bf16.mxu0 0
  %1127 = vmatpush1.bf16.msra.mxu0 %v819
  %1128 = vmatprep.subr.bf16.mxu0 0
  %1129 = vmatpush1.bf16.msra.mxu0 %v818
  %1130 = vmatprep.subr.bf16.mxu0 0
  %1131 = vmatpush1.bf16.msra.mxu0 %v817
  %1132 = vmatprep.subr.bf16.mxu0 0
  %1133 = vmatpush1.bf16.msra.mxu0 %v816
  %1134 = vmatprep.subr.bf16.mxu0 0
  %1135 = vmatpush1.bf16.msra.mxu0 %v815
  %1136 = vmatprep.subr.bf16.mxu0 0
  %1137 = vmatpush1.bf16.msra.mxu0 %v814
  %1138 = vmatprep.subr.bf16.mxu0 0
  %1139 = vmatpush2.bf16.msra.mxu0 %v829
  %1140 = vmatprep.subr.bf16.mxu0 0
  %1141 = vmatpush2.bf16.msra.mxu0 %v828
  %1142 = vmatprep.subr.bf16.mxu0 0
  %1143 = vmatpush2.bf16.msra.mxu0 %v827
  %1144 = vmatprep.subr.bf16.mxu0 0
  %1145 = vmatpush2.bf16.msra.mxu0 %v826
  %1146 = vmatprep.subr.bf16.mxu0 0
  %1147 = vmatpush2.bf16.msra.mxu0 %v825
  %1148 = vmatprep.subr.bf16.mxu0 0
  %1149 = vmatpush2.bf16.msra.mxu0 %v824
  %1150 = vmatprep.subr.bf16.mxu0 0
  %1151 = vmatpush2.bf16.msra.mxu0 %v823
  %1152 = vmatprep.subr.bf16.mxu0 0
  %1153 = vmatpush2.bf16.msra.mxu0 %v822
  %1154 = vmatprep.mubr.bf16.mxu0 %v317
  %1155 = vmatmul.mubr.bf16.gmra.mxu0 %v316
  %v1156 = vpop.f32.mrf.mxu0
  %v1157 = vadd.f32 %v1116, %v1156
  %v1158 = vpop.f32.mrf.mxu0
  %v1159 = vpop.f32.mrf.mxu0
  %v1160 = vadd.f32 %v1119, %v1159
  %v1161 = vpop.f32.mrf.mxu0
  %1162 = vdwg.mxu0
  %1163 = vmatprep.subr.bf16.mxu0 0
  %1164 = vmatpush1.bf16.msra.mxu0 %v837
  %1165 = vmatprep.subr.bf16.mxu0 0
  %1166 = vmatpush1.bf16.msra.mxu0 %v836
  %1167 = vmatprep.subr.bf16.mxu0 0
  %1168 = vmatpush1.bf16.msra.mxu0 %v835
  %1169 = vmatprep.subr.bf16.mxu0 0
  %1170 = vmatpush1.bf16.msra.mxu0 %v834
  %1171 = vmatprep.subr.bf16.mxu0 0
  %1172 = vmatpush1.bf16.msra.mxu0 %v833
  %1173 = vmatprep.subr.bf16.mxu0 0
  %1174 = vmatpush1.bf16.msra.mxu0 %v832
  %1175 = vmatprep.subr.bf16.mxu0 0
  %1176 = vmatpush1.bf16.msra.mxu0 %v831
  %1177 = vmatprep.subr.bf16.mxu0 0
  %1178 = vmatpush1.bf16.msra.mxu0 %v830
  %1179 = vmatprep.subr.bf16.mxu0 0
  %1180 = vmatpush2.bf16.msra.mxu0 %v845
  %1181 = vmatprep.subr.bf16.mxu0 0
  %1182 = vmatpush2.bf16.msra.mxu0 %v844
  %1183 = vmatprep.subr.bf16.mxu0 0
  %1184 = vmatpush2.bf16.msra.mxu0 %v843
  %1185 = vmatprep.subr.bf16.mxu0 0
  %1186 = vmatpush2.bf16.msra.mxu0 %v842
  %1187 = vmatprep.subr.bf16.mxu0 0
  %1188 = vmatpush2.bf16.msra.mxu0 %v841
  %1189 = vmatprep.subr.bf16.mxu0 0
  %1190 = vmatpush2.bf16.msra.mxu0 %v840
  %1191 = vmatprep.subr.bf16.mxu0 0
  %1192 = vmatpush2.bf16.msra.mxu0 %v839
  %1193 = vmatprep.subr.bf16.mxu0 0
  %1194 = vmatpush2.bf16.msra.mxu0 %v838
  %1195 = vmatprep.mubr.bf16.mxu0 %v319
  %1196 = vmatmul.mubr.bf16.gmra.mxu0 %v318
  %v1197 = vpop.f32.mrf.mxu0
  %v1198 = vadd.f32 %v1157, %v1197
  %v1199 = vpop.f32.mrf.mxu0
  %v1200 = vpop.f32.mrf.mxu0
  %v1201 = vadd.f32 %v1160, %v1200
  %v1202 = vpop.f32.mrf.mxu0
  %1203 = vdwg.mxu0
  %1204 = vmatprep.subr.bf16.mxu0 0
  %1205 = vmatpush1.bf16.msra.mxu0 %v853
  %1206 = vmatprep.subr.bf16.mxu0 0
  %1207 = vmatpush1.bf16.msra.mxu0 %v852
  %1208 = vmatprep.subr.bf16.mxu0 0
  %1209 = vmatpush1.bf16.msra.mxu0 %v851
  %1210 = vmatprep.subr.bf16.mxu0 0
  %1211 = vmatpush1.bf16.msra.mxu0 %v850
  %1212 = vmatprep.subr.bf16.mxu0 0
  %1213 = vmatpush1.bf16.msra.mxu0 %v849
  %1214 = vmatprep.subr.bf16.mxu0 0
  %1215 = vmatpush1.bf16.msra.mxu0 %v848
  %1216 = vmatprep.subr.bf16.mxu0 0
  %1217 = vmatpush1.bf16.msra.mxu0 %v847
  %1218 = vmatprep.subr.bf16.mxu0 0
  %1219 = vmatpush1.bf16.msra.mxu0 %v846
  %1220 = vmatprep.subr.bf16.mxu0 0
  %1221 = vmatpush2.bf16.msra.mxu0 0
  %1222 = vmatprep.subr.bf16.mxu0 0
  %1223 = vmatpush2.bf16.msra.mxu0 0
  %1224 = vmatprep.subr.bf16.mxu0 0
  %1225 = vmatpush2.bf16.msra.mxu0 0
  %1226 = vmatprep.subr.bf16.mxu0 0
  %1227 = vmatpush2.bf16.msra.mxu0 0
  %1228 = vmatprep.subr.bf16.mxu0 0
  %1229 = vmatpush2.bf16.msra.mxu0 0
  %1230 = vmatprep.subr.bf16.mxu0 0
  %1231 = vmatpush2.bf16.msra.mxu0 0
  %1232 = vmatprep.subr.bf16.mxu0 0
  %1233 = vmatpush2.bf16.msra.mxu0 0
  %1234 = vmatprep.subr.bf16.mxu0 0
  %1235 = vmatpush2.bf16.msra.mxu0 0
  %1236 = vmatprep.mubr.bf16.mxu0 0
  %1237 = vmatmul.mubr.bf16.gmra.mxu0 %v320
  %v1238 = vpop.f32.mrf.mxu0
  %v1239 = vadd.f32 %v1198, %v1238
  %v1240 = vpop.f32.mrf.mxu0
  %v1241 = vpop.f32.mrf.mxu0
  %v1242 = vadd.f32 %v1201, %v1241
  %v1243 = vpop.f32.mrf.mxu0
  %1244 = vdwg.mxu0
  %v1245 = vmax.f32 %v1239, 0.0
  %v1246 = vmax.f32 %v1242, 0.0
  %v1247 = vpack.c.bf16 %v1246, %v1245
  %v1248 = vld [vmem:[%s3] sm:$0xf]
  %v1249 = vld [vmem:[%s3 + $0x4] sm:$0xf]
  %v1250 = vld [vmem:[%s3 + $0x8] sm:$0xf]
  %v1251 = vld [vmem:[%s3 + $0xc] sm:$0xf]
  %v1252 = vld [vmem:[%s3 + $0x10] sm:$0xf]
  %v1253 = vld [vmem:[%s3 + $0x14] sm:$0xf]
  %v1254 = vld [vmem:[%s3 + $0x18] sm:$0xf]
  %v1255 = vld [vmem:[%s3 + $0x1c] sm:$0xf]
  %v1256 = vld [vmem:[%s4] sm:$0x1]
  %v1258 = vlaneseq
  %v1259 = vshrl.u32 %v1258, 7
  %v1260 = vsub.s32 0, %v1259
  %v1261 = vrot.slane %v1256, %v1260
  %v1271 = vunpack.c.l.b16 %v1248
  %v1272 = vunpack.c.l.b16 %v1249
  %v1273 = vunpack.c.l.b16 %v1250
  %v1274 = vunpack.c.l.b16 %v1251
  %v1275 = vunpack.c.l.b16 %v1252
  %v1276 = vunpack.c.l.b16 %v1253
  %v1277 = vunpack.c.l.b16 %v1254
  %v1278 = vunpack.c.l.b16 %v1255
  %v1279 = vpack.c.b16 %v1272, %v1271
  %v1280 = vpack.c.b16 %v1274, %v1273
  %v1281 = vpack.c.b16 %v1276, %v1275
  %v1282 = vpack.c.b16 %v1278, %v1277
  %vm1287 = vcmask 523264
  %v1289 = vsel %vm1287, %v1247, 0
  %1291 = vmatprep.subr.bf16.mxu0 0
  %1292 = vmatpush1.bf16.msra.mxu0 0
  %1293 = vmatprep.subr.bf16.mxu0 0
  %1294 = vmatpush1.bf16.msra.mxu0 0
  %1295 = vmatprep.subr.bf16.mxu0 0
  %1296 = vmatpush1.bf16.msra.mxu0 0
  %1297 = vmatprep.subr.bf16.mxu0 0
  %1298 = vmatpush1.bf16.msra.mxu0 0
  %1299 = vmatprep.subr.bf16.mxu0 0
  %1300 = vmatpush1.bf16.msra.mxu0 %v1282
  %1301 = vmatprep.subr.bf16.mxu0 0
  %1302 = vmatpush1.bf16.msra.mxu0 %v1281
  %1303 = vmatprep.subr.bf16.mxu0 0
  %1304 = vmatpush1.bf16.msra.mxu0 %v1280
  %1305 = vmatprep.subr.bf16.mxu0 0
  %1306 = vmatpush1.bf16.msra.mxu0 %v1279
  %1307 = vmatprep.subr.bf16.mxu0 0
  %1308 = vmatpush2.bf16.msra.mxu0 0
  %1309 = vmatprep.subr.bf16.mxu0 0
  %1310 = vmatpush2.bf16.msra.mxu0 0
  %1311 = vmatprep.subr.bf16.mxu0 0
  %1312 = vmatpush2.bf16.msra.mxu0 0
  %1313 = vmatprep.subr.bf16.mxu0 0
  %1314 = vmatpush2.bf16.msra.mxu0 0
  %1315 = vmatprep.subr.bf16.mxu0 0
  %1316 = vmatpush2.bf16.msra.mxu0 0
  %1317 = vmatprep.subr.bf16.mxu0 0
  %1318 = vmatpush2.bf16.msra.mxu0 0
  %1319 = vmatprep.subr.bf16.mxu0 0
  %1320 = vmatpush2.bf16.msra.mxu0 0
  %1321 = vmatprep.subr.bf16.mxu0 0
  %1322 = vmatpush2.bf16.msra.mxu0 0
  %1323 = vmatprep.mubr.bf16.mxu0 0
  %1324 = vmatmul.mubr.bf16.gmra.mxu0 %v1289
  %v1325 = vpop.f32.mrf.mxu0
  %v1326 = vadd.f32 %v1261, %v1325
  %v1327 = vpop.f32.mrf.mxu0
  %v1328 = vpop.f32.mrf.mxu0
  %v1329 = vadd.f32 %v1261, %v1328
  %v1330 = vpop.f32.mrf.mxu0
  %1331 = vdwg.mxu0
  %v1332 = vmax.f32 %v1326, 0.0
  %v1333 = vmax.f32 %v1329, 0.0
  %v1334 = vpack.c.bf16 %v1333, %v1332
  %v1335 = vld [vmem:[%s5] sm:$0xf]
  %v1336 = vld [vmem:[%s5 + $0x4] sm:$0xf]
  %v1337 = vld [vmem:[%s6] sm:$0x1]
  %v1339 = vlaneseq
  %v1340 = vshrl.u32 %v1339, 7
  %v1341 = vsub.s32 0, %v1340
  %v1342 = vrot.slane %v1337, %v1341
  %v1346 = vunpack.c.l.b16 %v1335
  %v1347 = vunpack.c.l.b16 %v1336
  %v1348 = vpack.c.b16 %v1347, %v1346
  %vm1350 = vcmask 130048
  %v1352 = vsel %vm1350, %v1334, 0
  %1354 = vmatprep.subr.bf16.mxu0 0
  %1355 = vmatpush1.bf16.msra.mxu0 0
  %1356 = vmatprep.subr.bf16.mxu0 0
  %1357 = vmatpush1.bf16.msra.mxu0 0
  %1358 = vmatprep.subr.bf16.mxu0 0
  %1359 = vmatpush1.bf16.msra.mxu0 0
  %1360 = vmatprep.subr.bf16.mxu0 0
  %1361 = vmatpush1.bf16.msra.mxu0 0
  %1362 = vmatprep.subr.bf16.mxu0 0
  %1363 = vmatpush1.bf16.msra.mxu0 0
  %1364 = vmatprep.subr.bf16.mxu0 0
  %1365 = vmatpush1.bf16.msra.mxu0 0
  %1366 = vmatprep.subr.bf16.mxu0 0
  %1367 = vmatpush1.bf16.msra.mxu0 0
  %1368 = vmatprep.subr.bf16.mxu0 0
  %1369 = vmatpush1.bf16.msra.mxu0 %v1348
  %1370 = vmatprep.subr.bf16.mxu0 0
  %1371 = vmatpush2.bf16.msra.mxu0 0
  %1372 = vmatprep.subr.bf16.mxu0 0
  %1373 = vmatpush2.bf16.msra.mxu0 0
  %1374 = vmatprep.subr.bf16.mxu0 0
  %1375 = vmatpush2.bf16.msra.mxu0 0
  %1376 = vmatprep.subr.bf16.mxu0 0
  %1377 = vmatpush2.bf16.msra.mxu0 0
  %1378 = vmatprep.subr.bf16.mxu0 0
  %1379 = vmatpush2.bf16.msra.mxu0 0
  %1380 = vmatprep.subr.bf16.mxu0 0
  %1381 = vmatpush2.bf16.msra.mxu0 0
  %1382 = vmatprep.subr.bf16.mxu0 0
  %1383 = vmatpush2.bf16.msra.mxu0 0
  %1384 = vmatprep.subr.bf16.mxu0 0
  %1385 = vmatpush2.bf16.msra.mxu0 0
  %1386 = vmatprep.mubr.bf16.mxu0 0
  %1387 = vmatmul.mubr.bf16.gmra.mxu0 %v1352
  %v1388 = vpop.f32.mrf.mxu0
  %v1389 = vadd.f32 %v1342, %v1388
  %v1390 = vpop.f32.mrf.mxu0
  %v1391 = vpop.f32.mrf.mxu0
  %v1392 = vadd.f32 %v1342, %v1391
  %v1393 = vpop.f32.mrf.mxu0
  %1394 = vdwg.mxu0
  %v1395 = vmax.f32 %v1389, 0.0
  %v1396 = vmax.f32 %v1392, 0.0
  %v1397 = vpack.c.bf16 %v1396, %v1395
  %v1398 = vld [vmem:[%s7] sm:$0xff]
  %v1399 = vld [vmem:[%s7 + $0x8] sm:$0xff]
  %v1400 = vld [vmem:[%s7 + $0x10] sm:$0xff]
  %v1401 = vld [vmem:[%s7 + $0x18] sm:$0xff]
  %v1402 = vld [vmem:[%s7 + $0x20] sm:$0xff]
  %v1403 = vld [vmem:[%s7 + $0x28] sm:$0xff]
  %v1404 = vld [vmem:[%s7 + $0x30] sm:$0xf]
  %v1405 = vld [vmem:[%s7 + $0x34] sm:$0xff]
  %v1406 = vld [vmem:[%s7 + $0x3c] sm:$0xff]
  %v1407 = vld [vmem:[%s7 + $0x44] sm:$0xff]
  %v1408 = vld [vmem:[%s7 + $0x4c] sm:$0xff]
  %v1409 = vld [vmem:[%s7 + $0x54] sm:$0xff]
  %v1410 = vld [vmem:[%s7 + $0x5c] sm:$0xff]
  %v1411 = vld [vmem:[%s7 + $0x64] sm:$0xf]
  %v1412 = vld [vmem:[%s7 + $0x68] sm:$0xff]
  %v1413 = vld [vmem:[%s7 + $0x70] sm:$0xff]
  %v1414 = vld [vmem:[%s7 + $0x78] sm:$0xff]
  %v1415 = vld [vmem:[%s7 + $0x80] sm:$0xff]
  %v1416 = vld [vmem:[%s7 + $0x88] sm:$0xff]
  %v1417 = vld [vmem:[%s7 + $0x90] sm:$0xff]
  %v1418 = vld [vmem:[%s7 + $0x98] sm:$0xf]
  %v1419 = vld [vmem:[%s7 + $0x9c] sm:$0xff]
  %v1420 = vld [vmem:[%s7 + $0xa4] sm:$0xff]
  %v1421 = vld [vmem:[%s7 + $0xac] sm:$0xff]
  %v1422 = vld [vmem:[%s7 + $0xb4] sm:$0xff]
  %v1423 = vld [vmem:[%s7 + $0xbc] sm:$0xff]
  %v1424 = vld [vmem:[%s7 + $0xc4] sm:$0xff]
  %v1425 = vld [vmem:[%s7 + $0xcc] sm:$0xf]
  %v1426 = vld [vmem:[%s7 + $0xd0] sm:$0xff]
  %v1427 = vld [vmem:[%s7 + $0xd8] sm:$0xff]
  %v1428 = vld [vmem:[%s7 + $0xe0] sm:$0xff]
  %v1429 = vld [vmem:[%s7 + $0xe8] sm:$0xff]
  %v1430 = vld [vmem:[%s7 + $0xf0] sm:$0xff]
  %v1431 = vld [vmem:[%s7 + $0xf8] sm:$0xff]
  %v1432 = vld [vmem:[%s7 + $0x100] sm:$0xf]
  %v1433 = vld [vmem:[%s7 + $0x104] sm:$0xff]
  %v1434 = vld [vmem:[%s7 + $0x10c] sm:$0xff]
  %v1435 = vld [vmem:[%s7 + $0x114] sm:$0xff]
  %v1436 = vld [vmem:[%s7 + $0x11c] sm:$0xff]
  %v1437 = vld [vmem:[%s7 + $0x124] sm:$0xff]
  %v1438 = vld [vmem:[%s7 + $0x12c] sm:$0xff]
  %v1439 = vld [vmem:[%s7 + $0x134] sm:$0xf]
  %v1440 = vld [vmem:[%s7 + $0x138] sm:$0xff]
  %v1441 = vld [vmem:[%s7 + $0x140] sm:$0xff]
  %v1442 = vld [vmem:[%s7 + $0x148] sm:$0xff]
  %v1443 = vld [vmem:[%s7 + $0x150] sm:$0xff]
  %v1444 = vld [vmem:[%s7 + $0x158] sm:$0xff]
  %v1445 = vld [vmem:[%s7 + $0x160] sm:$0xff]
  %v1446 = vld [vmem:[%s7 + $0x168] sm:$0xf]
  %v1447 = vld [vmem:[%s7 + $0x16c] sm:$0xff]
  %v1448 = vld [vmem:[%s7 + $0x174] sm:$0xff]
  %v1449 = vld [vmem:[%s7 + $0x17c] sm:$0xff]
  %v1450 = vld [vmem:[%s7 + $0x184] sm:$0xff]
  %v1451 = vld [vmem:[%s7 + $0x18c] sm:$0xff]
  %v1452 = vld [vmem:[%s7 + $0x194] sm:$0xff]
  %v1453 = vld [vmem:[%s7 + $0x19c] sm:$0xf]
  %v1454 = vld [vmem:[%s8] sm:$0xff]
  %v1455 = vld [vmem:[%s8 + $0x8] sm:$0x1f]
  %v1458 = vlaneseq
  %v1459 = vshrl.u32 %v1458, 7
  %v1460 = vsub.s32 0, %v1459
  %v1461 = vrot.slane %v1454, %v1460
  %v1462 = vlaneseq
  %v1463 = vshrl.u32 %v1462, 7
  %v1464 = vsub.s32 1, %v1463
  %v1465 = vrot.slane %v1454, %v1464
  %v1466 = vlaneseq
  %v1467 = vshrl.u32 %v1466, 7
  %v1468 = vsub.s32 2, %v1467
  %v1469 = vrot.slane %v1454, %v1468
  %v1470 = vlaneseq
  %v1471 = vshrl.u32 %v1470, 7
  %v1472 = vsub.s32 3, %v1471
  %v1473 = vrot.slane %v1454, %v1472
  %v1474 = vlaneseq
  %v1475 = vshrl.u32 %v1474, 7
  %v1476 = vsub.s32 4, %v1475
  %v1477 = vrot.slane %v1454, %v1476
  %v1478 = vlaneseq
  %v1479 = vshrl.u32 %v1478, 7
  %v1480 = vsub.s32 5, %v1479
  %v1481 = vrot.slane %v1454, %v1480
  %v1482 = vlaneseq
  %v1483 = vshrl.u32 %v1482, 7
  %v1484 = vsub.s32 6, %v1483
  %v1485 = vrot.slane %v1454, %v1484
  %v1486 = vlaneseq
  %v1487 = vshrl.u32 %v1486, 7
  %v1488 = vsub.s32 7, %v1487
  %v1489 = vrot.slane %v1454, %v1488
  %v1490 = vlaneseq
  %v1491 = vshrl.u32 %v1490, 7
  %v1492 = vsub.s32 0, %v1491
  %v1493 = vrot.slane %v1455, %v1492
  %v1494 = vlaneseq
  %v1495 = vshrl.u32 %v1494, 7
  %v1496 = vsub.s32 1, %v1495
  %v1497 = vrot.slane %v1455, %v1496
  %v1498 = vlaneseq
  %v1499 = vshrl.u32 %v1498, 7
  %v1500 = vsub.s32 2, %v1499
  %v1501 = vrot.slane %v1455, %v1500
  %v1502 = vlaneseq
  %v1503 = vshrl.u32 %v1502, 7
  %v1504 = vsub.s32 3, %v1503
  %v1505 = vrot.slane %v1455, %v1504
  %v1506 = vlaneseq
  %v1507 = vshrl.u32 %v1506, 7
  %v1508 = vsub.s32 4, %v1507
  %v1509 = vrot.slane %v1455, %v1508
  %v1579 = vunpack.c.l.b16 %v1398
  %v1580 = vunpack.c.h.b16 %v1398
  %v1581 = vunpack.c.l.b16 %v1399
  %v1582 = vunpack.c.h.b16 %v1399
  %v1583 = vunpack.c.l.b16 %v1400
  %v1584 = vunpack.c.h.b16 %v1400
  %v1585 = vunpack.c.l.b16 %v1401
  %v1586 = vunpack.c.h.b16 %v1401
  %v1587 = vunpack.c.l.b16 %v1402
  %v1588 = vunpack.c.h.b16 %v1402
  %v1589 = vunpack.c.l.b16 %v1403
  %v1590 = vunpack.c.h.b16 %v1403
  %v1591 = vunpack.c.l.b16 %v1404
  %v1592 = vunpack.c.l.b16 %v1405
  %v1593 = vunpack.c.h.b16 %v1405
  %v1594 = vunpack.c.l.b16 %v1406
  %v1595 = vunpack.c.h.b16 %v1406
  %v1596 = vunpack.c.l.b16 %v1407
  %v1597 = vunpack.c.h.b16 %v1407
  %v1598 = vunpack.c.l.b16 %v1408
  %v1599 = vunpack.c.h.b16 %v1408
  %v1600 = vunpack.c.l.b16 %v1409
  %v1601 = vunpack.c.h.b16 %v1409
  %v1602 = vunpack.c.l.b16 %v1410
  %v1603 = vunpack.c.h.b16 %v1410
  %v1604 = vunpack.c.l.b16 %v1411
  %v1605 = vunpack.c.l.b16 %v1412
  %v1606 = vunpack.c.h.b16 %v1412
  %v1607 = vunpack.c.l.b16 %v1413
  %v1608 = vunpack.c.h.b16 %v1413
  %v1609 = vunpack.c.l.b16 %v1414
  %v1610 = vunpack.c.h.b16 %v1414
  %v1611 = vunpack.c.l.b16 %v1415
  %v1612 = vunpack.c.h.b16 %v1415
  %v1613 = vunpack.c.l.b16 %v1416
  %v1614 = vunpack.c.h.b16 %v1416
  %v1615 = vunpack.c.l.b16 %v1417
  %v1616 = vunpack.c.h.b16 %v1417
  %v1617 = vunpack.c.l.b16 %v1418
  %v1618 = vunpack.c.l.b16 %v1419
  %v1619 = vunpack.c.h.b16 %v1419
  %v1620 = vunpack.c.l.b16 %v1420
  %v1621 = vunpack.c.h.b16 %v1420
  %v1622 = vunpack.c.l.b16 %v1421
  %v1623 = vunpack.c.h.b16 %v1421
  %v1624 = vunpack.c.l.b16 %v1422
  %v1625 = vunpack.c.h.b16 %v1422
  %v1626 = vunpack.c.l.b16 %v1423
  %v1627 = vunpack.c.h.b16 %v1423
  %v1628 = vunpack.c.l.b16 %v1424
  %v1629 = vunpack.c.h.b16 %v1424
  %v1630 = vunpack.c.l.b16 %v1425
  %v1631 = vunpack.c.l.b16 %v1426
  %v1632 = vunpack.c.h.b16 %v1426
  %v1633 = vunpack.c.l.b16 %v1427
  %v1634 = vunpack.c.h.b16 %v1427
  %v1635 = vunpack.c.l.b16 %v1428
  %v1636 = vunpack.c.h.b16 %v1428
  %v1637 = vunpack.c.l.b16 %v1429
  %v1638 = vunpack.c.h.b16 %v1429
  %v1639 = vunpack.c.l.b16 %v1430
  %v1640 = vunpack.c.h.b16 %v1430
  %v1641 = vunpack.c.l.b16 %v1431
  %v1642 = vunpack.c.h.b16 %v1431
  %v1643 = vunpack.c.l.b16 %v1432
  %v1644 = vunpack.c.l.b16 %v1433
  %v1645 = vunpack.c.h.b16 %v1433
  %v1646 = vunpack.c.l.b16 %v1434
  %v1647 = vunpack.c.h.b16 %v1434
  %v1648 = vunpack.c.l.b16 %v1435
  %v1649 = vunpack.c.h.b16 %v1435
  %v1650 = vunpack.c.l.b16 %v1436
  %v1651 = vunpack.c.h.b16 %v1436
  %v1652 = vunpack.c.l.b16 %v1437
  %v1653 = vunpack.c.h.b16 %v1437
  %v1654 = vunpack.c.l.b16 %v1438
  %v1655 = vunpack.c.h.b16 %v1438
  %v1656 = vunpack.c.l.b16 %v1439
  %v1657 = vunpack.c.l.b16 %v1440
  %v1658 = vunpack.c.h.b16 %v1440
  %v1659 = vunpack.c.l.b16 %v1441
  %v1660 = vunpack.c.h.b16 %v1441
  %v1661 = vunpack.c.l.b16 %v1442
  %v1662 = vunpack.c.h.b16 %v1442
  %v1663 = vunpack.c.l.b16 %v1443
  %v1664 = vunpack.c.h.b16 %v1443
  %v1665 = vunpack.c.l.b16 %v1444
  %v1666 = vunpack.c.h.b16 %v1444
  %v1667 = vunpack.c.l.b16 %v1445
  %v1668 = vunpack.c.h.b16 %v1445
  %v1669 = vunpack.c.l.b16 %v1446
  %v1670 = vunpack.c.l.b16 %v1447
  %v1671 = vunpack.c.h.b16 %v1447
  %v1672 = vunpack.c.l.b16 %v1448
  %v1673 = vunpack.c.h.b16 %v1448
  %v1674 = vunpack.c.l.b16 %v1449
  %v1675 = vunpack.c.h.b16 %v1449
  %v1676 = vunpack.c.l.b16 %v1450
  %v1677 = vunpack.c.h.b16 %v1450
  %v1678 = vunpack.c.l.b16 %v1451
  %v1679 = vunpack.c.h.b16 %v1451
  %v1680 = vunpack.c.l.b16 %v1452
  %v1681 = vunpack.c.h.b16 %v1452
  %v1682 = vunpack.c.l.b16 %v1453
  %v1683 = vpack.c.b16 %v1592, %v1579
  %v1684 = vpack.c.b16 %v1593, %v1580
  %v1685 = vpack.c.b16 %v1594, %v1581
  %v1686 = vpack.c.b16 %v1595, %v1582
  %v1687 = vpack.c.b16 %v1596, %v1583
  %v1688 = vpack.c.b16 %v1597, %v1584
  %v1689 = vpack.c.b16 %v1598, %v1585
  %v1690 = vpack.c.b16 %v1599, %v1586
  %v1691 = vpack.c.b16 %v1600, %v1587
  %v1692 = vpack.c.b16 %v1601, %v1588
  %v1693 = vpack.c.b16 %v1602, %v1589
  %v1694 = vpack.c.b16 %v1603, %v1590
  %v1695 = vpack.c.b16 %v1604, %v1591
  %v1696 = vpack.c.b16 %v1618, %v1605
  %v1697 = vpack.c.b16 %v1619, %v1606
  %v1698 = vpack.c.b16 %v1620, %v1607
  %v1699 = vpack.c.b16 %v1621, %v1608
  %v1700 = vpack.c.b16 %v1622, %v1609
  %v1701 = vpack.c.b16 %v1623, %v1610
  %v1702 = vpack.c.b16 %v1624, %v1611
  %v1703 = vpack.c.b16 %v1625, %v1612
  %v1704 = vpack.c.b16 %v1626, %v1613
  %v1705 = vpack.c.b16 %v1627, %v1614
  %v1706 = vpack.c.b16 %v1628, %v1615
  %v1707 = vpack.c.b16 %v1629, %v1616
  %v1708 = vpack.c.b16 %v1630, %v1617
  %v1709 = vpack.c.b16 %v1644, %v1631
  %v1710 = vpack.c.b16 %v1645, %v1632
  %v1711 = vpack.c.b16 %v1646, %v1633
  %v1712 = vpack.c.b16 %v1647, %v1634
  %v1713 = vpack.c.b16 %v1648, %v1635
  %v1714 = vpack.c.b16 %v1649, %v1636
  %v1715 = vpack.c.b16 %v1650, %v1637
  %v1716 = vpack.c.b16 %v1651, %v1638
  %v1717 = vpack.c.b16 %v1652, %v1639
  %v1718 = vpack.c.b16 %v1653, %v1640
  %v1719 = vpack.c.b16 %v1654, %v1641
  %v1720 = vpack.c.b16 %v1655, %v1642
  %v1721 = vpack.c.b16 %v1656, %v1643
  %v1722 = vpack.c.b16 %v1670, %v1657
  %v1723 = vpack.c.b16 %v1671, %v1658
  %v1724 = vpack.c.b16 %v1672, %v1659
  %v1725 = vpack.c.b16 %v1673, %v1660
  %v1726 = vpack.c.b16 %v1674, %v1661
  %v1727 = vpack.c.b16 %v1675, %v1662
  %v1728 = vpack.c.b16 %v1676, %v1663
  %v1729 = vpack.c.b16 %v1677, %v1664
  %v1730 = vpack.c.b16 %v1678, %v1665
  %v1731 = vpack.c.b16 %v1679, %v1666
  %v1732 = vpack.c.b16 %v1680, %v1667
  %v1733 = vpack.c.b16 %v1681, %v1668
  %v1734 = vpack.c.b16 %v1682, %v1669
  %v1788 = vsel %vm1287, %v1397, 0
  %1790 = vmatprep.subr.bf16.mxu0 0
  %1791 = vmatpush1.bf16.msra.mxu0 0
  %1792 = vmatprep.subr.bf16.mxu0 0
  %1793 = vmatpush1.bf16.msra.mxu0 0
  %1794 = vmatprep.subr.bf16.mxu0 0
  %1795 = vmatpush1.bf16.msra.mxu0 0
  %1796 = vmatprep.subr.bf16.mxu0 0
  %1797 = vmatpush1.bf16.msra.mxu0 0
  %1798 = vmatprep.subr.bf16.mxu0 %v1723
  %1799 = vmatpush1.bf16.msra.mxu0 %v1722
  %1800 = vmatprep.subr.bf16.mxu0 %v1710
  %1801 = vmatpush1.bf16.msra.mxu0 %v1709
  %1802 = vmatprep.subr.bf16.mxu0 %v1697
  %1803 = vmatpush1.bf16.msra.mxu0 %v1696
  %1804 = vmatprep.subr.bf16.mxu0 %v1684
  %1805 = vmatpush1.bf16.msra.mxu0 %v1683
  %1806 = vmatprep.subr.bf16.mxu0 0
  %1807 = vmatpush2.bf16.msra.mxu0 0
  %1808 = vmatprep.subr.bf16.mxu0 0
  %1809 = vmatpush2.bf16.msra.mxu0 0
  %1810 = vmatprep.subr.bf16.mxu0 0
  %1811 = vmatpush2.bf16.msra.mxu0 0
  %1812 = vmatprep.subr.bf16.mxu0 0
  %1813 = vmatpush2.bf16.msra.mxu0 0
  %1814 = vmatprep.subr.bf16.mxu0 0
  %1815 = vmatpush2.bf16.msra.mxu0 0
  %1816 = vmatprep.subr.bf16.mxu0 0
  %1817 = vmatpush2.bf16.msra.mxu0 0
  %1818 = vmatprep.subr.bf16.mxu0 0
  %1819 = vmatpush2.bf16.msra.mxu0 0
  %1820 = vmatprep.subr.bf16.mxu0 0
  %1821 = vmatpush2.bf16.msra.mxu0 0
  %1822 = vmatprep.mubr.bf16.mxu0 0
  %1823 = vmatmul.mubr.bf16.gmra.mxu0 %v1788
  %v1824 = vpop.f32.mrf.mxu0
  %v1825 = vadd.f32 %v1461, %v1824
  %v1826 = vpop.f32.mrf.mxu0
  %v1827 = vadd.f32 %v1465, %v1826
  %v1828 = vpop.f32.mrf.mxu0
  %v1829 = vadd.f32 %v1461, %v1828
  %v1830 = vpop.f32.mrf.mxu0
  %v1831 = vadd.f32 %v1465, %v1830
  %1832 = vdwg.mxu0
  %1833 = vmatprep.subr.bf16.mxu0 0
  %1834 = vmatpush1.bf16.msra.mxu0 0
  %1835 = vmatprep.subr.bf16.mxu0 0
  %1836 = vmatpush1.bf16.msra.mxu0 0
  %1837 = vmatprep.subr.bf16.mxu0 0
  %1838 = vmatpush1.bf16.msra.mxu0 0
  %1839 = vmatprep.subr.bf16.mxu0 0
  %1840 = vmatpush1.bf16.msra.mxu0 0
  %1841 = vmatprep.subr.bf16.mxu0 %v1725
  %1842 = vmatpush1.bf16.msra.mxu0 %v1724
  %1843 = vmatprep.subr.bf16.mxu0 %v1712
  %1844 = vmatpush1.bf16.msra.mxu0 %v1711
  %1845 = vmatprep.subr.bf16.mxu0 %v1699
  %1846 = vmatpush1.bf16.msra.mxu0 %v1698
  %1847 = vmatprep.subr.bf16.mxu0 %v1686
  %1848 = vmatpush1.bf16.msra.mxu0 %v1685
  %1849 = vmatprep.subr.bf16.mxu0 0
  %1850 = vmatpush2.bf16.msra.mxu0 0
  %1851 = vmatprep.subr.bf16.mxu0 0
  %1852 = vmatpush2.bf16.msra.mxu0 0
  %1853 = vmatprep.subr.bf16.mxu0 0
  %1854 = vmatpush2.bf16.msra.mxu0 0
  %1855 = vmatprep.subr.bf16.mxu0 0
  %1856 = vmatpush2.bf16.msra.mxu0 0
  %1857 = vmatprep.subr.bf16.mxu0 0
  %1858 = vmatpush2.bf16.msra.mxu0 0
  %1859 = vmatprep.subr.bf16.mxu0 0
  %1860 = vmatpush2.bf16.msra.mxu0 0
  %1861 = vmatprep.subr.bf16.mxu0 0
  %1862 = vmatpush2.bf16.msra.mxu0 0
  %1863 = vmatprep.subr.bf16.mxu0 0
  %1864 = vmatpush2.bf16.msra.mxu0 0
  %1865 = vmatprep.mubr.bf16.mxu0 0
  %1866 = vmatmul.mubr.bf16.gmra.mxu0 %v1788
  %v1867 = vpop.f32.mrf.mxu0
  %v1868 = vadd.f32 %v1469, %v1867
  %v1869 = vpop.f32.mrf.mxu0
  %v1870 = vadd.f32 %v1473, %v1869
  %v1871 = vpop.f32.mrf.mxu0
  %v1872 = vadd.f32 %v1469, %v1871
  %v1873 = vpop.f32.mrf.mxu0
  %v1874 = vadd.f32 %v1473, %v1873
  %1875 = vdwg.mxu0
  %1876 = vmatprep.subr.bf16.mxu0 0
  %1877 = vmatpush1.bf16.msra.mxu0 0
  %1878 = vmatprep.subr.bf16.mxu0 0
  %1879 = vmatpush1.bf16.msra.mxu0 0
  %1880 = vmatprep.subr.bf16.mxu0 0
  %1881 = vmatpush1.bf16.msra.mxu0 0
  %1882 = vmatprep.subr.bf16.mxu0 0
  %1883 = vmatpush1.bf16.msra.mxu0 0
  %1884 = vmatprep.subr.bf16.mxu0 %v1727
  %1885 = vmatpush1.bf16.msra.mxu0 %v1726
  %1886 = vmatprep.subr.bf16.mxu0 %v1714
  %1887 = vmatpush1.bf16.msra.mxu0 %v1713
  %1888 = vmatprep.subr.bf16.mxu0 %v1701
  %1889 = vmatpush1.bf16.msra.mxu0 %v1700
  %1890 = vmatprep.subr.bf16.mxu0 %v1688
  %1891 = vmatpush1.bf16.msra.mxu0 %v1687
  %1892 = vmatprep.subr.bf16.mxu0 0
  %1893 = vmatpush2.bf16.msra.mxu0 0
  %1894 = vmatprep.subr.bf16.mxu0 0
  %1895 = vmatpush2.bf16.msra.mxu0 0
  %1896 = vmatprep.subr.bf16.mxu0 0
  %1897 = vmatpush2.bf16.msra.mxu0 0
  %1898 = vmatprep.subr.bf16.mxu0 0
  %1899 = vmatpush2.bf16.msra.mxu0 0
  %1900 = vmatprep.subr.bf16.mxu0 0
  %1901 = vmatpush2.bf16.msra.mxu0 0
  %1902 = vmatprep.subr.bf16.mxu0 0
  %1903 = vmatpush2.bf16.msra.mxu0 0
  %1904 = vmatprep.subr.bf16.mxu0 0
  %1905 = vmatpush2.bf16.msra.mxu0 0
  %1906 = vmatprep.subr.bf16.mxu0 0
  %1907 = vmatpush2.bf16.msra.mxu0 0
  %1908 = vmatprep.mubr.bf16.mxu0 0
  %1909 = vmatmul.mubr.bf16.gmra.mxu0 %v1788
  %v1910 = vpop.f32.mrf.mxu0
  %v1911 = vadd.f32 %v1477, %v1910
  %v1912 = vpop.f32.mrf.mxu0
  %v1913 = vadd.f32 %v1481, %v1912
  %v1914 = vpop.f32.mrf.mxu0
  %v1915 = vadd.f32 %v1477, %v1914
  %v1916 = vpop.f32.mrf.mxu0
  %v1917 = vadd.f32 %v1481, %v1916
  %1918 = vdwg.mxu0
  %1919 = vmatprep.subr.bf16.mxu0 0
  %1920 = vmatpush1.bf16.msra.mxu0 0
  %1921 = vmatprep.subr.bf16.mxu0 0
  %1922 = vmatpush1.bf16.msra.mxu0 0
  %1923 = vmatprep.subr.bf16.mxu0 0
  %1924 = vmatpush1.bf16.msra.mxu0 0
  %1925 = vmatprep.subr.bf16.mxu0 0
  %1926 = vmatpush1.bf16.msra.mxu0 0
  %1927 = vmatprep.subr.bf16.mxu0 %v1729
  %1928 = vmatpush1.bf16.msra.mxu0 %v1728
  %1929 = vmatprep.subr.bf16.mxu0 %v1716
  %1930 = vmatpush1.bf16.msra.mxu0 %v1715
  %1931 = vmatprep.subr.bf16.mxu0 %v1703
  %1932 = vmatpush1.bf16.msra.mxu0 %v1702
  %1933 = vmatprep.subr.bf16.mxu0 %v1690
  %1934 = vmatpush1.bf16.msra.mxu0 %v1689
  %1935 = vmatprep.subr.bf16.mxu0 0
  %1936 = vmatpush2.bf16.msra.mxu0 0
  %1937 = vmatprep.subr.bf16.mxu0 0
  %1938 = vmatpush2.bf16.msra.mxu0 0
  %1939 = vmatprep.subr.bf16.mxu0 0
  %1940 = vmatpush2.bf16.msra.mxu0 0
  %1941 = vmatprep.subr.bf16.mxu0 0
  %1942 = vmatpush2.bf16.msra.mxu0 0
  %1943 = vmatprep.subr.bf16.mxu0 0
  %1944 = vmatpush2.bf16.msra.mxu0 0
  %1945 = vmatprep.subr.bf16.mxu0 0
  %1946 = vmatpush2.bf16.msra.mxu0 0
  %1947 = vmatprep.subr.bf16.mxu0 0
  %1948 = vmatpush2.bf16.msra.mxu0 0
  %1949 = vmatprep.subr.bf16.mxu0 0
  %1950 = vmatpush2.bf16.msra.mxu0 0
  %1951 = vmatprep.mubr.bf16.mxu0 0
  %1952 = vmatmul.mubr.bf16.gmra.mxu0 %v1788
  %v1953 = vpop.f32.mrf.mxu0
  %v1954 = vadd.f32 %v1485, %v1953
  %v1955 = vpop.f32.mrf.mxu0
  %v1956 = vadd.f32 %v1489, %v1955
  %v1957 = vpop.f32.mrf.mxu0
  %v1958 = vadd.f32 %v1485, %v1957
  %v1959 = vpop.f32.mrf.mxu0
  %v1960 = vadd.f32 %v1489, %v1959
  %1961 = vdwg.mxu0
  %1962 = vmatprep.subr.bf16.mxu0 0
  %1963 = vmatpush1.bf16.msra.mxu0 0
  %1964 = vmatprep.subr.bf16.mxu0 0
  %1965 = vmatpush1.bf16.msra.mxu0 0
  %1966 = vmatprep.subr.bf16.mxu0 0
  %1967 = vmatpush1.bf16.msra.mxu0 0
  %1968 = vmatprep.subr.bf16.mxu0 0
  %1969 = vmatpush1.bf16.msra.mxu0 0
  %1970 = vmatprep.subr.bf16.mxu0 %v1731
  %1971 = vmatpush1.bf16.msra.mxu0 %v1730
  %1972 = vmatprep.subr.bf16.mxu0 %v1718
  %1973 = vmatpush1.bf16.msra.mxu0 %v1717
  %1974 = vmatprep.subr.bf16.mxu0 %v1705
  %1975 = vmatpush1.bf16.msra.mxu0 %v1704
  %1976 = vmatprep.subr.bf16.mxu0 %v1692
  %1977 = vmatpush1.bf16.msra.mxu0 %v1691
  %1978 = vmatprep.subr.bf16.mxu0 0
  %1979 = vmatpush2.bf16.msra.mxu0 0
  %1980 = vmatprep.subr.bf16.mxu0 0
  %1981 = vmatpush2.bf16.msra.mxu0 0
  %1982 = vmatprep.subr.bf16.mxu0 0
  %1983 = vmatpush2.bf16.msra.mxu0 0
  %1984 = vmatprep.subr.bf16.mxu0 0
  %1985 = vmatpush2.bf16.msra.mxu0 0
  %1986 = vmatprep.subr.bf16.mxu0 0
  %1987 = vmatpush2.bf16.msra.mxu0 0
  %1988 = vmatprep.subr.bf16.mxu0 0
  %1989 = vmatpush2.bf16.msra.mxu0 0
  %1990 = vmatprep.subr.bf16.mxu0 0
  %1991 = vmatpush2.bf16.msra.mxu0 0
  %1992 = vmatprep.subr.bf16.mxu0 0
  %1993 = vmatpush2.bf16.msra.mxu0 0
  %1994 = vmatprep.mubr.bf16.mxu0 0
  %1995 = vmatmul.mubr.bf16.gmra.mxu0 %v1788
  %v1996 = vpop.f32.mrf.mxu0
  %v1997 = vadd.f32 %v1493, %v1996
  %v1998 = vpop.f32.mrf.mxu0
  %v1999 = vadd.f32 %v1497, %v1998
  %v2000 = vpop.f32.mrf.mxu0
  %v2001 = vadd.f32 %v1493, %v2000
  %v2002 = vpop.f32.mrf.mxu0
  %v2003 = vadd.f32 %v1497, %v2002
  %2004 = vdwg.mxu0
  %2005 = vmatprep.subr.bf16.mxu0 0
  %2006 = vmatpush1.bf16.msra.mxu0 0
  %2007 = vmatprep.subr.bf16.mxu0 0
  %2008 = vmatpush1.bf16.msra.mxu0 0
  %2009 = vmatprep.subr.bf16.mxu0 0
  %2010 = vmatpush1.bf16.msra.mxu0 0
  %2011 = vmatprep.subr.bf16.mxu0 0
  %2012 = vmatpush1.bf16.msra.mxu0 0
  %2013 = vmatprep.subr.bf16.mxu0 %v1733
  %2014 = vmatpush1.bf16.msra.mxu0 %v1732
  %2015 = vmatprep.subr.bf16.mxu0 %v1720
  %2016 = vmatpush1.bf16.msra.mxu0 %v1719
  %2017 = vmatprep.subr.bf16.mxu0 %v1707
  %2018 = vmatpush1.bf16.msra.mxu0 %v1706
  %2019 = vmatprep.subr.bf16.mxu0 %v1694
  %2020 = vmatpush1.bf16.msra.mxu0 %v1693
  %2021 = vmatprep.subr.bf16.mxu0 0
  %2022 = vmatpush2.bf16.msra.mxu0 0
  %2023 = vmatprep.subr.bf16.mxu0 0
  %2024 = vmatpush2.bf16.msra.mxu0 0
  %2025 = vmatprep.subr.bf16.mxu0 0
  %2026 = vmatpush2.bf16.msra.mxu0 0
  %2027 = vmatprep.subr.bf16.mxu0 0
  %2028 = vmatpush2.bf16.msra.mxu0 0
  %2029 = vmatprep.subr.bf16.mxu0 0
  %2030 = vmatpush2.bf16.msra.mxu0 0
  %2031 = vmatprep.subr.bf16.mxu0 0
  %2032 = vmatpush2.bf16.msra.mxu0 0
  %2033 = vmatprep.subr.bf16.mxu0 0
  %2034 = vmatpush2.bf16.msra.mxu0 0
  %2035 = vmatprep.subr.bf16.mxu0 0
  %2036 = vmatpush2.bf16.msra.mxu0 0
  %2037 = vmatprep.mubr.bf16.mxu0 0
  %2038 = vmatmul.mubr.bf16.gmra.mxu0 %v1788
  %v2039 = vpop.f32.mrf.mxu0
  %v2040 = vadd.f32 %v1501, %v2039
  %v2041 = vpop.f32.mrf.mxu0
  %v2042 = vadd.f32 %v1505, %v2041
  %v2043 = vpop.f32.mrf.mxu0
  %v2044 = vadd.f32 %v1501, %v2043
  %v2045 = vpop.f32.mrf.mxu0
  %v2046 = vadd.f32 %v1505, %v2045
  %2047 = vdwg.mxu0
  %2048 = vmatprep.subr.bf16.mxu0 0
  %2049 = vmatpush1.bf16.msra.mxu0 0
  %2050 = vmatprep.subr.bf16.mxu0 0
  %2051 = vmatpush1.bf16.msra.mxu0 0
  %2052 = vmatprep.subr.bf16.mxu0 0
  %2053 = vmatpush1.bf16.msra.mxu0 0
  %2054 = vmatprep.subr.bf16.mxu0 0
  %2055 = vmatpush1.bf16.msra.mxu0 0
  %2056 = vmatprep.subr.bf16.mxu0 0
  %2057 = vmatpush1.bf16.msra.mxu0 %v1734
  %2058 = vmatprep.subr.bf16.mxu0 0
  %2059 = vmatpush1.bf16.msra.mxu0 %v1721
  %2060 = vmatprep.subr.bf16.mxu0 0
  %2061 = vmatpush1.bf16.msra.mxu0 %v1708
  %2062 = vmatprep.subr.bf16.mxu0 0
  %2063 = vmatpush1.bf16.msra.mxu0 %v1695
  %2064 = vmatprep.subr.bf16.mxu0 0
  %2065 = vmatpush2.bf16.msra.mxu0 0
  %2066 = vmatprep.subr.bf16.mxu0 0
  %2067 = vmatpush2.bf16.msra.mxu0 0
  %2068 = vmatprep.subr.bf16.mxu0 0
  %2069 = vmatpush2.bf16.msra.mxu0 0
  %2070 = vmatprep.subr.bf16.mxu0 0
  %2071 = vmatpush2.bf16.msra.mxu0 0
  %2072 = vmatprep.subr.bf16.mxu0 0
  %2073 = vmatpush2.bf16.msra.mxu0 0
  %2074 = vmatprep.subr.bf16.mxu0 0
  %2075 = vmatpush2.bf16.msra.mxu0 0
  %2076 = vmatprep.subr.bf16.mxu0 0
  %2077 = vmatpush2.bf16.msra.mxu0 0
  %2078 = vmatprep.subr.bf16.mxu0 0
  %2079 = vmatpush2.bf16.msra.mxu0 0
  %2080 = vmatprep.mubr.bf16.mxu0 0
  %2081 = vmatmul.mubr.bf16.gmra.mxu0 %v1788
  %v2082 = vpop.f32.mrf.mxu0
  %v2083 = vadd.f32 %v1509, %v2082
  %v2084 = vpop.f32.mrf.mxu0
  %v2085 = vpop.f32.mrf.mxu0
  %v2086 = vadd.f32 %v1509, %v2085
  %v2087 = vpop.f32.mrf.mxu0
  %2088 = vdwg.mxu0
  %v2089 = vmax.f32 %v1825, 0.0
  %v2090 = vmax.f32 %v1827, 0.0
  %v2091 = vmax.f32 %v1868, 0.0
  %v2092 = vmax.f32 %v1870, 0.0
  %v2093 = vmax.f32 %v1911, 0.0
  %v2094 = vmax.f32 %v1913, 0.0
  %v2095 = vmax.f32 %v1954, 0.0
  %v2096 = vmax.f32 %v1956, 0.0
  %v2097 = vmax.f32 %v1997, 0.0
  %v2098 = vmax.f32 %v1999, 0.0
  %v2099 = vmax.f32 %v2040, 0.0
  %v2100 = vmax.f32 %v2042, 0.0
  %v2101 = vmax.f32 %v2083, 0.0
  %v2102 = vmax.f32 %v1829, 0.0
  %v2103 = vmax.f32 %v1831, 0.0
  %v2104 = vmax.f32 %v1872, 0.0
  %v2105 = vmax.f32 %v1874, 0.0
  %v2106 = vmax.f32 %v1915, 0.0
  %v2107 = vmax.f32 %v1917, 0.0
  %v2108 = vmax.f32 %v1958, 0.0
  %v2109 = vmax.f32 %v1960, 0.0
  %v2110 = vmax.f32 %v2001, 0.0
  %v2111 = vmax.f32 %v2003, 0.0
  %v2112 = vmax.f32 %v2044, 0.0
  %v2113 = vmax.f32 %v2046, 0.0
  %v2114 = vmax.f32 %v2086, 0.0
  %v2115 = vpack.c.bf16 %v2102, %v2089
  %v2116 = vpack.c.bf16 %v2103, %v2090
  %v2117 = vpack.c.bf16 %v2104, %v2091
  %v2118 = vpack.c.bf16 %v2105, %v2092
  %v2119 = vpack.c.bf16 %v2106, %v2093
  %v2120 = vpack.c.bf16 %v2107, %v2094
  %v2121 = vpack.c.bf16 %v2108, %v2095
  %v2122 = vpack.c.bf16 %v2109, %v2096
  %v2123 = vpack.c.bf16 %v2110, %v2097
  %v2124 = vpack.c.bf16 %v2111, %v2098
  %v2125 = vpack.c.bf16 %v2112, %v2099
  %v2126 = vpack.c.bf16 %v2113, %v2100
  %v2127 = vpack.c.bf16 %v2114, %v2101
  %v2128 = vld [vmem:[%s9] sm:$0xff]
  %v2129 = vld [vmem:[%s9 + $0x8] sm:$0xff]
  %v2130 = vld [vmem:[%s9 + $0x10] sm:$0xff]
  %v2131 = vld [vmem:[%s9 + $0x18] sm:$0xf]
  %v2132 = vld [vmem:[%s9 + $0x1c] sm:$0xff]
  %v2133 = vld [vmem:[%s9 + $0x24] sm:$0xff]
  %v2134 = vld [vmem:[%s9 + $0x2c] sm:$0xff]
  %v2135 = vld [vmem:[%s9 + $0x34] sm:$0xf]
  %v2136 = vld [vmem:[%s9 + $0x38] sm:$0xff]
  %v2137 = vld [vmem:[%s9 + $0x40] sm:$0xff]
  %v2138 = vld [vmem:[%s9 + $0x48] sm:$0xff]
  %v2139 = vld [vmem:[%s9 + $0x50] sm:$0xf]
  %v2140 = vld [vmem:[%s9 + $0x54] sm:$0xff]
  %v2141 = vld [vmem:[%s9 + $0x5c] sm:$0xff]
  %v2142 = vld [vmem:[%s9 + $0x64] sm:$0xff]
  %v2143 = vld [vmem:[%s9 + $0x6c] sm:$0xf]
  %v2144 = vld [vmem:[%s9 + $0x70] sm:$0xff]
  %v2145 = vld [vmem:[%s9 + $0x78] sm:$0xff]
  %v2146 = vld [vmem:[%s9 + $0x80] sm:$0xff]
  %v2147 = vld [vmem:[%s9 + $0x88] sm:$0xf]
  %v2148 = vld [vmem:[%s9 + $0x8c] sm:$0xff]
  %v2149 = vld [vmem:[%s9 + $0x94] sm:$0xff]
  %v2150 = vld [vmem:[%s9 + $0x9c] sm:$0xff]
  %v2151 = vld [vmem:[%s9 + $0xa4] sm:$0xf]
  %v2152 = vld [vmem:[%s9 + $0xa8] sm:$0xff]
  %v2153 = vld [vmem:[%s9 + $0xb0] sm:$0xff]
  %v2154 = vld [vmem:[%s9 + $0xb8] sm:$0xff]
  %v2155 = vld [vmem:[%s9 + $0xc0] sm:$0xf]
  %v2156 = vld [vmem:[%s9 + $0xc4] sm:$0xff]
  %v2157 = vld [vmem:[%s9 + $0xcc] sm:$0xff]
  %v2158 = vld [vmem:[%s9 + $0xd4] sm:$0xff]
  %v2159 = vld [vmem:[%s9 + $0xdc] sm:$0xf]
  %v2160 = vld [vmem:[%s9 + $0xe0] sm:$0xff]
  %v2161 = vld [vmem:[%s9 + $0xe8] sm:$0xff]
  %v2162 = vld [vmem:[%s9 + $0xf0] sm:$0xff]
  %v2163 = vld [vmem:[%s9 + $0xf8] sm:$0xf]
  %v2164 = vld [vmem:[%s9 + $0xfc] sm:$0xff]
  %v2165 = vld [vmem:[%s9 + $0x104] sm:$0xff]
  %v2166 = vld [vmem:[%s9 + $0x10c] sm:$0xff]
  %v2167 = vld [vmem:[%s9 + $0x114] sm:$0xf]
  %v2168 = vld [vmem:[%s9 + $0x118] sm:$0xff]
  %v2169 = vld [vmem:[%s9 + $0x120] sm:$0xff]
  %v2170 = vld [vmem:[%s9 + $0x128] sm:$0xff]
  %v2171 = vld [vmem:[%s9 + $0x130] sm:$0xf]
  %v2172 = vld [vmem:[%s9 + $0x134] sm:$0xff]
  %v2173 = vld [vmem:[%s9 + $0x13c] sm:$0xff]
  %v2174 = vld [vmem:[%s9 + $0x144] sm:$0xff]
  %v2175 = vld [vmem:[%s9 + $0x14c] sm:$0xf]
  %v2176 = vld [vmem:[%s9 + $0x150] sm:$0xff]
  %v2177 = vld [vmem:[%s9 + $0x158] sm:$0xff]
  %v2178 = vld [vmem:[%s9 + $0x160] sm:$0xff]
  %v2179 = vld [vmem:[%s9 + $0x168] sm:$0xf]
  %v2180 = vld [vmem:[%s9 + $0x16c] sm:$0xff]
  %v2181 = vld [vmem:[%s9 + $0x174] sm:$0xff]
  %v2182 = vld [vmem:[%s9 + $0x17c] sm:$0xff]
  %v2183 = vld [vmem:[%s9 + $0x184] sm:$0xf]
  %v2184 = vld [vmem:[%s9 + $0x188] sm:$0xff]
  %v2185 = vld [vmem:[%s9 + $0x190] sm:$0xff]
  %v2186 = vld [vmem:[%s9 + $0x198] sm:$0xff]
  %v2187 = vld [vmem:[%s9 + $0x1a0] sm:$0xf]
  %v2188 = vld [vmem:[%s9 + $0x1a4] sm:$0xff]
  %v2189 = vld [vmem:[%s9 + $0x1ac] sm:$0xff]
  %v2190 = vld [vmem:[%s9 + $0x1b4] sm:$0xff]
  %v2191 = vld [vmem:[%s9 + $0x1bc] sm:$0xf]
  %v2192 = vld [vmem:[%s9 + $0x1c0] sm:$0xff]
  %v2193 = vld [vmem:[%s9 + $0x1c8] sm:$0xff]
  %v2194 = vld [vmem:[%s9 + $0x1d0] sm:$0xff]
  %v2195 = vld [vmem:[%s9 + $0x1d8] sm:$0xf]
  %v2196 = vld [vmem:[%s9 + $0x1dc] sm:$0xff]
  %v2197 = vld [vmem:[%s9 + $0x1e4] sm:$0xff]
  %v2198 = vld [vmem:[%s9 + $0x1ec] sm:$0xff]
  %v2199 = vld [vmem:[%s9 + $0x1f4] sm:$0xf]
  %v2200 = vld [vmem:[%s9 + $0x1f8] sm:$0xff]
  %v2201 = vld [vmem:[%s9 + $0x200] sm:$0xff]
  %v2202 = vld [vmem:[%s9 + $0x208] sm:$0xff]
  %v2203 = vld [vmem:[%s9 + $0x210] sm:$0xf]
  %v2204 = vld [vmem:[%s9 + $0x214] sm:$0xff]
  %v2205 = vld [vmem:[%s9 + $0x21c] sm:$0xff]
  %v2206 = vld [vmem:[%s9 + $0x224] sm:$0xff]
  %v2207 = vld [vmem:[%s9 + $0x22c] sm:$0xf]
  %v2208 = vld [vmem:[%s9 + $0x230] sm:$0xff]
  %v2209 = vld [vmem:[%s9 + $0x238] sm:$0xff]
  %v2210 = vld [vmem:[%s9 + $0x240] sm:$0xff]
  %v2211 = vld [vmem:[%s9 + $0x248] sm:$0xf]
  %v2212 = vld [vmem:[%s9 + $0x24c] sm:$0xff]
  %v2213 = vld [vmem:[%s9 + $0x254] sm:$0xff]
  %v2214 = vld [vmem:[%s9 + $0x25c] sm:$0xff]
  %v2215 = vld [vmem:[%s9 + $0x264] sm:$0xf]
  %v2216 = vld [vmem:[%s9 + $0x268] sm:$0xff]
  %v2217 = vld [vmem:[%s9 + $0x270] sm:$0xff]
  %v2218 = vld [vmem:[%s9 + $0x278] sm:$0xff]
  %v2219 = vld [vmem:[%s9 + $0x280] sm:$0xf]
  %v2220 = vld [vmem:[%s9 + $0x284] sm:$0xff]
  %v2221 = vld [vmem:[%s9 + $0x28c] sm:$0xff]
  %v2222 = vld [vmem:[%s9 + $0x294] sm:$0xff]
  %v2223 = vld [vmem:[%s9 + $0x29c] sm:$0xf]
  %v2224 = vld [vmem:[%s9 + $0x2a0] sm:$0xff]
  %v2225 = vld [vmem:[%s9 + $0x2a8] sm:$0xff]
  %v2226 = vld [vmem:[%s9 + $0x2b0] sm:$0xff]
  %v2227 = vld [vmem:[%s9 + $0x2b8] sm:$0xf]
  %v2228 = vld [vmem:[%s9 + $0x2bc] sm:$0xff]
  %v2229 = vld [vmem:[%s9 + $0x2c4] sm:$0xff]
  %v2230 = vld [vmem:[%s9 + $0x2cc] sm:$0xff]
  %v2231 = vld [vmem:[%s9 + $0x2d4] sm:$0xf]
  %v2232 = vld [vmem:[%s9 + $0x2d8] sm:$0xff]
  %v2233 = vld [vmem:[%s9 + $0x2e0] sm:$0xff]
  %v2234 = vld [vmem:[%s9 + $0x2e8] sm:$0xff]
  %v2235 = vld [vmem:[%s9 + $0x2f0] sm:$0xf]
  %v2236 = vld [vmem:[%s9 + $0x2f4] sm:$0xff]
  %v2237 = vld [vmem:[%s9 + $0x2fc] sm:$0xff]
  %v2238 = vld [vmem:[%s9 + $0x304] sm:$0xff]
  %v2239 = vld [vmem:[%s9 + $0x30c] sm:$0xf]
  %v2240 = vld [vmem:[%s9 + $0x310] sm:$0xff]
  %v2241 = vld [vmem:[%s9 + $0x318] sm:$0xff]
  %v2242 = vld [vmem:[%s9 + $0x320] sm:$0xff]
  %v2243 = vld [vmem:[%s9 + $0x328] sm:$0xf]
  %v2244 = vld [vmem:[%s9 + $0x32c] sm:$0xff]
  %v2245 = vld [vmem:[%s9 + $0x334] sm:$0xff]
  %v2246 = vld [vmem:[%s9 + $0x33c] sm:$0xff]
  %v2247 = vld [vmem:[%s9 + $0x344] sm:$0xf]
  %v2248 = vld [vmem:[%s9 + $0x348] sm:$0xff]
  %v2249 = vld [vmem:[%s9 + $0x350] sm:$0xff]
  %v2250 = vld [vmem:[%s9 + $0x358] sm:$0xff]
  %v2251 = vld [vmem:[%s9 + $0x360] sm:$0xf]
  %v2252 = vld [vmem:[%s9 + $0x364] sm:$0xff]
  %v2253 = vld [vmem:[%s9 + $0x36c] sm:$0xff]
  %v2254 = vld [vmem:[%s9 + $0x374] sm:$0xff]
  %v2255 = vld [vmem:[%s9 + $0x37c] sm:$0xf]
  %v2256 = vld [vmem:[%s9 + $0x380] sm:$0xff]
  %v2257 = vld [vmem:[%s9 + $0x388] sm:$0xff]
  %v2258 = vld [vmem:[%s9 + $0x390] sm:$0xff]
  %v2259 = vld [vmem:[%s9 + $0x398] sm:$0xf]
  %v2260 = vld [vmem:[%s9 + $0x39c] sm:$0xff]
  %v2261 = vld [vmem:[%s9 + $0x3a4] sm:$0xff]
  %v2262 = vld [vmem:[%s9 + $0x3ac] sm:$0xff]
  %v2263 = vld [vmem:[%s9 + $0x3b4] sm:$0xf]
  %v2264 = vld [vmem:[%s9 + $0x3b8] sm:$0xff]
  %v2265 = vld [vmem:[%s9 + $0x3c0] sm:$0xff]
  %v2266 = vld [vmem:[%s9 + $0x3c8] sm:$0xff]
  %v2267 = vld [vmem:[%s9 + $0x3d0] sm:$0xf]
  %v2268 = vld [vmem:[%s9 + $0x3d4] sm:$0xff]
  %v2269 = vld [vmem:[%s9 + $0x3dc] sm:$0xff]
  %v2270 = vld [vmem:[%s9 + $0x3e4] sm:$0xff]
  %v2271 = vld [vmem:[%s9 + $0x3ec] sm:$0xf]
  %v2272 = vld [vmem:[%s9 + $0x3f0] sm:$0xff]
  %v2273 = vld [vmem:[%s9 + $0x3f8] sm:$0xff]
  %v2274 = vld [vmem:[%s9 + $0x400] sm:$0xff]
  %v2275 = vld [vmem:[%s9 + $0x408] sm:$0xf]
  %v2276 = vld [vmem:[%s9 + $0x40c] sm:$0xff]
  %v2277 = vld [vmem:[%s9 + $0x414] sm:$0xff]
  %v2278 = vld [vmem:[%s9 + $0x41c] sm:$0xff]
  %v2279 = vld [vmem:[%s9 + $0x424] sm:$0xf]
  %v2280 = vld [vmem:[%s9 + $0x428] sm:$0xff]
  %v2281 = vld [vmem:[%s9 + $0x430] sm:$0xff]
  %v2282 = vld [vmem:[%s9 + $0x438] sm:$0xff]
  %v2283 = vld [vmem:[%s9 + $0x440] sm:$0xf]
  %v2284 = vld [vmem:[%s9 + $0x444] sm:$0xff]
  %v2285 = vld [vmem:[%s9 + $0x44c] sm:$0xff]
  %v2286 = vld [vmem:[%s9 + $0x454] sm:$0xff]
  %v2287 = vld [vmem:[%s9 + $0x45c] sm:$0xf]
  %v2288 = vld [vmem:[%s9 + $0x460] sm:$0xff]
  %v2289 = vld [vmem:[%s9 + $0x468] sm:$0xff]
  %v2290 = vld [vmem:[%s9 + $0x470] sm:$0xff]
  %v2291 = vld [vmem:[%s9 + $0x478] sm:$0xf]
  %v2292 = vld [vmem:[%s9 + $0x47c] sm:$0xff]
  %v2293 = vld [vmem:[%s9 + $0x484] sm:$0xff]
  %v2294 = vld [vmem:[%s9 + $0x48c] sm:$0xff]
  %v2295 = vld [vmem:[%s9 + $0x494] sm:$0xf]
  %v2296 = vld [vmem:[%s9 + $0x498] sm:$0xff]
  %v2297 = vld [vmem:[%s9 + $0x4a0] sm:$0xff]
  %v2298 = vld [vmem:[%s9 + $0x4a8] sm:$0xff]
  %v2299 = vld [vmem:[%s9 + $0x4b0] sm:$0xf]
  %v2300 = vld [vmem:[%s9 + $0x4b4] sm:$0xff]
  %v2301 = vld [vmem:[%s9 + $0x4bc] sm:$0xff]
  %v2302 = vld [vmem:[%s9 + $0x4c4] sm:$0xff]
  %v2303 = vld [vmem:[%s9 + $0x4cc] sm:$0xf]
  %v2304 = vld [vmem:[%s9 + $0x4d0] sm:$0xff]
  %v2305 = vld [vmem:[%s9 + $0x4d8] sm:$0xff]
  %v2306 = vld [vmem:[%s9 + $0x4e0] sm:$0xff]
  %v2307 = vld [vmem:[%s9 + $0x4e8] sm:$0xf]
  %v2308 = vld [vmem:[%s9 + $0x4ec] sm:$0xff]
  %v2309 = vld [vmem:[%s9 + $0x4f4] sm:$0xff]
  %v2310 = vld [vmem:[%s9 + $0x4fc] sm:$0xff]
  %v2311 = vld [vmem:[%s9 + $0x504] sm:$0xf]
  %v2312 = vld [vmem:[%s9 + $0x508] sm:$0xff]
  %v2313 = vld [vmem:[%s9 + $0x510] sm:$0xff]
  %v2314 = vld [vmem:[%s9 + $0x518] sm:$0xff]
  %v2315 = vld [vmem:[%s9 + $0x520] sm:$0xf]
  %v2316 = vld [vmem:[%s9 + $0x524] sm:$0xff]
  %v2317 = vld [vmem:[%s9 + $0x52c] sm:$0xff]
  %v2318 = vld [vmem:[%s9 + $0x534] sm:$0xff]
  %v2319 = vld [vmem:[%s9 + $0x53c] sm:$0xf]
  %v2320 = vld [vmem:[%s9 + $0x540] sm:$0xff]
  %v2321 = vld [vmem:[%s9 + $0x548] sm:$0xff]
  %v2322 = vld [vmem:[%s9 + $0x550] sm:$0xff]
  %v2323 = vld [vmem:[%s9 + $0x558] sm:$0xf]
  %v2324 = vld [vmem:[%s9 + $0x55c] sm:$0xff]
  %v2325 = vld [vmem:[%s9 + $0x564] sm:$0xff]
  %v2326 = vld [vmem:[%s9 + $0x56c] sm:$0xff]
  %v2327 = vld [vmem:[%s9 + $0x574] sm:$0xf]
  %v2328 = vld [vmem:[%s9 + $0x578] sm:$0xff]
  %v2329 = vld [vmem:[%s9 + $0x580] sm:$0xff]
  %v2330 = vld [vmem:[%s9 + $0x588] sm:$0xff]
  %v2331 = vld [vmem:[%s9 + $0x590] sm:$0xf]
  %v2332 = vld [vmem:[%s9 + $0x594] sm:$0xff]
  %v2333 = vld [vmem:[%s9 + $0x59c] sm:$0xff]
  %v2334 = vld [vmem:[%s9 + $0x5a4] sm:$0xff]
  %v2335 = vld [vmem:[%s9 + $0x5ac] sm:$0xf]
  %v2336 = vld [vmem:[%s9 + $0x5b0] sm:$0xff]
  %v2337 = vld [vmem:[%s9 + $0x5b8] sm:$0xff]
  %v2338 = vld [vmem:[%s9 + $0x5c0] sm:$0xff]
  %v2339 = vld [vmem:[%s9 + $0x5c8] sm:$0xf]
  %v2340 = vld [vmem:[%s9 + $0x5cc] sm:$0xff]
  %v2341 = vld [vmem:[%s9 + $0x5d4] sm:$0xff]
  %v2342 = vld [vmem:[%s9 + $0x5dc] sm:$0xff]
  %v2343 = vld [vmem:[%s9 + $0x5e4] sm:$0xf]
  %v2344 = vld [vmem:[%s9 + $0x5e8] sm:$0xff]
  %v2345 = vld [vmem:[%s9 + $0x5f0] sm:$0xff]
  %v2346 = vld [vmem:[%s9 + $0x5f8] sm:$0xff]
  %v2347 = vld [vmem:[%s9 + $0x600] sm:$0xf]
  %v2348 = vld [vmem:[%s9 + $0x604] sm:$0xff]
  %v2349 = vld [vmem:[%s9 + $0x60c] sm:$0xff]
  %v2350 = vld [vmem:[%s9 + $0x614] sm:$0xff]
  %v2351 = vld [vmem:[%s9 + $0x61c] sm:$0xf]
  %v2352 = vld [vmem:[%s9 + $0x620] sm:$0xff]
  %v2353 = vld [vmem:[%s9 + $0x628] sm:$0xff]
  %v2354 = vld [vmem:[%s9 + $0x630] sm:$0xff]
  %v2355 = vld [vmem:[%s9 + $0x638] sm:$0xf]
  %v2356 = vld [vmem:[%s9 + $0x63c] sm:$0xff]
  %v2357 = vld [vmem:[%s9 + $0x644] sm:$0xff]
  %v2358 = vld [vmem:[%s9 + $0x64c] sm:$0xff]
  %v2359 = vld [vmem:[%s9 + $0x654] sm:$0xf]
  %v2360 = vld [vmem:[%s9 + $0x658] sm:$0xff]
  %v2361 = vld [vmem:[%s9 + $0x660] sm:$0xff]
  %v2362 = vld [vmem:[%s9 + $0x668] sm:$0xff]
  %v2363 = vld [vmem:[%s9 + $0x670] sm:$0xf]
  %v2364 = vld [vmem:[%s9 + $0x674] sm:$0xff]
  %v2365 = vld [vmem:[%s9 + $0x67c] sm:$0xff]
  %v2366 = vld [vmem:[%s9 + $0x684] sm:$0xff]
  %v2367 = vld [vmem:[%s9 + $0x68c] sm:$0xf]
  %v2368 = vld [vmem:[%s9 + $0x690] sm:$0xff]
  %v2369 = vld [vmem:[%s9 + $0x698] sm:$0xff]
  %v2370 = vld [vmem:[%s9 + $0x6a0] sm:$0xff]
  %v2371 = vld [vmem:[%s9 + $0x6a8] sm:$0xf]
  %v2372 = vld [vmem:[%s9 + $0x6ac] sm:$0xff]
  %v2373 = vld [vmem:[%s9 + $0x6b4] sm:$0xff]
  %v2374 = vld [vmem:[%s9 + $0x6bc] sm:$0xff]
  %v2375 = vld [vmem:[%s9 + $0x6c4] sm:$0xf]
  %v2376 = vld [vmem:[%s9 + $0x6c8] sm:$0xff]
  %v2377 = vld [vmem:[%s9 + $0x6d0] sm:$0xff]
  %v2378 = vld [vmem:[%s9 + $0x6d8] sm:$0xff]
  %v2379 = vld [vmem:[%s9 + $0x6e0] sm:$0xf]
  %v2380 = vld [vmem:[%s9 + $0x6e4] sm:$0xff]
  %v2381 = vld [vmem:[%s9 + $0x6ec] sm:$0xff]
  %v2382 = vld [vmem:[%s9 + $0x6f4] sm:$0xff]
  %v2383 = vld [vmem:[%s9 + $0x6fc] sm:$0xf]
  %v2384 = vld [vmem:[%s9 + $0x700] sm:$0xff]
  %v2385 = vld [vmem:[%s9 + $0x708] sm:$0xff]
  %v2386 = vld [vmem:[%s9 + $0x710] sm:$0xff]
  %v2387 = vld [vmem:[%s9 + $0x718] sm:$0xf]
  %v2388 = vld [vmem:[%s9 + $0x71c] sm:$0xff]
  %v2389 = vld [vmem:[%s9 + $0x724] sm:$0xff]
  %v2390 = vld [vmem:[%s9 + $0x72c] sm:$0xff]
  %v2391 = vld [vmem:[%s9 + $0x734] sm:$0xf]
  %v2392 = vld [vmem:[%s9 + $0x738] sm:$0xff]
  %v2393 = vld [vmem:[%s9 + $0x740] sm:$0xff]
  %v2394 = vld [vmem:[%s9 + $0x748] sm:$0xff]
  %v2395 = vld [vmem:[%s9 + $0x750] sm:$0xf]
  %v2396 = vld [vmem:[%s9 + $0x754] sm:$0xff]
  %v2397 = vld [vmem:[%s9 + $0x75c] sm:$0xff]
  %v2398 = vld [vmem:[%s9 + $0x764] sm:$0xff]
  %v2399 = vld [vmem:[%s9 + $0x76c] sm:$0xf]
  %v2400 = vld [vmem:[%s9 + $0x770] sm:$0xff]
  %v2401 = vld [vmem:[%s9 + $0x778] sm:$0xff]
  %v2402 = vld [vmem:[%s9 + $0x780] sm:$0xff]
  %v2403 = vld [vmem:[%s9 + $0x788] sm:$0xf]
  %v2404 = vld [vmem:[%s9 + $0x78c] sm:$0xff]
  %v2405 = vld [vmem:[%s9 + $0x794] sm:$0xff]
  %v2406 = vld [vmem:[%s9 + $0x79c] sm:$0xff]
  %v2407 = vld [vmem:[%s9 + $0x7a4] sm:$0xf]
  %v2408 = vld [vmem:[%s9 + $0x7a8] sm:$0xff]
  %v2409 = vld [vmem:[%s9 + $0x7b0] sm:$0xff]
  %v2410 = vld [vmem:[%s9 + $0x7b8] sm:$0xff]
  %v2411 = vld [vmem:[%s9 + $0x7c0] sm:$0xf]
  %v2412 = vld [vmem:[%s9 + $0x7c4] sm:$0xff]
  %v2413 = vld [vmem:[%s9 + $0x7cc] sm:$0xff]
  %v2414 = vld [vmem:[%s9 + $0x7d4] sm:$0xff]
  %v2415 = vld [vmem:[%s9 + $0x7dc] sm:$0xf]
  %v2416 = vld [vmem:[%s9 + $0x7e0] sm:$0xff]
  %v2417 = vld [vmem:[%s9 + $0x7e8] sm:$0xff]
  %v2418 = vld [vmem:[%s9 + $0x7f0] sm:$0xff]
  %v2419 = vld [vmem:[%s9 + $0x7f8] sm:$0xf]
  %v2420 = vld [vmem:[%s9 + $0x7fc] sm:$0xff]
  %v2421 = vld [vmem:[%s9 + $0x804] sm:$0xff]
  %v2422 = vld [vmem:[%s9 + $0x80c] sm:$0xff]
  %v2423 = vld [vmem:[%s9 + $0x814] sm:$0xf]
  %v2424 = vld [vmem:[%s9 + $0x818] sm:$0xff]
  %v2425 = vld [vmem:[%s9 + $0x820] sm:$0xff]
  %v2426 = vld [vmem:[%s9 + $0x828] sm:$0xff]
  %v2427 = vld [vmem:[%s9 + $0x830] sm:$0xf]
  %v2428 = vld [vmem:[%s9 + $0x834] sm:$0xff]
  %v2429 = vld [vmem:[%s9 + $0x83c] sm:$0xff]
  %v2430 = vld [vmem:[%s9 + $0x844] sm:$0xff]
  %v2431 = vld [vmem:[%s9 + $0x84c] sm:$0xf]
  %v2432 = vld [vmem:[%s9 + $0x850] sm:$0xff]
  %v2433 = vld [vmem:[%s9 + $0x858] sm:$0xff]
  %v2434 = vld [vmem:[%s9 + $0x860] sm:$0xff]
  %v2435 = vld [vmem:[%s9 + $0x868] sm:$0xf]
  %v2436 = vld [vmem:[%s9 + $0x86c] sm:$0xff]
  %v2437 = vld [vmem:[%s9 + $0x874] sm:$0xff]
  %v2438 = vld [vmem:[%s9 + $0x87c] sm:$0xff]
  %v2439 = vld [vmem:[%s9 + $0x884] sm:$0xf]
  %v2440 = vld [vmem:[%s9 + $0x888] sm:$0xff]
  %v2441 = vld [vmem:[%s9 + $0x890] sm:$0xff]
  %v2442 = vld [vmem:[%s9 + $0x898] sm:$0xff]
  %v2443 = vld [vmem:[%s9 + $0x8a0] sm:$0xf]
  %v2444 = vld [vmem:[%s9 + $0x8a4] sm:$0xff]
  %v2445 = vld [vmem:[%s9 + $0x8ac] sm:$0xff]
  %v2446 = vld [vmem:[%s9 + $0x8b4] sm:$0xff]
  %v2447 = vld [vmem:[%s9 + $0x8bc] sm:$0xf]
  %v2448 = vld [vmem:[%s9 + $0x8c0] sm:$0xff]
  %v2449 = vld [vmem:[%s9 + $0x8c8] sm:$0xff]
  %v2450 = vld [vmem:[%s9 + $0x8d0] sm:$0xff]
  %v2451 = vld [vmem:[%s9 + $0x8d8] sm:$0xf]
  %v2452 = vld [vmem:[%s9 + $0x8dc] sm:$0xff]
  %v2453 = vld [vmem:[%s9 + $0x8e4] sm:$0xff]
  %v2454 = vld [vmem:[%s9 + $0x8ec] sm:$0xff]
  %v2455 = vld [vmem:[%s9 + $0x8f4] sm:$0xf]
  %v2456 = vld [vmem:[%s9 + $0x8f8] sm:$0xff]
  %v2457 = vld [vmem:[%s9 + $0x900] sm:$0xff]
  %v2458 = vld [vmem:[%s9 + $0x908] sm:$0xff]
  %v2459 = vld [vmem:[%s9 + $0x910] sm:$0xf]
  %v2460 = vld [vmem:[%s9 + $0x914] sm:$0xff]
  %v2461 = vld [vmem:[%s9 + $0x91c] sm:$0xff]
  %v2462 = vld [vmem:[%s9 + $0x924] sm:$0xff]
  %v2463 = vld [vmem:[%s9 + $0x92c] sm:$0xf]
  %v2464 = vld [vmem:[%s9 + $0x930] sm:$0xff]
  %v2465 = vld [vmem:[%s9 + $0x938] sm:$0xff]
  %v2466 = vld [vmem:[%s9 + $0x940] sm:$0xff]
  %v2467 = vld [vmem:[%s9 + $0x948] sm:$0xf]
  %v2468 = vld [vmem:[%s9 + $0x94c] sm:$0xff]
  %v2469 = vld [vmem:[%s9 + $0x954] sm:$0xff]
  %v2470 = vld [vmem:[%s9 + $0x95c] sm:$0xff]
  %v2471 = vld [vmem:[%s9 + $0x964] sm:$0xf]
  %v2472 = vld [vmem:[%s9 + $0x968] sm:$0xff]
  %v2473 = vld [vmem:[%s9 + $0x970] sm:$0xff]
  %v2474 = vld [vmem:[%s9 + $0x978] sm:$0xff]
  %v2475 = vld [vmem:[%s9 + $0x980] sm:$0xf]
  %v2476 = vld [vmem:[%s9 + $0x984] sm:$0xff]
  %v2477 = vld [vmem:[%s9 + $0x98c] sm:$0xff]
  %v2478 = vld [vmem:[%s9 + $0x994] sm:$0xff]
  %v2479 = vld [vmem:[%s9 + $0x99c] sm:$0xf]
  %v2480 = vld [vmem:[%s9 + $0x9a0] sm:$0xff]
  %v2481 = vld [vmem:[%s9 + $0x9a8] sm:$0xff]
  %v2482 = vld [vmem:[%s9 + $0x9b0] sm:$0xff]
  %v2483 = vld [vmem:[%s9 + $0x9b8] sm:$0xf]
  %v2484 = vld [vmem:[%s9 + $0x9bc] sm:$0xff]
  %v2485 = vld [vmem:[%s9 + $0x9c4] sm:$0xff]
  %v2486 = vld [vmem:[%s9 + $0x9cc] sm:$0xff]
  %v2487 = vld [vmem:[%s9 + $0x9d4] sm:$0xf]
  %v2488 = vld [vmem:[%s9 + $0x9d8] sm:$0xff]
  %v2489 = vld [vmem:[%s9 + $0x9e0] sm:$0xff]
  %v2490 = vld [vmem:[%s9 + $0x9e8] sm:$0xff]
  %v2491 = vld [vmem:[%s9 + $0x9f0] sm:$0xf]
  %v2492 = vld [vmem:[%s9 + $0x9f4] sm:$0xff]
  %v2493 = vld [vmem:[%s9 + $0x9fc] sm:$0xff]
  %v2494 = vld [vmem:[%s9 + $0xa04] sm:$0xff]
  %v2495 = vld [vmem:[%s9 + $0xa0c] sm:$0xf]
  %v2496 = vld [vmem:[%s9 + $0xa10] sm:$0xff]
  %v2497 = vld [vmem:[%s9 + $0xa18] sm:$0xff]
  %v2498 = vld [vmem:[%s9 + $0xa20] sm:$0xff]
  %v2499 = vld [vmem:[%s9 + $0xa28] sm:$0xf]
  %v2500 = vld [vmem:[%s9 + $0xa2c] sm:$0xff]
  %v2501 = vld [vmem:[%s9 + $0xa34] sm:$0xff]
  %v2502 = vld [vmem:[%s9 + $0xa3c] sm:$0xff]
  %v2503 = vld [vmem:[%s9 + $0xa44] sm:$0xf]
  %v2504 = vld [vmem:[%s9 + $0xa48] sm:$0xff]
  %v2505 = vld [vmem:[%s9 + $0xa50] sm:$0xff]
  %v2506 = vld [vmem:[%s9 + $0xa58] sm:$0xff]
  %v2507 = vld [vmem:[%s9 + $0xa60] sm:$0xf]
  %v2508 = vld [vmem:[%s9 + $0xa64] sm:$0xff]
  %v2509 = vld [vmem:[%s9 + $0xa6c] sm:$0xff]
  %v2510 = vld [vmem:[%s9 + $0xa74] sm:$0xff]
  %v2511 = vld [vmem:[%s9 + $0xa7c] sm:$0xf]
  %v2512 = vld [vmem:[%s9 + $0xa80] sm:$0xff]
  %v2513 = vld [vmem:[%s9 + $0xa88] sm:$0xff]
  %v2514 = vld [vmem:[%s9 + $0xa90] sm:$0xff]
  %v2515 = vld [vmem:[%s9 + $0xa98] sm:$0xf]
  %v2516 = vld [vmem:[%s9 + $0xa9c] sm:$0xff]
  %v2517 = vld [vmem:[%s9 + $0xaa4] sm:$0xff]
  %v2518 = vld [vmem:[%s9 + $0xaac] sm:$0xff]
  %v2519 = vld [vmem:[%s9 + $0xab4] sm:$0xf]
  %v2520 = vld [vmem:[%s9 + $0xab8] sm:$0xff]
  %v2521 = vld [vmem:[%s9 + $0xac0] sm:$0xff]
  %v2522 = vld [vmem:[%s9 + $0xac8] sm:$0xff]
  %v2523 = vld [vmem:[%s9 + $0xad0] sm:$0xf]
  %v2524 = vld [vmem:[%s9 + $0xad4] sm:$0xff]
  %v2525 = vld [vmem:[%s9 + $0xadc] sm:$0xff]
  %v2526 = vld [vmem:[%s9 + $0xae4] sm:$0xff]
  %v2527 = vld [vmem:[%s9 + $0xaec] sm:$0xf]
  %v2528 = vld [vmem:[%s9 + $0xaf0] sm:$0xff]
  %v2529 = vld [vmem:[%s9 + $0xaf8] sm:$0xff]
  %v2530 = vld [vmem:[%s9 + $0xb00] sm:$0xff]
  %v2531 = vld [vmem:[%s9 + $0xb08] sm:$0xf]
  %v2532 = vld [vmem:[%s9 + $0xb0c] sm:$0xff]
  %v2533 = vld [vmem:[%s9 + $0xb14] sm:$0xff]
  %v2534 = vld [vmem:[%s9 + $0xb1c] sm:$0xff]
  %v2535 = vld [vmem:[%s9 + $0xb24] sm:$0xf]
  %v2536 = vld [vmem:[%s9 + $0xb28] sm:$0xff]
  %v2537 = vld [vmem:[%s9 + $0xb30] sm:$0xff]
  %v2538 = vld [vmem:[%s9 + $0xb38] sm:$0xff]
  %v2539 = vld [vmem:[%s9 + $0xb40] sm:$0xf]
  %v2540 = vld [vmem:[%s9 + $0xb44] sm:$0xff]
  %v2541 = vld [vmem:[%s9 + $0xb4c] sm:$0xff]
  %v2542 = vld [vmem:[%s9 + $0xb54] sm:$0xff]
  %v2543 = vld [vmem:[%s9 + $0xb5c] sm:$0xf]
  %v2544 = vld [vmem:[%s9 + $0xb60] sm:$0xff]
  %v2545 = vld [vmem:[%s9 + $0xb68] sm:$0xff]
  %v2546 = vld [vmem:[%s9 + $0xb70] sm:$0xff]
  %v2547 = vld [vmem:[%s9 + $0xb78] sm:$0xf]
  %v2548 = vld [vmem:[%s9 + $0xb7c] sm:$0xff]
  %v2549 = vld [vmem:[%s9 + $0xb84] sm:$0xff]
  %v2550 = vld [vmem:[%s9 + $0xb8c] sm:$0xff]
  %v2551 = vld [vmem:[%s9 + $0xb94] sm:$0xf]
  %v2552 = vld [vmem:[%s9 + $0xb98] sm:$0xff]
  %v2553 = vld [vmem:[%s9 + $0xba0] sm:$0xff]
  %v2554 = vld [vmem:[%s9 + $0xba8] sm:$0xff]
  %v2555 = vld [vmem:[%s9 + $0xbb0] sm:$0xf]
  %v2556 = vld [vmem:[%s9 + $0xbb4] sm:$0xff]
  %v2557 = vld [vmem:[%s9 + $0xbbc] sm:$0xff]
  %v2558 = vld [vmem:[%s9 + $0xbc4] sm:$0xff]
  %v2559 = vld [vmem:[%s9 + $0xbcc] sm:$0xf]
  %v2560 = vld [vmem:[%s9 + $0xbd0] sm:$0xff]
  %v2561 = vld [vmem:[%s9 + $0xbd8] sm:$0xff]
  %v2562 = vld [vmem:[%s9 + $0xbe0] sm:$0xff]
  %v2563 = vld [vmem:[%s9 + $0xbe8] sm:$0xf]
  %v2564 = vld [vmem:[%s9 + $0xbec] sm:$0xff]
  %v2565 = vld [vmem:[%s9 + $0xbf4] sm:$0xff]
  %v2566 = vld [vmem:[%s9 + $0xbfc] sm:$0xff]
  %v2567 = vld [vmem:[%s9 + $0xc04] sm:$0xf]
  %v2568 = vld [vmem:[%s9 + $0xc08] sm:$0xff]
  %v2569 = vld [vmem:[%s9 + $0xc10] sm:$0xff]
  %v2570 = vld [vmem:[%s9 + $0xc18] sm:$0xff]
  %v2571 = vld [vmem:[%s9 + $0xc20] sm:$0xf]
  %v2572 = vld [vmem:[%s9 + $0xc24] sm:$0xff]
  %v2573 = vld [vmem:[%s9 + $0xc2c] sm:$0xff]
  %v2574 = vld [vmem:[%s9 + $0xc34] sm:$0xff]
  %v2575 = vld [vmem:[%s9 + $0xc3c] sm:$0xf]
  %v2576 = vld [vmem:[%s9 + $0xc40] sm:$0xff]
  %v2577 = vld [vmem:[%s9 + $0xc48] sm:$0xff]
  %v2578 = vld [vmem:[%s9 + $0xc50] sm:$0xff]
  %v2579 = vld [vmem:[%s9 + $0xc58] sm:$0xf]
  %v2580 = vld [vmem:[%s9 + $0xc5c] sm:$0xff]
  %v2581 = vld [vmem:[%s9 + $0xc64] sm:$0xff]
  %v2582 = vld [vmem:[%s9 + $0xc6c] sm:$0xff]
  %v2583 = vld [vmem:[%s9 + $0xc74] sm:$0xf]
  %v2584 = vld [vmem:[%s9 + $0xc78] sm:$0xff]
  %v2585 = vld [vmem:[%s9 + $0xc80] sm:$0xff]
  %v2586 = vld [vmem:[%s9 + $0xc88] sm:$0xff]
  %v2587 = vld [vmem:[%s9 + $0xc90] sm:$0xf]
  %v2588 = vld [vmem:[%s9 + $0xc94] sm:$0xff]
  %v2589 = vld [vmem:[%s9 + $0xc9c] sm:$0xff]
  %v2590 = vld [vmem:[%s9 + $0xca4] sm:$0xff]
  %v2591 = vld [vmem:[%s9 + $0xcac] sm:$0xf]
  %v2592 = vld [vmem:[%s9 + $0xcb0] sm:$0xff]
  %v2593 = vld [vmem:[%s9 + $0xcb8] sm:$0xff]
  %v2594 = vld [vmem:[%s9 + $0xcc0] sm:$0xff]
  %v2595 = vld [vmem:[%s9 + $0xcc8] sm:$0xf]
  %v2596 = vld [vmem:[%s9 + $0xccc] sm:$0xff]
  %v2597 = vld [vmem:[%s9 + $0xcd4] sm:$0xff]
  %v2598 = vld [vmem:[%s9 + $0xcdc] sm:$0xff]
  %v2599 = vld [vmem:[%s9 + $0xce4] sm:$0xf]
  %v2600 = vld [vmem:[%s9 + $0xce8] sm:$0xff]
  %v2601 = vld [vmem:[%s9 + $0xcf0] sm:$0xff]
  %v2602 = vld [vmem:[%s9 + $0xcf8] sm:$0xff]
  %v2603 = vld [vmem:[%s9 + $0xd00] sm:$0xf]
  %v2604 = vld [vmem:[%s9 + $0xd04] sm:$0xff]
  %v2605 = vld [vmem:[%s9 + $0xd0c] sm:$0xff]
  %v2606 = vld [vmem:[%s9 + $0xd14] sm:$0xff]
  %v2607 = vld [vmem:[%s9 + $0xd1c] sm:$0xf]
  %v2608 = vld [vmem:[%s9 + $0xd20] sm:$0xff]
  %v2609 = vld [vmem:[%s9 + $0xd28] sm:$0xff]
  %v2610 = vld [vmem:[%s9 + $0xd30] sm:$0xff]
  %v2611 = vld [vmem:[%s9 + $0xd38] sm:$0xf]
  %v2612 = vld [vmem:[%s9 + $0xd3c] sm:$0xff]
  %v2613 = vld [vmem:[%s9 + $0xd44] sm:$0xff]
  %v2614 = vld [vmem:[%s9 + $0xd4c] sm:$0xff]
  %v2615 = vld [vmem:[%s9 + $0xd54] sm:$0xf]
  %v2616 = vld [vmem:[%s9 + $0xd58] sm:$0xff]
  %v2617 = vld [vmem:[%s9 + $0xd60] sm:$0xff]
  %v2618 = vld [vmem:[%s9 + $0xd68] sm:$0xff]
  %v2619 = vld [vmem:[%s9 + $0xd70] sm:$0xf]
  %v2620 = vld [vmem:[%s9 + $0xd74] sm:$0xff]
  %v2621 = vld [vmem:[%s9 + $0xd7c] sm:$0xff]
  %v2622 = vld [vmem:[%s9 + $0xd84] sm:$0xff]
  %v2623 = vld [vmem:[%s9 + $0xd8c] sm:$0xf]
  %v2624 = vld [vmem:[%s9 + $0xd90] sm:$0xff]
  %v2625 = vld [vmem:[%s9 + $0xd98] sm:$0xff]
  %v2626 = vld [vmem:[%s9 + $0xda0] sm:$0xff]
  %v2627 = vld [vmem:[%s9 + $0xda8] sm:$0xf]
  %v2628 = vld [vmem:[%s9 + $0xdac] sm:$0xff]
  %v2629 = vld [vmem:[%s9 + $0xdb4] sm:$0xff]
  %v2630 = vld [vmem:[%s9 + $0xdbc] sm:$0xff]
  %v2631 = vld [vmem:[%s9 + $0xdc4] sm:$0xf]
  %v2632 = vld [vmem:[%s9 + $0xdc8] sm:$0xff]
  %v2633 = vld [vmem:[%s9 + $0xdd0] sm:$0xff]
  %v2634 = vld [vmem:[%s9 + $0xdd8] sm:$0xff]
  %v2635 = vld [vmem:[%s9 + $0xde0] sm:$0xf]
  %v2636 = vld [vmem:[%s9 + $0xde4] sm:$0xff]
  %v2637 = vld [vmem:[%s9 + $0xdec] sm:$0xff]
  %v2638 = vld [vmem:[%s9 + $0xdf4] sm:$0xff]
  %v2639 = vld [vmem:[%s9 + $0xdfc] sm:$0xf]
  %v2640 = vld [vmem:[%s9 + $0xe00] sm:$0xff]
  %v2641 = vld [vmem:[%s9 + $0xe08] sm:$0xff]
  %v2642 = vld [vmem:[%s9 + $0xe10] sm:$0xff]
  %v2643 = vld [vmem:[%s9 + $0xe18] sm:$0xf]
  %v2644 = vld [vmem:[%s9 + $0xe1c] sm:$0xff]
  %v2645 = vld [vmem:[%s9 + $0xe24] sm:$0xff]
  %v2646 = vld [vmem:[%s9 + $0xe2c] sm:$0xff]
  %v2647 = vld [vmem:[%s9 + $0xe34] sm:$0xf]
  %v2648 = vld [vmem:[%s9 + $0xe38] sm:$0xff]
  %v2649 = vld [vmem:[%s9 + $0xe40] sm:$0xff]
  %v2650 = vld [vmem:[%s9 + $0xe48] sm:$0xff]
  %v2651 = vld [vmem:[%s9 + $0xe50] sm:$0xf]
  %v2652 = vld [vmem:[%s9 + $0xe54] sm:$0xff]
  %v2653 = vld [vmem:[%s9 + $0xe5c] sm:$0xff]
  %v2654 = vld [vmem:[%s9 + $0xe64] sm:$0xff]
  %v2655 = vld [vmem:[%s9 + $0xe6c] sm:$0xf]
  %v2656 = vld [vmem:[%s9 + $0xe70] sm:$0xff]
  %v2657 = vld [vmem:[%s9 + $0xe78] sm:$0xff]
  %v2658 = vld [vmem:[%s9 + $0xe80] sm:$0xff]
  %v2659 = vld [vmem:[%s9 + $0xe88] sm:$0xf]
  %v2660 = vld [vmem:[%s9 + $0xe8c] sm:$0xff]
  %v2661 = vld [vmem:[%s9 + $0xe94] sm:$0xff]
  %v2662 = vld [vmem:[%s9 + $0xe9c] sm:$0xff]
  %v2663 = vld [vmem:[%s9 + $0xea4] sm:$0xf]
  %v2664 = vld [vmem:[%s9 + $0xea8] sm:$0xff]
  %v2665 = vld [vmem:[%s9 + $0xeb0] sm:$0xff]
  %v2666 = vld [vmem:[%s9 + $0xeb8] sm:$0xff]
  %v2667 = vld [vmem:[%s9 + $0xec0] sm:$0xf]
  %v2668 = vld [vmem:[%s9 + $0xec4] sm:$0xff]
  %v2669 = vld [vmem:[%s9 + $0xecc] sm:$0xff]
  %v2670 = vld [vmem:[%s9 + $0xed4] sm:$0xff]
  %v2671 = vld [vmem:[%s9 + $0xedc] sm:$0xf]
  %v2672 = vld [vmem:[%s9 + $0xee0] sm:$0xff]
  %v2673 = vld [vmem:[%s9 + $0xee8] sm:$0xff]
  %v2674 = vld [vmem:[%s9 + $0xef0] sm:$0xff]
  %v2675 = vld [vmem:[%s9 + $0xef8] sm:$0xf]
  %v2676 = vld [vmem:[%s9 + $0xefc] sm:$0xff]
  %v2677 = vld [vmem:[%s9 + $0xf04] sm:$0xff]
  %v2678 = vld [vmem:[%s9 + $0xf0c] sm:$0xff]
  %v2679 = vld [vmem:[%s9 + $0xf14] sm:$0xf]
  %v2680 = vld [vmem:[%s9 + $0xf18] sm:$0xff]
  %v2681 = vld [vmem:[%s9 + $0xf20] sm:$0xff]
  %v2682 = vld [vmem:[%s9 + $0xf28] sm:$0xff]
  %v2683 = vld [vmem:[%s9 + $0xf30] sm:$0xf]
  %v2684 = vld [vmem:[%s9 + $0xf34] sm:$0xff]
  %v2685 = vld [vmem:[%s9 + $0xf3c] sm:$0xff]
  %v2686 = vld [vmem:[%s9 + $0xf44] sm:$0xff]
  %v2687 = vld [vmem:[%s9 + $0xf4c] sm:$0xf]
  %v2688 = vld [vmem:[%s9 + $0xf50] sm:$0xff]
  %v2689 = vld [vmem:[%s9 + $0xf58] sm:$0xff]
  %v2690 = vld [vmem:[%s9 + $0xf60] sm:$0xff]
  %v2691 = vld [vmem:[%s9 + $0xf68] sm:$0xf]
  %v2692 = vld [vmem:[%s9 + $0xf6c] sm:$0xff]
  %v2693 = vld [vmem:[%s9 + $0xf74] sm:$0xff]
  %v2694 = vld [vmem:[%s9 + $0xf7c] sm:$0xff]
  %v2695 = vld [vmem:[%s9 + $0xf84] sm:$0xf]
  %v2696 = vld [vmem:[%s9 + $0xf88] sm:$0xff]
  %v2697 = vld [vmem:[%s9 + $0xf90] sm:$0xff]
  %v2698 = vld [vmem:[%s9 + $0xf98] sm:$0xff]
  %v2699 = vld [vmem:[%s9 + $0xfa0] sm:$0xf]
  %v2700 = vld [vmem:[%s9 + $0xfa4] sm:$0xff]
  %v2701 = vld [vmem:[%s9 + $0xfac] sm:$0xff]
  %v2702 = vld [vmem:[%s9 + $0xfb4] sm:$0xff]
  %v2703 = vld [vmem:[%s9 + $0xfbc] sm:$0xf]
  %v2704 = vld [vmem:[%s9 + $0xfc0] sm:$0xff]
  %v2705 = vld [vmem:[%s9 + $0xfc8] sm:$0xff]
  %v2706 = vld [vmem:[%s9 + $0xfd0] sm:$0xff]
  %v2707 = vld [vmem:[%s9 + $0xfd8] sm:$0xf]
  %v2708 = vld [vmem:[%s9 + $0xfdc] sm:$0xff]
  %v2709 = vld [vmem:[%s9 + $0xfe4] sm:$0xff]
  %v2710 = vld [vmem:[%s9 + $0xfec] sm:$0xff]
  %v2711 = vld [vmem:[%s9 + $0xff4] sm:$0xf]
  %v2712 = vld [vmem:[%s9 + $0xff8] sm:$0xff]
  %v2713 = vld [vmem:[%s9 + $0x1000] sm:$0xff]
  %v2714 = vld [vmem:[%s9 + $0x1008] sm:$0xff]
  %v2715 = vld [vmem:[%s9 + $0x1010] sm:$0xf]
  %v2716 = vld [vmem:[%s9 + $0x1014] sm:$0xff]
  %v2717 = vld [vmem:[%s9 + $0x101c] sm:$0xff]
  %v2718 = vld [vmem:[%s9 + $0x1024] sm:$0xff]
  %v2719 = vld [vmem:[%s9 + $0x102c] sm:$0xf]
  %v2720 = vld [vmem:[%s9 + $0x1030] sm:$0xff]
  %v2721 = vld [vmem:[%s9 + $0x1038] sm:$0xff]
  %v2722 = vld [vmem:[%s9 + $0x1040] sm:$0xff]
  %v2723 = vld [vmem:[%s9 + $0x1048] sm:$0xf]
  %v2724 = vld [vmem:[%s9 + $0x104c] sm:$0xff]
  %v2725 = vld [vmem:[%s9 + $0x1054] sm:$0xff]
  %v2726 = vld [vmem:[%s9 + $0x105c] sm:$0xff]
  %v2727 = vld [vmem:[%s9 + $0x1064] sm:$0xf]
  %v2728 = vld [vmem:[%s9 + $0x1068] sm:$0xff]
  %v2729 = vld [vmem:[%s9 + $0x1070] sm:$0xff]
  %v2730 = vld [vmem:[%s9 + $0x1078] sm:$0xff]
  %v2731 = vld [vmem:[%s9 + $0x1080] sm:$0xf]
  %v2732 = vld [vmem:[%s9 + $0x1084] sm:$0xff]
  %v2733 = vld [vmem:[%s9 + $0x108c] sm:$0xff]
  %v2734 = vld [vmem:[%s9 + $0x1094] sm:$0xff]
  %v2735 = vld [vmem:[%s9 + $0x109c] sm:$0xf]
  %v2736 = vld [vmem:[%s9 + $0x10a0] sm:$0xff]
  %v2737 = vld [vmem:[%s9 + $0x10a8] sm:$0xff]
  %v2738 = vld [vmem:[%s9 + $0x10b0] sm:$0xff]
  %v2739 = vld [vmem:[%s9 + $0x10b8] sm:$0xf]
  %v2740 = vld [vmem:[%s9 + $0x10bc] sm:$0xff]
  %v2741 = vld [vmem:[%s9 + $0x10c4] sm:$0xff]
  %v2742 = vld [vmem:[%s9 + $0x10cc] sm:$0xff]
  %v2743 = vld [vmem:[%s9 + $0x10d4] sm:$0xf]
  %v2744 = vld [vmem:[%s9 + $0x10d8] sm:$0xff]
  %v2745 = vld [vmem:[%s9 + $0x10e0] sm:$0xff]
  %v2746 = vld [vmem:[%s9 + $0x10e8] sm:$0xff]
  %v2747 = vld [vmem:[%s9 + $0x10f0] sm:$0xf]
  %v2748 = vld [vmem:[%s9 + $0x10f4] sm:$0xff]
  %v2749 = vld [vmem:[%s9 + $0x10fc] sm:$0xff]
  %v2750 = vld [vmem:[%s9 + $0x1104] sm:$0xff]
  %v2751 = vld [vmem:[%s9 + $0x110c] sm:$0xf]
  %v2752 = vld [vmem:[%s9 + $0x1110] sm:$0xff]
  %v2753 = vld [vmem:[%s9 + $0x1118] sm:$0xff]
  %v2754 = vld [vmem:[%s9 + $0x1120] sm:$0xff]
  %v2755 = vld [vmem:[%s9 + $0x1128] sm:$0xf]
  %v2756 = vld [vmem:[%s9 + $0x112c] sm:$0xff]
  %v2757 = vld [vmem:[%s9 + $0x1134] sm:$0xff]
  %v2758 = vld [vmem:[%s9 + $0x113c] sm:$0xff]
  %v2759 = vld [vmem:[%s9 + $0x1144] sm:$0xf]
  %v2760 = vld [vmem:[%s9 + $0x1148] sm:$0xff]
  %v2761 = vld [vmem:[%s9 + $0x1150] sm:$0xff]
  %v2762 = vld [vmem:[%s9 + $0x1158] sm:$0xff]
  %v2763 = vld [vmem:[%s9 + $0x1160] sm:$0xf]
  %v2764 = vld [vmem:[%s9 + $0x1164] sm:$0xff]
  %v2765 = vld [vmem:[%s9 + $0x116c] sm:$0xff]
  %v2766 = vld [vmem:[%s9 + $0x1174] sm:$0xff]
  %v2767 = vld [vmem:[%s9 + $0x117c] sm:$0xf]
  %v2768 = vld [vmem:[%s9 + $0x1180] sm:$0xff]
  %v2769 = vld [vmem:[%s9 + $0x1188] sm:$0xff]
  %v2770 = vld [vmem:[%s9 + $0x1190] sm:$0xff]
  %v2771 = vld [vmem:[%s9 + $0x1198] sm:$0xf]
  %v2772 = vld [vmem:[%s9 + $0x119c] sm:$0xff]
  %v2773 = vld [vmem:[%s9 + $0x11a4] sm:$0xff]
  %v2774 = vld [vmem:[%s9 + $0x11ac] sm:$0xff]
  %v2775 = vld [vmem:[%s9 + $0x11b4] sm:$0xf]
  %v2776 = vld [vmem:[%s9 + $0x11b8] sm:$0xff]
  %v2777 = vld [vmem:[%s9 + $0x11c0] sm:$0xff]
  %v2778 = vld [vmem:[%s9 + $0x11c8] sm:$0xff]
  %v2779 = vld [vmem:[%s9 + $0x11d0] sm:$0xf]
  %v2780 = vld [vmem:[%s9 + $0x11d4] sm:$0xff]
  %v2781 = vld [vmem:[%s9 + $0x11dc] sm:$0xff]
  %v2782 = vld [vmem:[%s9 + $0x11e4] sm:$0xff]
  %v2783 = vld [vmem:[%s9 + $0x11ec] sm:$0xf]
  %v2784 = vld [vmem:[%s9 + $0x11f0] sm:$0xff]
  %v2785 = vld [vmem:[%s9 + $0x11f8] sm:$0xff]
  %v2786 = vld [vmem:[%s9 + $0x1200] sm:$0xff]
  %v2787 = vld [vmem:[%s9 + $0x1208] sm:$0xf]
  %v2788 = vld [vmem:[%s9 + $0x120c] sm:$0xff]
  %v2789 = vld [vmem:[%s9 + $0x1214] sm:$0xff]
  %v2790 = vld [vmem:[%s9 + $0x121c] sm:$0xff]
  %v2791 = vld [vmem:[%s9 + $0x1224] sm:$0xf]
  %v2792 = vld [vmem:[%s9 + $0x1228] sm:$0xff]
  %v2793 = vld [vmem:[%s9 + $0x1230] sm:$0xff]
  %v2794 = vld [vmem:[%s9 + $0x1238] sm:$0xff]
  %v2795 = vld [vmem:[%s9 + $0x1240] sm:$0xf]
  %v2796 = vld [vmem:[%s9 + $0x1244] sm:$0xff]
  %v2797 = vld [vmem:[%s9 + $0x124c] sm:$0xff]
  %v2798 = vld [vmem:[%s9 + $0x1254] sm:$0xff]
  %v2799 = vld [vmem:[%s9 + $0x125c] sm:$0xf]
  %v2800 = vld [vmem:[%s9 + $0x1260] sm:$0xff]
  %v2801 = vld [vmem:[%s9 + $0x1268] sm:$0xff]
  %v2802 = vld [vmem:[%s9 + $0x1270] sm:$0xff]
  %v2803 = vld [vmem:[%s9 + $0x1278] sm:$0xf]
  %v2804 = vld [vmem:[%s9 + $0x127c] sm:$0xff]
  %v2805 = vld [vmem:[%s9 + $0x1284] sm:$0xff]
  %v2806 = vld [vmem:[%s9 + $0x128c] sm:$0xff]
  %v2807 = vld [vmem:[%s9 + $0x1294] sm:$0xf]
  %v2808 = vld [vmem:[%s9 + $0x1298] sm:$0xff]
  %v2809 = vld [vmem:[%s9 + $0x12a0] sm:$0xff]
  %v2810 = vld [vmem:[%s9 + $0x12a8] sm:$0xff]
  %v2811 = vld [vmem:[%s9 + $0x12b0] sm:$0xf]
  %v2812 = vld [vmem:[%s9 + $0x12b4] sm:$0xff]
  %v2813 = vld [vmem:[%s9 + $0x12bc] sm:$0xff]
  %v2814 = vld [vmem:[%s9 + $0x12c4] sm:$0xff]
  %v2815 = vld [vmem:[%s9 + $0x12cc] sm:$0xf]
  %v2816 = vld [vmem:[%s9 + $0x12d0] sm:$0xff]
  %v2817 = vld [vmem:[%s9 + $0x12d8] sm:$0xff]
  %v2818 = vld [vmem:[%s9 + $0x12e0] sm:$0xff]
  %v2819 = vld [vmem:[%s9 + $0x12e8] sm:$0xf]
  %v2820 = vld [vmem:[%s9 + $0x12ec] sm:$0xff]
  %v2821 = vld [vmem:[%s9 + $0x12f4] sm:$0xff]
  %v2822 = vld [vmem:[%s9 + $0x12fc] sm:$0xff]
  %v2823 = vld [vmem:[%s9 + $0x1304] sm:$0xf]
  %v2824 = vld [vmem:[%s9 + $0x1308] sm:$0xff]
  %v2825 = vld [vmem:[%s9 + $0x1310] sm:$0xff]
  %v2826 = vld [vmem:[%s9 + $0x1318] sm:$0xff]
  %v2827 = vld [vmem:[%s9 + $0x1320] sm:$0xf]
  %v2828 = vld [vmem:[%s9 + $0x1324] sm:$0xff]
  %v2829 = vld [vmem:[%s9 + $0x132c] sm:$0xff]
  %v2830 = vld [vmem:[%s9 + $0x1334] sm:$0xff]
  %v2831 = vld [vmem:[%s9 + $0x133c] sm:$0xf]
  %v2832 = vld [vmem:[%s9 + $0x1340] sm:$0xff]
  %v2833 = vld [vmem:[%s9 + $0x1348] sm:$0xff]
  %v2834 = vld [vmem:[%s9 + $0x1350] sm:$0xff]
  %v2835 = vld [vmem:[%s9 + $0x1358] sm:$0xf]
  %v2836 = vld [vmem:[%s9 + $0x135c] sm:$0xff]
  %v2837 = vld [vmem:[%s9 + $0x1364] sm:$0xff]
  %v2838 = vld [vmem:[%s9 + $0x136c] sm:$0xff]
  %v2839 = vld [vmem:[%s9 + $0x1374] sm:$0xf]
  %v2840 = vld [vmem:[%s9 + $0x1378] sm:$0xff]
  %v2841 = vld [vmem:[%s9 + $0x1380] sm:$0xff]
  %v2842 = vld [vmem:[%s9 + $0x1388] sm:$0xff]
  %v2843 = vld [vmem:[%s9 + $0x1390] sm:$0xf]
  %v2844 = vld [vmem:[%s9 + $0x1394] sm:$0xff]
  %v2845 = vld [vmem:[%s9 + $0x139c] sm:$0xff]
  %v2846 = vld [vmem:[%s9 + $0x13a4] sm:$0xff]
  %v2847 = vld [vmem:[%s9 + $0x13ac] sm:$0xf]
  %v2848 = vld [vmem:[%s9 + $0x13b0] sm:$0xff]
  %v2849 = vld [vmem:[%s9 + $0x13b8] sm:$0xff]
  %v2850 = vld [vmem:[%s9 + $0x13c0] sm:$0xff]
  %v2851 = vld [vmem:[%s9 + $0x13c8] sm:$0xf]
  %v2852 = vld [vmem:[%s9 + $0x13cc] sm:$0xff]
  %v2853 = vld [vmem:[%s9 + $0x13d4] sm:$0xff]
  %v2854 = vld [vmem:[%s9 + $0x13dc] sm:$0xff]
  %v2855 = vld [vmem:[%s9 + $0x13e4] sm:$0xf]
  %v2856 = vld [vmem:[%s9 + $0x13e8] sm:$0xff]
  %v2857 = vld [vmem:[%s9 + $0x13f0] sm:$0xff]
  %v2858 = vld [vmem:[%s9 + $0x13f8] sm:$0xff]
  %v2859 = vld [vmem:[%s9 + $0x1400] sm:$0xf]
  %v2860 = vld [vmem:[%s9 + $0x1404] sm:$0xff]
  %v2861 = vld [vmem:[%s9 + $0x140c] sm:$0xff]
  %v2862 = vld [vmem:[%s9 + $0x1414] sm:$0xff]
  %v2863 = vld [vmem:[%s9 + $0x141c] sm:$0xf]
  %v2864 = vld [vmem:[%s9 + $0x1420] sm:$0xff]
  %v2865 = vld [vmem:[%s9 + $0x1428] sm:$0xff]
  %v2866 = vld [vmem:[%s9 + $0x1430] sm:$0xff]
  %v2867 = vld [vmem:[%s9 + $0x1438] sm:$0xf]
  %v2868 = vld [vmem:[%s9 + $0x143c] sm:$0xff]
  %v2869 = vld [vmem:[%s9 + $0x1444] sm:$0xff]
  %v2870 = vld [vmem:[%s9 + $0x144c] sm:$0xff]
  %v2871 = vld [vmem:[%s9 + $0x1454] sm:$0xf]
  %v2872 = vld [vmem:[%s9 + $0x1458] sm:$0xff]
  %v2873 = vld [vmem:[%s9 + $0x1460] sm:$0xff]
  %v2874 = vld [vmem:[%s9 + $0x1468] sm:$0xff]
  %v2875 = vld [vmem:[%s9 + $0x1470] sm:$0xf]
  %v2876 = vld [vmem:[%s9 + $0x1474] sm:$0xff]
  %v2877 = vld [vmem:[%s9 + $0x147c] sm:$0xff]
  %v2878 = vld [vmem:[%s9 + $0x1484] sm:$0xff]
  %v2879 = vld [vmem:[%s9 + $0x148c] sm:$0xf]
  %v2880 = vld [vmem:[%s9 + $0x1490] sm:$0xff]
  %v2881 = vld [vmem:[%s9 + $0x1498] sm:$0xff]
  %v2882 = vld [vmem:[%s9 + $0x14a0] sm:$0xff]
  %v2883 = vld [vmem:[%s9 + $0x14a8] sm:$0xf]
  %v2884 = vld [vmem:[%s9 + $0x14ac] sm:$0xff]
  %v2885 = vld [vmem:[%s9 + $0x14b4] sm:$0xff]
  %v2886 = vld [vmem:[%s9 + $0x14bc] sm:$0xff]
  %v2887 = vld [vmem:[%s9 + $0x14c4] sm:$0xf]
  %v2888 = vld [vmem:[%s9 + $0x14c8] sm:$0xff]
  %v2889 = vld [vmem:[%s9 + $0x14d0] sm:$0xff]
  %v2890 = vld [vmem:[%s9 + $0x14d8] sm:$0xff]
  %v2891 = vld [vmem:[%s9 + $0x14e0] sm:$0xf]
  %v2892 = vld [vmem:[%s9 + $0x14e4] sm:$0xff]
  %v2893 = vld [vmem:[%s9 + $0x14ec] sm:$0xff]
  %v2894 = vld [vmem:[%s9 + $0x14f4] sm:$0xff]
  %v2895 = vld [vmem:[%s9 + $0x14fc] sm:$0xf]
  %v2896 = vld [vmem:[%s9 + $0x1500] sm:$0xff]
  %v2897 = vld [vmem:[%s9 + $0x1508] sm:$0xff]
  %v2898 = vld [vmem:[%s9 + $0x1510] sm:$0xff]
  %v2899 = vld [vmem:[%s9 + $0x1518] sm:$0xf]
  %v2900 = vld [vmem:[%s9 + $0x151c] sm:$0xff]
  %v2901 = vld [vmem:[%s9 + $0x1524] sm:$0xff]
  %v2902 = vld [vmem:[%s9 + $0x152c] sm:$0xff]
  %v2903 = vld [vmem:[%s9 + $0x1534] sm:$0xf]
  %v2904 = vld [vmem:[%s9 + $0x1538] sm:$0xff]
  %v2905 = vld [vmem:[%s9 + $0x1540] sm:$0xff]
  %v2906 = vld [vmem:[%s9 + $0x1548] sm:$0xff]
  %v2907 = vld [vmem:[%s9 + $0x1550] sm:$0xf]
  %v2908 = vld [vmem:[%s9 + $0x1554] sm:$0xff]
  %v2909 = vld [vmem:[%s9 + $0x155c] sm:$0xff]
  %v2910 = vld [vmem:[%s9 + $0x1564] sm:$0xff]
  %v2911 = vld [vmem:[%s9 + $0x156c] sm:$0xf]
  %v2912 = vld [vmem:[%s9 + $0x1570] sm:$0xff]
  %v2913 = vld [vmem:[%s9 + $0x1578] sm:$0xff]
  %v2914 = vld [vmem:[%s9 + $0x1580] sm:$0xff]
  %v2915 = vld [vmem:[%s9 + $0x1588] sm:$0xf]
  %v2916 = vld [vmem:[%s9 + $0x158c] sm:$0xff]
  %v2917 = vld [vmem:[%s9 + $0x1594] sm:$0xff]
  %v2918 = vld [vmem:[%s9 + $0x159c] sm:$0xff]
  %v2919 = vld [vmem:[%s9 + $0x15a4] sm:$0xf]
  %v2920 = vld [vmem:[%s9 + $0x15a8] sm:$0xff]
  %v2921 = vld [vmem:[%s9 + $0x15b0] sm:$0xff]
  %v2922 = vld [vmem:[%s9 + $0x15b8] sm:$0xff]
  %v2923 = vld [vmem:[%s9 + $0x15c0] sm:$0xf]
  %v2924 = vld [vmem:[%s9 + $0x15c4] sm:$0xff]
  %v2925 = vld [vmem:[%s9 + $0x15cc] sm:$0xff]
  %v2926 = vld [vmem:[%s9 + $0x15d4] sm:$0xff]
  %v2927 = vld [vmem:[%s9 + $0x15dc] sm:$0xf]
  %v2928 = vld [vmem:[%s9 + $0x15e0] sm:$0xff]
  %v2929 = vld [vmem:[%s9 + $0x15e8] sm:$0xff]
  %v2930 = vld [vmem:[%s9 + $0x15f0] sm:$0xff]
  %v2931 = vld [vmem:[%s9 + $0x15f8] sm:$0xf]
  %v2932 = vld [vmem:[%s9 + $0x15fc] sm:$0xff]
  %v2933 = vld [vmem:[%s9 + $0x1604] sm:$0xff]
  %v2934 = vld [vmem:[%s9 + $0x160c] sm:$0xff]
  %v2935 = vld [vmem:[%s9 + $0x1614] sm:$0xf]
  %v2936 = vld [vmem:[%s9 + $0x1618] sm:$0xff]
  %v2937 = vld [vmem:[%s9 + $0x1620] sm:$0xff]
  %v2938 = vld [vmem:[%s9 + $0x1628] sm:$0xff]
  %v2939 = vld [vmem:[%s9 + $0x1630] sm:$0xf]
  %v2940 = vld [vmem:[%s9 + $0x1634] sm:$0xff]
  %v2941 = vld [vmem:[%s9 + $0x163c] sm:$0xff]
  %v2942 = vld [vmem:[%s9 + $0x1644] sm:$0xff]
  %v2943 = vld [vmem:[%s9 + $0x164c] sm:$0xf]
  %v2944 = vld [vmem:[%s9 + $0x1650] sm:$0xff]
  %v2945 = vld [vmem:[%s9 + $0x1658] sm:$0xff]
  %v2946 = vld [vmem:[%s9 + $0x1660] sm:$0xff]
  %v2947 = vld [vmem:[%s9 + $0x1668] sm:$0xf]
  %v2948 = vld [vmem:[%s9 + $0x166c] sm:$0xff]
  %v2949 = vld [vmem:[%s9 + $0x1674] sm:$0xff]
  %v2950 = vld [vmem:[%s9 + $0x167c] sm:$0xff]
  %v2951 = vld [vmem:[%s9 + $0x1684] sm:$0xf]
  %v2952 = vld [vmem:[%s9 + $0x1688] sm:$0xff]
  %v2953 = vld [vmem:[%s9 + $0x1690] sm:$0xff]
  %v2954 = vld [vmem:[%s9 + $0x1698] sm:$0xff]
  %v2955 = vld [vmem:[%s9 + $0x16a0] sm:$0xf]
  %v2956 = vld [vmem:[%s9 + $0x16a4] sm:$0xff]
  %v2957 = vld [vmem:[%s9 + $0x16ac] sm:$0xff]
  %v2958 = vld [vmem:[%s9 + $0x16b4] sm:$0xff]
  %v2959 = vld [vmem:[%s9 + $0x16bc] sm:$0xf]
  %v2960 = vld [vmem:[%s10] sm:$0xff]
  %v2962 = vlaneseq
  %v2963 = vshrl.u32 %v2962, 7
  %v2964 = vsub.s32 0, %v2963
  %v2965 = vrot.slane %v2960, %v2964
  %v2966 = vlaneseq
  %v2967 = vshrl.u32 %v2966, 7
  %v2968 = vsub.s32 1, %v2967
  %v2969 = vrot.slane %v2960, %v2968
  %v2970 = vlaneseq
  %v2971 = vshrl.u32 %v2970, 7
  %v2972 = vsub.s32 2, %v2971
  %v2973 = vrot.slane %v2960, %v2972
  %v2974 = vlaneseq
  %v2975 = vshrl.u32 %v2974, 7
  %v2976 = vsub.s32 3, %v2975
  %v2977 = vrot.slane %v2960, %v2976
  %v2978 = vlaneseq
  %v2979 = vshrl.u32 %v2978, 7
  %v2980 = vsub.s32 4, %v2979
  %v2981 = vrot.slane %v2960, %v2980
  %v2982 = vlaneseq
  %v2983 = vshrl.u32 %v2982, 7
  %v2984 = vsub.s32 5, %v2983
  %v2985 = vrot.slane %v2960, %v2984
  %v2986 = vlaneseq
  %v2987 = vshrl.u32 %v2986, 7
  %v2988 = vsub.s32 6, %v2987
  %v2989 = vrot.slane %v2960, %v2988
  %v3829 = vunpack.c.l.b16 %v2128
  %v3830 = vunpack.c.h.b16 %v2128
  %v3831 = vunpack.c.l.b16 %v2129
  %v3832 = vunpack.c.h.b16 %v2129
  %v3833 = vunpack.c.l.b16 %v2130
  %v3834 = vunpack.c.h.b16 %v2130
  %v3835 = vunpack.c.l.b16 %v2131
  %v3836 = vunpack.c.l.b16 %v2132
  %v3837 = vunpack.c.h.b16 %v2132
  %v3838 = vunpack.c.l.b16 %v2133
  %v3839 = vunpack.c.h.b16 %v2133
  %v3840 = vunpack.c.l.b16 %v2134
  %v3841 = vunpack.c.h.b16 %v2134
  %v3842 = vunpack.c.l.b16 %v2135
  %v3843 = vunpack.c.l.b16 %v2136
  %v3844 = vunpack.c.h.b16 %v2136
  %v3845 = vunpack.c.l.b16 %v2137
  %v3846 = vunpack.c.h.b16 %v2137
  %v3847 = vunpack.c.l.b16 %v2138
  %v3848 = vunpack.c.h.b16 %v2138
  %v3849 = vunpack.c.l.b16 %v2139
  %v3850 = vunpack.c.l.b16 %v2140
  %v3851 = vunpack.c.h.b16 %v2140
  %v3852 = vunpack.c.l.b16 %v2141
  %v3853 = vunpack.c.h.b16 %v2141
  %v3854 = vunpack.c.l.b16 %v2142
  %v3855 = vunpack.c.h.b16 %v2142
  %v3856 = vunpack.c.l.b16 %v2143
  %v3857 = vunpack.c.l.b16 %v2144
  %v3858 = vunpack.c.h.b16 %v2144
  %v3859 = vunpack.c.l.b16 %v2145
  %v3860 = vunpack.c.h.b16 %v2145
  %v3861 = vunpack.c.l.b16 %v2146
  %v3862 = vunpack.c.h.b16 %v2146
  %v3863 = vunpack.c.l.b16 %v2147
  %v3864 = vunpack.c.l.b16 %v2148
  %v3865 = vunpack.c.h.b16 %v2148
  %v3866 = vunpack.c.l.b16 %v2149
  %v3867 = vunpack.c.h.b16 %v2149
  %v3868 = vunpack.c.l.b16 %v2150
  %v3869 = vunpack.c.h.b16 %v2150
  %v3870 = vunpack.c.l.b16 %v2151
  %v3871 = vunpack.c.l.b16 %v2152
  %v3872 = vunpack.c.h.b16 %v2152
  %v3873 = vunpack.c.l.b16 %v2153
  %v3874 = vunpack.c.h.b16 %v2153
  %v3875 = vunpack.c.l.b16 %v2154
  %v3876 = vunpack.c.h.b16 %v2154
  %v3877 = vunpack.c.l.b16 %v2155
  %v3878 = vunpack.c.l.b16 %v2156
  %v3879 = vunpack.c.h.b16 %v2156
  %v3880 = vunpack.c.l.b16 %v2157
  %v3881 = vunpack.c.h.b16 %v2157
  %v3882 = vunpack.c.l.b16 %v2158
  %v3883 = vunpack.c.h.b16 %v2158
  %v3884 = vunpack.c.l.b16 %v2159
  %v3885 = vunpack.c.l.b16 %v2160
  %v3886 = vunpack.c.h.b16 %v2160
  %v3887 = vunpack.c.l.b16 %v2161
  %v3888 = vunpack.c.h.b16 %v2161
  %v3889 = vunpack.c.l.b16 %v2162
  %v3890 = vunpack.c.h.b16 %v2162
  %v3891 = vunpack.c.l.b16 %v2163
  %v3892 = vunpack.c.l.b16 %v2164
  %v3893 = vunpack.c.h.b16 %v2164
  %v3894 = vunpack.c.l.b16 %v2165
  %v3895 = vunpack.c.h.b16 %v2165
  %v3896 = vunpack.c.l.b16 %v2166
  %v3897 = vunpack.c.h.b16 %v2166
  %v3898 = vunpack.c.l.b16 %v2167
  %v3899 = vunpack.c.l.b16 %v2168
  %v3900 = vunpack.c.h.b16 %v2168
  %v3901 = vunpack.c.l.b16 %v2169
  %v3902 = vunpack.c.h.b16 %v2169
  %v3903 = vunpack.c.l.b16 %v2170
  %v3904 = vunpack.c.h.b16 %v2170
  %v3905 = vunpack.c.l.b16 %v2171
  %v3906 = vunpack.c.l.b16 %v2172
  %v3907 = vunpack.c.h.b16 %v2172
  %v3908 = vunpack.c.l.b16 %v2173
  %v3909 = vunpack.c.h.b16 %v2173
  %v3910 = vunpack.c.l.b16 %v2174
  %v3911 = vunpack.c.h.b16 %v2174
  %v3912 = vunpack.c.l.b16 %v2175
  %v3913 = vunpack.c.l.b16 %v2176
  %v3914 = vunpack.c.h.b16 %v2176
  %v3915 = vunpack.c.l.b16 %v2177
  %v3916 = vunpack.c.h.b16 %v2177
  %v3917 = vunpack.c.l.b16 %v2178
  %v3918 = vunpack.c.h.b16 %v2178
  %v3919 = vunpack.c.l.b16 %v2179
  %v3920 = vunpack.c.l.b16 %v2180
  %v3921 = vunpack.c.h.b16 %v2180
  %v3922 = vunpack.c.l.b16 %v2181
  %v3923 = vunpack.c.h.b16 %v2181
  %v3924 = vunpack.c.l.b16 %v2182
  %v3925 = vunpack.c.h.b16 %v2182
  %v3926 = vunpack.c.l.b16 %v2183
  %v3927 = vunpack.c.l.b16 %v2184
  %v3928 = vunpack.c.h.b16 %v2184
  %v3929 = vunpack.c.l.b16 %v2185
  %v3930 = vunpack.c.h.b16 %v2185
  %v3931 = vunpack.c.l.b16 %v2186
  %v3932 = vunpack.c.h.b16 %v2186
  %v3933 = vunpack.c.l.b16 %v2187
  %v3934 = vunpack.c.l.b16 %v2188
  %v3935 = vunpack.c.h.b16 %v2188
  %v3936 = vunpack.c.l.b16 %v2189
  %v3937 = vunpack.c.h.b16 %v2189
  %v3938 = vunpack.c.l.b16 %v2190
  %v3939 = vunpack.c.h.b16 %v2190
  %v3940 = vunpack.c.l.b16 %v2191
  %v3941 = vunpack.c.l.b16 %v2192
  %v3942 = vunpack.c.h.b16 %v2192
  %v3943 = vunpack.c.l.b16 %v2193
  %v3944 = vunpack.c.h.b16 %v2193
  %v3945 = vunpack.c.l.b16 %v2194
  %v3946 = vunpack.c.h.b16 %v2194
  %v3947 = vunpack.c.l.b16 %v2195
  %v3948 = vunpack.c.l.b16 %v2196
  %v3949 = vunpack.c.h.b16 %v2196
  %v3950 = vunpack.c.l.b16 %v2197
  %v3951 = vunpack.c.h.b16 %v2197
  %v3952 = vunpack.c.l.b16 %v2198
  %v3953 = vunpack.c.h.b16 %v2198
  %v3954 = vunpack.c.l.b16 %v2199
  %v3955 = vunpack.c.l.b16 %v2200
  %v3956 = vunpack.c.h.b16 %v2200
  %v3957 = vunpack.c.l.b16 %v2201
  %v3958 = vunpack.c.h.b16 %v2201
  %v3959 = vunpack.c.l.b16 %v2202
  %v3960 = vunpack.c.h.b16 %v2202
  %v3961 = vunpack.c.l.b16 %v2203
  %v3962 = vunpack.c.l.b16 %v2204
  %v3963 = vunpack.c.h.b16 %v2204
  %v3964 = vunpack.c.l.b16 %v2205
  %v3965 = vunpack.c.h.b16 %v2205
  %v3966 = vunpack.c.l.b16 %v2206
  %v3967 = vunpack.c.h.b16 %v2206
  %v3968 = vunpack.c.l.b16 %v2207
  %v3969 = vunpack.c.l.b16 %v2208
  %v3970 = vunpack.c.h.b16 %v2208
  %v3971 = vunpack.c.l.b16 %v2209
  %v3972 = vunpack.c.h.b16 %v2209
  %v3973 = vunpack.c.l.b16 %v2210
  %v3974 = vunpack.c.h.b16 %v2210
  %v3975 = vunpack.c.l.b16 %v2211
  %v3976 = vunpack.c.l.b16 %v2212
  %v3977 = vunpack.c.h.b16 %v2212
  %v3978 = vunpack.c.l.b16 %v2213
  %v3979 = vunpack.c.h.b16 %v2213
  %v3980 = vunpack.c.l.b16 %v2214
  %v3981 = vunpack.c.h.b16 %v2214
  %v3982 = vunpack.c.l.b16 %v2215
  %v3983 = vunpack.c.l.b16 %v2216
  %v3984 = vunpack.c.h.b16 %v2216
  %v3985 = vunpack.c.l.b16 %v2217
  %v3986 = vunpack.c.h.b16 %v2217
  %v3987 = vunpack.c.l.b16 %v2218
  %v3988 = vunpack.c.h.b16 %v2218
  %v3989 = vunpack.c.l.b16 %v2219
  %v3990 = vunpack.c.l.b16 %v2220
  %v3991 = vunpack.c.h.b16 %v2220
  %v3992 = vunpack.c.l.b16 %v2221
  %v3993 = vunpack.c.h.b16 %v2221
  %v3994 = vunpack.c.l.b16 %v2222
  %v3995 = vunpack.c.h.b16 %v2222
  %v3996 = vunpack.c.l.b16 %v2223
  %v3997 = vunpack.c.l.b16 %v2224
  %v3998 = vunpack.c.h.b16 %v2224
  %v3999 = vunpack.c.l.b16 %v2225
  %v4000 = vunpack.c.h.b16 %v2225
  %v4001 = vunpack.c.l.b16 %v2226
  %v4002 = vunpack.c.h.b16 %v2226
  %v4003 = vunpack.c.l.b16 %v2227
  %v4004 = vunpack.c.l.b16 %v2228
  %v4005 = vunpack.c.h.b16 %v2228
  %v4006 = vunpack.c.l.b16 %v2229
  %v4007 = vunpack.c.h.b16 %v2229
  %v4008 = vunpack.c.l.b16 %v2230
  %v4009 = vunpack.c.h.b16 %v2230
  %v4010 = vunpack.c.l.b16 %v2231
  %v4011 = vunpack.c.l.b16 %v2232
  %v4012 = vunpack.c.h.b16 %v2232
  %v4013 = vunpack.c.l.b16 %v2233
  %v4014 = vunpack.c.h.b16 %v2233
  %v4015 = vunpack.c.l.b16 %v2234
  %v4016 = vunpack.c.h.b16 %v2234
  %v4017 = vunpack.c.l.b16 %v2235
  %v4018 = vunpack.c.l.b16 %v2236
  %v4019 = vunpack.c.h.b16 %v2236
  %v4020 = vunpack.c.l.b16 %v2237
  %v4021 = vunpack.c.h.b16 %v2237
  %v4022 = vunpack.c.l.b16 %v2238
  %v4023 = vunpack.c.h.b16 %v2238
  %v4024 = vunpack.c.l.b16 %v2239
  %v4025 = vunpack.c.l.b16 %v2240
  %v4026 = vunpack.c.h.b16 %v2240
  %v4027 = vunpack.c.l.b16 %v2241
  %v4028 = vunpack.c.h.b16 %v2241
  %v4029 = vunpack.c.l.b16 %v2242
  %v4030 = vunpack.c.h.b16 %v2242
  %v4031 = vunpack.c.l.b16 %v2243
  %v4032 = vunpack.c.l.b16 %v2244
  %v4033 = vunpack.c.h.b16 %v2244
  %v4034 = vunpack.c.l.b16 %v2245
  %v4035 = vunpack.c.h.b16 %v2245
  %v4036 = vunpack.c.l.b16 %v2246
  %v4037 = vunpack.c.h.b16 %v2246
  %v4038 = vunpack.c.l.b16 %v2247
  %v4039 = vunpack.c.l.b16 %v2248
  %v4040 = vunpack.c.h.b16 %v2248
  %v4041 = vunpack.c.l.b16 %v2249
  %v4042 = vunpack.c.h.b16 %v2249
  %v4043 = vunpack.c.l.b16 %v2250
  %v4044 = vunpack.c.h.b16 %v2250
  %v4045 = vunpack.c.l.b16 %v2251
  %v4046 = vunpack.c.l.b16 %v2252
  %v4047 = vunpack.c.h.b16 %v2252
  %v4048 = vunpack.c.l.b16 %v2253
  %v4049 = vunpack.c.h.b16 %v2253
  %v4050 = vunpack.c.l.b16 %v2254
  %v4051 = vunpack.c.h.b16 %v2254
  %v4052 = vunpack.c.l.b16 %v2255
  %v4053 = vunpack.c.l.b16 %v2256
  %v4054 = vunpack.c.h.b16 %v2256
  %v4055 = vunpack.c.l.b16 %v2257
  %v4056 = vunpack.c.h.b16 %v2257
  %v4057 = vunpack.c.l.b16 %v2258
  %v4058 = vunpack.c.h.b16 %v2258
  %v4059 = vunpack.c.l.b16 %v2259
  %v4060 = vunpack.c.l.b16 %v2260
  %v4061 = vunpack.c.h.b16 %v2260
  %v4062 = vunpack.c.l.b16 %v2261
  %v4063 = vunpack.c.h.b16 %v2261
  %v4064 = vunpack.c.l.b16 %v2262
  %v4065 = vunpack.c.h.b16 %v2262
  %v4066 = vunpack.c.l.b16 %v2263
  %v4067 = vunpack.c.l.b16 %v2264
  %v4068 = vunpack.c.h.b16 %v2264
  %v4069 = vunpack.c.l.b16 %v2265
  %v4070 = vunpack.c.h.b16 %v2265
  %v4071 = vunpack.c.l.b16 %v2266
  %v4072 = vunpack.c.h.b16 %v2266
  %v4073 = vunpack.c.l.b16 %v2267
  %v4074 = vunpack.c.l.b16 %v2268
  %v4075 = vunpack.c.h.b16 %v2268
  %v4076 = vunpack.c.l.b16 %v2269
  %v4077 = vunpack.c.h.b16 %v2269
  %v4078 = vunpack.c.l.b16 %v2270
  %v4079 = vunpack.c.h.b16 %v2270
  %v4080 = vunpack.c.l.b16 %v2271
  %v4081 = vunpack.c.l.b16 %v2272
  %v4082 = vunpack.c.h.b16 %v2272
  %v4083 = vunpack.c.l.b16 %v2273
  %v4084 = vunpack.c.h.b16 %v2273
  %v4085 = vunpack.c.l.b16 %v2274
  %v4086 = vunpack.c.h.b16 %v2274
  %v4087 = vunpack.c.l.b16 %v2275
  %v4088 = vunpack.c.l.b16 %v2276
  %v4089 = vunpack.c.h.b16 %v2276
  %v4090 = vunpack.c.l.b16 %v2277
  %v4091 = vunpack.c.h.b16 %v2277
  %v4092 = vunpack.c.l.b16 %v2278
  %v4093 = vunpack.c.h.b16 %v2278
  %v4094 = vunpack.c.l.b16 %v2279
  %v4095 = vunpack.c.l.b16 %v2280
  %v4096 = vunpack.c.h.b16 %v2280
  %v4097 = vunpack.c.l.b16 %v2281
  %v4098 = vunpack.c.h.b16 %v2281
  %v4099 = vunpack.c.l.b16 %v2282
  %v4100 = vunpack.c.h.b16 %v2282
  %v4101 = vunpack.c.l.b16 %v2283
  %v4102 = vunpack.c.l.b16 %v2284
  %v4103 = vunpack.c.h.b16 %v2284
  %v4104 = vunpack.c.l.b16 %v2285
  %v4105 = vunpack.c.h.b16 %v2285
  %v4106 = vunpack.c.l.b16 %v2286
  %v4107 = vunpack.c.h.b16 %v2286
  %v4108 = vunpack.c.l.b16 %v2287
  %v4109 = vunpack.c.l.b16 %v2288
  %v4110 = vunpack.c.h.b16 %v2288
  %v4111 = vunpack.c.l.b16 %v2289
  %v4112 = vunpack.c.h.b16 %v2289
  %v4113 = vunpack.c.l.b16 %v2290
  %v4114 = vunpack.c.h.b16 %v2290
  %v4115 = vunpack.c.l.b16 %v2291
  %v4116 = vunpack.c.l.b16 %v2292
  %v4117 = vunpack.c.h.b16 %v2292
  %v4118 = vunpack.c.l.b16 %v2293
  %v4119 = vunpack.c.h.b16 %v2293
  %v4120 = vunpack.c.l.b16 %v2294
  %v4121 = vunpack.c.h.b16 %v2294
  %v4122 = vunpack.c.l.b16 %v2295
  %v4123 = vunpack.c.l.b16 %v2296
  %v4124 = vunpack.c.h.b16 %v2296
  %v4125 = vunpack.c.l.b16 %v2297
  %v4126 = vunpack.c.h.b16 %v2297
  %v4127 = vunpack.c.l.b16 %v2298
  %v4128 = vunpack.c.h.b16 %v2298
  %v4129 = vunpack.c.l.b16 %v2299
  %v4130 = vunpack.c.l.b16 %v2300
  %v4131 = vunpack.c.h.b16 %v2300
  %v4132 = vunpack.c.l.b16 %v2301
  %v4133 = vunpack.c.h.b16 %v2301
  %v4134 = vunpack.c.l.b16 %v2302
  %v4135 = vunpack.c.h.b16 %v2302
  %v4136 = vunpack.c.l.b16 %v2303
  %v4137 = vunpack.c.l.b16 %v2304
  %v4138 = vunpack.c.h.b16 %v2304
  %v4139 = vunpack.c.l.b16 %v2305
  %v4140 = vunpack.c.h.b16 %v2305
  %v4141 = vunpack.c.l.b16 %v2306
  %v4142 = vunpack.c.h.b16 %v2306
  %v4143 = vunpack.c.l.b16 %v2307
  %v4144 = vunpack.c.l.b16 %v2308
  %v4145 = vunpack.c.h.b16 %v2308
  %v4146 = vunpack.c.l.b16 %v2309
  %v4147 = vunpack.c.h.b16 %v2309
  %v4148 = vunpack.c.l.b16 %v2310
  %v4149 = vunpack.c.h.b16 %v2310
  %v4150 = vunpack.c.l.b16 %v2311
  %v4151 = vunpack.c.l.b16 %v2312
  %v4152 = vunpack.c.h.b16 %v2312
  %v4153 = vunpack.c.l.b16 %v2313
  %v4154 = vunpack.c.h.b16 %v2313
  %v4155 = vunpack.c.l.b16 %v2314
  %v4156 = vunpack.c.h.b16 %v2314
  %v4157 = vunpack.c.l.b16 %v2315
  %v4158 = vunpack.c.l.b16 %v2316
  %v4159 = vunpack.c.h.b16 %v2316
  %v4160 = vunpack.c.l.b16 %v2317
  %v4161 = vunpack.c.h.b16 %v2317
  %v4162 = vunpack.c.l.b16 %v2318
  %v4163 = vunpack.c.h.b16 %v2318
  %v4164 = vunpack.c.l.b16 %v2319
  %v4165 = vunpack.c.l.b16 %v2320
  %v4166 = vunpack.c.h.b16 %v2320
  %v4167 = vunpack.c.l.b16 %v2321
  %v4168 = vunpack.c.h.b16 %v2321
  %v4169 = vunpack.c.l.b16 %v2322
  %v4170 = vunpack.c.h.b16 %v2322
  %v4171 = vunpack.c.l.b16 %v2323
  %v4172 = vunpack.c.l.b16 %v2324
  %v4173 = vunpack.c.h.b16 %v2324
  %v4174 = vunpack.c.l.b16 %v2325
  %v4175 = vunpack.c.h.b16 %v2325
  %v4176 = vunpack.c.l.b16 %v2326
  %v4177 = vunpack.c.h.b16 %v2326
  %v4178 = vunpack.c.l.b16 %v2327
  %v4179 = vunpack.c.l.b16 %v2328
  %v4180 = vunpack.c.h.b16 %v2328
  %v4181 = vunpack.c.l.b16 %v2329
  %v4182 = vunpack.c.h.b16 %v2329
  %v4183 = vunpack.c.l.b16 %v2330
  %v4184 = vunpack.c.h.b16 %v2330
  %v4185 = vunpack.c.l.b16 %v2331
  %v4186 = vunpack.c.l.b16 %v2332
  %v4187 = vunpack.c.h.b16 %v2332
  %v4188 = vunpack.c.l.b16 %v2333
  %v4189 = vunpack.c.h.b16 %v2333
  %v4190 = vunpack.c.l.b16 %v2334
  %v4191 = vunpack.c.h.b16 %v2334
  %v4192 = vunpack.c.l.b16 %v2335
  %v4193 = vunpack.c.l.b16 %v2336
  %v4194 = vunpack.c.h.b16 %v2336
  %v4195 = vunpack.c.l.b16 %v2337
  %v4196 = vunpack.c.h.b16 %v2337
  %v4197 = vunpack.c.l.b16 %v2338
  %v4198 = vunpack.c.h.b16 %v2338
  %v4199 = vunpack.c.l.b16 %v2339
  %v4200 = vunpack.c.l.b16 %v2340
  %v4201 = vunpack.c.h.b16 %v2340
  %v4202 = vunpack.c.l.b16 %v2341
  %v4203 = vunpack.c.h.b16 %v2341
  %v4204 = vunpack.c.l.b16 %v2342
  %v4205 = vunpack.c.h.b16 %v2342
  %v4206 = vunpack.c.l.b16 %v2343
  %v4207 = vunpack.c.l.b16 %v2344
  %v4208 = vunpack.c.h.b16 %v2344
  %v4209 = vunpack.c.l.b16 %v2345
  %v4210 = vunpack.c.h.b16 %v2345
  %v4211 = vunpack.c.l.b16 %v2346
  %v4212 = vunpack.c.h.b16 %v2346
  %v4213 = vunpack.c.l.b16 %v2347
  %v4214 = vunpack.c.l.b16 %v2348
  %v4215 = vunpack.c.h.b16 %v2348
  %v4216 = vunpack.c.l.b16 %v2349
  %v4217 = vunpack.c.h.b16 %v2349
  %v4218 = vunpack.c.l.b16 %v2350
  %v4219 = vunpack.c.h.b16 %v2350
  %v4220 = vunpack.c.l.b16 %v2351
  %v4221 = vunpack.c.l.b16 %v2352
  %v4222 = vunpack.c.h.b16 %v2352
  %v4223 = vunpack.c.l.b16 %v2353
  %v4224 = vunpack.c.h.b16 %v2353
  %v4225 = vunpack.c.l.b16 %v2354
  %v4226 = vunpack.c.h.b16 %v2354
  %v4227 = vunpack.c.l.b16 %v2355
  %v4228 = vunpack.c.l.b16 %v2356
  %v4229 = vunpack.c.h.b16 %v2356
  %v4230 = vunpack.c.l.b16 %v2357
  %v4231 = vunpack.c.h.b16 %v2357
  %v4232 = vunpack.c.l.b16 %v2358
  %v4233 = vunpack.c.h.b16 %v2358
  %v4234 = vunpack.c.l.b16 %v2359
  %v4235 = vunpack.c.l.b16 %v2360
  %v4236 = vunpack.c.h.b16 %v2360
  %v4237 = vunpack.c.l.b16 %v2361
  %v4238 = vunpack.c.h.b16 %v2361
  %v4239 = vunpack.c.l.b16 %v2362
  %v4240 = vunpack.c.h.b16 %v2362
  %v4241 = vunpack.c.l.b16 %v2363
  %v4242 = vunpack.c.l.b16 %v2364
  %v4243 = vunpack.c.h.b16 %v2364
  %v4244 = vunpack.c.l.b16 %v2365
  %v4245 = vunpack.c.h.b16 %v2365
  %v4246 = vunpack.c.l.b16 %v2366
  %v4247 = vunpack.c.h.b16 %v2366
  %v4248 = vunpack.c.l.b16 %v2367
  %v4249 = vunpack.c.l.b16 %v2368
  %v4250 = vunpack.c.h.b16 %v2368
  %v4251 = vunpack.c.l.b16 %v2369
  %v4252 = vunpack.c.h.b16 %v2369
  %v4253 = vunpack.c.l.b16 %v2370
  %v4254 = vunpack.c.h.b16 %v2370
  %v4255 = vunpack.c.l.b16 %v2371
  %v4256 = vunpack.c.l.b16 %v2372
  %v4257 = vunpack.c.h.b16 %v2372
  %v4258 = vunpack.c.l.b16 %v2373
  %v4259 = vunpack.c.h.b16 %v2373
  %v4260 = vunpack.c.l.b16 %v2374
  %v4261 = vunpack.c.h.b16 %v2374
  %v4262 = vunpack.c.l.b16 %v2375
  %v4263 = vunpack.c.l.b16 %v2376
  %v4264 = vunpack.c.h.b16 %v2376
  %v4265 = vunpack.c.l.b16 %v2377
  %v4266 = vunpack.c.h.b16 %v2377
  %v4267 = vunpack.c.l.b16 %v2378
  %v4268 = vunpack.c.h.b16 %v2378
  %v4269 = vunpack.c.l.b16 %v2379
  %v4270 = vunpack.c.l.b16 %v2380
  %v4271 = vunpack.c.h.b16 %v2380
  %v4272 = vunpack.c.l.b16 %v2381
  %v4273 = vunpack.c.h.b16 %v2381
  %v4274 = vunpack.c.l.b16 %v2382
  %v4275 = vunpack.c.h.b16 %v2382
  %v4276 = vunpack.c.l.b16 %v2383
  %v4277 = vunpack.c.l.b16 %v2384
  %v4278 = vunpack.c.h.b16 %v2384
  %v4279 = vunpack.c.l.b16 %v2385
  %v4280 = vunpack.c.h.b16 %v2385
  %v4281 = vunpack.c.l.b16 %v2386
  %v4282 = vunpack.c.h.b16 %v2386
  %v4283 = vunpack.c.l.b16 %v2387
  %v4284 = vunpack.c.l.b16 %v2388
  %v4285 = vunpack.c.h.b16 %v2388
  %v4286 = vunpack.c.l.b16 %v2389
  %v4287 = vunpack.c.h.b16 %v2389
  %v4288 = vunpack.c.l.b16 %v2390
  %v4289 = vunpack.c.h.b16 %v2390
  %v4290 = vunpack.c.l.b16 %v2391
  %v4291 = vunpack.c.l.b16 %v2392
  %v4292 = vunpack.c.h.b16 %v2392
  %v4293 = vunpack.c.l.b16 %v2393
  %v4294 = vunpack.c.h.b16 %v2393
  %v4295 = vunpack.c.l.b16 %v2394
  %v4296 = vunpack.c.h.b16 %v2394
  %v4297 = vunpack.c.l.b16 %v2395
  %v4298 = vunpack.c.l.b16 %v2396
  %v4299 = vunpack.c.h.b16 %v2396
  %v4300 = vunpack.c.l.b16 %v2397
  %v4301 = vunpack.c.h.b16 %v2397
  %v4302 = vunpack.c.l.b16 %v2398
  %v4303 = vunpack.c.h.b16 %v2398
  %v4304 = vunpack.c.l.b16 %v2399
  %v4305 = vunpack.c.l.b16 %v2400
  %v4306 = vunpack.c.h.b16 %v2400
  %v4307 = vunpack.c.l.b16 %v2401
  %v4308 = vunpack.c.h.b16 %v2401
  %v4309 = vunpack.c.l.b16 %v2402
  %v4310 = vunpack.c.h.b16 %v2402
  %v4311 = vunpack.c.l.b16 %v2403
  %v4312 = vunpack.c.l.b16 %v2404
  %v4313 = vunpack.c.h.b16 %v2404
  %v4314 = vunpack.c.l.b16 %v2405
  %v4315 = vunpack.c.h.b16 %v2405
  %v4316 = vunpack.c.l.b16 %v2406
  %v4317 = vunpack.c.h.b16 %v2406
  %v4318 = vunpack.c.l.b16 %v2407
  %v4319 = vunpack.c.l.b16 %v2408
  %v4320 = vunpack.c.h.b16 %v2408
  %v4321 = vunpack.c.l.b16 %v2409
  %v4322 = vunpack.c.h.b16 %v2409
  %v4323 = vunpack.c.l.b16 %v2410
  %v4324 = vunpack.c.h.b16 %v2410
  %v4325 = vunpack.c.l.b16 %v2411
  %v4326 = vunpack.c.l.b16 %v2412
  %v4327 = vunpack.c.h.b16 %v2412
  %v4328 = vunpack.c.l.b16 %v2413
  %v4329 = vunpack.c.h.b16 %v2413
  %v4330 = vunpack.c.l.b16 %v2414
  %v4331 = vunpack.c.h.b16 %v2414
  %v4332 = vunpack.c.l.b16 %v2415
  %v4333 = vunpack.c.l.b16 %v2416
  %v4334 = vunpack.c.h.b16 %v2416
  %v4335 = vunpack.c.l.b16 %v2417
  %v4336 = vunpack.c.h.b16 %v2417
  %v4337 = vunpack.c.l.b16 %v2418
  %v4338 = vunpack.c.h.b16 %v2418
  %v4339 = vunpack.c.l.b16 %v2419
  %v4340 = vunpack.c.l.b16 %v2420
  %v4341 = vunpack.c.h.b16 %v2420
  %v4342 = vunpack.c.l.b16 %v2421
  %v4343 = vunpack.c.h.b16 %v2421
  %v4344 = vunpack.c.l.b16 %v2422
  %v4345 = vunpack.c.h.b16 %v2422
  %v4346 = vunpack.c.l.b16 %v2423
  %v4347 = vunpack.c.l.b16 %v2424
  %v4348 = vunpack.c.h.b16 %v2424
  %v4349 = vunpack.c.l.b16 %v2425
  %v4350 = vunpack.c.h.b16 %v2425
  %v4351 = vunpack.c.l.b16 %v2426
  %v4352 = vunpack.c.h.b16 %v2426
  %v4353 = vunpack.c.l.b16 %v2427
  %v4354 = vunpack.c.l.b16 %v2428
  %v4355 = vunpack.c.h.b16 %v2428
  %v4356 = vunpack.c.l.b16 %v2429
  %v4357 = vunpack.c.h.b16 %v2429
  %v4358 = vunpack.c.l.b16 %v2430
  %v4359 = vunpack.c.h.b16 %v2430
  %v4360 = vunpack.c.l.b16 %v2431
  %v4361 = vunpack.c.l.b16 %v2432
  %v4362 = vunpack.c.h.b16 %v2432
  %v4363 = vunpack.c.l.b16 %v2433
  %v4364 = vunpack.c.h.b16 %v2433
  %v4365 = vunpack.c.l.b16 %v2434
  %v4366 = vunpack.c.h.b16 %v2434
  %v4367 = vunpack.c.l.b16 %v2435
  %v4368 = vunpack.c.l.b16 %v2436
  %v4369 = vunpack.c.h.b16 %v2436
  %v4370 = vunpack.c.l.b16 %v2437
  %v4371 = vunpack.c.h.b16 %v2437
  %v4372 = vunpack.c.l.b16 %v2438
  %v4373 = vunpack.c.h.b16 %v2438
  %v4374 = vunpack.c.l.b16 %v2439
  %v4375 = vunpack.c.l.b16 %v2440
  %v4376 = vunpack.c.h.b16 %v2440
  %v4377 = vunpack.c.l.b16 %v2441
  %v4378 = vunpack.c.h.b16 %v2441
  %v4379 = vunpack.c.l.b16 %v2442
  %v4380 = vunpack.c.h.b16 %v2442
  %v4381 = vunpack.c.l.b16 %v2443
  %v4382 = vunpack.c.l.b16 %v2444
  %v4383 = vunpack.c.h.b16 %v2444
  %v4384 = vunpack.c.l.b16 %v2445
  %v4385 = vunpack.c.h.b16 %v2445
  %v4386 = vunpack.c.l.b16 %v2446
  %v4387 = vunpack.c.h.b16 %v2446
  %v4388 = vunpack.c.l.b16 %v2447
  %v4389 = vunpack.c.l.b16 %v2448
  %v4390 = vunpack.c.h.b16 %v2448
  %v4391 = vunpack.c.l.b16 %v2449
  %v4392 = vunpack.c.h.b16 %v2449
  %v4393 = vunpack.c.l.b16 %v2450
  %v4394 = vunpack.c.h.b16 %v2450
  %v4395 = vunpack.c.l.b16 %v2451
  %v4396 = vunpack.c.l.b16 %v2452
  %v4397 = vunpack.c.h.b16 %v2452
  %v4398 = vunpack.c.l.b16 %v2453
  %v4399 = vunpack.c.h.b16 %v2453
  %v4400 = vunpack.c.l.b16 %v2454
  %v4401 = vunpack.c.h.b16 %v2454
  %v4402 = vunpack.c.l.b16 %v2455
  %v4403 = vunpack.c.l.b16 %v2456
  %v4404 = vunpack.c.h.b16 %v2456
  %v4405 = vunpack.c.l.b16 %v2457
  %v4406 = vunpack.c.h.b16 %v2457
  %v4407 = vunpack.c.l.b16 %v2458
  %v4408 = vunpack.c.h.b16 %v2458
  %v4409 = vunpack.c.l.b16 %v2459
  %v4410 = vunpack.c.l.b16 %v2460
  %v4411 = vunpack.c.h.b16 %v2460
  %v4412 = vunpack.c.l.b16 %v2461
  %v4413 = vunpack.c.h.b16 %v2461
  %v4414 = vunpack.c.l.b16 %v2462
  %v4415 = vunpack.c.h.b16 %v2462
  %v4416 = vunpack.c.l.b16 %v2463
  %v4417 = vunpack.c.l.b16 %v2464
  %v4418 = vunpack.c.h.b16 %v2464
  %v4419 = vunpack.c.l.b16 %v2465
  %v4420 = vunpack.c.h.b16 %v2465
  %v4421 = vunpack.c.l.b16 %v2466
  %v4422 = vunpack.c.h.b16 %v2466
  %v4423 = vunpack.c.l.b16 %v2467
  %v4424 = vunpack.c.l.b16 %v2468
  %v4425 = vunpack.c.h.b16 %v2468
  %v4426 = vunpack.c.l.b16 %v2469
  %v4427 = vunpack.c.h.b16 %v2469
  %v4428 = vunpack.c.l.b16 %v2470
  %v4429 = vunpack.c.h.b16 %v2470
  %v4430 = vunpack.c.l.b16 %v2471
  %v4431 = vunpack.c.l.b16 %v2472
  %v4432 = vunpack.c.h.b16 %v2472
  %v4433 = vunpack.c.l.b16 %v2473
  %v4434 = vunpack.c.h.b16 %v2473
  %v4435 = vunpack.c.l.b16 %v2474
  %v4436 = vunpack.c.h.b16 %v2474
  %v4437 = vunpack.c.l.b16 %v2475
  %v4438 = vunpack.c.l.b16 %v2476
  %v4439 = vunpack.c.h.b16 %v2476
  %v4440 = vunpack.c.l.b16 %v2477
  %v4441 = vunpack.c.h.b16 %v2477
  %v4442 = vunpack.c.l.b16 %v2478
  %v4443 = vunpack.c.h.b16 %v2478
  %v4444 = vunpack.c.l.b16 %v2479
  %v4445 = vunpack.c.l.b16 %v2480
  %v4446 = vunpack.c.h.b16 %v2480
  %v4447 = vunpack.c.l.b16 %v2481
  %v4448 = vunpack.c.h.b16 %v2481
  %v4449 = vunpack.c.l.b16 %v2482
  %v4450 = vunpack.c.h.b16 %v2482
  %v4451 = vunpack.c.l.b16 %v2483
  %v4452 = vunpack.c.l.b16 %v2484
  %v4453 = vunpack.c.h.b16 %v2484
  %v4454 = vunpack.c.l.b16 %v2485
  %v4455 = vunpack.c.h.b16 %v2485
  %v4456 = vunpack.c.l.b16 %v2486
  %v4457 = vunpack.c.h.b16 %v2486
  %v4458 = vunpack.c.l.b16 %v2487
  %v4459 = vunpack.c.l.b16 %v2488
  %v4460 = vunpack.c.h.b16 %v2488
  %v4461 = vunpack.c.l.b16 %v2489
  %v4462 = vunpack.c.h.b16 %v2489
  %v4463 = vunpack.c.l.b16 %v2490
  %v4464 = vunpack.c.h.b16 %v2490
  %v4465 = vunpack.c.l.b16 %v2491
  %v4466 = vunpack.c.l.b16 %v2492
  %v4467 = vunpack.c.h.b16 %v2492
  %v4468 = vunpack.c.l.b16 %v2493
  %v4469 = vunpack.c.h.b16 %v2493
  %v4470 = vunpack.c.l.b16 %v2494
  %v4471 = vunpack.c.h.b16 %v2494
  %v4472 = vunpack.c.l.b16 %v2495
  %v4473 = vunpack.c.l.b16 %v2496
  %v4474 = vunpack.c.h.b16 %v2496
  %v4475 = vunpack.c.l.b16 %v2497
  %v4476 = vunpack.c.h.b16 %v2497
  %v4477 = vunpack.c.l.b16 %v2498
  %v4478 = vunpack.c.h.b16 %v2498
  %v4479 = vunpack.c.l.b16 %v2499
  %v4480 = vunpack.c.l.b16 %v2500
  %v4481 = vunpack.c.h.b16 %v2500
  %v4482 = vunpack.c.l.b16 %v2501
  %v4483 = vunpack.c.h.b16 %v2501
  %v4484 = vunpack.c.l.b16 %v2502
  %v4485 = vunpack.c.h.b16 %v2502
  %v4486 = vunpack.c.l.b16 %v2503
  %v4487 = vunpack.c.l.b16 %v2504
  %v4488 = vunpack.c.h.b16 %v2504
  %v4489 = vunpack.c.l.b16 %v2505
  %v4490 = vunpack.c.h.b16 %v2505
  %v4491 = vunpack.c.l.b16 %v2506
  %v4492 = vunpack.c.h.b16 %v2506
  %v4493 = vunpack.c.l.b16 %v2507
  %v4494 = vunpack.c.l.b16 %v2508
  %v4495 = vunpack.c.h.b16 %v2508
  %v4496 = vunpack.c.l.b16 %v2509
  %v4497 = vunpack.c.h.b16 %v2509
  %v4498 = vunpack.c.l.b16 %v2510
  %v4499 = vunpack.c.h.b16 %v2510
  %v4500 = vunpack.c.l.b16 %v2511
  %v4501 = vunpack.c.l.b16 %v2512
  %v4502 = vunpack.c.h.b16 %v2512
  %v4503 = vunpack.c.l.b16 %v2513
  %v4504 = vunpack.c.h.b16 %v2513
  %v4505 = vunpack.c.l.b16 %v2514
  %v4506 = vunpack.c.h.b16 %v2514
  %v4507 = vunpack.c.l.b16 %v2515
  %v4508 = vunpack.c.l.b16 %v2516
  %v4509 = vunpack.c.h.b16 %v2516
  %v4510 = vunpack.c.l.b16 %v2517
  %v4511 = vunpack.c.h.b16 %v2517
  %v4512 = vunpack.c.l.b16 %v2518
  %v4513 = vunpack.c.h.b16 %v2518
  %v4514 = vunpack.c.l.b16 %v2519
  %v4515 = vunpack.c.l.b16 %v2520
  %v4516 = vunpack.c.h.b16 %v2520
  %v4517 = vunpack.c.l.b16 %v2521
  %v4518 = vunpack.c.h.b16 %v2521
  %v4519 = vunpack.c.l.b16 %v2522
  %v4520 = vunpack.c.h.b16 %v2522
  %v4521 = vunpack.c.l.b16 %v2523
  %v4522 = vunpack.c.l.b16 %v2524
  %v4523 = vunpack.c.h.b16 %v2524
  %v4524 = vunpack.c.l.b16 %v2525
  %v4525 = vunpack.c.h.b16 %v2525
  %v4526 = vunpack.c.l.b16 %v2526
  %v4527 = vunpack.c.h.b16 %v2526
  %v4528 = vunpack.c.l.b16 %v2527
  %v4529 = vunpack.c.l.b16 %v2528
  %v4530 = vunpack.c.h.b16 %v2528
  %v4531 = vunpack.c.l.b16 %v2529
  %v4532 = vunpack.c.h.b16 %v2529
  %v4533 = vunpack.c.l.b16 %v2530
  %v4534 = vunpack.c.h.b16 %v2530
  %v4535 = vunpack.c.l.b16 %v2531
  %v4536 = vunpack.c.l.b16 %v2532
  %v4537 = vunpack.c.h.b16 %v2532
  %v4538 = vunpack.c.l.b16 %v2533
  %v4539 = vunpack.c.h.b16 %v2533
  %v4540 = vunpack.c.l.b16 %v2534
  %v4541 = vunpack.c.h.b16 %v2534
  %v4542 = vunpack.c.l.b16 %v2535
  %v4543 = vunpack.c.l.b16 %v2536
  %v4544 = vunpack.c.h.b16 %v2536
  %v4545 = vunpack.c.l.b16 %v2537
  %v4546 = vunpack.c.h.b16 %v2537
  %v4547 = vunpack.c.l.b16 %v2538
  %v4548 = vunpack.c.h.b16 %v2538
  %v4549 = vunpack.c.l.b16 %v2539
  %v4550 = vunpack.c.l.b16 %v2540
  %v4551 = vunpack.c.h.b16 %v2540
  %v4552 = vunpack.c.l.b16 %v2541
  %v4553 = vunpack.c.h.b16 %v2541
  %v4554 = vunpack.c.l.b16 %v2542
  %v4555 = vunpack.c.h.b16 %v2542
  %v4556 = vunpack.c.l.b16 %v2543
  %v4557 = vunpack.c.l.b16 %v2544
  %v4558 = vunpack.c.h.b16 %v2544
  %v4559 = vunpack.c.l.b16 %v2545
  %v4560 = vunpack.c.h.b16 %v2545
  %v4561 = vunpack.c.l.b16 %v2546
  %v4562 = vunpack.c.h.b16 %v2546
  %v4563 = vunpack.c.l.b16 %v2547
  %v4564 = vunpack.c.l.b16 %v2548
  %v4565 = vunpack.c.h.b16 %v2548
  %v4566 = vunpack.c.l.b16 %v2549
  %v4567 = vunpack.c.h.b16 %v2549
  %v4568 = vunpack.c.l.b16 %v2550
  %v4569 = vunpack.c.h.b16 %v2550
  %v4570 = vunpack.c.l.b16 %v2551
  %v4571 = vunpack.c.l.b16 %v2552
  %v4572 = vunpack.c.h.b16 %v2552
  %v4573 = vunpack.c.l.b16 %v2553
  %v4574 = vunpack.c.h.b16 %v2553
  %v4575 = vunpack.c.l.b16 %v2554
  %v4576 = vunpack.c.h.b16 %v2554
  %v4577 = vunpack.c.l.b16 %v2555
  %v4578 = vunpack.c.l.b16 %v2556
  %v4579 = vunpack.c.h.b16 %v2556
  %v4580 = vunpack.c.l.b16 %v2557
  %v4581 = vunpack.c.h.b16 %v2557
  %v4582 = vunpack.c.l.b16 %v2558
  %v4583 = vunpack.c.h.b16 %v2558
  %v4584 = vunpack.c.l.b16 %v2559
  %v4585 = vunpack.c.l.b16 %v2560
  %v4586 = vunpack.c.h.b16 %v2560
  %v4587 = vunpack.c.l.b16 %v2561
  %v4588 = vunpack.c.h.b16 %v2561
  %v4589 = vunpack.c.l.b16 %v2562
  %v4590 = vunpack.c.h.b16 %v2562
  %v4591 = vunpack.c.l.b16 %v2563
  %v4592 = vunpack.c.l.b16 %v2564
  %v4593 = vunpack.c.h.b16 %v2564
  %v4594 = vunpack.c.l.b16 %v2565
  %v4595 = vunpack.c.h.b16 %v2565
  %v4596 = vunpack.c.l.b16 %v2566
  %v4597 = vunpack.c.h.b16 %v2566
  %v4598 = vunpack.c.l.b16 %v2567
  %v4599 = vunpack.c.l.b16 %v2568
  %v4600 = vunpack.c.h.b16 %v2568
  %v4601 = vunpack.c.l.b16 %v2569
  %v4602 = vunpack.c.h.b16 %v2569
  %v4603 = vunpack.c.l.b16 %v2570
  %v4604 = vunpack.c.h.b16 %v2570
  %v4605 = vunpack.c.l.b16 %v2571
  %v4606 = vunpack.c.l.b16 %v2572
  %v4607 = vunpack.c.h.b16 %v2572
  %v4608 = vunpack.c.l.b16 %v2573
  %v4609 = vunpack.c.h.b16 %v2573
  %v4610 = vunpack.c.l.b16 %v2574
  %v4611 = vunpack.c.h.b16 %v2574
  %v4612 = vunpack.c.l.b16 %v2575
  %v4613 = vunpack.c.l.b16 %v2576
  %v4614 = vunpack.c.h.b16 %v2576
  %v4615 = vunpack.c.l.b16 %v2577
  %v4616 = vunpack.c.h.b16 %v2577
  %v4617 = vunpack.c.l.b16 %v2578
  %v4618 = vunpack.c.h.b16 %v2578
  %v4619 = vunpack.c.l.b16 %v2579
  %v4620 = vunpack.c.l.b16 %v2580
  %v4621 = vunpack.c.h.b16 %v2580
  %v4622 = vunpack.c.l.b16 %v2581
  %v4623 = vunpack.c.h.b16 %v2581
  %v4624 = vunpack.c.l.b16 %v2582
  %v4625 = vunpack.c.h.b16 %v2582
  %v4626 = vunpack.c.l.b16 %v2583
  %v4627 = vunpack.c.l.b16 %v2584
  %v4628 = vunpack.c.h.b16 %v2584
  %v4629 = vunpack.c.l.b16 %v2585
  %v4630 = vunpack.c.h.b16 %v2585
  %v4631 = vunpack.c.l.b16 %v2586
  %v4632 = vunpack.c.h.b16 %v2586
  %v4633 = vunpack.c.l.b16 %v2587
  %v4634 = vunpack.c.l.b16 %v2588
  %v4635 = vunpack.c.h.b16 %v2588
  %v4636 = vunpack.c.l.b16 %v2589
  %v4637 = vunpack.c.h.b16 %v2589
  %v4638 = vunpack.c.l.b16 %v2590
  %v4639 = vunpack.c.h.b16 %v2590
  %v4640 = vunpack.c.l.b16 %v2591
  %v4641 = vunpack.c.l.b16 %v2592
  %v4642 = vunpack.c.h.b16 %v2592
  %v4643 = vunpack.c.l.b16 %v2593
  %v4644 = vunpack.c.h.b16 %v2593
  %v4645 = vunpack.c.l.b16 %v2594
  %v4646 = vunpack.c.h.b16 %v2594
  %v4647 = vunpack.c.l.b16 %v2595
  %v4648 = vunpack.c.l.b16 %v2596
  %v4649 = vunpack.c.h.b16 %v2596
  %v4650 = vunpack.c.l.b16 %v2597
  %v4651 = vunpack.c.h.b16 %v2597
  %v4652 = vunpack.c.l.b16 %v2598
  %v4653 = vunpack.c.h.b16 %v2598
  %v4654 = vunpack.c.l.b16 %v2599
  %v4655 = vunpack.c.l.b16 %v2600
  %v4656 = vunpack.c.h.b16 %v2600
  %v4657 = vunpack.c.l.b16 %v2601
  %v4658 = vunpack.c.h.b16 %v2601
  %v4659 = vunpack.c.l.b16 %v2602
  %v4660 = vunpack.c.h.b16 %v2602
  %v4661 = vunpack.c.l.b16 %v2603
  %v4662 = vunpack.c.l.b16 %v2604
  %v4663 = vunpack.c.h.b16 %v2604
  %v4664 = vunpack.c.l.b16 %v2605
  %v4665 = vunpack.c.h.b16 %v2605
  %v4666 = vunpack.c.l.b16 %v2606
  %v4667 = vunpack.c.h.b16 %v2606
  %v4668 = vunpack.c.l.b16 %v2607
  %v4669 = vunpack.c.l.b16 %v2608
  %v4670 = vunpack.c.h.b16 %v2608
  %v4671 = vunpack.c.l.b16 %v2609
  %v4672 = vunpack.c.h.b16 %v2609
  %v4673 = vunpack.c.l.b16 %v2610
  %v4674 = vunpack.c.h.b16 %v2610
  %v4675 = vunpack.c.l.b16 %v2611
  %v4676 = vunpack.c.l.b16 %v2612
  %v4677 = vunpack.c.h.b16 %v2612
  %v4678 = vunpack.c.l.b16 %v2613
  %v4679 = vunpack.c.h.b16 %v2613
  %v4680 = vunpack.c.l.b16 %v2614
  %v4681 = vunpack.c.h.b16 %v2614
  %v4682 = vunpack.c.l.b16 %v2615
  %v4683 = vunpack.c.l.b16 %v2616
  %v4684 = vunpack.c.h.b16 %v2616
  %v4685 = vunpack.c.l.b16 %v2617
  %v4686 = vunpack.c.h.b16 %v2617
  %v4687 = vunpack.c.l.b16 %v2618
  %v4688 = vunpack.c.h.b16 %v2618
  %v4689 = vunpack.c.l.b16 %v2619
  %v4690 = vunpack.c.l.b16 %v2620
  %v4691 = vunpack.c.h.b16 %v2620
  %v4692 = vunpack.c.l.b16 %v2621
  %v4693 = vunpack.c.h.b16 %v2621
  %v4694 = vunpack.c.l.b16 %v2622
  %v4695 = vunpack.c.h.b16 %v2622
  %v4696 = vunpack.c.l.b16 %v2623
  %v4697 = vunpack.c.l.b16 %v2624
  %v4698 = vunpack.c.h.b16 %v2624
  %v4699 = vunpack.c.l.b16 %v2625
  %v4700 = vunpack.c.h.b16 %v2625
  %v4701 = vunpack.c.l.b16 %v2626
  %v4702 = vunpack.c.h.b16 %v2626
  %v4703 = vunpack.c.l.b16 %v2627
  %v4704 = vunpack.c.l.b16 %v2628
  %v4705 = vunpack.c.h.b16 %v2628
  %v4706 = vunpack.c.l.b16 %v2629
  %v4707 = vunpack.c.h.b16 %v2629
  %v4708 = vunpack.c.l.b16 %v2630
  %v4709 = vunpack.c.h.b16 %v2630
  %v4710 = vunpack.c.l.b16 %v2631
  %v4711 = vunpack.c.l.b16 %v2632
  %v4712 = vunpack.c.h.b16 %v2632
  %v4713 = vunpack.c.l.b16 %v2633
  %v4714 = vunpack.c.h.b16 %v2633
  %v4715 = vunpack.c.l.b16 %v2634
  %v4716 = vunpack.c.h.b16 %v2634
  %v4717 = vunpack.c.l.b16 %v2635
  %v4718 = vunpack.c.l.b16 %v2636
  %v4719 = vunpack.c.h.b16 %v2636
  %v4720 = vunpack.c.l.b16 %v2637
  %v4721 = vunpack.c.h.b16 %v2637
  %v4722 = vunpack.c.l.b16 %v2638
  %v4723 = vunpack.c.h.b16 %v2638
  %v4724 = vunpack.c.l.b16 %v2639
  %v4725 = vunpack.c.l.b16 %v2640
  %v4726 = vunpack.c.h.b16 %v2640
  %v4727 = vunpack.c.l.b16 %v2641
  %v4728 = vunpack.c.h.b16 %v2641
  %v4729 = vunpack.c.l.b16 %v2642
  %v4730 = vunpack.c.h.b16 %v2642
  %v4731 = vunpack.c.l.b16 %v2643
  %v4732 = vunpack.c.l.b16 %v2644
  %v4733 = vunpack.c.h.b16 %v2644
  %v4734 = vunpack.c.l.b16 %v2645
  %v4735 = vunpack.c.h.b16 %v2645
  %v4736 = vunpack.c.l.b16 %v2646
  %v4737 = vunpack.c.h.b16 %v2646
  %v4738 = vunpack.c.l.b16 %v2647
  %v4739 = vunpack.c.l.b16 %v2648
  %v4740 = vunpack.c.h.b16 %v2648
  %v4741 = vunpack.c.l.b16 %v2649
  %v4742 = vunpack.c.h.b16 %v2649
  %v4743 = vunpack.c.l.b16 %v2650
  %v4744 = vunpack.c.h.b16 %v2650
  %v4745 = vunpack.c.l.b16 %v2651
  %v4746 = vunpack.c.l.b16 %v2652
  %v4747 = vunpack.c.h.b16 %v2652
  %v4748 = vunpack.c.l.b16 %v2653
  %v4749 = vunpack.c.h.b16 %v2653
  %v4750 = vunpack.c.l.b16 %v2654
  %v4751 = vunpack.c.h.b16 %v2654
  %v4752 = vunpack.c.l.b16 %v2655
  %v4753 = vunpack.c.l.b16 %v2656
  %v4754 = vunpack.c.h.b16 %v2656
  %v4755 = vunpack.c.l.b16 %v2657
  %v4756 = vunpack.c.h.b16 %v2657
  %v4757 = vunpack.c.l.b16 %v2658
  %v4758 = vunpack.c.h.b16 %v2658
  %v4759 = vunpack.c.l.b16 %v2659
  %v4760 = vunpack.c.l.b16 %v2660
  %v4761 = vunpack.c.h.b16 %v2660
  %v4762 = vunpack.c.l.b16 %v2661
  %v4763 = vunpack.c.h.b16 %v2661
  %v4764 = vunpack.c.l.b16 %v2662
  %v4765 = vunpack.c.h.b16 %v2662
  %v4766 = vunpack.c.l.b16 %v2663
  %v4767 = vunpack.c.l.b16 %v2664
  %v4768 = vunpack.c.h.b16 %v2664
  %v4769 = vunpack.c.l.b16 %v2665
  %v4770 = vunpack.c.h.b16 %v2665
  %v4771 = vunpack.c.l.b16 %v2666
  %v4772 = vunpack.c.h.b16 %v2666
  %v4773 = vunpack.c.l.b16 %v2667
  %v4774 = vunpack.c.l.b16 %v2668
  %v4775 = vunpack.c.h.b16 %v2668
  %v4776 = vunpack.c.l.b16 %v2669
  %v4777 = vunpack.c.h.b16 %v2669
  %v4778 = vunpack.c.l.b16 %v2670
  %v4779 = vunpack.c.h.b16 %v2670
  %v4780 = vunpack.c.l.b16 %v2671
  %v4781 = vunpack.c.l.b16 %v2672
  %v4782 = vunpack.c.h.b16 %v2672
  %v4783 = vunpack.c.l.b16 %v2673
  %v4784 = vunpack.c.h.b16 %v2673
  %v4785 = vunpack.c.l.b16 %v2674
  %v4786 = vunpack.c.h.b16 %v2674
  %v4787 = vunpack.c.l.b16 %v2675
  %v4788 = vunpack.c.l.b16 %v2676
  %v4789 = vunpack.c.h.b16 %v2676
  %v4790 = vunpack.c.l.b16 %v2677
  %v4791 = vunpack.c.h.b16 %v2677
  %v4792 = vunpack.c.l.b16 %v2678
  %v4793 = vunpack.c.h.b16 %v2678
  %v4794 = vunpack.c.l.b16 %v2679
  %v4795 = vunpack.c.l.b16 %v2680
  %v4796 = vunpack.c.h.b16 %v2680
  %v4797 = vunpack.c.l.b16 %v2681
  %v4798 = vunpack.c.h.b16 %v2681
  %v4799 = vunpack.c.l.b16 %v2682
  %v4800 = vunpack.c.h.b16 %v2682
  %v4801 = vunpack.c.l.b16 %v2683
  %v4802 = vunpack.c.l.b16 %v2684
  %v4803 = vunpack.c.h.b16 %v2684
  %v4804 = vunpack.c.l.b16 %v2685
  %v4805 = vunpack.c.h.b16 %v2685
  %v4806 = vunpack.c.l.b16 %v2686
  %v4807 = vunpack.c.h.b16 %v2686
  %v4808 = vunpack.c.l.b16 %v2687
  %v4809 = vunpack.c.l.b16 %v2688
  %v4810 = vunpack.c.h.b16 %v2688
  %v4811 = vunpack.c.l.b16 %v2689
  %v4812 = vunpack.c.h.b16 %v2689
  %v4813 = vunpack.c.l.b16 %v2690
  %v4814 = vunpack.c.h.b16 %v2690
  %v4815 = vunpack.c.l.b16 %v2691
  %v4816 = vunpack.c.l.b16 %v2692
  %v4817 = vunpack.c.h.b16 %v2692
  %v4818 = vunpack.c.l.b16 %v2693
  %v4819 = vunpack.c.h.b16 %v2693
  %v4820 = vunpack.c.l.b16 %v2694
  %v4821 = vunpack.c.h.b16 %v2694
  %v4822 = vunpack.c.l.b16 %v2695
  %v4823 = vunpack.c.l.b16 %v2696
  %v4824 = vunpack.c.h.b16 %v2696
  %v4825 = vunpack.c.l.b16 %v2697
  %v4826 = vunpack.c.h.b16 %v2697
  %v4827 = vunpack.c.l.b16 %v2698
  %v4828 = vunpack.c.h.b16 %v2698
  %v4829 = vunpack.c.l.b16 %v2699
  %v4830 = vunpack.c.l.b16 %v2700
  %v4831 = vunpack.c.h.b16 %v2700
  %v4832 = vunpack.c.l.b16 %v2701
  %v4833 = vunpack.c.h.b16 %v2701
  %v4834 = vunpack.c.l.b16 %v2702
  %v4835 = vunpack.c.h.b16 %v2702
  %v4836 = vunpack.c.l.b16 %v2703
  %v4837 = vunpack.c.l.b16 %v2704
  %v4838 = vunpack.c.h.b16 %v2704
  %v4839 = vunpack.c.l.b16 %v2705
  %v4840 = vunpack.c.h.b16 %v2705
  %v4841 = vunpack.c.l.b16 %v2706
  %v4842 = vunpack.c.h.b16 %v2706
  %v4843 = vunpack.c.l.b16 %v2707
  %v4844 = vunpack.c.l.b16 %v2708
  %v4845 = vunpack.c.h.b16 %v2708
  %v4846 = vunpack.c.l.b16 %v2709
  %v4847 = vunpack.c.h.b16 %v2709
  %v4848 = vunpack.c.l.b16 %v2710
  %v4849 = vunpack.c.h.b16 %v2710
  %v4850 = vunpack.c.l.b16 %v2711
  %v4851 = vunpack.c.l.b16 %v2712
  %v4852 = vunpack.c.h.b16 %v2712
  %v4853 = vunpack.c.l.b16 %v2713
  %v4854 = vunpack.c.h.b16 %v2713
  %v4855 = vunpack.c.l.b16 %v2714
  %v4856 = vunpack.c.h.b16 %v2714
  %v4857 = vunpack.c.l.b16 %v2715
  %v4858 = vunpack.c.l.b16 %v2716
  %v4859 = vunpack.c.h.b16 %v2716
  %v4860 = vunpack.c.l.b16 %v2717
  %v4861 = vunpack.c.h.b16 %v2717
  %v4862 = vunpack.c.l.b16 %v2718
  %v4863 = vunpack.c.h.b16 %v2718
  %v4864 = vunpack.c.l.b16 %v2719
  %v4865 = vunpack.c.l.b16 %v2720
  %v4866 = vunpack.c.h.b16 %v2720
  %v4867 = vunpack.c.l.b16 %v2721
  %v4868 = vunpack.c.h.b16 %v2721
  %v4869 = vunpack.c.l.b16 %v2722
  %v4870 = vunpack.c.h.b16 %v2722
  %v4871 = vunpack.c.l.b16 %v2723
  %v4872 = vunpack.c.l.b16 %v2724
  %v4873 = vunpack.c.h.b16 %v2724
  %v4874 = vunpack.c.l.b16 %v2725
  %v4875 = vunpack.c.h.b16 %v2725
  %v4876 = vunpack.c.l.b16 %v2726
  %v4877 = vunpack.c.h.b16 %v2726
  %v4878 = vunpack.c.l.b16 %v2727
  %v4879 = vunpack.c.l.b16 %v2728
  %v4880 = vunpack.c.h.b16 %v2728
  %v4881 = vunpack.c.l.b16 %v2729
  %v4882 = vunpack.c.h.b16 %v2729
  %v4883 = vunpack.c.l.b16 %v2730
  %v4884 = vunpack.c.h.b16 %v2730
  %v4885 = vunpack.c.l.b16 %v2731
  %v4886 = vunpack.c.l.b16 %v2732
  %v4887 = vunpack.c.h.b16 %v2732
  %v4888 = vunpack.c.l.b16 %v2733
  %v4889 = vunpack.c.h.b16 %v2733
  %v4890 = vunpack.c.l.b16 %v2734
  %v4891 = vunpack.c.h.b16 %v2734
  %v4892 = vunpack.c.l.b16 %v2735
  %v4893 = vunpack.c.l.b16 %v2736
  %v4894 = vunpack.c.h.b16 %v2736
  %v4895 = vunpack.c.l.b16 %v2737
  %v4896 = vunpack.c.h.b16 %v2737
  %v4897 = vunpack.c.l.b16 %v2738
  %v4898 = vunpack.c.h.b16 %v2738
  %v4899 = vunpack.c.l.b16 %v2739
  %v4900 = vunpack.c.l.b16 %v2740
  %v4901 = vunpack.c.h.b16 %v2740
  %v4902 = vunpack.c.l.b16 %v2741
  %v4903 = vunpack.c.h.b16 %v2741
  %v4904 = vunpack.c.l.b16 %v2742
  %v4905 = vunpack.c.h.b16 %v2742
  %v4906 = vunpack.c.l.b16 %v2743
  %v4907 = vunpack.c.l.b16 %v2744
  %v4908 = vunpack.c.h.b16 %v2744
  %v4909 = vunpack.c.l.b16 %v2745
  %v4910 = vunpack.c.h.b16 %v2745
  %v4911 = vunpack.c.l.b16 %v2746
  %v4912 = vunpack.c.h.b16 %v2746
  %v4913 = vunpack.c.l.b16 %v2747
  %v4914 = vunpack.c.l.b16 %v2748
  %v4915 = vunpack.c.h.b16 %v2748
  %v4916 = vunpack.c.l.b16 %v2749
  %v4917 = vunpack.c.h.b16 %v2749
  %v4918 = vunpack.c.l.b16 %v2750
  %v4919 = vunpack.c.h.b16 %v2750
  %v4920 = vunpack.c.l.b16 %v2751
  %v4921 = vunpack.c.l.b16 %v2752
  %v4922 = vunpack.c.h.b16 %v2752
  %v4923 = vunpack.c.l.b16 %v2753
  %v4924 = vunpack.c.h.b16 %v2753
  %v4925 = vunpack.c.l.b16 %v2754
  %v4926 = vunpack.c.h.b16 %v2754
  %v4927 = vunpack.c.l.b16 %v2755
  %v4928 = vunpack.c.l.b16 %v2756
  %v4929 = vunpack.c.h.b16 %v2756
  %v4930 = vunpack.c.l.b16 %v2757
  %v4931 = vunpack.c.h.b16 %v2757
  %v4932 = vunpack.c.l.b16 %v2758
  %v4933 = vunpack.c.h.b16 %v2758
  %v4934 = vunpack.c.l.b16 %v2759
  %v4935 = vunpack.c.l.b16 %v2760
  %v4936 = vunpack.c.h.b16 %v2760
  %v4937 = vunpack.c.l.b16 %v2761
  %v4938 = vunpack.c.h.b16 %v2761
  %v4939 = vunpack.c.l.b16 %v2762
  %v4940 = vunpack.c.h.b16 %v2762
  %v4941 = vunpack.c.l.b16 %v2763
  %v4942 = vunpack.c.l.b16 %v2764
  %v4943 = vunpack.c.h.b16 %v2764
  %v4944 = vunpack.c.l.b16 %v2765
  %v4945 = vunpack.c.h.b16 %v2765
  %v4946 = vunpack.c.l.b16 %v2766
  %v4947 = vunpack.c.h.b16 %v2766
  %v4948 = vunpack.c.l.b16 %v2767
  %v4949 = vunpack.c.l.b16 %v2768
  %v4950 = vunpack.c.h.b16 %v2768
  %v4951 = vunpack.c.l.b16 %v2769
  %v4952 = vunpack.c.h.b16 %v2769
  %v4953 = vunpack.c.l.b16 %v2770
  %v4954 = vunpack.c.h.b16 %v2770
  %v4955 = vunpack.c.l.b16 %v2771
  %v4956 = vunpack.c.l.b16 %v2772
  %v4957 = vunpack.c.h.b16 %v2772
  %v4958 = vunpack.c.l.b16 %v2773
  %v4959 = vunpack.c.h.b16 %v2773
  %v4960 = vunpack.c.l.b16 %v2774
  %v4961 = vunpack.c.h.b16 %v2774
  %v4962 = vunpack.c.l.b16 %v2775
  %v4963 = vunpack.c.l.b16 %v2776
  %v4964 = vunpack.c.h.b16 %v2776
  %v4965 = vunpack.c.l.b16 %v2777
  %v4966 = vunpack.c.h.b16 %v2777
  %v4967 = vunpack.c.l.b16 %v2778
  %v4968 = vunpack.c.h.b16 %v2778
  %v4969 = vunpack.c.l.b16 %v2779
  %v4970 = vunpack.c.l.b16 %v2780
  %v4971 = vunpack.c.h.b16 %v2780
  %v4972 = vunpack.c.l.b16 %v2781
  %v4973 = vunpack.c.h.b16 %v2781
  %v4974 = vunpack.c.l.b16 %v2782
  %v4975 = vunpack.c.h.b16 %v2782
  %v4976 = vunpack.c.l.b16 %v2783
  %v4977 = vunpack.c.l.b16 %v2784
  %v4978 = vunpack.c.h.b16 %v2784
  %v4979 = vunpack.c.l.b16 %v2785
  %v4980 = vunpack.c.h.b16 %v2785
  %v4981 = vunpack.c.l.b16 %v2786
  %v4982 = vunpack.c.h.b16 %v2786
  %v4983 = vunpack.c.l.b16 %v2787
  %v4984 = vunpack.c.l.b16 %v2788
  %v4985 = vunpack.c.h.b16 %v2788
  %v4986 = vunpack.c.l.b16 %v2789
  %v4987 = vunpack.c.h.b16 %v2789
  %v4988 = vunpack.c.l.b16 %v2790
  %v4989 = vunpack.c.h.b16 %v2790
  %v4990 = vunpack.c.l.b16 %v2791
  %v4991 = vunpack.c.l.b16 %v2792
  %v4992 = vunpack.c.h.b16 %v2792
  %v4993 = vunpack.c.l.b16 %v2793
  %v4994 = vunpack.c.h.b16 %v2793
  %v4995 = vunpack.c.l.b16 %v2794
  %v4996 = vunpack.c.h.b16 %v2794
  %v4997 = vunpack.c.l.b16 %v2795
  %v4998 = vunpack.c.l.b16 %v2796
  %v4999 = vunpack.c.h.b16 %v2796
  %v5000 = vunpack.c.l.b16 %v2797
  %v5001 = vunpack.c.h.b16 %v2797
  %v5002 = vunpack.c.l.b16 %v2798
  %v5003 = vunpack.c.h.b16 %v2798
  %v5004 = vunpack.c.l.b16 %v2799
  %v5005 = vunpack.c.l.b16 %v2800
  %v5006 = vunpack.c.h.b16 %v2800
  %v5007 = vunpack.c.l.b16 %v2801
  %v5008 = vunpack.c.h.b16 %v2801
  %v5009 = vunpack.c.l.b16 %v2802
  %v5010 = vunpack.c.h.b16 %v2802
  %v5011 = vunpack.c.l.b16 %v2803
  %v5012 = vunpack.c.l.b16 %v2804
  %v5013 = vunpack.c.h.b16 %v2804
  %v5014 = vunpack.c.l.b16 %v2805
  %v5015 = vunpack.c.h.b16 %v2805
  %v5016 = vunpack.c.l.b16 %v2806
  %v5017 = vunpack.c.h.b16 %v2806
  %v5018 = vunpack.c.l.b16 %v2807
  %v5019 = vunpack.c.l.b16 %v2808
  %v5020 = vunpack.c.h.b16 %v2808
  %v5021 = vunpack.c.l.b16 %v2809
  %v5022 = vunpack.c.h.b16 %v2809
  %v5023 = vunpack.c.l.b16 %v2810
  %v5024 = vunpack.c.h.b16 %v2810
  %v5025 = vunpack.c.l.b16 %v2811
  %v5026 = vunpack.c.l.b16 %v2812
  %v5027 = vunpack.c.h.b16 %v2812
  %v5028 = vunpack.c.l.b16 %v2813
  %v5029 = vunpack.c.h.b16 %v2813
  %v5030 = vunpack.c.l.b16 %v2814
  %v5031 = vunpack.c.h.b16 %v2814
  %v5032 = vunpack.c.l.b16 %v2815
  %v5033 = vunpack.c.l.b16 %v2816
  %v5034 = vunpack.c.h.b16 %v2816
  %v5035 = vunpack.c.l.b16 %v2817
  %v5036 = vunpack.c.h.b16 %v2817
  %v5037 = vunpack.c.l.b16 %v2818
  %v5038 = vunpack.c.h.b16 %v2818
  %v5039 = vunpack.c.l.b16 %v2819
  %v5040 = vunpack.c.l.b16 %v2820
  %v5041 = vunpack.c.h.b16 %v2820
  %v5042 = vunpack.c.l.b16 %v2821
  %v5043 = vunpack.c.h.b16 %v2821
  %v5044 = vunpack.c.l.b16 %v2822
  %v5045 = vunpack.c.h.b16 %v2822
  %v5046 = vunpack.c.l.b16 %v2823
  %v5047 = vunpack.c.l.b16 %v2824
  %v5048 = vunpack.c.h.b16 %v2824
  %v5049 = vunpack.c.l.b16 %v2825
  %v5050 = vunpack.c.h.b16 %v2825
  %v5051 = vunpack.c.l.b16 %v2826
  %v5052 = vunpack.c.h.b16 %v2826
  %v5053 = vunpack.c.l.b16 %v2827
  %v5054 = vunpack.c.l.b16 %v2828
  %v5055 = vunpack.c.h.b16 %v2828
  %v5056 = vunpack.c.l.b16 %v2829
  %v5057 = vunpack.c.h.b16 %v2829
  %v5058 = vunpack.c.l.b16 %v2830
  %v5059 = vunpack.c.h.b16 %v2830
  %v5060 = vunpack.c.l.b16 %v2831
  %v5061 = vunpack.c.l.b16 %v2832
  %v5062 = vunpack.c.h.b16 %v2832
  %v5063 = vunpack.c.l.b16 %v2833
  %v5064 = vunpack.c.h.b16 %v2833
  %v5065 = vunpack.c.l.b16 %v2834
  %v5066 = vunpack.c.h.b16 %v2834
  %v5067 = vunpack.c.l.b16 %v2835
  %v5068 = vunpack.c.l.b16 %v2836
  %v5069 = vunpack.c.h.b16 %v2836
  %v5070 = vunpack.c.l.b16 %v2837
  %v5071 = vunpack.c.h.b16 %v2837
  %v5072 = vunpack.c.l.b16 %v2838
  %v5073 = vunpack.c.h.b16 %v2838
  %v5074 = vunpack.c.l.b16 %v2839
  %v5075 = vunpack.c.l.b16 %v2840
  %v5076 = vunpack.c.h.b16 %v2840
  %v5077 = vunpack.c.l.b16 %v2841
  %v5078 = vunpack.c.h.b16 %v2841
  %v5079 = vunpack.c.l.b16 %v2842
  %v5080 = vunpack.c.h.b16 %v2842
  %v5081 = vunpack.c.l.b16 %v2843
  %v5082 = vunpack.c.l.b16 %v2844
  %v5083 = vunpack.c.h.b16 %v2844
  %v5084 = vunpack.c.l.b16 %v2845
  %v5085 = vunpack.c.h.b16 %v2845
  %v5086 = vunpack.c.l.b16 %v2846
  %v5087 = vunpack.c.h.b16 %v2846
  %v5088 = vunpack.c.l.b16 %v2847
  %v5089 = vunpack.c.l.b16 %v2848
  %v5090 = vunpack.c.h.b16 %v2848
  %v5091 = vunpack.c.l.b16 %v2849
  %v5092 = vunpack.c.h.b16 %v2849
  %v5093 = vunpack.c.l.b16 %v2850
  %v5094 = vunpack.c.h.b16 %v2850
  %v5095 = vunpack.c.l.b16 %v2851
  %v5096 = vunpack.c.l.b16 %v2852
  %v5097 = vunpack.c.h.b16 %v2852
  %v5098 = vunpack.c.l.b16 %v2853
  %v5099 = vunpack.c.h.b16 %v2853
  %v5100 = vunpack.c.l.b16 %v2854
  %v5101 = vunpack.c.h.b16 %v2854
  %v5102 = vunpack.c.l.b16 %v2855
  %v5103 = vunpack.c.l.b16 %v2856
  %v5104 = vunpack.c.h.b16 %v2856
  %v5105 = vunpack.c.l.b16 %v2857
  %v5106 = vunpack.c.h.b16 %v2857
  %v5107 = vunpack.c.l.b16 %v2858
  %v5108 = vunpack.c.h.b16 %v2858
  %v5109 = vunpack.c.l.b16 %v2859
  %v5110 = vunpack.c.l.b16 %v2860
  %v5111 = vunpack.c.h.b16 %v2860
  %v5112 = vunpack.c.l.b16 %v2861
  %v5113 = vunpack.c.h.b16 %v2861
  %v5114 = vunpack.c.l.b16 %v2862
  %v5115 = vunpack.c.h.b16 %v2862
  %v5116 = vunpack.c.l.b16 %v2863
  %v5117 = vunpack.c.l.b16 %v2864
  %v5118 = vunpack.c.h.b16 %v2864
  %v5119 = vunpack.c.l.b16 %v2865
  %v5120 = vunpack.c.h.b16 %v2865
  %v5121 = vunpack.c.l.b16 %v2866
  %v5122 = vunpack.c.h.b16 %v2866
  %v5123 = vunpack.c.l.b16 %v2867
  %v5124 = vunpack.c.l.b16 %v2868
  %v5125 = vunpack.c.h.b16 %v2868
  %v5126 = vunpack.c.l.b16 %v2869
  %v5127 = vunpack.c.h.b16 %v2869
  %v5128 = vunpack.c.l.b16 %v2870
  %v5129 = vunpack.c.h.b16 %v2870
  %v5130 = vunpack.c.l.b16 %v2871
  %v5131 = vunpack.c.l.b16 %v2872
  %v5132 = vunpack.c.h.b16 %v2872
  %v5133 = vunpack.c.l.b16 %v2873
  %v5134 = vunpack.c.h.b16 %v2873
  %v5135 = vunpack.c.l.b16 %v2874
  %v5136 = vunpack.c.h.b16 %v2874
  %v5137 = vunpack.c.l.b16 %v2875
  %v5138 = vunpack.c.l.b16 %v2876
  %v5139 = vunpack.c.h.b16 %v2876
  %v5140 = vunpack.c.l.b16 %v2877
  %v5141 = vunpack.c.h.b16 %v2877
  %v5142 = vunpack.c.l.b16 %v2878
  %v5143 = vunpack.c.h.b16 %v2878
  %v5144 = vunpack.c.l.b16 %v2879
  %v5145 = vunpack.c.l.b16 %v2880
  %v5146 = vunpack.c.h.b16 %v2880
  %v5147 = vunpack.c.l.b16 %v2881
  %v5148 = vunpack.c.h.b16 %v2881
  %v5149 = vunpack.c.l.b16 %v2882
  %v5150 = vunpack.c.h.b16 %v2882
  %v5151 = vunpack.c.l.b16 %v2883
  %v5152 = vunpack.c.l.b16 %v2884
  %v5153 = vunpack.c.h.b16 %v2884
  %v5154 = vunpack.c.l.b16 %v2885
  %v5155 = vunpack.c.h.b16 %v2885
  %v5156 = vunpack.c.l.b16 %v2886
  %v5157 = vunpack.c.h.b16 %v2886
  %v5158 = vunpack.c.l.b16 %v2887
  %v5159 = vunpack.c.l.b16 %v2888
  %v5160 = vunpack.c.h.b16 %v2888
  %v5161 = vunpack.c.l.b16 %v2889
  %v5162 = vunpack.c.h.b16 %v2889
  %v5163 = vunpack.c.l.b16 %v2890
  %v5164 = vunpack.c.h.b16 %v2890
  %v5165 = vunpack.c.l.b16 %v2891
  %v5166 = vunpack.c.l.b16 %v2892
  %v5167 = vunpack.c.h.b16 %v2892
  %v5168 = vunpack.c.l.b16 %v2893
  %v5169 = vunpack.c.h.b16 %v2893
  %v5170 = vunpack.c.l.b16 %v2894
  %v5171 = vunpack.c.h.b16 %v2894
  %v5172 = vunpack.c.l.b16 %v2895
  %v5173 = vunpack.c.l.b16 %v2896
  %v5174 = vunpack.c.h.b16 %v2896
  %v5175 = vunpack.c.l.b16 %v2897
  %v5176 = vunpack.c.h.b16 %v2897
  %v5177 = vunpack.c.l.b16 %v2898
  %v5178 = vunpack.c.h.b16 %v2898
  %v5179 = vunpack.c.l.b16 %v2899
  %v5180 = vunpack.c.l.b16 %v2900
  %v5181 = vunpack.c.h.b16 %v2900
  %v5182 = vunpack.c.l.b16 %v2901
  %v5183 = vunpack.c.h.b16 %v2901
  %v5184 = vunpack.c.l.b16 %v2902
  %v5185 = vunpack.c.h.b16 %v2902
  %v5186 = vunpack.c.l.b16 %v2903
  %v5187 = vunpack.c.l.b16 %v2904
  %v5188 = vunpack.c.h.b16 %v2904
  %v5189 = vunpack.c.l.b16 %v2905
  %v5190 = vunpack.c.h.b16 %v2905
  %v5191 = vunpack.c.l.b16 %v2906
  %v5192 = vunpack.c.h.b16 %v2906
  %v5193 = vunpack.c.l.b16 %v2907
  %v5194 = vunpack.c.l.b16 %v2908
  %v5195 = vunpack.c.h.b16 %v2908
  %v5196 = vunpack.c.l.b16 %v2909
  %v5197 = vunpack.c.h.b16 %v2909
  %v5198 = vunpack.c.l.b16 %v2910
  %v5199 = vunpack.c.h.b16 %v2910
  %v5200 = vunpack.c.l.b16 %v2911
  %v5201 = vunpack.c.l.b16 %v2912
  %v5202 = vunpack.c.h.b16 %v2912
  %v5203 = vunpack.c.l.b16 %v2913
  %v5204 = vunpack.c.h.b16 %v2913
  %v5205 = vunpack.c.l.b16 %v2914
  %v5206 = vunpack.c.h.b16 %v2914
  %v5207 = vunpack.c.l.b16 %v2915
  %v5208 = vunpack.c.l.b16 %v2916
  %v5209 = vunpack.c.h.b16 %v2916
  %v5210 = vunpack.c.l.b16 %v2917
  %v5211 = vunpack.c.h.b16 %v2917
  %v5212 = vunpack.c.l.b16 %v2918
  %v5213 = vunpack.c.h.b16 %v2918
  %v5214 = vunpack.c.l.b16 %v2919
  %v5215 = vunpack.c.l.b16 %v2920
  %v5216 = vunpack.c.h.b16 %v2920
  %v5217 = vunpack.c.l.b16 %v2921
  %v5218 = vunpack.c.h.b16 %v2921
  %v5219 = vunpack.c.l.b16 %v2922
  %v5220 = vunpack.c.h.b16 %v2922
  %v5221 = vunpack.c.l.b16 %v2923
  %v5222 = vunpack.c.l.b16 %v2924
  %v5223 = vunpack.c.h.b16 %v2924
  %v5224 = vunpack.c.l.b16 %v2925
  %v5225 = vunpack.c.h.b16 %v2925
  %v5226 = vunpack.c.l.b16 %v2926
  %v5227 = vunpack.c.h.b16 %v2926
  %v5228 = vunpack.c.l.b16 %v2927
  %v5229 = vunpack.c.l.b16 %v2928
  %v5230 = vunpack.c.h.b16 %v2928
  %v5231 = vunpack.c.l.b16 %v2929
  %v5232 = vunpack.c.h.b16 %v2929
  %v5233 = vunpack.c.l.b16 %v2930
  %v5234 = vunpack.c.h.b16 %v2930
  %v5235 = vunpack.c.l.b16 %v2931
  %v5236 = vunpack.c.l.b16 %v2932
  %v5237 = vunpack.c.h.b16 %v2932
  %v5238 = vunpack.c.l.b16 %v2933
  %v5239 = vunpack.c.h.b16 %v2933
  %v5240 = vunpack.c.l.b16 %v2934
  %v5241 = vunpack.c.h.b16 %v2934
  %v5242 = vunpack.c.l.b16 %v2935
  %v5243 = vunpack.c.l.b16 %v2936
  %v5244 = vunpack.c.h.b16 %v2936
  %v5245 = vunpack.c.l.b16 %v2937
  %v5246 = vunpack.c.h.b16 %v2937
  %v5247 = vunpack.c.l.b16 %v2938
  %v5248 = vunpack.c.h.b16 %v2938
  %v5249 = vunpack.c.l.b16 %v2939
  %v5250 = vunpack.c.l.b16 %v2940
  %v5251 = vunpack.c.h.b16 %v2940
  %v5252 = vunpack.c.l.b16 %v2941
  %v5253 = vunpack.c.h.b16 %v2941
  %v5254 = vunpack.c.l.b16 %v2942
  %v5255 = vunpack.c.h.b16 %v2942
  %v5256 = vunpack.c.l.b16 %v2943
  %v5257 = vunpack.c.l.b16 %v2944
  %v5258 = vunpack.c.h.b16 %v2944
  %v5259 = vunpack.c.l.b16 %v2945
  %v5260 = vunpack.c.h.b16 %v2945
  %v5261 = vunpack.c.l.b16 %v2946
  %v5262 = vunpack.c.h.b16 %v2946
  %v5263 = vunpack.c.l.b16 %v2947
  %v5264 = vunpack.c.l.b16 %v2948
  %v5265 = vunpack.c.h.b16 %v2948
  %v5266 = vunpack.c.l.b16 %v2949
  %v5267 = vunpack.c.h.b16 %v2949
  %v5268 = vunpack.c.l.b16 %v2950
  %v5269 = vunpack.c.h.b16 %v2950
  %v5270 = vunpack.c.l.b16 %v2951
  %v5271 = vunpack.c.l.b16 %v2952
  %v5272 = vunpack.c.h.b16 %v2952
  %v5273 = vunpack.c.l.b16 %v2953
  %v5274 = vunpack.c.h.b16 %v2953
  %v5275 = vunpack.c.l.b16 %v2954
  %v5276 = vunpack.c.h.b16 %v2954
  %v5277 = vunpack.c.l.b16 %v2955
  %v5278 = vunpack.c.l.b16 %v2956
  %v5279 = vunpack.c.h.b16 %v2956
  %v5280 = vunpack.c.l.b16 %v2957
  %v5281 = vunpack.c.h.b16 %v2957
  %v5282 = vunpack.c.l.b16 %v2958
  %v5283 = vunpack.c.h.b16 %v2958
  %v5284 = vunpack.c.l.b16 %v2959
  %v5285 = vpack.c.b16 %v3836, %v3829
  %v5286 = vpack.c.b16 %v3837, %v3830
  %v5287 = vpack.c.b16 %v3838, %v3831
  %v5288 = vpack.c.b16 %v3839, %v3832
  %v5289 = vpack.c.b16 %v3840, %v3833
  %v5290 = vpack.c.b16 %v3841, %v3834
  %v5291 = vpack.c.b16 %v3842, %v3835
  %v5292 = vpack.c.b16 %v3850, %v3843
  %v5293 = vpack.c.b16 %v3851, %v3844
  %v5294 = vpack.c.b16 %v3852, %v3845
  %v5295 = vpack.c.b16 %v3853, %v3846
  %v5296 = vpack.c.b16 %v3854, %v3847
  %v5297 = vpack.c.b16 %v3855, %v3848
  %v5298 = vpack.c.b16 %v3856, %v3849
  %v5299 = vpack.c.b16 %v3864, %v3857
  %v5300 = vpack.c.b16 %v3865, %v3858
  %v5301 = vpack.c.b16 %v3866, %v3859
  %v5302 = vpack.c.b16 %v3867, %v3860
  %v5303 = vpack.c.b16 %v3868, %v3861
  %v5304 = vpack.c.b16 %v3869, %v3862
  %v5305 = vpack.c.b16 %v3870, %v3863
  %v5306 = vpack.c.b16 %v3878, %v3871
  %v5307 = vpack.c.b16 %v3879, %v3872
  %v5308 = vpack.c.b16 %v3880, %v3873
  %v5309 = vpack.c.b16 %v3881, %v3874
  %v5310 = vpack.c.b16 %v3882, %v3875
  %v5311 = vpack.c.b16 %v3883, %v3876
  %v5312 = vpack.c.b16 %v3884, %v3877
  %v5313 = vpack.c.b16 %v3892, %v3885
  %v5314 = vpack.c.b16 %v3893, %v3886
  %v5315 = vpack.c.b16 %v3894, %v3887
  %v5316 = vpack.c.b16 %v3895, %v3888
  %v5317 = vpack.c.b16 %v3896, %v3889
  %v5318 = vpack.c.b16 %v3897, %v3890
  %v5319 = vpack.c.b16 %v3898, %v3891
  %v5320 = vpack.c.b16 %v3906, %v3899
  %v5321 = vpack.c.b16 %v3907, %v3900
  %v5322 = vpack.c.b16 %v3908, %v3901
  %v5323 = vpack.c.b16 %v3909, %v3902
  %v5324 = vpack.c.b16 %v3910, %v3903
  %v5325 = vpack.c.b16 %v3911, %v3904
  %v5326 = vpack.c.b16 %v3912, %v3905
  %v5327 = vpack.c.b16 %v3920, %v3913
  %v5328 = vpack.c.b16 %v3921, %v3914
  %v5329 = vpack.c.b16 %v3922, %v3915
  %v5330 = vpack.c.b16 %v3923, %v3916
  %v5331 = vpack.c.b16 %v3924, %v3917
  %v5332 = vpack.c.b16 %v3925, %v3918
  %v5333 = vpack.c.b16 %v3926, %v3919
  %v5334 = vpack.c.b16 %v3934, %v3927
  %v5335 = vpack.c.b16 %v3935, %v3928
  %v5336 = vpack.c.b16 %v3936, %v3929
  %v5337 = vpack.c.b16 %v3937, %v3930
  %v5338 = vpack.c.b16 %v3938, %v3931
  %v5339 = vpack.c.b16 %v3939, %v3932
  %v5340 = vpack.c.b16 %v3940, %v3933
  %v5341 = vpack.c.b16 %v3948, %v3941
  %v5342 = vpack.c.b16 %v3949, %v3942
  %v5343 = vpack.c.b16 %v3950, %v3943
  %v5344 = vpack.c.b16 %v3951, %v3944
  %v5345 = vpack.c.b16 %v3952, %v3945
  %v5346 = vpack.c.b16 %v3953, %v3946
  %v5347 = vpack.c.b16 %v3954, %v3947
  %v5348 = vpack.c.b16 %v3962, %v3955
  %v5349 = vpack.c.b16 %v3963, %v3956
  %v5350 = vpack.c.b16 %v3964, %v3957
  %v5351 = vpack.c.b16 %v3965, %v3958
  %v5352 = vpack.c.b16 %v3966, %v3959
  %v5353 = vpack.c.b16 %v3967, %v3960
  %v5354 = vpack.c.b16 %v3968, %v3961
  %v5355 = vpack.c.b16 %v3976, %v3969
  %v5356 = vpack.c.b16 %v3977, %v3970
  %v5357 = vpack.c.b16 %v3978, %v3971
  %v5358 = vpack.c.b16 %v3979, %v3972
  %v5359 = vpack.c.b16 %v3980, %v3973
  %v5360 = vpack.c.b16 %v3981, %v3974
  %v5361 = vpack.c.b16 %v3982, %v3975
  %v5362 = vpack.c.b16 %v3990, %v3983
  %v5363 = vpack.c.b16 %v3991, %v3984
  %v5364 = vpack.c.b16 %v3992, %v3985
  %v5365 = vpack.c.b16 %v3993, %v3986
  %v5366 = vpack.c.b16 %v3994, %v3987
  %v5367 = vpack.c.b16 %v3995, %v3988
  %v5368 = vpack.c.b16 %v3996, %v3989
  %v5369 = vpack.c.b16 %v4004, %v3997
  %v5370 = vpack.c.b16 %v4005, %v3998
  %v5371 = vpack.c.b16 %v4006, %v3999
  %v5372 = vpack.c.b16 %v4007, %v4000
  %v5373 = vpack.c.b16 %v4008, %v4001
  %v5374 = vpack.c.b16 %v4009, %v4002
  %v5375 = vpack.c.b16 %v4010, %v4003
  %v5376 = vpack.c.b16 %v4018, %v4011
  %v5377 = vpack.c.b16 %v4019, %v4012
  %v5378 = vpack.c.b16 %v4020, %v4013
  %v5379 = vpack.c.b16 %v4021, %v4014
  %v5380 = vpack.c.b16 %v4022, %v4015
  %v5381 = vpack.c.b16 %v4023, %v4016
  %v5382 = vpack.c.b16 %v4024, %v4017
  %v5383 = vpack.c.b16 %v4032, %v4025
  %v5384 = vpack.c.b16 %v4033, %v4026
  %v5385 = vpack.c.b16 %v4034, %v4027
  %v5386 = vpack.c.b16 %v4035, %v4028
  %v5387 = vpack.c.b16 %v4036, %v4029
  %v5388 = vpack.c.b16 %v4037, %v4030
  %v5389 = vpack.c.b16 %v4038, %v4031
  %v5390 = vpack.c.b16 %v4046, %v4039
  %v5391 = vpack.c.b16 %v4047, %v4040
  %v5392 = vpack.c.b16 %v4048, %v4041
  %v5393 = vpack.c.b16 %v4049, %v4042
  %v5394 = vpack.c.b16 %v4050, %v4043
  %v5395 = vpack.c.b16 %v4051, %v4044
  %v5396 = vpack.c.b16 %v4052, %v4045
  %v5397 = vpack.c.b16 %v4060, %v4053
  %v5398 = vpack.c.b16 %v4061, %v4054
  %v5399 = vpack.c.b16 %v4062, %v4055
  %v5400 = vpack.c.b16 %v4063, %v4056
  %v5401 = vpack.c.b16 %v4064, %v4057
  %v5402 = vpack.c.b16 %v4065, %v4058
  %v5403 = vpack.c.b16 %v4066, %v4059
  %v5404 = vpack.c.b16 %v4074, %v4067
  %v5405 = vpack.c.b16 %v4075, %v4068
  %v5406 = vpack.c.b16 %v4076, %v4069
  %v5407 = vpack.c.b16 %v4077, %v4070
  %v5408 = vpack.c.b16 %v4078, %v4071
  %v5409 = vpack.c.b16 %v4079, %v4072
  %v5410 = vpack.c.b16 %v4080, %v4073
  %v5411 = vpack.c.b16 %v4088, %v4081
  %v5412 = vpack.c.b16 %v4089, %v4082
  %v5413 = vpack.c.b16 %v4090, %v4083
  %v5414 = vpack.c.b16 %v4091, %v4084
  %v5415 = vpack.c.b16 %v4092, %v4085
  %v5416 = vpack.c.b16 %v4093, %v4086
  %v5417 = vpack.c.b16 %v4094, %v4087
  %v5418 = vpack.c.b16 %v4102, %v4095
  %v5419 = vpack.c.b16 %v4103, %v4096
  %v5420 = vpack.c.b16 %v4104, %v4097
  %v5421 = vpack.c.b16 %v4105, %v4098
  %v5422 = vpack.c.b16 %v4106, %v4099
  %v5423 = vpack.c.b16 %v4107, %v4100
  %v5424 = vpack.c.b16 %v4108, %v4101
  %v5425 = vpack.c.b16 %v4116, %v4109
  %v5426 = vpack.c.b16 %v4117, %v4110
  %v5427 = vpack.c.b16 %v4118, %v4111
  %v5428 = vpack.c.b16 %v4119, %v4112
  %v5429 = vpack.c.b16 %v4120, %v4113
  %v5430 = vpack.c.b16 %v4121, %v4114
  %v5431 = vpack.c.b16 %v4122, %v4115
  %v5432 = vpack.c.b16 %v4130, %v4123
  %v5433 = vpack.c.b16 %v4131, %v4124
  %v5434 = vpack.c.b16 %v4132, %v4125
  %v5435 = vpack.c.b16 %v4133, %v4126
  %v5436 = vpack.c.b16 %v4134, %v4127
  %v5437 = vpack.c.b16 %v4135, %v4128
  %v5438 = vpack.c.b16 %v4136, %v4129
  %v5439 = vpack.c.b16 %v4144, %v4137
  %v5440 = vpack.c.b16 %v4145, %v4138
  %v5441 = vpack.c.b16 %v4146, %v4139
  %v5442 = vpack.c.b16 %v4147, %v4140
  %v5443 = vpack.c.b16 %v4148, %v4141
  %v5444 = vpack.c.b16 %v4149, %v4142
  %v5445 = vpack.c.b16 %v4150, %v4143
  %v5446 = vpack.c.b16 %v4158, %v4151
  %v5447 = vpack.c.b16 %v4159, %v4152
  %v5448 = vpack.c.b16 %v4160, %v4153
  %v5449 = vpack.c.b16 %v4161, %v4154
  %v5450 = vpack.c.b16 %v4162, %v4155
  %v5451 = vpack.c.b16 %v4163, %v4156
  %v5452 = vpack.c.b16 %v4164, %v4157
  %v5453 = vpack.c.b16 %v4172, %v4165
  %v5454 = vpack.c.b16 %v4173, %v4166
  %v5455 = vpack.c.b16 %v4174, %v4167
  %v5456 = vpack.c.b16 %v4175, %v4168
  %v5457 = vpack.c.b16 %v4176, %v4169
  %v5458 = vpack.c.b16 %v4177, %v4170
  %v5459 = vpack.c.b16 %v4178, %v4171
  %v5460 = vpack.c.b16 %v4186, %v4179
  %v5461 = vpack.c.b16 %v4187, %v4180
  %v5462 = vpack.c.b16 %v4188, %v4181
  %v5463 = vpack.c.b16 %v4189, %v4182
  %v5464 = vpack.c.b16 %v4190, %v4183
  %v5465 = vpack.c.b16 %v4191, %v4184
  %v5466 = vpack.c.b16 %v4192, %v4185
  %v5467 = vpack.c.b16 %v4200, %v4193
  %v5468 = vpack.c.b16 %v4201, %v4194
  %v5469 = vpack.c.b16 %v4202, %v4195
  %v5470 = vpack.c.b16 %v4203, %v4196
  %v5471 = vpack.c.b16 %v4204, %v4197
  %v5472 = vpack.c.b16 %v4205, %v4198
  %v5473 = vpack.c.b16 %v4206, %v4199
  %v5474 = vpack.c.b16 %v4214, %v4207
  %v5475 = vpack.c.b16 %v4215, %v4208
  %v5476 = vpack.c.b16 %v4216, %v4209
  %v5477 = vpack.c.b16 %v4217, %v4210
  %v5478 = vpack.c.b16 %v4218, %v4211
  %v5479 = vpack.c.b16 %v4219, %v4212
  %v5480 = vpack.c.b16 %v4220, %v4213
  %v5481 = vpack.c.b16 %v4228, %v4221
  %v5482 = vpack.c.b16 %v4229, %v4222
  %v5483 = vpack.c.b16 %v4230, %v4223
  %v5484 = vpack.c.b16 %v4231, %v4224
  %v5485 = vpack.c.b16 %v4232, %v4225
  %v5486 = vpack.c.b16 %v4233, %v4226
  %v5487 = vpack.c.b16 %v4234, %v4227
  %v5488 = vpack.c.b16 %v4242, %v4235
  %v5489 = vpack.c.b16 %v4243, %v4236
  %v5490 = vpack.c.b16 %v4244, %v4237
  %v5491 = vpack.c.b16 %v4245, %v4238
  %v5492 = vpack.c.b16 %v4246, %v4239
  %v5493 = vpack.c.b16 %v4247, %v4240
  %v5494 = vpack.c.b16 %v4248, %v4241
  %v5495 = vpack.c.b16 %v4256, %v4249
  %v5496 = vpack.c.b16 %v4257, %v4250
  %v5497 = vpack.c.b16 %v4258, %v4251
  %v5498 = vpack.c.b16 %v4259, %v4252
  %v5499 = vpack.c.b16 %v4260, %v4253
  %v5500 = vpack.c.b16 %v4261, %v4254
  %v5501 = vpack.c.b16 %v4262, %v4255
  %v5502 = vpack.c.b16 %v4270, %v4263
  %v5503 = vpack.c.b16 %v4271, %v4264
  %v5504 = vpack.c.b16 %v4272, %v4265
  %v5505 = vpack.c.b16 %v4273, %v4266
  %v5506 = vpack.c.b16 %v4274, %v4267
  %v5507 = vpack.c.b16 %v4275, %v4268
  %v5508 = vpack.c.b16 %v4276, %v4269
  %v5509 = vpack.c.b16 %v4284, %v4277
  %v5510 = vpack.c.b16 %v4285, %v4278
  %v5511 = vpack.c.b16 %v4286, %v4279
  %v5512 = vpack.c.b16 %v4287, %v4280
  %v5513 = vpack.c.b16 %v4288, %v4281
  %v5514 = vpack.c.b16 %v4289, %v4282
  %v5515 = vpack.c.b16 %v4290, %v4283
  %v5516 = vpack.c.b16 %v4298, %v4291
  %v5517 = vpack.c.b16 %v4299, %v4292
  %v5518 = vpack.c.b16 %v4300, %v4293
  %v5519 = vpack.c.b16 %v4301, %v4294
  %v5520 = vpack.c.b16 %v4302, %v4295
  %v5521 = vpack.c.b16 %v4303, %v4296
  %v5522 = vpack.c.b16 %v4304, %v4297
  %v5523 = vpack.c.b16 %v4312, %v4305
  %v5524 = vpack.c.b16 %v4313, %v4306
  %v5525 = vpack.c.b16 %v4314, %v4307
  %v5526 = vpack.c.b16 %v4315, %v4308
  %v5527 = vpack.c.b16 %v4316, %v4309
  %v5528 = vpack.c.b16 %v4317, %v4310
  %v5529 = vpack.c.b16 %v4318, %v4311
  %v5530 = vpack.c.b16 %v4326, %v4319
  %v5531 = vpack.c.b16 %v4327, %v4320
  %v5532 = vpack.c.b16 %v4328, %v4321
  %v5533 = vpack.c.b16 %v4329, %v4322
  %v5534 = vpack.c.b16 %v4330, %v4323
  %v5535 = vpack.c.b16 %v4331, %v4324
  %v5536 = vpack.c.b16 %v4332, %v4325
  %v5537 = vpack.c.b16 %v4340, %v4333
  %v5538 = vpack.c.b16 %v4341, %v4334
  %v5539 = vpack.c.b16 %v4342, %v4335
  %v5540 = vpack.c.b16 %v4343, %v4336
  %v5541 = vpack.c.b16 %v4344, %v4337
  %v5542 = vpack.c.b16 %v4345, %v4338
  %v5543 = vpack.c.b16 %v4346, %v4339
  %v5544 = vpack.c.b16 %v4354, %v4347
  %v5545 = vpack.c.b16 %v4355, %v4348
  %v5546 = vpack.c.b16 %v4356, %v4349
  %v5547 = vpack.c.b16 %v4357, %v4350
  %v5548 = vpack.c.b16 %v4358, %v4351
  %v5549 = vpack.c.b16 %v4359, %v4352
  %v5550 = vpack.c.b16 %v4360, %v4353
  %v5551 = vpack.c.b16 %v4368, %v4361
  %v5552 = vpack.c.b16 %v4369, %v4362
  %v5553 = vpack.c.b16 %v4370, %v4363
  %v5554 = vpack.c.b16 %v4371, %v4364
  %v5555 = vpack.c.b16 %v4372, %v4365
  %v5556 = vpack.c.b16 %v4373, %v4366
  %v5557 = vpack.c.b16 %v4374, %v4367
  %v5558 = vpack.c.b16 %v4382, %v4375
  %v5559 = vpack.c.b16 %v4383, %v4376
  %v5560 = vpack.c.b16 %v4384, %v4377
  %v5561 = vpack.c.b16 %v4385, %v4378
  %v5562 = vpack.c.b16 %v4386, %v4379
  %v5563 = vpack.c.b16 %v4387, %v4380
  %v5564 = vpack.c.b16 %v4388, %v4381
  %v5565 = vpack.c.b16 %v4396, %v4389
  %v5566 = vpack.c.b16 %v4397, %v4390
  %v5567 = vpack.c.b16 %v4398, %v4391
  %v5568 = vpack.c.b16 %v4399, %v4392
  %v5569 = vpack.c.b16 %v4400, %v4393
  %v5570 = vpack.c.b16 %v4401, %v4394
  %v5571 = vpack.c.b16 %v4402, %v4395
  %v5572 = vpack.c.b16 %v4410, %v4403
  %v5573 = vpack.c.b16 %v4411, %v4404
  %v5574 = vpack.c.b16 %v4412, %v4405
  %v5575 = vpack.c.b16 %v4413, %v4406
  %v5576 = vpack.c.b16 %v4414, %v4407
  %v5577 = vpack.c.b16 %v4415, %v4408
  %v5578 = vpack.c.b16 %v4416, %v4409
  %v5579 = vpack.c.b16 %v4424, %v4417
  %v5580 = vpack.c.b16 %v4425, %v4418
  %v5581 = vpack.c.b16 %v4426, %v4419
  %v5582 = vpack.c.b16 %v4427, %v4420
  %v5583 = vpack.c.b16 %v4428, %v4421
  %v5584 = vpack.c.b16 %v4429, %v4422
  %v5585 = vpack.c.b16 %v4430, %v4423
  %v5586 = vpack.c.b16 %v4438, %v4431
  %v5587 = vpack.c.b16 %v4439, %v4432
  %v5588 = vpack.c.b16 %v4440, %v4433
  %v5589 = vpack.c.b16 %v4441, %v4434
  %v5590 = vpack.c.b16 %v4442, %v4435
  %v5591 = vpack.c.b16 %v4443, %v4436
  %v5592 = vpack.c.b16 %v4444, %v4437
  %v5593 = vpack.c.b16 %v4452, %v4445
  %v5594 = vpack.c.b16 %v4453, %v4446
  %v5595 = vpack.c.b16 %v4454, %v4447
  %v5596 = vpack.c.b16 %v4455, %v4448
  %v5597 = vpack.c.b16 %v4456, %v4449
  %v5598 = vpack.c.b16 %v4457, %v4450
  %v5599 = vpack.c.b16 %v4458, %v4451
  %v5600 = vpack.c.b16 %v4466, %v4459
  %v5601 = vpack.c.b16 %v4467, %v4460
  %v5602 = vpack.c.b16 %v4468, %v4461
  %v5603 = vpack.c.b16 %v4469, %v4462
  %v5604 = vpack.c.b16 %v4470, %v4463
  %v5605 = vpack.c.b16 %v4471, %v4464
  %v5606 = vpack.c.b16 %v4472, %v4465
  %v5607 = vpack.c.b16 %v4480, %v4473
  %v5608 = vpack.c.b16 %v4481, %v4474
  %v5609 = vpack.c.b16 %v4482, %v4475
  %v5610 = vpack.c.b16 %v4483, %v4476
  %v5611 = vpack.c.b16 %v4484, %v4477
  %v5612 = vpack.c.b16 %v4485, %v4478
  %v5613 = vpack.c.b16 %v4486, %v4479
  %v5614 = vpack.c.b16 %v4494, %v4487
  %v5615 = vpack.c.b16 %v4495, %v4488
  %v5616 = vpack.c.b16 %v4496, %v4489
  %v5617 = vpack.c.b16 %v4497, %v4490
  %v5618 = vpack.c.b16 %v4498, %v4491
  %v5619 = vpack.c.b16 %v4499, %v4492
  %v5620 = vpack.c.b16 %v4500, %v4493
  %v5621 = vpack.c.b16 %v4508, %v4501
  %v5622 = vpack.c.b16 %v4509, %v4502
  %v5623 = vpack.c.b16 %v4510, %v4503
  %v5624 = vpack.c.b16 %v4511, %v4504
  %v5625 = vpack.c.b16 %v4512, %v4505
  %v5626 = vpack.c.b16 %v4513, %v4506
  %v5627 = vpack.c.b16 %v4514, %v4507
  %v5628 = vpack.c.b16 %v4522, %v4515
  %v5629 = vpack.c.b16 %v4523, %v4516
  %v5630 = vpack.c.b16 %v4524, %v4517
  %v5631 = vpack.c.b16 %v4525, %v4518
  %v5632 = vpack.c.b16 %v4526, %v4519
  %v5633 = vpack.c.b16 %v4527, %v4520
  %v5634 = vpack.c.b16 %v4528, %v4521
  %v5635 = vpack.c.b16 %v4536, %v4529
  %v5636 = vpack.c.b16 %v4537, %v4530
  %v5637 = vpack.c.b16 %v4538, %v4531
  %v5638 = vpack.c.b16 %v4539, %v4532
  %v5639 = vpack.c.b16 %v4540, %v4533
  %v5640 = vpack.c.b16 %v4541, %v4534
  %v5641 = vpack.c.b16 %v4542, %v4535
  %v5642 = vpack.c.b16 %v4550, %v4543
  %v5643 = vpack.c.b16 %v4551, %v4544
  %v5644 = vpack.c.b16 %v4552, %v4545
  %v5645 = vpack.c.b16 %v4553, %v4546
  %v5646 = vpack.c.b16 %v4554, %v4547
  %v5647 = vpack.c.b16 %v4555, %v4548
  %v5648 = vpack.c.b16 %v4556, %v4549
  %v5649 = vpack.c.b16 %v4564, %v4557
  %v5650 = vpack.c.b16 %v4565, %v4558
  %v5651 = vpack.c.b16 %v4566, %v4559
  %v5652 = vpack.c.b16 %v4567, %v4560
  %v5653 = vpack.c.b16 %v4568, %v4561
  %v5654 = vpack.c.b16 %v4569, %v4562
  %v5655 = vpack.c.b16 %v4570, %v4563
  %v5656 = vpack.c.b16 %v4578, %v4571
  %v5657 = vpack.c.b16 %v4579, %v4572
  %v5658 = vpack.c.b16 %v4580, %v4573
  %v5659 = vpack.c.b16 %v4581, %v4574
  %v5660 = vpack.c.b16 %v4582, %v4575
  %v5661 = vpack.c.b16 %v4583, %v4576
  %v5662 = vpack.c.b16 %v4584, %v4577
  %v5663 = vpack.c.b16 %v4592, %v4585
  %v5664 = vpack.c.b16 %v4593, %v4586
  %v5665 = vpack.c.b16 %v4594, %v4587
  %v5666 = vpack.c.b16 %v4595, %v4588
  %v5667 = vpack.c.b16 %v4596, %v4589
  %v5668 = vpack.c.b16 %v4597, %v4590
  %v5669 = vpack.c.b16 %v4598, %v4591
  %v5670 = vpack.c.b16 %v4606, %v4599
  %v5671 = vpack.c.b16 %v4607, %v4600
  %v5672 = vpack.c.b16 %v4608, %v4601
  %v5673 = vpack.c.b16 %v4609, %v4602
  %v5674 = vpack.c.b16 %v4610, %v4603
  %v5675 = vpack.c.b16 %v4611, %v4604
  %v5676 = vpack.c.b16 %v4612, %v4605
  %v5677 = vpack.c.b16 %v4620, %v4613
  %v5678 = vpack.c.b16 %v4621, %v4614
  %v5679 = vpack.c.b16 %v4622, %v4615
  %v5680 = vpack.c.b16 %v4623, %v4616
  %v5681 = vpack.c.b16 %v4624, %v4617
  %v5682 = vpack.c.b16 %v4625, %v4618
  %v5683 = vpack.c.b16 %v4626, %v4619
  %v5684 = vpack.c.b16 %v4634, %v4627
  %v5685 = vpack.c.b16 %v4635, %v4628
  %v5686 = vpack.c.b16 %v4636, %v4629
  %v5687 = vpack.c.b16 %v4637, %v4630
  %v5688 = vpack.c.b16 %v4638, %v4631
  %v5689 = vpack.c.b16 %v4639, %v4632
  %v5690 = vpack.c.b16 %v4640, %v4633
  %v5691 = vpack.c.b16 %v4648, %v4641
  %v5692 = vpack.c.b16 %v4649, %v4642
  %v5693 = vpack.c.b16 %v4650, %v4643
  %v5694 = vpack.c.b16 %v4651, %v4644
  %v5695 = vpack.c.b16 %v4652, %v4645
  %v5696 = vpack.c.b16 %v4653, %v4646
  %v5697 = vpack.c.b16 %v4654, %v4647
  %v5698 = vpack.c.b16 %v4662, %v4655
  %v5699 = vpack.c.b16 %v4663, %v4656
  %v5700 = vpack.c.b16 %v4664, %v4657
  %v5701 = vpack.c.b16 %v4665, %v4658
  %v5702 = vpack.c.b16 %v4666, %v4659
  %v5703 = vpack.c.b16 %v4667, %v4660
  %v5704 = vpack.c.b16 %v4668, %v4661
  %v5705 = vpack.c.b16 %v4676, %v4669
  %v5706 = vpack.c.b16 %v4677, %v4670
  %v5707 = vpack.c.b16 %v4678, %v4671
  %v5708 = vpack.c.b16 %v4679, %v4672
  %v5709 = vpack.c.b16 %v4680, %v4673
  %v5710 = vpack.c.b16 %v4681, %v4674
  %v5711 = vpack.c.b16 %v4682, %v4675
  %v5712 = vpack.c.b16 %v4690, %v4683
  %v5713 = vpack.c.b16 %v4691, %v4684
  %v5714 = vpack.c.b16 %v4692, %v4685
  %v5715 = vpack.c.b16 %v4693, %v4686
  %v5716 = vpack.c.b16 %v4694, %v4687
  %v5717 = vpack.c.b16 %v4695, %v4688
  %v5718 = vpack.c.b16 %v4696, %v4689
  %v5719 = vpack.c.b16 %v4704, %v4697
  %v5720 = vpack.c.b16 %v4705, %v4698
  %v5721 = vpack.c.b16 %v4706, %v4699
  %v5722 = vpack.c.b16 %v4707, %v4700
  %v5723 = vpack.c.b16 %v4708, %v4701
  %v5724 = vpack.c.b16 %v4709, %v4702
  %v5725 = vpack.c.b16 %v4710, %v4703
  %v5726 = vpack.c.b16 %v4718, %v4711
  %v5727 = vpack.c.b16 %v4719, %v4712
  %v5728 = vpack.c.b16 %v4720, %v4713
  %v5729 = vpack.c.b16 %v4721, %v4714
  %v5730 = vpack.c.b16 %v4722, %v4715
  %v5731 = vpack.c.b16 %v4723, %v4716
  %v5732 = vpack.c.b16 %v4724, %v4717
  %v5733 = vpack.c.b16 %v4732, %v4725
  %v5734 = vpack.c.b16 %v4733, %v4726
  %v5735 = vpack.c.b16 %v4734, %v4727
  %v5736 = vpack.c.b16 %v4735, %v4728
  %v5737 = vpack.c.b16 %v4736, %v4729
  %v5738 = vpack.c.b16 %v4737, %v4730
  %v5739 = vpack.c.b16 %v4738, %v4731
  %v5740 = vpack.c.b16 %v4746, %v4739
  %v5741 = vpack.c.b16 %v4747, %v4740
  %v5742 = vpack.c.b16 %v4748, %v4741
  %v5743 = vpack.c.b16 %v4749, %v4742
  %v5744 = vpack.c.b16 %v4750, %v4743
  %v5745 = vpack.c.b16 %v4751, %v4744
  %v5746 = vpack.c.b16 %v4752, %v4745
  %v5747 = vpack.c.b16 %v4760, %v4753
  %v5748 = vpack.c.b16 %v4761, %v4754
  %v5749 = vpack.c.b16 %v4762, %v4755
  %v5750 = vpack.c.b16 %v4763, %v4756
  %v5751 = vpack.c.b16 %v4764, %v4757
  %v5752 = vpack.c.b16 %v4765, %v4758
  %v5753 = vpack.c.b16 %v4766, %v4759
  %v5754 = vpack.c.b16 %v4774, %v4767
  %v5755 = vpack.c.b16 %v4775, %v4768
  %v5756 = vpack.c.b16 %v4776, %v4769
  %v5757 = vpack.c.b16 %v4777, %v4770
  %v5758 = vpack.c.b16 %v4778, %v4771
  %v5759 = vpack.c.b16 %v4779, %v4772
  %v5760 = vpack.c.b16 %v4780, %v4773
  %v5761 = vpack.c.b16 %v4788, %v4781
  %v5762 = vpack.c.b16 %v4789, %v4782
  %v5763 = vpack.c.b16 %v4790, %v4783
  %v5764 = vpack.c.b16 %v4791, %v4784
  %v5765 = vpack.c.b16 %v4792, %v4785
  %v5766 = vpack.c.b16 %v4793, %v4786
  %v5767 = vpack.c.b16 %v4794, %v4787
  %v5768 = vpack.c.b16 %v4802, %v4795
  %v5769 = vpack.c.b16 %v4803, %v4796
  %v5770 = vpack.c.b16 %v4804, %v4797
  %v5771 = vpack.c.b16 %v4805, %v4798
  %v5772 = vpack.c.b16 %v4806, %v4799
  %v5773 = vpack.c.b16 %v4807, %v4800
  %v5774 = vpack.c.b16 %v4808, %v4801
  %v5775 = vpack.c.b16 %v4816, %v4809
  %v5776 = vpack.c.b16 %v4817, %v4810
  %v5777 = vpack.c.b16 %v4818, %v4811
  %v5778 = vpack.c.b16 %v4819, %v4812
  %v5779 = vpack.c.b16 %v4820, %v4813
  %v5780 = vpack.c.b16 %v4821, %v4814
  %v5781 = vpack.c.b16 %v4822, %v4815
  %v5782 = vpack.c.b16 %v4830, %v4823
  %v5783 = vpack.c.b16 %v4831, %v4824
  %v5784 = vpack.c.b16 %v4832, %v4825
  %v5785 = vpack.c.b16 %v4833, %v4826
  %v5786 = vpack.c.b16 %v4834, %v4827
  %v5787 = vpack.c.b16 %v4835, %v4828
  %v5788 = vpack.c.b16 %v4836, %v4829
  %v5789 = vpack.c.b16 %v4844, %v4837
  %v5790 = vpack.c.b16 %v4845, %v4838
  %v5791 = vpack.c.b16 %v4846, %v4839
  %v5792 = vpack.c.b16 %v4847, %v4840
  %v5793 = vpack.c.b16 %v4848, %v4841
  %v5794 = vpack.c.b16 %v4849, %v4842
  %v5795 = vpack.c.b16 %v4850, %v4843
  %v5796 = vpack.c.b16 %v4858, %v4851
  %v5797 = vpack.c.b16 %v4859, %v4852
  %v5798 = vpack.c.b16 %v4860, %v4853
  %v5799 = vpack.c.b16 %v4861, %v4854
  %v5800 = vpack.c.b16 %v4862, %v4855
  %v5801 = vpack.c.b16 %v4863, %v4856
  %v5802 = vpack.c.b16 %v4864, %v4857
  %v5803 = vpack.c.b16 %v4872, %v4865
  %v5804 = vpack.c.b16 %v4873, %v4866
  %v5805 = vpack.c.b16 %v4874, %v4867
  %v5806 = vpack.c.b16 %v4875, %v4868
  %v5807 = vpack.c.b16 %v4876, %v4869
  %v5808 = vpack.c.b16 %v4877, %v4870
  %v5809 = vpack.c.b16 %v4878, %v4871
  %v5810 = vpack.c.b16 %v4886, %v4879
  %v5811 = vpack.c.b16 %v4887, %v4880
  %v5812 = vpack.c.b16 %v4888, %v4881
  %v5813 = vpack.c.b16 %v4889, %v4882
  %v5814 = vpack.c.b16 %v4890, %v4883
  %v5815 = vpack.c.b16 %v4891, %v4884
  %v5816 = vpack.c.b16 %v4892, %v4885
  %v5817 = vpack.c.b16 %v4900, %v4893
  %v5818 = vpack.c.b16 %v4901, %v4894
  %v5819 = vpack.c.b16 %v4902, %v4895
  %v5820 = vpack.c.b16 %v4903, %v4896
  %v5821 = vpack.c.b16 %v4904, %v4897
  %v5822 = vpack.c.b16 %v4905, %v4898
  %v5823 = vpack.c.b16 %v4906, %v4899
  %v5824 = vpack.c.b16 %v4914, %v4907
  %v5825 = vpack.c.b16 %v4915, %v4908
  %v5826 = vpack.c.b16 %v4916, %v4909
  %v5827 = vpack.c.b16 %v4917, %v4910
  %v5828 = vpack.c.b16 %v4918, %v4911
  %v5829 = vpack.c.b16 %v4919, %v4912
  %v5830 = vpack.c.b16 %v4920, %v4913
  %v5831 = vpack.c.b16 %v4928, %v4921
  %v5832 = vpack.c.b16 %v4929, %v4922
  %v5833 = vpack.c.b16 %v4930, %v4923
  %v5834 = vpack.c.b16 %v4931, %v4924
  %v5835 = vpack.c.b16 %v4932, %v4925
  %v5836 = vpack.c.b16 %v4933, %v4926
  %v5837 = vpack.c.b16 %v4934, %v4927
  %v5838 = vpack.c.b16 %v4942, %v4935
  %v5839 = vpack.c.b16 %v4943, %v4936
  %v5840 = vpack.c.b16 %v4944, %v4937
  %v5841 = vpack.c.b16 %v4945, %v4938
  %v5842 = vpack.c.b16 %v4946, %v4939
  %v5843 = vpack.c.b16 %v4947, %v4940
  %v5844 = vpack.c.b16 %v4948, %v4941
  %v5845 = vpack.c.b16 %v4956, %v4949
  %v5846 = vpack.c.b16 %v4957, %v4950
  %v5847 = vpack.c.b16 %v4958, %v4951
  %v5848 = vpack.c.b16 %v4959, %v4952
  %v5849 = vpack.c.b16 %v4960, %v4953
  %v5850 = vpack.c.b16 %v4961, %v4954
  %v5851 = vpack.c.b16 %v4962, %v4955
  %v5852 = vpack.c.b16 %v4970, %v4963
  %v5853 = vpack.c.b16 %v4971, %v4964
  %v5854 = vpack.c.b16 %v4972, %v4965
  %v5855 = vpack.c.b16 %v4973, %v4966
  %v5856 = vpack.c.b16 %v4974, %v4967
  %v5857 = vpack.c.b16 %v4975, %v4968
  %v5858 = vpack.c.b16 %v4976, %v4969
  %v5859 = vpack.c.b16 %v4984, %v4977
  %v5860 = vpack.c.b16 %v4985, %v4978
  %v5861 = vpack.c.b16 %v4986, %v4979
  %v5862 = vpack.c.b16 %v4987, %v4980
  %v5863 = vpack.c.b16 %v4988, %v4981
  %v5864 = vpack.c.b16 %v4989, %v4982
  %v5865 = vpack.c.b16 %v4990, %v4983
  %v5866 = vpack.c.b16 %v4998, %v4991
  %v5867 = vpack.c.b16 %v4999, %v4992
  %v5868 = vpack.c.b16 %v5000, %v4993
  %v5869 = vpack.c.b16 %v5001, %v4994
  %v5870 = vpack.c.b16 %v5002, %v4995
  %v5871 = vpack.c.b16 %v5003, %v4996
  %v5872 = vpack.c.b16 %v5004, %v4997
  %v5873 = vpack.c.b16 %v5012, %v5005
  %v5874 = vpack.c.b16 %v5013, %v5006
  %v5875 = vpack.c.b16 %v5014, %v5007
  %v5876 = vpack.c.b16 %v5015, %v5008
  %v5877 = vpack.c.b16 %v5016, %v5009
  %v5878 = vpack.c.b16 %v5017, %v5010
  %v5879 = vpack.c.b16 %v5018, %v5011
  %v5880 = vpack.c.b16 %v5026, %v5019
  %v5881 = vpack.c.b16 %v5027, %v5020
  %v5882 = vpack.c.b16 %v5028, %v5021
  %v5883 = vpack.c.b16 %v5029, %v5022
  %v5884 = vpack.c.b16 %v5030, %v5023
  %v5885 = vpack.c.b16 %v5031, %v5024
  %v5886 = vpack.c.b16 %v5032, %v5025
  %v5887 = vpack.c.b16 %v5040, %v5033
  %v5888 = vpack.c.b16 %v5041, %v5034
  %v5889 = vpack.c.b16 %v5042, %v5035
  %v5890 = vpack.c.b16 %v5043, %v5036
  %v5891 = vpack.c.b16 %v5044, %v5037
  %v5892 = vpack.c.b16 %v5045, %v5038
  %v5893 = vpack.c.b16 %v5046, %v5039
  %v5894 = vpack.c.b16 %v5054, %v5047
  %v5895 = vpack.c.b16 %v5055, %v5048
  %v5896 = vpack.c.b16 %v5056, %v5049
  %v5897 = vpack.c.b16 %v5057, %v5050
  %v5898 = vpack.c.b16 %v5058, %v5051
  %v5899 = vpack.c.b16 %v5059, %v5052
  %v5900 = vpack.c.b16 %v5060, %v5053
  %v5901 = vpack.c.b16 %v5068, %v5061
  %v5902 = vpack.c.b16 %v5069, %v5062
  %v5903 = vpack.c.b16 %v5070, %v5063
  %v5904 = vpack.c.b16 %v5071, %v5064
  %v5905 = vpack.c.b16 %v5072, %v5065
  %v5906 = vpack.c.b16 %v5073, %v5066
  %v5907 = vpack.c.b16 %v5074, %v5067
  %v5908 = vpack.c.b16 %v5082, %v5075
  %v5909 = vpack.c.b16 %v5083, %v5076
  %v5910 = vpack.c.b16 %v5084, %v5077
  %v5911 = vpack.c.b16 %v5085, %v5078
  %v5912 = vpack.c.b16 %v5086, %v5079
  %v5913 = vpack.c.b16 %v5087, %v5080
  %v5914 = vpack.c.b16 %v5088, %v5081
  %v5915 = vpack.c.b16 %v5096, %v5089
  %v5916 = vpack.c.b16 %v5097, %v5090
  %v5917 = vpack.c.b16 %v5098, %v5091
  %v5918 = vpack.c.b16 %v5099, %v5092
  %v5919 = vpack.c.b16 %v5100, %v5093
  %v5920 = vpack.c.b16 %v5101, %v5094
  %v5921 = vpack.c.b16 %v5102, %v5095
  %v5922 = vpack.c.b16 %v5110, %v5103
  %v5923 = vpack.c.b16 %v5111, %v5104
  %v5924 = vpack.c.b16 %v5112, %v5105
  %v5925 = vpack.c.b16 %v5113, %v5106
  %v5926 = vpack.c.b16 %v5114, %v5107
  %v5927 = vpack.c.b16 %v5115, %v5108
  %v5928 = vpack.c.b16 %v5116, %v5109
  %v5929 = vpack.c.b16 %v5124, %v5117
  %v5930 = vpack.c.b16 %v5125, %v5118
  %v5931 = vpack.c.b16 %v5126, %v5119
  %v5932 = vpack.c.b16 %v5127, %v5120
  %v5933 = vpack.c.b16 %v5128, %v5121
  %v5934 = vpack.c.b16 %v5129, %v5122
  %v5935 = vpack.c.b16 %v5130, %v5123
  %v5936 = vpack.c.b16 %v5138, %v5131
  %v5937 = vpack.c.b16 %v5139, %v5132
  %v5938 = vpack.c.b16 %v5140, %v5133
  %v5939 = vpack.c.b16 %v5141, %v5134
  %v5940 = vpack.c.b16 %v5142, %v5135
  %v5941 = vpack.c.b16 %v5143, %v5136
  %v5942 = vpack.c.b16 %v5144, %v5137
  %v5943 = vpack.c.b16 %v5152, %v5145
  %v5944 = vpack.c.b16 %v5153, %v5146
  %v5945 = vpack.c.b16 %v5154, %v5147
  %v5946 = vpack.c.b16 %v5155, %v5148
  %v5947 = vpack.c.b16 %v5156, %v5149
  %v5948 = vpack.c.b16 %v5157, %v5150
  %v5949 = vpack.c.b16 %v5158, %v5151
  %v5950 = vpack.c.b16 %v5166, %v5159
  %v5951 = vpack.c.b16 %v5167, %v5160
  %v5952 = vpack.c.b16 %v5168, %v5161
  %v5953 = vpack.c.b16 %v5169, %v5162
  %v5954 = vpack.c.b16 %v5170, %v5163
  %v5955 = vpack.c.b16 %v5171, %v5164
  %v5956 = vpack.c.b16 %v5172, %v5165
  %v5957 = vpack.c.b16 %v5180, %v5173
  %v5958 = vpack.c.b16 %v5181, %v5174
  %v5959 = vpack.c.b16 %v5182, %v5175
  %v5960 = vpack.c.b16 %v5183, %v5176
  %v5961 = vpack.c.b16 %v5184, %v5177
  %v5962 = vpack.c.b16 %v5185, %v5178
  %v5963 = vpack.c.b16 %v5186, %v5179
  %v5964 = vpack.c.b16 %v5194, %v5187
  %v5965 = vpack.c.b16 %v5195, %v5188
  %v5966 = vpack.c.b16 %v5196, %v5189
  %v5967 = vpack.c.b16 %v5197, %v5190
  %v5968 = vpack.c.b16 %v5198, %v5191
  %v5969 = vpack.c.b16 %v5199, %v5192
  %v5970 = vpack.c.b16 %v5200, %v5193
  %v5971 = vpack.c.b16 %v5208, %v5201
  %v5972 = vpack.c.b16 %v5209, %v5202
  %v5973 = vpack.c.b16 %v5210, %v5203
  %v5974 = vpack.c.b16 %v5211, %v5204
  %v5975 = vpack.c.b16 %v5212, %v5205
  %v5976 = vpack.c.b16 %v5213, %v5206
  %v5977 = vpack.c.b16 %v5214, %v5207
  %v5978 = vpack.c.b16 %v5222, %v5215
  %v5979 = vpack.c.b16 %v5223, %v5216
  %v5980 = vpack.c.b16 %v5224, %v5217
  %v5981 = vpack.c.b16 %v5225, %v5218
  %v5982 = vpack.c.b16 %v5226, %v5219
  %v5983 = vpack.c.b16 %v5227, %v5220
  %v5984 = vpack.c.b16 %v5228, %v5221
  %v5985 = vpack.c.b16 %v5236, %v5229
  %v5986 = vpack.c.b16 %v5237, %v5230
  %v5987 = vpack.c.b16 %v5238, %v5231
  %v5988 = vpack.c.b16 %v5239, %v5232
  %v5989 = vpack.c.b16 %v5240, %v5233
  %v5990 = vpack.c.b16 %v5241, %v5234
  %v5991 = vpack.c.b16 %v5242, %v5235
  %v5992 = vpack.c.b16 %v5250, %v5243
  %v5993 = vpack.c.b16 %v5251, %v5244
  %v5994 = vpack.c.b16 %v5252, %v5245
  %v5995 = vpack.c.b16 %v5253, %v5246
  %v5996 = vpack.c.b16 %v5254, %v5247
  %v5997 = vpack.c.b16 %v5255, %v5248
  %v5998 = vpack.c.b16 %v5256, %v5249
  %v5999 = vpack.c.b16 %v5264, %v5257
  %v6000 = vpack.c.b16 %v5265, %v5258
  %v6001 = vpack.c.b16 %v5266, %v5259
  %v6002 = vpack.c.b16 %v5267, %v5260
  %v6003 = vpack.c.b16 %v5268, %v5261
  %v6004 = vpack.c.b16 %v5269, %v5262
  %v6005 = vpack.c.b16 %v5270, %v5263
  %v6006 = vpack.c.b16 %v5278, %v5271
  %v6007 = vpack.c.b16 %v5279, %v5272
  %v6008 = vpack.c.b16 %v5280, %v5273
  %v6009 = vpack.c.b16 %v5281, %v5274
  %v6010 = vpack.c.b16 %v5282, %v5275
  %v6011 = vpack.c.b16 %v5283, %v5276
  %v6012 = vpack.c.b16 %v5284, %v5277
  %6741 = vmatprep.subr.bf16.mxu0 %v5335
  %6742 = vmatpush1.bf16.msra.mxu0 %v5334
  %6743 = vmatprep.subr.bf16.mxu0 %v5328
  %6744 = vmatpush1.bf16.msra.mxu0 %v5327
  %6745 = vmatprep.subr.bf16.mxu0 %v5321
  %6746 = vmatpush1.bf16.msra.mxu0 %v5320
  %6747 = vmatprep.subr.bf16.mxu0 %v5314
  %6748 = vmatpush1.bf16.msra.mxu0 %v5313
  %6749 = vmatprep.subr.bf16.mxu0 %v5307
  %6750 = vmatpush1.bf16.msra.mxu0 %v5306
  %6751 = vmatprep.subr.bf16.mxu0 %v5300
  %6752 = vmatpush1.bf16.msra.mxu0 %v5299
  %6753 = vmatprep.subr.bf16.mxu0 %v5293
  %6754 = vmatpush1.bf16.msra.mxu0 %v5292
  %6755 = vmatprep.subr.bf16.mxu0 %v5286
  %6756 = vmatpush1.bf16.msra.mxu0 %v5285
  %6757 = vmatprep.subr.bf16.mxu0 %v5391
  %6758 = vmatpush2.bf16.msra.mxu0 %v5390
  %6759 = vmatprep.subr.bf16.mxu0 %v5384
  %6760 = vmatpush2.bf16.msra.mxu0 %v5383
  %6761 = vmatprep.subr.bf16.mxu0 %v5377
  %6762 = vmatpush2.bf16.msra.mxu0 %v5376
  %6763 = vmatprep.subr.bf16.mxu0 %v5370
  %6764 = vmatpush2.bf16.msra.mxu0 %v5369
  %6765 = vmatprep.subr.bf16.mxu0 %v5363
  %6766 = vmatpush2.bf16.msra.mxu0 %v5362
  %6767 = vmatprep.subr.bf16.mxu0 %v5356
  %6768 = vmatpush2.bf16.msra.mxu0 %v5355
  %6769 = vmatprep.subr.bf16.mxu0 %v5349
  %6770 = vmatpush2.bf16.msra.mxu0 %v5348
  %6771 = vmatprep.subr.bf16.mxu0 %v5342
  %6772 = vmatpush2.bf16.msra.mxu0 %v5341
  %6773 = vmatprep.mubr.bf16.mxu0 %v2116
  %6774 = vmatmul.mubr.bf16.gmra.mxu0 %v2115
  %v6775 = vpop.f32.mrf.mxu0
  %v6776 = vadd.f32 %v2965, %v6775
  %v6777 = vpop.f32.mrf.mxu0
  %v6778 = vadd.f32 %v2969, %v6777
  %v6779 = vpop.f32.mrf.mxu0
  %v6780 = vadd.f32 %v2965, %v6779
  %v6781 = vpop.f32.mrf.mxu0
  %v6782 = vadd.f32 %v2969, %v6781
  %6783 = vdwg.mxu0
  %6784 = vmatprep.subr.bf16.mxu0 %v5447
  %6785 = vmatpush1.bf16.msra.mxu0 %v5446
  %6786 = vmatprep.subr.bf16.mxu0 %v5440
  %6787 = vmatpush1.bf16.msra.mxu0 %v5439
  %6788 = vmatprep.subr.bf16.mxu0 %v5433
  %6789 = vmatpush1.bf16.msra.mxu0 %v5432
  %6790 = vmatprep.subr.bf16.mxu0 %v5426
  %6791 = vmatpush1.bf16.msra.mxu0 %v5425
  %6792 = vmatprep.subr.bf16.mxu0 %v5419
  %6793 = vmatpush1.bf16.msra.mxu0 %v5418
  %6794 = vmatprep.subr.bf16.mxu0 %v5412
  %6795 = vmatpush1.bf16.msra.mxu0 %v5411
  %6796 = vmatprep.subr.bf16.mxu0 %v5405
  %6797 = vmatpush1.bf16.msra.mxu0 %v5404
  %6798 = vmatprep.subr.bf16.mxu0 %v5398
  %6799 = vmatpush1.bf16.msra.mxu0 %v5397
  %6800 = vmatprep.subr.bf16.mxu0 %v5503
  %6801 = vmatpush2.bf16.msra.mxu0 %v5502
  %6802 = vmatprep.subr.bf16.mxu0 %v5496
  %6803 = vmatpush2.bf16.msra.mxu0 %v5495
  %6804 = vmatprep.subr.bf16.mxu0 %v5489
  %6805 = vmatpush2.bf16.msra.mxu0 %v5488
  %6806 = vmatprep.subr.bf16.mxu0 %v5482
  %6807 = vmatpush2.bf16.msra.mxu0 %v5481
  %6808 = vmatprep.subr.bf16.mxu0 %v5475
  %6809 = vmatpush2.bf16.msra.mxu0 %v5474
  %6810 = vmatprep.subr.bf16.mxu0 %v5468
  %6811 = vmatpush2.bf16.msra.mxu0 %v5467
  %6812 = vmatprep.subr.bf16.mxu0 %v5461
  %6813 = vmatpush2.bf16.msra.mxu0 %v5460
  %6814 = vmatprep.subr.bf16.mxu0 %v5454
  %6815 = vmatpush2.bf16.msra.mxu0 %v5453
  %6816 = vmatprep.mubr.bf16.mxu0 %v2118
  %6817 = vmatmul.mubr.bf16.gmra.mxu0 %v2117
  %v6818 = vpop.f32.mrf.mxu0
  %v6819 = vadd.f32 %v6776, %v6818
  %v6820 = vpop.f32.mrf.mxu0
  %v6821 = vadd.f32 %v6778, %v6820
  %v6822 = vpop.f32.mrf.mxu0
  %v6823 = vadd.f32 %v6780, %v6822
  %v6824 = vpop.f32.mrf.mxu0
  %v6825 = vadd.f32 %v6782, %v6824
  %6826 = vdwg.mxu0
  %6827 = vmatprep.subr.bf16.mxu0 %v5559
  %6828 = vmatpush1.bf16.msra.mxu0 %v5558
  %6829 = vmatprep.subr.bf16.mxu0 %v5552
  %6830 = vmatpush1.bf16.msra.mxu0 %v5551
  %6831 = vmatprep.subr.bf16.mxu0 %v5545
  %6832 = vmatpush1.bf16.msra.mxu0 %v5544
  %6833 = vmatprep.subr.bf16.mxu0 %v5538
  %6834 = vmatpush1.bf16.msra.mxu0 %v5537
  %6835 = vmatprep.subr.bf16.mxu0 %v5531
  %6836 = vmatpush1.bf16.msra.mxu0 %v5530
  %6837 = vmatprep.subr.bf16.mxu0 %v5524
  %6838 = vmatpush1.bf16.msra.mxu0 %v5523
  %6839 = vmatprep.subr.bf16.mxu0 %v5517
  %6840 = vmatpush1.bf16.msra.mxu0 %v5516
  %6841 = vmatprep.subr.bf16.mxu0 %v5510
  %6842 = vmatpush1.bf16.msra.mxu0 %v5509
  %6843 = vmatprep.subr.bf16.mxu0 %v5615
  %6844 = vmatpush2.bf16.msra.mxu0 %v5614
  %6845 = vmatprep.subr.bf16.mxu0 %v5608
  %6846 = vmatpush2.bf16.msra.mxu0 %v5607
  %6847 = vmatprep.subr.bf16.mxu0 %v5601
  %6848 = vmatpush2.bf16.msra.mxu0 %v5600
  %6849 = vmatprep.subr.bf16.mxu0 %v5594
  %6850 = vmatpush2.bf16.msra.mxu0 %v5593
  %6851 = vmatprep.subr.bf16.mxu0 %v5587
  %6852 = vmatpush2.bf16.msra.mxu0 %v5586
  %6853 = vmatprep.subr.bf16.mxu0 %v5580
  %6854 = vmatpush2.bf16.msra.mxu0 %v5579
  %6855 = vmatprep.subr.bf16.mxu0 %v5573
  %6856 = vmatpush2.bf16.msra.mxu0 %v5572
  %6857 = vmatprep.subr.bf16.mxu0 %v5566
  %6858 = vmatpush2.bf16.msra.mxu0 %v5565
  %6859 = vmatprep.mubr.bf16.mxu0 %v2120
  %6860 = vmatmul.mubr.bf16.gmra.mxu0 %v2119
  %v6861 = vpop.f32.mrf.mxu0
  %v6862 = vadd.f32 %v6819, %v6861
  %v6863 = vpop.f32.mrf.mxu0
  %v6864 = vadd.f32 %v6821, %v6863
  %v6865 = vpop.f32.mrf.mxu0
  %v6866 = vadd.f32 %v6823, %v6865
  %v6867 = vpop.f32.mrf.mxu0
  %v6868 = vadd.f32 %v6825, %v6867
  %6869 = vdwg.mxu0
  %6870 = vmatprep.subr.bf16.mxu0 %v5671
  %6871 = vmatpush1.bf16.msra.mxu0 %v5670
  %6872 = vmatprep.subr.bf16.mxu0 %v5664
  %6873 = vmatpush1.bf16.msra.mxu0 %v5663
  %6874 = vmatprep.subr.bf16.mxu0 %v5657
  %6875 = vmatpush1.bf16.msra.mxu0 %v5656
  %6876 = vmatprep.subr.bf16.mxu0 %v5650
  %6877 = vmatpush1.bf16.msra.mxu0 %v5649
  %6878 = vmatprep.subr.bf16.mxu0 %v5643
  %6879 = vmatpush1.bf16.msra.mxu0 %v5642
  %6880 = vmatprep.subr.bf16.mxu0 %v5636
  %6881 = vmatpush1.bf16.msra.mxu0 %v5635
  %6882 = vmatprep.subr.bf16.mxu0 %v5629
  %6883 = vmatpush1.bf16.msra.mxu0 %v5628
  %6884 = vmatprep.subr.bf16.mxu0 %v5622
  %6885 = vmatpush1.bf16.msra.mxu0 %v5621
  %6886 = vmatprep.subr.bf16.mxu0 %v5727
  %6887 = vmatpush2.bf16.msra.mxu0 %v5726
  %6888 = vmatprep.subr.bf16.mxu0 %v5720
  %6889 = vmatpush2.bf16.msra.mxu0 %v5719
  %6890 = vmatprep.subr.bf16.mxu0 %v5713
  %6891 = vmatpush2.bf16.msra.mxu0 %v5712
  %6892 = vmatprep.subr.bf16.mxu0 %v5706
  %6893 = vmatpush2.bf16.msra.mxu0 %v5705
  %6894 = vmatprep.subr.bf16.mxu0 %v5699
  %6895 = vmatpush2.bf16.msra.mxu0 %v5698
  %6896 = vmatprep.subr.bf16.mxu0 %v5692
  %6897 = vmatpush2.bf16.msra.mxu0 %v5691
  %6898 = vmatprep.subr.bf16.mxu0 %v5685
  %6899 = vmatpush2.bf16.msra.mxu0 %v5684
  %6900 = vmatprep.subr.bf16.mxu0 %v5678
  %6901 = vmatpush2.bf16.msra.mxu0 %v5677
  %6902 = vmatprep.mubr.bf16.mxu0 %v2122
  %6903 = vmatmul.mubr.bf16.gmra.mxu0 %v2121
  %v6904 = vpop.f32.mrf.mxu0
  %v6905 = vadd.f32 %v6862, %v6904
  %v6906 = vpop.f32.mrf.mxu0
  %v6907 = vadd.f32 %v6864, %v6906
  %v6908 = vpop.f32.mrf.mxu0
  %v6909 = vadd.f32 %v6866, %v6908
  %v6910 = vpop.f32.mrf.mxu0
  %v6911 = vadd.f32 %v6868, %v6910
  %6912 = vdwg.mxu0
  %6913 = vmatprep.subr.bf16.mxu0 %v5783
  %6914 = vmatpush1.bf16.msra.mxu0 %v5782
  %6915 = vmatprep.subr.bf16.mxu0 %v5776
  %6916 = vmatpush1.bf16.msra.mxu0 %v5775
  %6917 = vmatprep.subr.bf16.mxu0 %v5769
  %6918 = vmatpush1.bf16.msra.mxu0 %v5768
  %6919 = vmatprep.subr.bf16.mxu0 %v5762
  %6920 = vmatpush1.bf16.msra.mxu0 %v5761
  %6921 = vmatprep.subr.bf16.mxu0 %v5755
  %6922 = vmatpush1.bf16.msra.mxu0 %v5754
  %6923 = vmatprep.subr.bf16.mxu0 %v5748
  %6924 = vmatpush1.bf16.msra.mxu0 %v5747
  %6925 = vmatprep.subr.bf16.mxu0 %v5741
  %6926 = vmatpush1.bf16.msra.mxu0 %v5740
  %6927 = vmatprep.subr.bf16.mxu0 %v5734
  %6928 = vmatpush1.bf16.msra.mxu0 %v5733
  %6929 = vmatprep.subr.bf16.mxu0 %v5839
  %6930 = vmatpush2.bf16.msra.mxu0 %v5838
  %6931 = vmatprep.subr.bf16.mxu0 %v5832
  %6932 = vmatpush2.bf16.msra.mxu0 %v5831
  %6933 = vmatprep.subr.bf16.mxu0 %v5825
  %6934 = vmatpush2.bf16.msra.mxu0 %v5824
  %6935 = vmatprep.subr.bf16.mxu0 %v5818
  %6936 = vmatpush2.bf16.msra.mxu0 %v5817
  %6937 = vmatprep.subr.bf16.mxu0 %v5811
  %6938 = vmatpush2.bf16.msra.mxu0 %v5810
  %6939 = vmatprep.subr.bf16.mxu0 %v5804
  %6940 = vmatpush2.bf16.msra.mxu0 %v5803
  %6941 = vmatprep.subr.bf16.mxu0 %v5797
  %6942 = vmatpush2.bf16.msra.mxu0 %v5796
  %6943 = vmatprep.subr.bf16.mxu0 %v5790
  %6944 = vmatpush2.bf16.msra.mxu0 %v5789
  %6945 = vmatprep.mubr.bf16.mxu0 %v2124
  %6946 = vmatmul.mubr.bf16.gmra.mxu0 %v2123
  %v6947 = vpop.f32.mrf.mxu0
  %v6948 = vadd.f32 %v6905, %v6947
  %v6949 = vpop.f32.mrf.mxu0
  %v6950 = vadd.f32 %v6907, %v6949
  %v6951 = vpop.f32.mrf.mxu0
  %v6952 = vadd.f32 %v6909, %v6951
  %v6953 = vpop.f32.mrf.mxu0
  %v6954 = vadd.f32 %v6911, %v6953
  %6955 = vdwg.mxu0
  %6956 = vmatprep.subr.bf16.mxu0 %v5895
  %6957 = vmatpush1.bf16.msra.mxu0 %v5894
  %6958 = vmatprep.subr.bf16.mxu0 %v5888
  %6959 = vmatpush1.bf16.msra.mxu0 %v5887
  %6960 = vmatprep.subr.bf16.mxu0 %v5881
  %6961 = vmatpush1.bf16.msra.mxu0 %v5880
  %6962 = vmatprep.subr.bf16.mxu0 %v5874
  %6963 = vmatpush1.bf16.msra.mxu0 %v5873
  %6964 = vmatprep.subr.bf16.mxu0 %v5867
  %6965 = vmatpush1.bf16.msra.mxu0 %v5866
  %6966 = vmatprep.subr.bf16.mxu0 %v5860
  %6967 = vmatpush1.bf16.msra.mxu0 %v5859
  %6968 = vmatprep.subr.bf16.mxu0 %v5853
  %6969 = vmatpush1.bf16.msra.mxu0 %v5852
  %6970 = vmatprep.subr.bf16.mxu0 %v5846
  %6971 = vmatpush1.bf16.msra.mxu0 %v5845
  %6972 = vmatprep.subr.bf16.mxu0 %v5951
  %6973 = vmatpush2.bf16.msra.mxu0 %v5950
  %6974 = vmatprep.subr.bf16.mxu0 %v5944
  %6975 = vmatpush2.bf16.msra.mxu0 %v5943
  %6976 = vmatprep.subr.bf16.mxu0 %v5937
  %6977 = vmatpush2.bf16.msra.mxu0 %v5936
  %6978 = vmatprep.subr.bf16.mxu0 %v5930
  %6979 = vmatpush2.bf16.msra.mxu0 %v5929
  %6980 = vmatprep.subr.bf16.mxu0 %v5923
  %6981 = vmatpush2.bf16.msra.mxu0 %v5922
  %6982 = vmatprep.subr.bf16.mxu0 %v5916
  %6983 = vmatpush2.bf16.msra.mxu0 %v5915
  %6984 = vmatprep.subr.bf16.mxu0 %v5909
  %6985 = vmatpush2.bf16.msra.mxu0 %v5908
  %6986 = vmatprep.subr.bf16.mxu0 %v5902
  %6987 = vmatpush2.bf16.msra.mxu0 %v5901
  %6988 = vmatprep.mubr.bf16.mxu0 %v2126
  %6989 = vmatmul.mubr.bf16.gmra.mxu0 %v2125
  %v6990 = vpop.f32.mrf.mxu0
  %v6991 = vadd.f32 %v6948, %v6990
  %v6992 = vpop.f32.mrf.mxu0
  %v6993 = vadd.f32 %v6950, %v6992
  %v6994 = vpop.f32.mrf.mxu0
  %v6995 = vadd.f32 %v6952, %v6994
  %v6996 = vpop.f32.mrf.mxu0
  %v6997 = vadd.f32 %v6954, %v6996
  %6998 = vdwg.mxu0
  %6999 = vmatprep.subr.bf16.mxu0 %v6007
  %7000 = vmatpush1.bf16.msra.mxu0 %v6006
  %7001 = vmatprep.subr.bf16.mxu0 %v6000
  %7002 = vmatpush1.bf16.msra.mxu0 %v5999
  %7003 = vmatprep.subr.bf16.mxu0 %v5993
  %7004 = vmatpush1.bf16.msra.mxu0 %v5992
  %7005 = vmatprep.subr.bf16.mxu0 %v5986
  %7006 = vmatpush1.bf16.msra.mxu0 %v5985
  %7007 = vmatprep.subr.bf16.mxu0 %v5979
  %7008 = vmatpush1.bf16.msra.mxu0 %v5978
  %7009 = vmatprep.subr.bf16.mxu0 %v5972
  %7010 = vmatpush1.bf16.msra.mxu0 %v5971
  %7011 = vmatprep.subr.bf16.mxu0 %v5965
  %7012 = vmatpush1.bf16.msra.mxu0 %v5964
  %7013 = vmatprep.subr.bf16.mxu0 %v5958
  %7014 = vmatpush1.bf16.msra.mxu0 %v5957
  %7015 = vmatprep.subr.bf16.mxu0 0
  %7016 = vmatpush2.bf16.msra.mxu0 0
  %7017 = vmatprep.subr.bf16.mxu0 0
  %7018 = vmatpush2.bf16.msra.mxu0 0
  %7019 = vmatprep.subr.bf16.mxu0 0
  %7020 = vmatpush2.bf16.msra.mxu0 0
  %7021 = vmatprep.subr.bf16.mxu0 0
  %7022 = vmatpush2.bf16.msra.mxu0 0
  %7023 = vmatprep.subr.bf16.mxu0 0
  %7024 = vmatpush2.bf16.msra.mxu0 0
  %7025 = vmatprep.subr.bf16.mxu0 0
  %7026 = vmatpush2.bf16.msra.mxu0 0
  %7027 = vmatprep.subr.bf16.mxu0 0
  %7028 = vmatpush2.bf16.msra.mxu0 0
  %7029 = vmatprep.subr.bf16.mxu0 0
  %7030 = vmatpush2.bf16.msra.mxu0 0
  %7031 = vmatprep.mubr.bf16.mxu0 0
  %7032 = vmatmul.mubr.bf16.gmra.mxu0 %v2127
  %v7033 = vpop.f32.mrf.mxu0
  %v7034 = vadd.f32 %v6991, %v7033
  %v7035 = vpop.f32.mrf.mxu0
  %v7036 = vadd.f32 %v6993, %v7035
  %v7037 = vpop.f32.mrf.mxu0
  %v7038 = vadd.f32 %v6995, %v7037
  %v7039 = vpop.f32.mrf.mxu0
  %v7040 = vadd.f32 %v6997, %v7039
  %7041 = vdwg.mxu0
  %7042 = vmatprep.subr.bf16.mxu0 %v5337
  %7043 = vmatpush1.bf16.msra.mxu0 %v5336
  %7044 = vmatprep.subr.bf16.mxu0 %v5330
  %7045 = vmatpush1.bf16.msra.mxu0 %v5329
  %7046 = vmatprep.subr.bf16.mxu0 %v5323
  %7047 = vmatpush1.bf16.msra.mxu0 %v5322
  %7048 = vmatprep.subr.bf16.mxu0 %v5316
  %7049 = vmatpush1.bf16.msra.mxu0 %v5315
  %7050 = vmatprep.subr.bf16.mxu0 %v5309
  %7051 = vmatpush1.bf16.msra.mxu0 %v5308
  %7052 = vmatprep.subr.bf16.mxu0 %v5302
  %7053 = vmatpush1.bf16.msra.mxu0 %v5301
  %7054 = vmatprep.subr.bf16.mxu0 %v5295
  %7055 = vmatpush1.bf16.msra.mxu0 %v5294
  %7056 = vmatprep.subr.bf16.mxu0 %v5288
  %7057 = vmatpush1.bf16.msra.mxu0 %v5287
  %7058 = vmatprep.subr.bf16.mxu0 %v5393
  %7059 = vmatpush2.bf16.msra.mxu0 %v5392
  %7060 = vmatprep.subr.bf16.mxu0 %v5386
  %7061 = vmatpush2.bf16.msra.mxu0 %v5385
  %7062 = vmatprep.subr.bf16.mxu0 %v5379
  %7063 = vmatpush2.bf16.msra.mxu0 %v5378
  %7064 = vmatprep.subr.bf16.mxu0 %v5372
  %7065 = vmatpush2.bf16.msra.mxu0 %v5371
  %7066 = vmatprep.subr.bf16.mxu0 %v5365
  %7067 = vmatpush2.bf16.msra.mxu0 %v5364
  %7068 = vmatprep.subr.bf16.mxu0 %v5358
  %7069 = vmatpush2.bf16.msra.mxu0 %v5357
  %7070 = vmatprep.subr.bf16.mxu0 %v5351
  %7071 = vmatpush2.bf16.msra.mxu0 %v5350
  %7072 = vmatprep.subr.bf16.mxu0 %v5344
  %7073 = vmatpush2.bf16.msra.mxu0 %v5343
  %7074 = vmatprep.mubr.bf16.mxu0 %v2116
  %7075 = vmatmul.mubr.bf16.gmra.mxu0 %v2115
  %v7076 = vpop.f32.mrf.mxu0
  %v7077 = vadd.f32 %v2973, %v7076
  %v7078 = vpop.f32.mrf.mxu0
  %v7079 = vadd.f32 %v2977, %v7078
  %v7080 = vpop.f32.mrf.mxu0
  %v7081 = vadd.f32 %v2973, %v7080
  %v7082 = vpop.f32.mrf.mxu0
  %v7083 = vadd.f32 %v2977, %v7082
  %7084 = vdwg.mxu0
  %7085 = vmatprep.subr.bf16.mxu0 %v5449
  %7086 = vmatpush1.bf16.msra.mxu0 %v5448
  %7087 = vmatprep.subr.bf16.mxu0 %v5442
  %7088 = vmatpush1.bf16.msra.mxu0 %v5441
  %7089 = vmatprep.subr.bf16.mxu0 %v5435
  %7090 = vmatpush1.bf16.msra.mxu0 %v5434
  %7091 = vmatprep.subr.bf16.mxu0 %v5428
  %7092 = vmatpush1.bf16.msra.mxu0 %v5427
  %7093 = vmatprep.subr.bf16.mxu0 %v5421
  %7094 = vmatpush1.bf16.msra.mxu0 %v5420
  %7095 = vmatprep.subr.bf16.mxu0 %v5414
  %7096 = vmatpush1.bf16.msra.mxu0 %v5413
  %7097 = vmatprep.subr.bf16.mxu0 %v5407
  %7098 = vmatpush1.bf16.msra.mxu0 %v5406
  %7099 = vmatprep.subr.bf16.mxu0 %v5400
  %7100 = vmatpush1.bf16.msra.mxu0 %v5399
  %7101 = vmatprep.subr.bf16.mxu0 %v5505
  %7102 = vmatpush2.bf16.msra.mxu0 %v5504
  %7103 = vmatprep.subr.bf16.mxu0 %v5498
  %7104 = vmatpush2.bf16.msra.mxu0 %v5497
  %7105 = vmatprep.subr.bf16.mxu0 %v5491
  %7106 = vmatpush2.bf16.msra.mxu0 %v5490
  %7107 = vmatprep.subr.bf16.mxu0 %v5484
  %7108 = vmatpush2.bf16.msra.mxu0 %v5483
  %7109 = vmatprep.subr.bf16.mxu0 %v5477
  %7110 = vmatpush2.bf16.msra.mxu0 %v5476
  %7111 = vmatprep.subr.bf16.mxu0 %v5470
  %7112 = vmatpush2.bf16.msra.mxu0 %v5469
  %7113 = vmatprep.subr.bf16.mxu0 %v5463
  %7114 = vmatpush2.bf16.msra.mxu0 %v5462
  %7115 = vmatprep.subr.bf16.mxu0 %v5456
  %7116 = vmatpush2.bf16.msra.mxu0 %v5455
  %7117 = vmatprep.mubr.bf16.mxu0 %v2118
  %7118 = vmatmul.mubr.bf16.gmra.mxu0 %v2117
  %v7119 = vpop.f32.mrf.mxu0
  %v7120 = vadd.f32 %v7077, %v7119
  %v7121 = vpop.f32.mrf.mxu0
  %v7122 = vadd.f32 %v7079, %v7121
  %v7123 = vpop.f32.mrf.mxu0
  %v7124 = vadd.f32 %v7081, %v7123
  %v7125 = vpop.f32.mrf.mxu0
  %v7126 = vadd.f32 %v7083, %v7125
  %7127 = vdwg.mxu0
  %7128 = vmatprep.subr.bf16.mxu0 %v5561
  %7129 = vmatpush1.bf16.msra.mxu0 %v5560
  %7130 = vmatprep.subr.bf16.mxu0 %v5554
  %7131 = vmatpush1.bf16.msra.mxu0 %v5553
  %7132 = vmatprep.subr.bf16.mxu0 %v5547
  %7133 = vmatpush1.bf16.msra.mxu0 %v5546
  %7134 = vmatprep.subr.bf16.mxu0 %v5540
  %7135 = vmatpush1.bf16.msra.mxu0 %v5539
  %7136 = vmatprep.subr.bf16.mxu0 %v5533
  %7137 = vmatpush1.bf16.msra.mxu0 %v5532
  %7138 = vmatprep.subr.bf16.mxu0 %v5526
  %7139 = vmatpush1.bf16.msra.mxu0 %v5525
  %7140 = vmatprep.subr.bf16.mxu0 %v5519
  %7141 = vmatpush1.bf16.msra.mxu0 %v5518
  %7142 = vmatprep.subr.bf16.mxu0 %v5512
  %7143 = vmatpush1.bf16.msra.mxu0 %v5511
  %7144 = vmatprep.subr.bf16.mxu0 %v5617
  %7145 = vmatpush2.bf16.msra.mxu0 %v5616
  %7146 = vmatprep.subr.bf16.mxu0 %v5610
  %7147 = vmatpush2.bf16.msra.mxu0 %v5609
  %7148 = vmatprep.subr.bf16.mxu0 %v5603
  %7149 = vmatpush2.bf16.msra.mxu0 %v5602
  %7150 = vmatprep.subr.bf16.mxu0 %v5596
  %7151 = vmatpush2.bf16.msra.mxu0 %v5595
  %7152 = vmatprep.subr.bf16.mxu0 %v5589
  %7153 = vmatpush2.bf16.msra.mxu0 %v5588
  %7154 = vmatprep.subr.bf16.mxu0 %v5582
  %7155 = vmatpush2.bf16.msra.mxu0 %v5581
  %7156 = vmatprep.subr.bf16.mxu0 %v5575
  %7157 = vmatpush2.bf16.msra.mxu0 %v5574
  %7158 = vmatprep.subr.bf16.mxu0 %v5568
  %7159 = vmatpush2.bf16.msra.mxu0 %v5567
  %7160 = vmatprep.mubr.bf16.mxu0 %v2120
  %7161 = vmatmul.mubr.bf16.gmra.mxu0 %v2119
  %v7162 = vpop.f32.mrf.mxu0
  %v7163 = vadd.f32 %v7120, %v7162
  %v7164 = vpop.f32.mrf.mxu0
  %v7165 = vadd.f32 %v7122, %v7164
  %v7166 = vpop.f32.mrf.mxu0
  %v7167 = vadd.f32 %v7124, %v7166
  %v7168 = vpop.f32.mrf.mxu0
  %v7169 = vadd.f32 %v7126, %v7168
  %7170 = vdwg.mxu0
  %7171 = vmatprep.subr.bf16.mxu0 %v5673
  %7172 = vmatpush1.bf16.msra.mxu0 %v5672
  %7173 = vmatprep.subr.bf16.mxu0 %v5666
  %7174 = vmatpush1.bf16.msra.mxu0 %v5665
  %7175 = vmatprep.subr.bf16.mxu0 %v5659
  %7176 = vmatpush1.bf16.msra.mxu0 %v5658
  %7177 = vmatprep.subr.bf16.mxu0 %v5652
  %7178 = vmatpush1.bf16.msra.mxu0 %v5651
  %7179 = vmatprep.subr.bf16.mxu0 %v5645
  %7180 = vmatpush1.bf16.msra.mxu0 %v5644
  %7181 = vmatprep.subr.bf16.mxu0 %v5638
  %7182 = vmatpush1.bf16.msra.mxu0 %v5637
  %7183 = vmatprep.subr.bf16.mxu0 %v5631
  %7184 = vmatpush1.bf16.msra.mxu0 %v5630
  %7185 = vmatprep.subr.bf16.mxu0 %v5624
  %7186 = vmatpush1.bf16.msra.mxu0 %v5623
  %7187 = vmatprep.subr.bf16.mxu0 %v5729
  %7188 = vmatpush2.bf16.msra.mxu0 %v5728
  %7189 = vmatprep.subr.bf16.mxu0 %v5722
  %7190 = vmatpush2.bf16.msra.mxu0 %v5721
  %7191 = vmatprep.subr.bf16.mxu0 %v5715
  %7192 = vmatpush2.bf16.msra.mxu0 %v5714
  %7193 = vmatprep.subr.bf16.mxu0 %v5708
  %7194 = vmatpush2.bf16.msra.mxu0 %v5707
  %7195 = vmatprep.subr.bf16.mxu0 %v5701
  %7196 = vmatpush2.bf16.msra.mxu0 %v5700
  %7197 = vmatprep.subr.bf16.mxu0 %v5694
  %7198 = vmatpush2.bf16.msra.mxu0 %v5693
  %7199 = vmatprep.subr.bf16.mxu0 %v5687
  %7200 = vmatpush2.bf16.msra.mxu0 %v5686
  %7201 = vmatprep.subr.bf16.mxu0 %v5680
  %7202 = vmatpush2.bf16.msra.mxu0 %v5679
  %7203 = vmatprep.mubr.bf16.mxu0 %v2122
  %7204 = vmatmul.mubr.bf16.gmra.mxu0 %v2121
  %v7205 = vpop.f32.mrf.mxu0
  %v7206 = vadd.f32 %v7163, %v7205
  %v7207 = vpop.f32.mrf.mxu0
  %v7208 = vadd.f32 %v7165, %v7207
  %v7209 = vpop.f32.mrf.mxu0
  %v7210 = vadd.f32 %v7167, %v7209
  %v7211 = vpop.f32.mrf.mxu0
  %v7212 = vadd.f32 %v7169, %v7211
  %7213 = vdwg.mxu0
  %7214 = vmatprep.subr.bf16.mxu0 %v5785
  %7215 = vmatpush1.bf16.msra.mxu0 %v5784
  %7216 = vmatprep.subr.bf16.mxu0 %v5778
  %7217 = vmatpush1.bf16.msra.mxu0 %v5777
  %7218 = vmatprep.subr.bf16.mxu0 %v5771
  %7219 = vmatpush1.bf16.msra.mxu0 %v5770
  %7220 = vmatprep.subr.bf16.mxu0 %v5764
  %7221 = vmatpush1.bf16.msra.mxu0 %v5763
  %7222 = vmatprep.subr.bf16.mxu0 %v5757
  %7223 = vmatpush1.bf16.msra.mxu0 %v5756
  %7224 = vmatprep.subr.bf16.mxu0 %v5750
  %7225 = vmatpush1.bf16.msra.mxu0 %v5749
  %7226 = vmatprep.subr.bf16.mxu0 %v5743
  %7227 = vmatpush1.bf16.msra.mxu0 %v5742
  %7228 = vmatprep.subr.bf16.mxu0 %v5736
  %7229 = vmatpush1.bf16.msra.mxu0 %v5735
  %7230 = vmatprep.subr.bf16.mxu0 %v5841
  %7231 = vmatpush2.bf16.msra.mxu0 %v5840
  %7232 = vmatprep.subr.bf16.mxu0 %v5834
  %7233 = vmatpush2.bf16.msra.mxu0 %v5833
  %7234 = vmatprep.subr.bf16.mxu0 %v5827
  %7235 = vmatpush2.bf16.msra.mxu0 %v5826
  %7236 = vmatprep.subr.bf16.mxu0 %v5820
  %7237 = vmatpush2.bf16.msra.mxu0 %v5819
  %7238 = vmatprep.subr.bf16.mxu0 %v5813
  %7239 = vmatpush2.bf16.msra.mxu0 %v5812
  %7240 = vmatprep.subr.bf16.mxu0 %v5806
  %7241 = vmatpush2.bf16.msra.mxu0 %v5805
  %7242 = vmatprep.subr.bf16.mxu0 %v5799
  %7243 = vmatpush2.bf16.msra.mxu0 %v5798
  %7244 = vmatprep.subr.bf16.mxu0 %v5792
  %7245 = vmatpush2.bf16.msra.mxu0 %v5791
  %7246 = vmatprep.mubr.bf16.mxu0 %v2124
  %7247 = vmatmul.mubr.bf16.gmra.mxu0 %v2123
  %v7248 = vpop.f32.mrf.mxu0
  %v7249 = vadd.f32 %v7206, %v7248
  %v7250 = vpop.f32.mrf.mxu0
  %v7251 = vadd.f32 %v7208, %v7250
  %v7252 = vpop.f32.mrf.mxu0
  %v7253 = vadd.f32 %v7210, %v7252
  %v7254 = vpop.f32.mrf.mxu0
  %v7255 = vadd.f32 %v7212, %v7254
  %7256 = vdwg.mxu0
  %7257 = vmatprep.subr.bf16.mxu0 %v5897
  %7258 = vmatpush1.bf16.msra.mxu0 %v5896
  %7259 = vmatprep.subr.bf16.mxu0 %v5890
  %7260 = vmatpush1.bf16.msra.mxu0 %v5889
  %7261 = vmatprep.subr.bf16.mxu0 %v5883
  %7262 = vmatpush1.bf16.msra.mxu0 %v5882
  %7263 = vmatprep.subr.bf16.mxu0 %v5876
  %7264 = vmatpush1.bf16.msra.mxu0 %v5875
  %7265 = vmatprep.subr.bf16.mxu0 %v5869
  %7266 = vmatpush1.bf16.msra.mxu0 %v5868
  %7267 = vmatprep.subr.bf16.mxu0 %v5862
  %7268 = vmatpush1.bf16.msra.mxu0 %v5861
  %7269 = vmatprep.subr.bf16.mxu0 %v5855
  %7270 = vmatpush1.bf16.msra.mxu0 %v5854
  %7271 = vmatprep.subr.bf16.mxu0 %v5848
  %7272 = vmatpush1.bf16.msra.mxu0 %v5847
  %7273 = vmatprep.subr.bf16.mxu0 %v5953
  %7274 = vmatpush2.bf16.msra.mxu0 %v5952
  %7275 = vmatprep.subr.bf16.mxu0 %v5946
  %7276 = vmatpush2.bf16.msra.mxu0 %v5945
  %7277 = vmatprep.subr.bf16.mxu0 %v5939
  %7278 = vmatpush2.bf16.msra.mxu0 %v5938
  %7279 = vmatprep.subr.bf16.mxu0 %v5932
  %7280 = vmatpush2.bf16.msra.mxu0 %v5931
  %7281 = vmatprep.subr.bf16.mxu0 %v5925
  %7282 = vmatpush2.bf16.msra.mxu0 %v5924
  %7283 = vmatprep.subr.bf16.mxu0 %v5918
  %7284 = vmatpush2.bf16.msra.mxu0 %v5917
  %7285 = vmatprep.subr.bf16.mxu0 %v5911
  %7286 = vmatpush2.bf16.msra.mxu0 %v5910
  %7287 = vmatprep.subr.bf16.mxu0 %v5904
  %7288 = vmatpush2.bf16.msra.mxu0 %v5903
  %7289 = vmatprep.mubr.bf16.mxu0 %v2126
  %7290 = vmatmul.mubr.bf16.gmra.mxu0 %v2125
  %v7291 = vpop.f32.mrf.mxu0
  %v7292 = vadd.f32 %v7249, %v7291
  %v7293 = vpop.f32.mrf.mxu0
  %v7294 = vadd.f32 %v7251, %v7293
  %v7295 = vpop.f32.mrf.mxu0
  %v7296 = vadd.f32 %v7253, %v7295
  %v7297 = vpop.f32.mrf.mxu0
  %v7298 = vadd.f32 %v7255, %v7297
  %7299 = vdwg.mxu0
  %7300 = vmatprep.subr.bf16.mxu0 %v6009
  %7301 = vmatpush1.bf16.msra.mxu0 %v6008
  %7302 = vmatprep.subr.bf16.mxu0 %v6002
  %7303 = vmatpush1.bf16.msra.mxu0 %v6001
  %7304 = vmatprep.subr.bf16.mxu0 %v5995
  %7305 = vmatpush1.bf16.msra.mxu0 %v5994
  %7306 = vmatprep.subr.bf16.mxu0 %v5988
  %7307 = vmatpush1.bf16.msra.mxu0 %v5987
  %7308 = vmatprep.subr.bf16.mxu0 %v5981
  %7309 = vmatpush1.bf16.msra.mxu0 %v5980
  %7310 = vmatprep.subr.bf16.mxu0 %v5974
  %7311 = vmatpush1.bf16.msra.mxu0 %v5973
  %7312 = vmatprep.subr.bf16.mxu0 %v5967
  %7313 = vmatpush1.bf16.msra.mxu0 %v5966
  %7314 = vmatprep.subr.bf16.mxu0 %v5960
  %7315 = vmatpush1.bf16.msra.mxu0 %v5959
  %7316 = vmatprep.subr.bf16.mxu0 0
  %7317 = vmatpush2.bf16.msra.mxu0 0
  %7318 = vmatprep.subr.bf16.mxu0 0
  %7319 = vmatpush2.bf16.msra.mxu0 0
  %7320 = vmatprep.subr.bf16.mxu0 0
  %7321 = vmatpush2.bf16.msra.mxu0 0
  %7322 = vmatprep.subr.bf16.mxu0 0
  %7323 = vmatpush2.bf16.msra.mxu0 0
  %7324 = vmatprep.subr.bf16.mxu0 0
  %7325 = vmatpush2.bf16.msra.mxu0 0
  %7326 = vmatprep.subr.bf16.mxu0 0
  %7327 = vmatpush2.bf16.msra.mxu0 0
  %7328 = vmatprep.subr.bf16.mxu0 0
  %7329 = vmatpush2.bf16.msra.mxu0 0
  %7330 = vmatprep.subr.bf16.mxu0 0
  %7331 = vmatpush2.bf16.msra.mxu0 0
  %7332 = vmatprep.mubr.bf16.mxu0 0
  %7333 = vmatmul.mubr.bf16.gmra.mxu0 %v2127
  %v7334 = vpop.f32.mrf.mxu0
  %v7335 = vadd.f32 %v7292, %v7334
  %v7336 = vpop.f32.mrf.mxu0
  %v7337 = vadd.f32 %v7294, %v7336
  %v7338 = vpop.f32.mrf.mxu0
  %v7339 = vadd.f32 %v7296, %v7338
  %v7340 = vpop.f32.mrf.mxu0
  %v7341 = vadd.f32 %v7298, %v7340
  %7342 = vdwg.mxu0
  %7343 = vmatprep.subr.bf16.mxu0 %v5339
  %7344 = vmatpush1.bf16.msra.mxu0 %v5338
  %7345 = vmatprep.subr.bf16.mxu0 %v5332
  %7346 = vmatpush1.bf16.msra.mxu0 %v5331
  %7347 = vmatprep.subr.bf16.mxu0 %v5325
  %7348 = vmatpush1.bf16.msra.mxu0 %v5324
  %7349 = vmatprep.subr.bf16.mxu0 %v5318
  %7350 = vmatpush1.bf16.msra.mxu0 %v5317
  %7351 = vmatprep.subr.bf16.mxu0 %v5311
  %7352 = vmatpush1.bf16.msra.mxu0 %v5310
  %7353 = vmatprep.subr.bf16.mxu0 %v5304
  %7354 = vmatpush1.bf16.msra.mxu0 %v5303
  %7355 = vmatprep.subr.bf16.mxu0 %v5297
  %7356 = vmatpush1.bf16.msra.mxu0 %v5296
  %7357 = vmatprep.subr.bf16.mxu0 %v5290
  %7358 = vmatpush1.bf16.msra.mxu0 %v5289
  %7359 = vmatprep.subr.bf16.mxu0 %v5395
  %7360 = vmatpush2.bf16.msra.mxu0 %v5394
  %7361 = vmatprep.subr.bf16.mxu0 %v5388
  %7362 = vmatpush2.bf16.msra.mxu0 %v5387
  %7363 = vmatprep.subr.bf16.mxu0 %v5381
  %7364 = vmatpush2.bf16.msra.mxu0 %v5380
  %7365 = vmatprep.subr.bf16.mxu0 %v5374
  %7366 = vmatpush2.bf16.msra.mxu0 %v5373
  %7367 = vmatprep.subr.bf16.mxu0 %v5367
  %7368 = vmatpush2.bf16.msra.mxu0 %v5366
  %7369 = vmatprep.subr.bf16.mxu0 %v5360
  %7370 = vmatpush2.bf16.msra.mxu0 %v5359
  %7371 = vmatprep.subr.bf16.mxu0 %v5353
  %7372 = vmatpush2.bf16.msra.mxu0 %v5352
  %7373 = vmatprep.subr.bf16.mxu0 %v5346
  %7374 = vmatpush2.bf16.msra.mxu0 %v5345
  %7375 = vmatprep.mubr.bf16.mxu0 %v2116
  %7376 = vmatmul.mubr.bf16.gmra.mxu0 %v2115
  %v7377 = vpop.f32.mrf.mxu0
  %v7378 = vadd.f32 %v2981, %v7377
  %v7379 = vpop.f32.mrf.mxu0
  %v7380 = vadd.f32 %v2985, %v7379
  %v7381 = vpop.f32.mrf.mxu0
  %v7382 = vadd.f32 %v2981, %v7381
  %v7383 = vpop.f32.mrf.mxu0
  %v7384 = vadd.f32 %v2985, %v7383
  %7385 = vdwg.mxu0
  %7386 = vmatprep.subr.bf16.mxu0 %v5451
  %7387 = vmatpush1.bf16.msra.mxu0 %v5450
  %7388 = vmatprep.subr.bf16.mxu0 %v5444
  %7389 = vmatpush1.bf16.msra.mxu0 %v5443
  %7390 = vmatprep.subr.bf16.mxu0 %v5437
  %7391 = vmatpush1.bf16.msra.mxu0 %v5436
  %7392 = vmatprep.subr.bf16.mxu0 %v5430
  %7393 = vmatpush1.bf16.msra.mxu0 %v5429
  %7394 = vmatprep.subr.bf16.mxu0 %v5423
  %7395 = vmatpush1.bf16.msra.mxu0 %v5422
  %7396 = vmatprep.subr.bf16.mxu0 %v5416
  %7397 = vmatpush1.bf16.msra.mxu0 %v5415
  %7398 = vmatprep.subr.bf16.mxu0 %v5409
  %7399 = vmatpush1.bf16.msra.mxu0 %v5408
  %7400 = vmatprep.subr.bf16.mxu0 %v5402
  %7401 = vmatpush1.bf16.msra.mxu0 %v5401
  %7402 = vmatprep.subr.bf16.mxu0 %v5507
  %7403 = vmatpush2.bf16.msra.mxu0 %v5506
  %7404 = vmatprep.subr.bf16.mxu0 %v5500
  %7405 = vmatpush2.bf16.msra.mxu0 %v5499
  %7406 = vmatprep.subr.bf16.mxu0 %v5493
  %7407 = vmatpush2.bf16.msra.mxu0 %v5492
  %7408 = vmatprep.subr.bf16.mxu0 %v5486
  %7409 = vmatpush2.bf16.msra.mxu0 %v5485
  %7410 = vmatprep.subr.bf16.mxu0 %v5479
  %7411 = vmatpush2.bf16.msra.mxu0 %v5478
  %7412 = vmatprep.subr.bf16.mxu0 %v5472
  %7413 = vmatpush2.bf16.msra.mxu0 %v5471
  %7414 = vmatprep.subr.bf16.mxu0 %v5465
  %7415 = vmatpush2.bf16.msra.mxu0 %v5464
  %7416 = vmatprep.subr.bf16.mxu0 %v5458
  %7417 = vmatpush2.bf16.msra.mxu0 %v5457
  %7418 = vmatprep.mubr.bf16.mxu0 %v2118
  %7419 = vmatmul.mubr.bf16.gmra.mxu0 %v2117
  %v7420 = vpop.f32.mrf.mxu0
  %v7421 = vadd.f32 %v7378, %v7420
  %v7422 = vpop.f32.mrf.mxu0
  %v7423 = vadd.f32 %v7380, %v7422
  %v7424 = vpop.f32.mrf.mxu0
  %v7425 = vadd.f32 %v7382, %v7424
  %v7426 = vpop.f32.mrf.mxu0
  %v7427 = vadd.f32 %v7384, %v7426
  %7428 = vdwg.mxu0
  %7429 = vmatprep.subr.bf16.mxu0 %v5563
  %7430 = vmatpush1.bf16.msra.mxu0 %v5562
  %7431 = vmatprep.subr.bf16.mxu0 %v5556
  %7432 = vmatpush1.bf16.msra.mxu0 %v5555
  %7433 = vmatprep.subr.bf16.mxu0 %v5549
  %7434 = vmatpush1.bf16.msra.mxu0 %v5548
  %7435 = vmatprep.subr.bf16.mxu0 %v5542
  %7436 = vmatpush1.bf16.msra.mxu0 %v5541
  %7437 = vmatprep.subr.bf16.mxu0 %v5535
  %7438 = vmatpush1.bf16.msra.mxu0 %v5534
  %7439 = vmatprep.subr.bf16.mxu0 %v5528
  %7440 = vmatpush1.bf16.msra.mxu0 %v5527
  %7441 = vmatprep.subr.bf16.mxu0 %v5521
  %7442 = vmatpush1.bf16.msra.mxu0 %v5520
  %7443 = vmatprep.subr.bf16.mxu0 %v5514
  %7444 = vmatpush1.bf16.msra.mxu0 %v5513
  %7445 = vmatprep.subr.bf16.mxu0 %v5619
  %7446 = vmatpush2.bf16.msra.mxu0 %v5618
  %7447 = vmatprep.subr.bf16.mxu0 %v5612
  %7448 = vmatpush2.bf16.msra.mxu0 %v5611
  %7449 = vmatprep.subr.bf16.mxu0 %v5605
  %7450 = vmatpush2.bf16.msra.mxu0 %v5604
  %7451 = vmatprep.subr.bf16.mxu0 %v5598
  %7452 = vmatpush2.bf16.msra.mxu0 %v5597
  %7453 = vmatprep.subr.bf16.mxu0 %v5591
  %7454 = vmatpush2.bf16.msra.mxu0 %v5590
  %7455 = vmatprep.subr.bf16.mxu0 %v5584
  %7456 = vmatpush2.bf16.msra.mxu0 %v5583
  %7457 = vmatprep.subr.bf16.mxu0 %v5577
  %7458 = vmatpush2.bf16.msra.mxu0 %v5576
  %7459 = vmatprep.subr.bf16.mxu0 %v5570
  %7460 = vmatpush2.bf16.msra.mxu0 %v5569
  %7461 = vmatprep.mubr.bf16.mxu0 %v2120
  %7462 = vmatmul.mubr.bf16.gmra.mxu0 %v2119
  %v7463 = vpop.f32.mrf.mxu0
  %v7464 = vadd.f32 %v7421, %v7463
  %v7465 = vpop.f32.mrf.mxu0
  %v7466 = vadd.f32 %v7423, %v7465
  %v7467 = vpop.f32.mrf.mxu0
  %v7468 = vadd.f32 %v7425, %v7467
  %v7469 = vpop.f32.mrf.mxu0
  %v7470 = vadd.f32 %v7427, %v7469
  %7471 = vdwg.mxu0
  %7472 = vmatprep.subr.bf16.mxu0 %v5675
  %7473 = vmatpush1.bf16.msra.mxu0 %v5674
  %7474 = vmatprep.subr.bf16.mxu0 %v5668
  %7475 = vmatpush1.bf16.msra.mxu0 %v5667
  %7476 = vmatprep.subr.bf16.mxu0 %v5661
  %7477 = vmatpush1.bf16.msra.mxu0 %v5660
  %7478 = vmatprep.subr.bf16.mxu0 %v5654
  %7479 = vmatpush1.bf16.msra.mxu0 %v5653
  %7480 = vmatprep.subr.bf16.mxu0 %v5647
  %7481 = vmatpush1.bf16.msra.mxu0 %v5646
  %7482 = vmatprep.subr.bf16.mxu0 %v5640
  %7483 = vmatpush1.bf16.msra.mxu0 %v5639
  %7484 = vmatprep.subr.bf16.mxu0 %v5633
  %7485 = vmatpush1.bf16.msra.mxu0 %v5632
  %7486 = vmatprep.subr.bf16.mxu0 %v5626
  %7487 = vmatpush1.bf16.msra.mxu0 %v5625
  %7488 = vmatprep.subr.bf16.mxu0 %v5731
  %7489 = vmatpush2.bf16.msra.mxu0 %v5730
  %7490 = vmatprep.subr.bf16.mxu0 %v5724
  %7491 = vmatpush2.bf16.msra.mxu0 %v5723
  %7492 = vmatprep.subr.bf16.mxu0 %v5717
  %7493 = vmatpush2.bf16.msra.mxu0 %v5716
  %7494 = vmatprep.subr.bf16.mxu0 %v5710
  %7495 = vmatpush2.bf16.msra.mxu0 %v5709
  %7496 = vmatprep.subr.bf16.mxu0 %v5703
  %7497 = vmatpush2.bf16.msra.mxu0 %v5702
  %7498 = vmatprep.subr.bf16.mxu0 %v5696
  %7499 = vmatpush2.bf16.msra.mxu0 %v5695
  %7500 = vmatprep.subr.bf16.mxu0 %v5689
  %7501 = vmatpush2.bf16.msra.mxu0 %v5688
  %7502 = vmatprep.subr.bf16.mxu0 %v5682
  %7503 = vmatpush2.bf16.msra.mxu0 %v5681
  %7504 = vmatprep.mubr.bf16.mxu0 %v2122
  %7505 = vmatmul.mubr.bf16.gmra.mxu0 %v2121
  %v7506 = vpop.f32.mrf.mxu0
  %v7507 = vadd.f32 %v7464, %v7506
  %v7508 = vpop.f32.mrf.mxu0
  %v7509 = vadd.f32 %v7466, %v7508
  %v7510 = vpop.f32.mrf.mxu0
  %v7511 = vadd.f32 %v7468, %v7510
  %v7512 = vpop.f32.mrf.mxu0
  %v7513 = vadd.f32 %v7470, %v7512
  %7514 = vdwg.mxu0
  %7515 = vmatprep.subr.bf16.mxu0 %v5787
  %7516 = vmatpush1.bf16.msra.mxu0 %v5786
  %7517 = vmatprep.subr.bf16.mxu0 %v5780
  %7518 = vmatpush1.bf16.msra.mxu0 %v5779
  %7519 = vmatprep.subr.bf16.mxu0 %v5773
  %7520 = vmatpush1.bf16.msra.mxu0 %v5772
  %7521 = vmatprep.subr.bf16.mxu0 %v5766
  %7522 = vmatpush1.bf16.msra.mxu0 %v5765
  %7523 = vmatprep.subr.bf16.mxu0 %v5759
  %7524 = vmatpush1.bf16.msra.mxu0 %v5758
  %7525 = vmatprep.subr.bf16.mxu0 %v5752
  %7526 = vmatpush1.bf16.msra.mxu0 %v5751
  %7527 = vmatprep.subr.bf16.mxu0 %v5745
  %7528 = vmatpush1.bf16.msra.mxu0 %v5744
  %7529 = vmatprep.subr.bf16.mxu0 %v5738
  %7530 = vmatpush1.bf16.msra.mxu0 %v5737
  %7531 = vmatprep.subr.bf16.mxu0 %v5843
  %7532 = vmatpush2.bf16.msra.mxu0 %v5842
  %7533 = vmatprep.subr.bf16.mxu0 %v5836
  %7534 = vmatpush2.bf16.msra.mxu0 %v5835
  %7535 = vmatprep.subr.bf16.mxu0 %v5829
  %7536 = vmatpush2.bf16.msra.mxu0 %v5828
  %7537 = vmatprep.subr.bf16.mxu0 %v5822
  %7538 = vmatpush2.bf16.msra.mxu0 %v5821
  %7539 = vmatprep.subr.bf16.mxu0 %v5815
  %7540 = vmatpush2.bf16.msra.mxu0 %v5814
  %7541 = vmatprep.subr.bf16.mxu0 %v5808
  %7542 = vmatpush2.bf16.msra.mxu0 %v5807
  %7543 = vmatprep.subr.bf16.mxu0 %v5801
  %7544 = vmatpush2.bf16.msra.mxu0 %v5800
  %7545 = vmatprep.subr.bf16.mxu0 %v5794
  %7546 = vmatpush2.bf16.msra.mxu0 %v5793
  %7547 = vmatprep.mubr.bf16.mxu0 %v2124
  %7548 = vmatmul.mubr.bf16.gmra.mxu0 %v2123
  %v7549 = vpop.f32.mrf.mxu0
  %v7550 = vadd.f32 %v7507, %v7549
  %v7551 = vpop.f32.mrf.mxu0
  %v7552 = vadd.f32 %v7509, %v7551
  %v7553 = vpop.f32.mrf.mxu0
  %v7554 = vadd.f32 %v7511, %v7553
  %v7555 = vpop.f32.mrf.mxu0
  %v7556 = vadd.f32 %v7513, %v7555
  %7557 = vdwg.mxu0
  %7558 = vmatprep.subr.bf16.mxu0 %v5899
  %7559 = vmatpush1.bf16.msra.mxu0 %v5898
  %7560 = vmatprep.subr.bf16.mxu0 %v5892
  %7561 = vmatpush1.bf16.msra.mxu0 %v5891
  %7562 = vmatprep.subr.bf16.mxu0 %v5885
  %7563 = vmatpush1.bf16.msra.mxu0 %v5884
  %7564 = vmatprep.subr.bf16.mxu0 %v5878
  %7565 = vmatpush1.bf16.msra.mxu0 %v5877
  %7566 = vmatprep.subr.bf16.mxu0 %v5871
  %7567 = vmatpush1.bf16.msra.mxu0 %v5870
  %7568 = vmatprep.subr.bf16.mxu0 %v5864
  %7569 = vmatpush1.bf16.msra.mxu0 %v5863
  %7570 = vmatprep.subr.bf16.mxu0 %v5857
  %7571 = vmatpush1.bf16.msra.mxu0 %v5856
  %7572 = vmatprep.subr.bf16.mxu0 %v5850
  %7573 = vmatpush1.bf16.msra.mxu0 %v5849
  %7574 = vmatprep.subr.bf16.mxu0 %v5955
  %7575 = vmatpush2.bf16.msra.mxu0 %v5954
  %7576 = vmatprep.subr.bf16.mxu0 %v5948
  %7577 = vmatpush2.bf16.msra.mxu0 %v5947
  %7578 = vmatprep.subr.bf16.mxu0 %v5941
  %7579 = vmatpush2.bf16.msra.mxu0 %v5940
  %7580 = vmatprep.subr.bf16.mxu0 %v5934
  %7581 = vmatpush2.bf16.msra.mxu0 %v5933
  %7582 = vmatprep.subr.bf16.mxu0 %v5927
  %7583 = vmatpush2.bf16.msra.mxu0 %v5926
  %7584 = vmatprep.subr.bf16.mxu0 %v5920
  %7585 = vmatpush2.bf16.msra.mxu0 %v5919
  %7586 = vmatprep.subr.bf16.mxu0 %v5913
  %7587 = vmatpush2.bf16.msra.mxu0 %v5912
  %7588 = vmatprep.subr.bf16.mxu0 %v5906
  %7589 = vmatpush2.bf16.msra.mxu0 %v5905
  %7590 = vmatprep.mubr.bf16.mxu0 %v2126
  %7591 = vmatmul.mubr.bf16.gmra.mxu0 %v2125
  %v7592 = vpop.f32.mrf.mxu0
  %v7593 = vadd.f32 %v7550, %v7592
  %v7594 = vpop.f32.mrf.mxu0
  %v7595 = vadd.f32 %v7552, %v7594
  %v7596 = vpop.f32.mrf.mxu0
  %v7597 = vadd.f32 %v7554, %v7596
  %v7598 = vpop.f32.mrf.mxu0
  %v7599 = vadd.f32 %v7556, %v7598
  %7600 = vdwg.mxu0
  %7601 = vmatprep.subr.bf16.mxu0 %v6011
  %7602 = vmatpush1.bf16.msra.mxu0 %v6010
  %7603 = vmatprep.subr.bf16.mxu0 %v6004
  %7604 = vmatpush1.bf16.msra.mxu0 %v6003
  %7605 = vmatprep.subr.bf16.mxu0 %v5997
  %7606 = vmatpush1.bf16.msra.mxu0 %v5996
  %7607 = vmatprep.subr.bf16.mxu0 %v5990
  %7608 = vmatpush1.bf16.msra.mxu0 %v5989
  %7609 = vmatprep.subr.bf16.mxu0 %v5983
  %7610 = vmatpush1.bf16.msra.mxu0 %v5982
  %7611 = vmatprep.subr.bf16.mxu0 %v5976
  %7612 = vmatpush1.bf16.msra.mxu0 %v5975
  %7613 = vmatprep.subr.bf16.mxu0 %v5969
  %7614 = vmatpush1.bf16.msra.mxu0 %v5968
  %7615 = vmatprep.subr.bf16.mxu0 %v5962
  %7616 = vmatpush1.bf16.msra.mxu0 %v5961
  %7617 = vmatprep.subr.bf16.mxu0 0
  %7618 = vmatpush2.bf16.msra.mxu0 0
  %7619 = vmatprep.subr.bf16.mxu0 0
  %7620 = vmatpush2.bf16.msra.mxu0 0
  %7621 = vmatprep.subr.bf16.mxu0 0
  %7622 = vmatpush2.bf16.msra.mxu0 0
  %7623 = vmatprep.subr.bf16.mxu0 0
  %7624 = vmatpush2.bf16.msra.mxu0 0
  %7625 = vmatprep.subr.bf16.mxu0 0
  %7626 = vmatpush2.bf16.msra.mxu0 0
  %7627 = vmatprep.subr.bf16.mxu0 0
  %7628 = vmatpush2.bf16.msra.mxu0 0
  %7629 = vmatprep.subr.bf16.mxu0 0
  %7630 = vmatpush2.bf16.msra.mxu0 0
  %7631 = vmatprep.subr.bf16.mxu0 0
  %7632 = vmatpush2.bf16.msra.mxu0 0
  %7633 = vmatprep.mubr.bf16.mxu0 0
  %7634 = vmatmul.mubr.bf16.gmra.mxu0 %v2127
  %v7635 = vpop.f32.mrf.mxu0
  %v7636 = vadd.f32 %v7593, %v7635
  %v7637 = vpop.f32.mrf.mxu0
  %v7638 = vadd.f32 %v7595, %v7637
  %v7639 = vpop.f32.mrf.mxu0
  %v7640 = vadd.f32 %v7597, %v7639
  %v7641 = vpop.f32.mrf.mxu0
  %v7642 = vadd.f32 %v7599, %v7641
  %7643 = vdwg.mxu0
  %7644 = vmatprep.subr.bf16.mxu0 0
  %7645 = vmatpush1.bf16.msra.mxu0 %v5340
  %7646 = vmatprep.subr.bf16.mxu0 0
  %7647 = vmatpush1.bf16.msra.mxu0 %v5333
  %7648 = vmatprep.subr.bf16.mxu0 0
  %7649 = vmatpush1.bf16.msra.mxu0 %v5326
  %7650 = vmatprep.subr.bf16.mxu0 0
  %7651 = vmatpush1.bf16.msra.mxu0 %v5319
  %7652 = vmatprep.subr.bf16.mxu0 0
  %7653 = vmatpush1.bf16.msra.mxu0 %v5312
  %7654 = vmatprep.subr.bf16.mxu0 0
  %7655 = vmatpush1.bf16.msra.mxu0 %v5305
  %7656 = vmatprep.subr.bf16.mxu0 0
  %7657 = vmatpush1.bf16.msra.mxu0 %v5298
  %7658 = vmatprep.subr.bf16.mxu0 0
  %7659 = vmatpush1.bf16.msra.mxu0 %v5291
  %7660 = vmatprep.subr.bf16.mxu0 0
  %7661 = vmatpush2.bf16.msra.mxu0 %v5396
  %7662 = vmatprep.subr.bf16.mxu0 0
  %7663 = vmatpush2.bf16.msra.mxu0 %v5389
  %7664 = vmatprep.subr.bf16.mxu0 0
  %7665 = vmatpush2.bf16.msra.mxu0 %v5382
  %7666 = vmatprep.subr.bf16.mxu0 0
  %7667 = vmatpush2.bf16.msra.mxu0 %v5375
  %7668 = vmatprep.subr.bf16.mxu0 0
  %7669 = vmatpush2.bf16.msra.mxu0 %v5368
  %7670 = vmatprep.subr.bf16.mxu0 0
  %7671 = vmatpush2.bf16.msra.mxu0 %v5361
  %7672 = vmatprep.subr.bf16.mxu0 0
  %7673 = vmatpush2.bf16.msra.mxu0 %v5354
  %7674 = vmatprep.subr.bf16.mxu0 0
  %7675 = vmatpush2.bf16.msra.mxu0 %v5347
  %7676 = vmatprep.mubr.bf16.mxu0 %v2116
  %7677 = vmatmul.mubr.bf16.gmra.mxu0 %v2115
  %v7678 = vpop.f32.mrf.mxu0
  %v7679 = vadd.f32 %v2989, %v7678
  %v7680 = vpop.f32.mrf.mxu0
  %v7681 = vpop.f32.mrf.mxu0
  %v7682 = vadd.f32 %v2989, %v7681
  %v7683 = vpop.f32.mrf.mxu0
  %7684 = vdwg.mxu0
  %7685 = vmatprep.subr.bf16.mxu0 0
  %7686 = vmatpush1.bf16.msra.mxu0 %v5452
  %7687 = vmatprep.subr.bf16.mxu0 0
  %7688 = vmatpush1.bf16.msra.mxu0 %v5445
  %7689 = vmatprep.subr.bf16.mxu0 0
  %7690 = vmatpush1.bf16.msra.mxu0 %v5438
  %7691 = vmatprep.subr.bf16.mxu0 0
  %7692 = vmatpush1.bf16.msra.mxu0 %v5431
  %7693 = vmatprep.subr.bf16.mxu0 0
  %7694 = vmatpush1.bf16.msra.mxu0 %v5424
  %7695 = vmatprep.subr.bf16.mxu0 0
  %7696 = vmatpush1.bf16.msra.mxu0 %v5417
  %7697 = vmatprep.subr.bf16.mxu0 0
  %7698 = vmatpush1.bf16.msra.mxu0 %v5410
  %7699 = vmatprep.subr.bf16.mxu0 0
  %7700 = vmatpush1.bf16.msra.mxu0 %v5403
  %7701 = vmatprep.subr.bf16.mxu0 0
  %7702 = vmatpush2.bf16.msra.mxu0 %v5508
  %7703 = vmatprep.subr.bf16.mxu0 0
  %7704 = vmatpush2.bf16.msra.mxu0 %v5501
  %7705 = vmatprep.subr.bf16.mxu0 0
  %7706 = vmatpush2.bf16.msra.mxu0 %v5494
  %7707 = vmatprep.subr.bf16.mxu0 0
  %7708 = vmatpush2.bf16.msra.mxu0 %v5487
  %7709 = vmatprep.subr.bf16.mxu0 0
  %7710 = vmatpush2.bf16.msra.mxu0 %v5480
  %7711 = vmatprep.subr.bf16.mxu0 0
  %7712 = vmatpush2.bf16.msra.mxu0 %v5473
  %7713 = vmatprep.subr.bf16.mxu0 0
  %7714 = vmatpush2.bf16.msra.mxu0 %v5466
  %7715 = vmatprep.subr.bf16.mxu0 0
  %7716 = vmatpush2.bf16.msra.mxu0 %v5459
  %7717 = vmatprep.mubr.bf16.mxu0 %v2118
  %7718 = vmatmul.mubr.bf16.gmra.mxu0 %v2117
  %v7719 = vpop.f32.mrf.mxu0
  %v7720 = vadd.f32 %v7679, %v7719
  %v7721 = vpop.f32.mrf.mxu0
  %v7722 = vpop.f32.mrf.mxu0
  %v7723 = vadd.f32 %v7682, %v7722
  %v7724 = vpop.f32.mrf.mxu0
  %7725 = vdwg.mxu0
  %7726 = vmatprep.subr.bf16.mxu0 0
  %7727 = vmatpush1.bf16.msra.mxu0 %v5564
  %7728 = vmatprep.subr.bf16.mxu0 0
  %7729 = vmatpush1.bf16.msra.mxu0 %v5557
  %7730 = vmatprep.subr.bf16.mxu0 0
  %7731 = vmatpush1.bf16.msra.mxu0 %v5550
  %7732 = vmatprep.subr.bf16.mxu0 0
  %7733 = vmatpush1.bf16.msra.mxu0 %v5543
  %7734 = vmatprep.subr.bf16.mxu0 0
  %7735 = vmatpush1.bf16.msra.mxu0 %v5536
  %7736 = vmatprep.subr.bf16.mxu0 0
  %7737 = vmatpush1.bf16.msra.mxu0 %v5529
  %7738 = vmatprep.subr.bf16.mxu0 0
  %7739 = vmatpush1.bf16.msra.mxu0 %v5522
  %7740 = vmatprep.subr.bf16.mxu0 0
  %7741 = vmatpush1.bf16.msra.mxu0 %v5515
  %7742 = vmatprep.subr.bf16.mxu0 0
  %7743 = vmatpush2.bf16.msra.mxu0 %v5620
  %7744 = vmatprep.subr.bf16.mxu0 0
  %7745 = vmatpush2.bf16.msra.mxu0 %v5613
  %7746 = vmatprep.subr.bf16.mxu0 0
  %7747 = vmatpush2.bf16.msra.mxu0 %v5606
  %7748 = vmatprep.subr.bf16.mxu0 0
  %7749 = vmatpush2.bf16.msra.mxu0 %v5599
  %7750 = vmatprep.subr.bf16.mxu0 0
  %7751 = vmatpush2.bf16.msra.mxu0 %v5592
  %7752 = vmatprep.subr.bf16.mxu0 0
  %7753 = vmatpush2.bf16.msra.mxu0 %v5585
  %7754 = vmatprep.subr.bf16.mxu0 0
  %7755 = vmatpush2.bf16.msra.mxu0 %v5578
  %7756 = vmatprep.subr.bf16.mxu0 0
  %7757 = vmatpush2.bf16.msra.mxu0 %v5571
  %7758 = vmatprep.mubr.bf16.mxu0 %v2120
  %7759 = vmatmul.mubr.bf16.gmra.mxu0 %v2119
  %v7760 = vpop.f32.mrf.mxu0
  %v7761 = vadd.f32 %v7720, %v7760
  %v7762 = vpop.f32.mrf.mxu0
  %v7763 = vpop.f32.mrf.mxu0
  %v7764 = vadd.f32 %v7723, %v7763
  %v7765 = vpop.f32.mrf.mxu0
  %7766 = vdwg.mxu0
  %7767 = vmatprep.subr.bf16.mxu0 0
  %7768 = vmatpush1.bf16.msra.mxu0 %v5676
  %7769 = vmatprep.subr.bf16.mxu0 0
  %7770 = vmatpush1.bf16.msra.mxu0 %v5669
  %7771 = vmatprep.subr.bf16.mxu0 0
  %7772 = vmatpush1.bf16.msra.mxu0 %v5662
  %7773 = vmatprep.subr.bf16.mxu0 0
  %7774 = vmatpush1.bf16.msra.mxu0 %v5655
  %7775 = vmatprep.subr.bf16.mxu0 0
  %7776 = vmatpush1.bf16.msra.mxu0 %v5648
  %7777 = vmatprep.subr.bf16.mxu0 0
  %7778 = vmatpush1.bf16.msra.mxu0 %v5641
  %7779 = vmatprep.subr.bf16.mxu0 0
  %7780 = vmatpush1.bf16.msra.mxu0 %v5634
  %7781 = vmatprep.subr.bf16.mxu0 0
  %7782 = vmatpush1.bf16.msra.mxu0 %v5627
  %7783 = vmatprep.subr.bf16.mxu0 0
  %7784 = vmatpush2.bf16.msra.mxu0 %v5732
  %7785 = vmatprep.subr.bf16.mxu0 0
  %7786 = vmatpush2.bf16.msra.mxu0 %v5725
  %7787 = vmatprep.subr.bf16.mxu0 0
  %7788 = vmatpush2.bf16.msra.mxu0 %v5718
  %7789 = vmatprep.subr.bf16.mxu0 0
  %7790 = vmatpush2.bf16.msra.mxu0 %v5711
  %7791 = vmatprep.subr.bf16.mxu0 0
  %7792 = vmatpush2.bf16.msra.mxu0 %v5704
  %7793 = vmatprep.subr.bf16.mxu0 0
  %7794 = vmatpush2.bf16.msra.mxu0 %v5697
  %7795 = vmatprep.subr.bf16.mxu0 0
  %7796 = vmatpush2.bf16.msra.mxu0 %v5690
  %7797 = vmatprep.subr.bf16.mxu0 0
  %7798 = vmatpush2.bf16.msra.mxu0 %v5683
  %7799 = vmatprep.mubr.bf16.mxu0 %v2122
  %7800 = vmatmul.mubr.bf16.gmra.mxu0 %v2121
  %v7801 = vpop.f32.mrf.mxu0
  %v7802 = vadd.f32 %v7761, %v7801
  %v7803 = vpop.f32.mrf.mxu0
  %v7804 = vpop.f32.mrf.mxu0
  %v7805 = vadd.f32 %v7764, %v7804
  %v7806 = vpop.f32.mrf.mxu0
  %7807 = vdwg.mxu0
  %7808 = vmatprep.subr.bf16.mxu0 0
  %7809 = vmatpush1.bf16.msra.mxu0 %v5788
  %7810 = vmatprep.subr.bf16.mxu0 0
  %7811 = vmatpush1.bf16.msra.mxu0 %v5781
  %7812 = vmatprep.subr.bf16.mxu0 0
  %7813 = vmatpush1.bf16.msra.mxu0 %v5774
  %7814 = vmatprep.subr.bf16.mxu0 0
  %7815 = vmatpush1.bf16.msra.mxu0 %v5767
  %7816 = vmatprep.subr.bf16.mxu0 0
  %7817 = vmatpush1.bf16.msra.mxu0 %v5760
  %7818 = vmatprep.subr.bf16.mxu0 0
  %7819 = vmatpush1.bf16.msra.mxu0 %v5753
  %7820 = vmatprep.subr.bf16.mxu0 0
  %7821 = vmatpush1.bf16.msra.mxu0 %v5746
  %7822 = vmatprep.subr.bf16.mxu0 0
  %7823 = vmatpush1.bf16.msra.mxu0 %v5739
  %7824 = vmatprep.subr.bf16.mxu0 0
  %7825 = vmatpush2.bf16.msra.mxu0 %v5844
  %7826 = vmatprep.subr.bf16.mxu0 0
  %7827 = vmatpush2.bf16.msra.mxu0 %v5837
  %7828 = vmatprep.subr.bf16.mxu0 0
  %7829 = vmatpush2.bf16.msra.mxu0 %v5830
  %7830 = vmatprep.subr.bf16.mxu0 0
  %7831 = vmatpush2.bf16.msra.mxu0 %v5823
  %7832 = vmatprep.subr.bf16.mxu0 0
  %7833 = vmatpush2.bf16.msra.mxu0 %v5816
  %7834 = vmatprep.subr.bf16.mxu0 0
  %7835 = vmatpush2.bf16.msra.mxu0 %v5809
  %7836 = vmatprep.subr.bf16.mxu0 0
  %7837 = vmatpush2.bf16.msra.mxu0 %v5802
  %7838 = vmatprep.subr.bf16.mxu0 0
  %7839 = vmatpush2.bf16.msra.mxu0 %v5795
  %7840 = vmatprep.mubr.bf16.mxu0 %v2124
  %7841 = vmatmul.mubr.bf16.gmra.mxu0 %v2123
  %v7842 = vpop.f32.mrf.mxu0
  %v7843 = vadd.f32 %v7802, %v7842
  %v7844 = vpop.f32.mrf.mxu0
  %v7845 = vpop.f32.mrf.mxu0
  %v7846 = vadd.f32 %v7805, %v7845
  %v7847 = vpop.f32.mrf.mxu0
  %7848 = vdwg.mxu0
  %7849 = vmatprep.subr.bf16.mxu0 0
  %7850 = vmatpush1.bf16.msra.mxu0 %v5900
  %7851 = vmatprep.subr.bf16.mxu0 0
  %7852 = vmatpush1.bf16.msra.mxu0 %v5893
  %7853 = vmatprep.subr.bf16.mxu0 0
  %7854 = vmatpush1.bf16.msra.mxu0 %v5886
  %7855 = vmatprep.subr.bf16.mxu0 0
  %7856 = vmatpush1.bf16.msra.mxu0 %v5879
  %7857 = vmatprep.subr.bf16.mxu0 0
  %7858 = vmatpush1.bf16.msra.mxu0 %v5872
  %7859 = vmatprep.subr.bf16.mxu0 0
  %7860 = vmatpush1.bf16.msra.mxu0 %v5865
  %7861 = vmatprep.subr.bf16.mxu0 0
  %7862 = vmatpush1.bf16.msra.mxu0 %v5858
  %7863 = vmatprep.subr.bf16.mxu0 0
  %7864 = vmatpush1.bf16.msra.mxu0 %v5851
  %7865 = vmatprep.subr.bf16.mxu0 0
  %7866 = vmatpush2.bf16.msra.mxu0 %v5956
  %7867 = vmatprep.subr.bf16.mxu0 0
  %7868 = vmatpush2.bf16.msra.mxu0 %v5949
  %7869 = vmatprep.subr.bf16.mxu0 0
  %7870 = vmatpush2.bf16.msra.mxu0 %v5942
  %7871 = vmatprep.subr.bf16.mxu0 0
  %7872 = vmatpush2.bf16.msra.mxu0 %v5935
  %7873 = vmatprep.subr.bf16.mxu0 0
  %7874 = vmatpush2.bf16.msra.mxu0 %v5928
  %7875 = vmatprep.subr.bf16.mxu0 0
  %7876 = vmatpush2.bf16.msra.mxu0 %v5921
  %7877 = vmatprep.subr.bf16.mxu0 0
  %7878 = vmatpush2.bf16.msra.mxu0 %v5914
  %7879 = vmatprep.subr.bf16.mxu0 0
  %7880 = vmatpush2.bf16.msra.mxu0 %v5907
  %7881 = vmatprep.mubr.bf16.mxu0 %v2126
  %7882 = vmatmul.mubr.bf16.gmra.mxu0 %v2125
  %v7883 = vpop.f32.mrf.mxu0
  %v7884 = vadd.f32 %v7843, %v7883
  %v7885 = vpop.f32.mrf.mxu0
  %v7886 = vpop.f32.mrf.mxu0
  %v7887 = vadd.f32 %v7846, %v7886
  %v7888 = vpop.f32.mrf.mxu0
  %7889 = vdwg.mxu0
  %7890 = vmatprep.subr.bf16.mxu0 0
  %7891 = vmatpush1.bf16.msra.mxu0 %v6012
  %7892 = vmatprep.subr.bf16.mxu0 0
  %7893 = vmatpush1.bf16.msra.mxu0 %v6005
  %7894 = vmatprep.subr.bf16.mxu0 0
  %7895 = vmatpush1.bf16.msra.mxu0 %v5998
  %7896 = vmatprep.subr.bf16.mxu0 0
  %7897 = vmatpush1.bf16.msra.mxu0 %v5991
  %7898 = vmatprep.subr.bf16.mxu0 0
  %7899 = vmatpush1.bf16.msra.mxu0 %v5984
  %7900 = vmatprep.subr.bf16.mxu0 0
  %7901 = vmatpush1.bf16.msra.mxu0 %v5977
  %7902 = vmatprep.subr.bf16.mxu0 0
  %7903 = vmatpush1.bf16.msra.mxu0 %v5970
  %7904 = vmatprep.subr.bf16.mxu0 0
  %7905 = vmatpush1.bf16.msra.mxu0 %v5963
  %7906 = vmatprep.subr.bf16.mxu0 0
  %7907 = vmatpush2.bf16.msra.mxu0 0
  %7908 = vmatprep.subr.bf16.mxu0 0
  %7909 = vmatpush2.bf16.msra.mxu0 0
  %7910 = vmatprep.subr.bf16.mxu0 0
  %7911 = vmatpush2.bf16.msra.mxu0 0
  %7912 = vmatprep.subr.bf16.mxu0 0
  %7913 = vmatpush2.bf16.msra.mxu0 0
  %7914 = vmatprep.subr.bf16.mxu0 0
  %7915 = vmatpush2.bf16.msra.mxu0 0
  %7916 = vmatprep.subr.bf16.mxu0 0
  %7917 = vmatpush2.bf16.msra.mxu0 0
  %7918 = vmatprep.subr.bf16.mxu0 0
  %7919 = vmatpush2.bf16.msra.mxu0 0
  %7920 = vmatprep.subr.bf16.mxu0 0
  %7921 = vmatpush2.bf16.msra.mxu0 0
  %7922 = vmatprep.mubr.bf16.mxu0 0
  %7923 = vmatmul.mubr.bf16.gmra.mxu0 %v2127
  %v7924 = vpop.f32.mrf.mxu0
  %v7925 = vadd.f32 %v7884, %v7924
  %v7926 = vpop.f32.mrf.mxu0
  %v7927 = vpop.f32.mrf.mxu0
  %v7928 = vadd.f32 %v7887, %v7927
  %v7929 = vpop.f32.mrf.mxu0
  %7930 = vdwg.mxu0
  %v7931 = vmax.f32 %v7034, 0.0
  %v7932 = vmax.f32 %v7036, 0.0
  %v7933 = vmax.f32 %v7335, 0.0
  %v7934 = vmax.f32 %v7337, 0.0
  %v7935 = vmax.f32 %v7636, 0.0
  %v7936 = vmax.f32 %v7638, 0.0
  %v7937 = vmax.f32 %v7925, 0.0
  %v7938 = vmax.f32 %v7038, 0.0
  %v7939 = vmax.f32 %v7040, 0.0
  %v7940 = vmax.f32 %v7339, 0.0
  %v7941 = vmax.f32 %v7341, 0.0
  %v7942 = vmax.f32 %v7640, 0.0
  %v7943 = vmax.f32 %v7642, 0.0
  %v7944 = vmax.f32 %v7928, 0.0
  %7945 = vst [vmem:[%s11] sm:$0xff] %v7931
  %7946 = vst [vmem:[%s11 + $0x8] sm:$0xff] %v7932
  %7947 = vst [vmem:[%s11 + $0x10] sm:$0xff] %v7933
  %7948 = vst [vmem:[%s11 + $0x18] sm:$0xff] %v7934
  %7949 = vst [vmem:[%s11 + $0x20] sm:$0xff] %v7935
  %7950 = vst [vmem:[%s11 + $0x28] sm:$0xff] %v7936
  %7951 = vst [vmem:[%s11 + $0x30] sm:$0xff] %v7937
  %7952 = vst [vmem:[%s11 + $0x38] sm:$0xff] %v7938
  %7953 = vst [vmem:[%s11 + $0x40] sm:$0xff] %v7939
  %7954 = vst [vmem:[%s11 + $0x48] sm:$0xff] %v7940
  %7955 = vst [vmem:[%s11 + $0x50] sm:$0xff] %v7941
  %7956 = vst [vmem:[%s11 + $0x58] sm:$0xff] %v7942
  %7957 = vst [vmem:[%s11 + $0x60] sm:$0xff] %v7943
  %7958 = vst [vmem:[%s11 + $0x68] sm:$0xff] %v7944
  // Predicated region
  $region46: #{autoencoder_forward.5} parent=0 // pred_check
    _
  $region47: #{autoencoder_forward.5} parent=0 // pred_check_branch
    %7960 = sbr.rel (0) target = $region49
  $region48: #{autoencoder_forward.5} parent=0 // pred_region
    _
  $region49: #{autoencoder_forward.5} parent=0 // pred_fallthru
    _
  // Predicated region
  $region50: #{autoencoder_forward.5} parent=0 // pred_check
    _
  $region51: #{autoencoder_forward.5} parent=0 // pred_check_branch
    %7962 = sbr.rel (0) target = $region53
  $region52: #{autoencoder_forward.5} parent=0 // pred_region
    _
  $region53: #{autoencoder_forward.5} parent=0 // pred_fallthru
    _

</llo_original>
